<compile_context>
chip_gen: v7x
topology: tpu7x:2x2x1
jax: 0.10.0
libtpu: 0.0.40
codegen_flags: <defaults>
</compile_context>

<pallas_src>
import functools

import jax
import jax.numpy as jnp
from jax.experimental import pallas as pl
from jax.experimental.pallas import tpu as pltpu

_VMEM_LIMIT = 48 * 1024 * 1024   # <= ~56 MiB (v7x physical 64), > 16/32 MiB defaults
_LANE = 128


def _round_up(x, m):
    return ((x + m - 1) // m) * m


def _pick_tile(total, cap):
    """Largest tile <= cap dividing total (total is a multiple of 8)."""
    t = min(cap, total)
    while total % t != 0:
        t //= 2
    return t


# ---------------------------------------------------------------------------
# Pallas kernel 1: matmul with full-weight residency, f32 accum, fused tanh
# ---------------------------------------------------------------------------
def _matmul_kernel(a_ref, w_ref, o_ref, *, activation):
    acc = jnp.dot(a_ref[...], w_ref[...], preferred_element_type=jnp.float32)
    if activation == "tanh":
        acc = jnp.tanh(acc)                  # f32 epilogue on the EUP
    o_ref[...] = acc.astype(o_ref.dtype)


def matmul_pallas(a, w, activation=None, out_dtype=jnp.bfloat16, tm_cap=1024):
    """(M, K) @ (K, Nn) -> (M, Nn) in out_dtype (bf16 on the wire).

    The whole (Kp, Np) weight is kept resident in VMEM (constant index_map ->
    DMAed once per core); the M dimension is streamed in `tm`-row stripes and
    marked "parallel" so both v7x TensorCores can share it.  Zero padding of
    K/N/M is numerically inert and sliced off on return.
    """
    M, K = a.shape
    Kw, Nn = w.shape
    assert K == Kw
    Kp = _round_up(K, _LANE)
    Np = _round_up(Nn, _LANE)
    Mp8 = _round_up(M, 8)
    tm = Mp8 if Mp8 <= tm_cap else tm_cap
    Mp = _round_up(M, tm)

    a_p = jnp.pad(a.astype(jnp.bfloat16), ((0, Mp - M), (0, Kp - K)))
    w_p = jnp.pad(w.astype(jnp.bfloat16), ((0, Kp - K), (0, Np - Nn)))

    out = pl.pallas_call(
        functools.partial(_matmul_kernel, activation=activation),
        out_shape=jax.ShapeDtypeStruct((Mp, Np), out_dtype),
        grid_spec=pltpu.PrefetchScalarGridSpec(
            num_scalar_prefetch=0,
            grid=(Mp // tm,),
            in_specs=[
                pl.BlockSpec((tm, Kp), lambda i: (i, 0)),
                pl.BlockSpec((Kp, Np), lambda i: (0, 0)),   # resident weights
            ],
            out_specs=pl.BlockSpec((tm, Np), lambda i: (i, 0)),
        ),
        compiler_params=pltpu.CompilerParams(
            dimension_semantics=("parallel",),
            vmem_limit_bytes=_VMEM_LIMIT),
    )(a_p, w_p)
    return out[:M, :Nn]


# ---------------------------------------------------------------------------
# Pallas kernels 2+3: BatchNorm2d (training stats, biased var) + ReLU, bf16 io
# ---------------------------------------------------------------------------
def _bn_stats_kernel(x_ref, mean_ref, rstd_ref, sum_ref, sq_ref, *, m_true):
    @pl.when(pl.program_id(0) == 0)
    def _():
        sum_ref[...] = jnp.zeros_like(sum_ref)
        sq_ref[...] = jnp.zeros_like(sq_ref)

    x = x_ref[...].astype(jnp.float32)
    sum_ref[...] += jnp.sum(x, axis=0, keepdims=True)
    sq_ref[...] += jnp.sum(x * x, axis=0, keepdims=True)

    @pl.when(pl.program_id(0) == pl.num_programs(0) - 1)
    def _():
        inv_m = jnp.float32(1.0 / m_true)
        mean = sum_ref[...] * inv_m
        # biased variance (torch BN training mode); f32 accumulators, clamp >=0
        var = jnp.maximum(sq_ref[...] * inv_m - mean * mean, 0.0)
        mean_ref[...] = mean
        rstd_ref[...] = jax.lax.rsqrt(var + 1e-5)


def _bn_norm_relu_kernel(x_ref, mean_ref, rstd_ref, g_ref, b_ref, o_ref):
    x = x_ref[...].astype(jnp.float32)
    scale = rstd_ref[...] * g_ref[...]
    y = (x - mean_ref[...]) * scale + b_ref[...]
    o_ref[...] = jnp.maximum(y, 0.0).astype(o_ref.dtype)


def batchnorm_relu(y, gamma, beta):
    """y: (N, OH, OW, C) bf16 -> training-mode BatchNorm2d + ReLU, bf16 out.

    Per-channel partial sums are combined across ALL row tiles (f32 scratch)
    before normalizing; the channel dim is used un-padded (full-dim block).
    """
    N, OH, OW, C = y.shape
    M = N * OH * OW
    x2 = y.reshape(M, C)
    Mp = _round_up(M, 8)
    if Mp != M:                 # not hit for these configs; kept for safety
        x2 = jnp.pad(x2, ((0, Mp - M), (0, 0)))
    tm = _pick_tile(Mp, 2048)
    grid = (Mp // tm,)

    mean, rstd = pl.pallas_call(
        functools.partial(_bn_stats_kernel, m_true=M),
        out_shape=(jax.ShapeDtypeStruct((1, C), jnp.float32),
                   jax.ShapeDtypeStruct((1, C), jnp.float32)),
        grid_spec=pltpu.PrefetchScalarGridSpec(
            num_scalar_prefetch=0,
            grid=grid,
            in_specs=[pl.BlockSpec((tm, C), lambda i: (i, 0))],
            out_specs=[pl.BlockSpec((1, C), lambda i: (0, 0)),
                       pl.BlockSpec((1, C), lambda i: (0, 0))],
            scratch_shapes=[pltpu.VMEM((1, C), jnp.float32),
                            pltpu.VMEM((1, C), jnp.float32)],
        ),
        compiler_params=pltpu.CompilerParams(
            dimension_semantics=("arbitrary",),
            vmem_limit_bytes=_VMEM_LIMIT),
    )(x2)

    g = gamma.reshape(1, C).astype(jnp.float32)
    b = beta.reshape(1, C).astype(jnp.float32)
    out = pl.pallas_call(
        _bn_norm_relu_kernel,
        out_shape=jax.ShapeDtypeStruct((Mp, C), jnp.bfloat16),
        grid_spec=pltpu.PrefetchScalarGridSpec(
            num_scalar_prefetch=0,
            grid=grid,
            in_specs=[pl.BlockSpec((tm, C), lambda i: (i, 0)),
                      pl.BlockSpec((1, C), lambda i: (0, 0)),
                      pl.BlockSpec((1, C), lambda i: (0, 0)),
                      pl.BlockSpec((1, C), lambda i: (0, 0)),
                      pl.BlockSpec((1, C), lambda i: (0, 0))],
            out_specs=pl.BlockSpec((tm, C), lambda i: (i, 0)),
        ),
        compiler_params=pltpu.CompilerParams(
            dimension_semantics=("parallel",),
            vmem_limit_bytes=_VMEM_LIMIT),
    )(x2, mean, rstd, g, b)
    return out[:M].reshape(N, OH, OW, C)


# ---------------------------------------------------------------------------
# ConvTranspose2d -> sub-pixel (shared 2x2 window) matmul lowering (JAX glue)
# ---------------------------------------------------------------------------
def conv_transpose_weight_comb(w, s):
    """PyTorch ConvTranspose2d weight (Cin, Cout, k, k) -> combined stride-1
    weight (4*Cin, s*s*Cout).  Rows ordered (dh, dw, ci) over the shared 2x2
    input window; columns ordered (th, tw, co) over the s x s output phases.
    W_comb[dh,dw,ci, th,tw,co] = w[ci, co, th+s*(1-dh), tw+s*(1-dw)] (0 when
    the tap index is >= k, which only happens for the k=5, s=3 layer)."""
    Cin, Cout, k, _ = w.shape
    wc = jnp.zeros((2, 2, Cin, s, s, Cout), w.dtype)
    for dh in range(2):
        for dw in range(2):
            for th in range(s):
                for tw in range(s):
                    ah = th + s * (1 - dh)
                    aw = tw + s * (1 - dw)
                    if ah < k and aw < k:
                        wc = wc.at[dh, dw, :, th, tw, :].set(w[:, :, ah, aw])
    return wc.reshape(4 * Cin, s * s * Cout)


def build_patches(x):
    """x: (N, H, W, Cin) bf16 -> patches (N*(H+1)*(W+1), 4*Cin).

    Sub-pixel decomposition of ConvTranspose2d(k, s, p=1) with s <= k <= 2s:
    with m = floor((oh+p)/s), every output pixel reads exactly the 2x2 window
    {m-1, m} of the 1-padded input, so no zero-dilated rows/cols and no
    k^2-wide patch rows are ever materialized."""
    N, H, W, Cin = x.shape
    Hm, Wm = H + 1, W + 1
    xp = jnp.pad(x, ((0, 0), (1, 1), (1, 1), (0, 0)))
    taps = [xp[:, dh:dh + Hm, dw:dw + Wm, :] for dh in (0, 1) for dw in (0, 1)]
    p = jnp.stack(taps, axis=3)                        # (N, Hm, Wm, 4, Cin)
    return p.reshape(N * Hm * Wm, 4 * Cin), Hm, Wm


def pixel_shuffle_crop(y_comb, N, Hm, Wm, s, Cout, OH, OW):
    """(N*Hm*Wm, s*s*Cout) -> (N, OH, OW, Cout): interleave the s*s output
    phases (oh = s*mh + th - 1) and crop the one-pixel halo."""
    y = y_comb.reshape(N, Hm, Wm, s, s, Cout)
    y = y.transpose(0, 1, 3, 2, 4, 5).reshape(N, Hm * s, Wm * s, Cout)
    return y[:, 1:1 + OH, 1:1 + OW, :]


# ---------------------------------------------------------------------------
# NetG: parameters + forward
# ---------------------------------------------------------------------------
# (kernel, stride, pad) of the 5 ConvTranspose2d layers of NetG
_CONV_CFG = [(4, 1, 0), (4, 2, 1), (4, 2, 1), (4, 2, 1), (5, 3, 1)]


def make_netg_params(key, nz, ngf):
    dims = [(nz, ngf * 8), (ngf * 8, ngf * 4), (ngf * 4, ngf * 2),
            (ngf * 2, ngf), (ngf, 3)]
    params = []
    for i, ((cin, cout), (k, _, _)) in enumerate(zip(dims, _CONV_CFG)):
        key, wk = jax.random.split(key)
        w = 0.02 * jax.random.normal(wk, (cin, cout, k, k), jnp.float32)
        if i < 4:  # BatchNorm2d default affine params: weight=1, bias=0
            gamma = jnp.ones((cout,), jnp.float32)
            beta = jnp.zeros((cout,), jnp.float32)
        else:
            gamma, beta = None, None
        params.append((w, gamma, beta))
    return params


def netg_forward(z, params):
    """z: (N, nz, 1, 1) NCHW f32 -> (N, 3, 96*, 96*) NCHW f32."""
    N, nz = z.shape[0], z.shape[1]

    # Layer 1 (k=4, s=1, p=0 on a 1x1 input) == a fully-connected matmul.
    w0, g0, b0 = params[0]
    c0 = w0.shape[1]
    wfc = w0.transpose(0, 2, 3, 1).reshape(nz, 16 * c0)        # (ci, (a,b,co))
    y = matmul_pallas(z.reshape(N, nz), wfc)                   # (N, 16*c0) bf16
    x = batchnorm_relu(y.reshape(N, 4, 4, c0), g0, b0)         # NHWC bf16

    # Layers 2..5: sub-pixel ConvTranspose2d as a single stride-1 matmul each.
    for i in range(1, 5):
        k, s, p = _CONV_CFG[i]
        w, gamma, beta = params[i]
        cout = w.shape[1]
        Nb, H, W, _ = x.shape
        OH = (H - 1) * s - 2 * p + k
        OW = (W - 1) * s - 2 * p + k
        last = i == 4

        patches, Hm, Wm = build_patches(x)                     # bf16, 4*Cin wide
        wc = conv_transpose_weight_comb(w, s)                  # (4*Cin, s*s*Cout)
        y_comb = matmul_pallas(patches, wc,
                               activation="tanh" if last else None)
        y = pixel_shuffle_crop(y_comb, Nb, Hm, Wm, s, cout, OH, OW)
        x = y if last else batchnorm_relu(y, gamma, beta)

    return jnp.transpose(x, (0, 3, 1, 2)).astype(jnp.float32)  # NCHW boundary


if __name__ == "__main__":
    # Small but shape-consistent config: nz=16, ngf=8, batch=2.
    # Spatial pipeline: 1 -> 4 -> 8 -> 16 -> 32 -> 96 (same as the real NetG).
    batch, nz, ngf = 2, 16, 8

    key = jax.random.PRNGKey(0)
    pkey, zkey = jax.random.split(key)
    params = make_netg_params(pkey, nz, ngf)
    z = jax.random.normal(zkey, (batch, nz, 1, 1), jnp.float32)

    fwd = jax.jit(netg_forward)
    out = jax.block_until_ready(fwd(z, params))

    assert out.shape == (batch, 3, 96, 96), out.shape
    assert out.dtype == jnp.float32
    assert bool(jnp.all(jnp.isfinite(out)))
    assert bool(jnp.all(jnp.abs(out) <= 1.0))  # tanh range
    print("KERNEL_OK")
</pallas_src>

<mosaic_0001>
module attributes {stable_mosaic.version = 11 : i64} {
  func.func @_bn_norm_relu_kernel(%arg0: i32, %arg1: memref<32x64xbf16, #tpu.memory_space<vmem>>, %arg2: memref<1x64xf32, #tpu.memory_space<vmem>>, %arg3: memref<1x64xf32, #tpu.memory_space<vmem>>, %arg4: memref<1x64xf32, #tpu.memory_space<vmem>>, %arg5: memref<1x64xf32, #tpu.memory_space<vmem>>, %arg6: memref<32x64xbf16, #tpu.memory_space<vmem>>) attributes {dimension_semantics = [#tpu.dimension_semantics<parallel>], iteration_bounds = array<i64: 1>, scalar_prefetch = 0 : i64, scratch_operands = 0 : i64, tpu.core_type = #tpu.core_type<tc>, window_params = [{transform_indices = @transform_0, window_bounds = array<i64: 32, 64>}, {pipeline_mode = #tpu.pipeline_mode<synchronous>, transform_indices = @transform_1, window_bounds = array<i64: 1, 64>}, {pipeline_mode = #tpu.pipeline_mode<synchronous>, transform_indices = @transform_2, window_bounds = array<i64: 1, 64>}, {pipeline_mode = #tpu.pipeline_mode<synchronous>, transform_indices = @transform_3, window_bounds = array<i64: 1, 64>}, {pipeline_mode = #tpu.pipeline_mode<synchronous>, transform_indices = @transform_4, window_bounds = array<i64: 1, 64>}, {transform_indices = @transform_5, window_bounds = array<i64: 32, 64>}]} {
    %c0 = arith.constant 0 : index
    %c0_0 = arith.constant 0 : index
    %0 = vector.load %arg1[%c0, %c0_0] : memref<32x64xbf16, #tpu.memory_space<vmem>>, vector<32x64xbf16>
    %1 = arith.extf %0 : vector<32x64xbf16> to vector<32x64xf32>
    %c0_1 = arith.constant 0 : index
    %c0_2 = arith.constant 0 : index
    %2 = vector.load %arg3[%c0_1, %c0_2] : memref<1x64xf32, #tpu.memory_space<vmem>>, vector<1x64xf32>
    %c0_3 = arith.constant 0 : index
    %c0_4 = arith.constant 0 : index
    %3 = vector.load %arg4[%c0_3, %c0_4] : memref<1x64xf32, #tpu.memory_space<vmem>>, vector<1x64xf32>
    %4 = arith.mulf %2, %3 : vector<1x64xf32>
    %c0_5 = arith.constant 0 : index
    %c0_6 = arith.constant 0 : index
    %5 = vector.load %arg2[%c0_5, %c0_6] : memref<1x64xf32, #tpu.memory_space<vmem>>, vector<1x64xf32>
    %6 = vector.broadcast %5 : vector<1x64xf32> to vector<32x64xf32>
    %7 = arith.subf %1, %6 : vector<32x64xf32>
    %8 = vector.broadcast %4 : vector<1x64xf32> to vector<32x64xf32>
    %9 = arith.mulf %7, %8 : vector<32x64xf32>
    %c0_7 = arith.constant 0 : index
    %c0_8 = arith.constant 0 : index
    %10 = vector.load %arg5[%c0_7, %c0_8] : memref<1x64xf32, #tpu.memory_space<vmem>>, vector<1x64xf32>
    %11 = vector.broadcast %10 : vector<1x64xf32> to vector<32x64xf32>
    %12 = arith.addf %9, %11 : vector<32x64xf32>
    %cst = arith.constant 0.000000e+00 : f32
    %13 = vector.broadcast %cst : f32 to vector<32x64xf32>
    %14 = arith.maximumf %12, %13 : vector<32x64xf32>
    %15 = arith.truncf %14 : vector<32x64xf32> to vector<32x64xbf16>
    %c0_9 = arith.constant 0 : index
    %c0_10 = arith.constant 0 : index
    %16 = vector.load %arg6[%c0_9, %c0_10] : memref<32x64xbf16, #tpu.memory_space<vmem>>, vector<32x64xbf16>
    tpu.vector_store %arg6[%c0_9, %c0_10], %15 {strides = array<i32>} : memref<32x64xbf16, #tpu.memory_space<vmem>>, vector<32x64xbf16>,
    return
  }
  func.func @transform_0(%arg0: i32) -> (i32, i32) {
    %c0_i32 = arith.constant 0 : i32
    %c0_i32_0 = arith.constant 0 : i32
    return %arg0, %c0_i32 : i32, i32
  }
  func.func @transform_1(%arg0: i32) -> (i32, i32) {
    %c0_i32 = arith.constant 0 : i32
    %c0_i32_0 = arith.constant 0 : i32
    %c0_i32_1 = arith.constant 0 : i32
    return %c0_i32, %c0_i32_0 : i32, i32
  }
  func.func @transform_2(%arg0: i32) -> (i32, i32) {
    %c0_i32 = arith.constant 0 : i32
    %c0_i32_0 = arith.constant 0 : i32
    %c0_i32_1 = arith.constant 0 : i32
    return %c0_i32, %c0_i32_0 : i32, i32
  }
  func.func @transform_3(%arg0: i32) -> (i32, i32) {
    %c0_i32 = arith.constant 0 : i32
    %c0_i32_0 = arith.constant 0 : i32
    %c0_i32_1 = arith.constant 0 : i32
    return %c0_i32, %c0_i32_0 : i32, i32
  }
  func.func @transform_4(%arg0: i32) -> (i32, i32) {
    %c0_i32 = arith.constant 0 : i32
    %c0_i32_0 = arith.constant 0 : i32
    %c0_i32_1 = arith.constant 0 : i32
    return %c0_i32, %c0_i32_0 : i32, i32
  }
  func.func @transform_5(%arg0: i32) -> (i32, i32) {
    %c0_i32 = arith.constant 0 : i32
    %c0_i32_0 = arith.constant 0 : i32
    return %arg0, %c0_i32 : i32, i32
  }
}

module attributes {stable_mosaic.version = 11 : i64} {
  func.func @_matmul_kernel(%arg0: i32, %arg1: memref<8x128xbf16, #tpu.memory_space<vmem>>, %arg2: memref<128x1024xbf16, #tpu.memory_space<vmem>>, %arg3: memref<8x1024xbf16, #tpu.memory_space<vmem>>) attributes {dimension_semantics = [#tpu.dimension_semantics<parallel>], iteration_bounds = array<i64: 1>, scalar_prefetch = 0 : i64, scratch_operands = 0 : i64, tpu.core_type = #tpu.core_type<tc>, window_params = [{transform_indices = @transform_0, window_bounds = array<i64: 8, 128>}, {pipeline_mode = #tpu.pipeline_mode<synchronous>, transform_indices = @transform_1, window_bounds = array<i64: 128, 1024>}, {transform_indices = @transform_2, window_bounds = array<i64: 8, 1024>}]} {
    %c0 = arith.constant 0 : index
    %c0_0 = arith.constant 0 : index
    %0 = vector.load %arg1[%c0, %c0_0] : memref<8x128xbf16, #tpu.memory_space<vmem>>, vector<8x128xbf16>
    %c0_1 = arith.constant 0 : index
    %c0_2 = arith.constant 0 : index
    %1 = vector.load %arg2[%c0_1, %c0_2] : memref<128x1024xbf16, #tpu.memory_space<vmem>>, vector<128x1024xbf16>
    %cst = arith.constant dense<0.000000e+00> : vector<8x1024xf32>
    %2 = tpu.matmul %0, %1, %cst {dimension_numbers = #tpu.dot_dimension_numbers<[1], [0], [0], [1], [0, 0, 1, 1], [], []>} : vector<8x128xbf16>, vector<128x1024xbf16>, vector<8x1024xf32> -> vector<8x1024xf32>
    %3 = arith.truncf %2 : vector<8x1024xf32> to vector<8x1024xbf16>
    %c0_3 = arith.constant 0 : index
    %c0_4 = arith.constant 0 : index
    %4 = vector.load %arg3[%c0_3, %c0_4] : memref<8x1024xbf16, #tpu.memory_space<vmem>>, vector<8x1024xbf16>
    tpu.vector_store %arg3[%c0_3, %c0_4], %3 {strides = array<i32>} : memref<8x1024xbf16, #tpu.memory_space<vmem>>, vector<8x1024xbf16>,
    return
  }
  func.func @transform_0(%arg0: i32) -> (i32, i32) {
    %c0_i32 = arith.constant 0 : i32
    %c0_i32_0 = arith.constant 0 : i32
    return %arg0, %c0_i32 : i32, i32
  }
  func.func @transform_1(%arg0: i32) -> (i32, i32) {
    %c0_i32 = arith.constant 0 : i32
    %c0_i32_0 = arith.constant 0 : i32
    %c0_i32_1 = arith.constant 0 : i32
    return %c0_i32, %c0_i32_0 : i32, i32
  }
  func.func @transform_2(%arg0: i32) -> (i32, i32) {
    %c0_i32 = arith.constant 0 : i32
    %c0_i32_0 = arith.constant 0 : i32
    return %arg0, %c0_i32 : i32, i32
  }
}

module attributes {stable_mosaic.version = 11 : i64} {
  func.func @_bn_stats_kernel(%arg0: i32, %arg1: memref<32x64xbf16, #tpu.memory_space<vmem>>, %arg2: memref<1x64xf32, #tpu.memory_space<vmem>>, %arg3: memref<1x64xf32, #tpu.memory_space<vmem>>, %arg4: memref<1x64xf32, #tpu.memory_space<vmem>>, %arg5: memref<1x64xf32, #tpu.memory_space<vmem>>) attributes {dimension_semantics = [#tpu.dimension_semantics<arbitrary>], iteration_bounds = array<i64: 1>, scalar_prefetch = 0 : i64, scratch_operands = 2 : i64, tpu.core_type = #tpu.core_type<tc>, window_params = [{transform_indices = @transform_0, window_bounds = array<i64: 32, 64>}, {pipeline_mode = #tpu.pipeline_mode<synchronous>, transform_indices = @transform_1, window_bounds = array<i64: 1, 64>}, {pipeline_mode = #tpu.pipeline_mode<synchronous>, transform_indices = @transform_2, window_bounds = array<i64: 1, 64>}]} {
    %c0_i32 = arith.constant 0 : i32
    %0 = arith.cmpi eq, %arg0, %c0_i32 : i32
    %1 = arith.extui %0 : i1 to i32
    %c0_i32_0 = arith.constant 0 : i32
    %2 = arith.cmpi ne, %1, %c0_i32_0 : i32
    scf.if %2 {
      %cst_13 = arith.constant 0.000000e+00 : f32
      %19 = vector.broadcast %cst_13 : f32 to vector<1x64xf32>
      %c0_14 = arith.constant 0 : index
      %c0_15 = arith.constant 0 : index
      %20 = vector.load %arg4[%c0_14, %c0_15] : memref<1x64xf32, #tpu.memory_space<vmem>>, vector<1x64xf32>
      tpu.vector_store %arg4[%c0_14, %c0_15], %19 {strides = array<i32>} : memref<1x64xf32, #tpu.memory_space<vmem>>, vector<1x64xf32>,
      %cst_16 = arith.constant 0.000000e+00 : f32
      %21 = vector.broadcast %cst_16 : f32 to vector<1x64xf32>
      %c0_17 = arith.constant 0 : index
      %c0_18 = arith.constant 0 : index
      %22 = vector.load %arg5[%c0_17, %c0_18] : memref<1x64xf32, #tpu.memory_space<vmem>>, vector<1x64xf32>
      tpu.vector_store %arg5[%c0_17, %c0_18], %21 {strides = array<i32>} : memref<1x64xf32, #tpu.memory_space<vmem>>, vector<1x64xf32>,
    } else {
    }
    %c0 = arith.constant 0 : index
    %c0_1 = arith.constant 0 : index
    %3 = vector.load %arg1[%c0, %c0_1] : memref<32x64xbf16, #tpu.memory_space<vmem>>, vector<32x64xbf16>
    %4 = arith.extf %3 : vector<32x64xbf16> to vector<32x64xf32>
    %c0_2 = arith.constant 0 : index
    %c0_3 = arith.constant 0 : index
    %5 = vector.load %arg4[%c0_2, %c0_3] : memref<1x64xf32, #tpu.memory_space<vmem>>, vector<1x64xf32>
    %cst = arith.constant dense<0.000000e+00> : vector<64xf32>
    %6 = vector.multi_reduction <add>, %4, %cst [0] : vector<32x64xf32> to vector<64xf32>
    %7 = vector.shape_cast %6 : vector<64xf32> to vector<1x64xf32>
    %8 = arith.addf %5, %7 : vector<1x64xf32>
    %c0_4 = arith.constant 0 : index
    %c0_5 = arith.constant 0 : index
    %9 = vector.load %arg4[%c0_4, %c0_5] : memref<1x64xf32, #tpu.memory_space<vmem>>, vector<1x64xf32>
    tpu.vector_store %arg4[%c0_4, %c0_5], %8 {strides = array<i32>} : memref<1x64xf32, #tpu.memory_space<vmem>>, vector<1x64xf32>,
    %c0_6 = arith.constant 0 : index
    %c0_7 = arith.constant 0 : index
    %10 = vector.load %arg5[%c0_6, %c0_7] : memref<1x64xf32, #tpu.memory_space<vmem>>, vector<1x64xf32>
    %11 = arith.mulf %4, %4 : vector<32x64xf32>
    %cst_8 = arith.constant dense<0.000000e+00> : vector<64xf32>
    %12 = vector.multi_reduction <add>, %11, %cst_8 [0] : vector<32x64xf32> to vector<64xf32>
    %13 = vector.shape_cast %12 : vector<64xf32> to vector<1x64xf32>
    %14 = arith.addf %10, %13 : vector<1x64xf32>
    %c0_9 = arith.constant 0 : index
    %c0_10 = arith.constant 0 : index
    %15 = vector.load %arg5[%c0_9, %c0_10] : memref<1x64xf32, #tpu.memory_space<vmem>>, vector<1x64xf32>
    tpu.vector_store %arg5[%c0_9, %c0_10], %14 {strides = array<i32>} : memref<1x64xf32, #tpu.memory_space<vmem>>, vector<1x64xf32>,
    %c0_i32_11 = arith.constant 0 : i32
    %16 = arith.cmpi eq, %arg0, %c0_i32_11 : i32
    %17 = arith.extui %16 : i1 to i32
    %c0_i32_12 = arith.constant 0 : i32
    %18 = arith.cmpi ne, %17, %c0_i32_12 : i32
    scf.if %18 {
      %c0_13 = arith.constant 0 : index
      %c0_14 = arith.constant 0 : index
      %19 = vector.load %arg4[%c0_13, %c0_14] : memref<1x64xf32, #tpu.memory_space<vmem>>, vector<1x64xf32>
      %cst_15 = arith.constant 3.125000e-02 : f32
      %20 = vector.broadcast %cst_15 : f32 to vector<1x64xf32>
      %21 = arith.mulf %19, %20 : vector<1x64xf32>
      %c0_16 = arith.constant 0 : index
      %c0_17 = arith.constant 0 : index
      %22 = vector.load %arg5[%c0_16, %c0_17] : memref<1x64xf32, #tpu.memory_space<vmem>>, vector<1x64xf32>
      %cst_18 = arith.constant 3.125000e-02 : f32
      %23 = vector.broadcast %cst_18 : f32 to vector<1x64xf32>
      %24 = arith.mulf %22, %23 : vector<1x64xf32>
      %25 = arith.mulf %21, %21 : vector<1x64xf32>
      %26 = arith.subf %24, %25 : vector<1x64xf32>
      %cst_19 = arith.constant 0.000000e+00 : f32
      %27 = vector.broadcast %cst_19 : f32 to vector<1x64xf32>
      %28 = arith.maximumf %26, %27 : vector<1x64xf32>
      %c0_20 = arith.constant 0 : index
      %c0_21 = arith.constant 0 : index
      %29 = vector.load %arg2[%c0_20, %c0_21] : memref<1x64xf32, #tpu.memory_space<vmem>>, vector<1x64xf32>
      tpu.vector_store %arg2[%c0_20, %c0_21], %21 {strides = array<i32>} : memref<1x64xf32, #tpu.memory_space<vmem>>, vector<1x64xf32>,
      %cst_22 = arith.constant 9.99999974E-6 : f32
      %30 = vector.broadcast %cst_22 : f32 to vector<1x64xf32>
      %31 = arith.addf %28, %30 : vector<1x64xf32>
      %32 = math.rsqrt %31 : vector<1x64xf32>
      %c0_23 = arith.constant 0 : index
      %c0_24 = arith.constant 0 : index
      %33 = vector.load %arg3[%c0_23, %c0_24] : memref<1x64xf32, #tpu.memory_space<vmem>>, vector<1x64xf32>
      tpu.vector_store %arg3[%c0_23, %c0_24], %32 {strides = array<i32>} : memref<1x64xf32, #tpu.memory_space<vmem>>, vector<1x64xf32>,
    } else {
    }
    return
  }
  func.func @transform_0(%arg0: i32) -> (i32, i32) {
    %c0_i32 = arith.constant 0 : i32
    %c0_i32_0 = arith.constant 0 : i32
    return %arg0, %c0_i32 : i32, i32
  }
  func.func @transform_1(%arg0: i32) -> (i32, i32) {
    %c0_i32 = arith.constant 0 : i32
    %c0_i32_0 = arith.constant 0 : i32
    %c0_i32_1 = arith.constant 0 : i32
    return %c0_i32, %c0_i32_0 : i32, i32
  }
  func.func @transform_2(%arg0: i32) -> (i32, i32) {
    %c0_i32 = arith.constant 0 : i32
    %c0_i32_0 = arith.constant 0 : i32
    %c0_i32_1 = arith.constant 0 : i32
    return %c0_i32, %c0_i32_0 : i32, i32
  }
}

module attributes {stable_mosaic.version = 11 : i64} {
  func.func @_matmul_kernel(%arg0: i32, %arg1: memref<56x256xbf16, #tpu.memory_space<vmem>>, %arg2: memref<256x128xbf16, #tpu.memory_space<vmem>>, %arg3: memref<56x128xbf16, #tpu.memory_space<vmem>>) attributes {dimension_semantics = [#tpu.dimension_semantics<parallel>], iteration_bounds = array<i64: 1>, scalar_prefetch = 0 : i64, scratch_operands = 0 : i64, tpu.core_type = #tpu.core_type<tc>, window_params = [{transform_indices = @transform_0, window_bounds = array<i64: 56, 256>}, {pipeline_mode = #tpu.pipeline_mode<synchronous>, transform_indices = @transform_1, window_bounds = array<i64: 256, 128>}, {transform_indices = @transform_2, window_bounds = array<i64: 56, 128>}]} {
    %c0 = arith.constant 0 : index
    %c0_0 = arith.constant 0 : index
    %0 = vector.load %arg1[%c0, %c0_0] : memref<56x256xbf16, #tpu.memory_space<vmem>>, vector<56x256xbf16>
    %c0_1 = arith.constant 0 : index
    %c0_2 = arith.constant 0 : index
    %1 = vector.load %arg2[%c0_1, %c0_2] : memref<256x128xbf16, #tpu.memory_space<vmem>>, vector<256x128xbf16>
    %cst = arith.constant dense<0.000000e+00> : vector<56x128xf32>
    %2 = tpu.matmul %0, %1, %cst {dimension_numbers = #tpu.dot_dimension_numbers<[1], [0], [0], [1], [0, 0, 1, 1], [], []>} : vector<56x256xbf16>, vector<256x128xbf16>, vector<56x128xf32> -> vector<56x128xf32>
    %3 = arith.truncf %2 : vector<56x128xf32> to vector<56x128xbf16>
    %c0_3 = arith.constant 0 : index
    %c0_4 = arith.constant 0 : index
    %4 = vector.load %arg3[%c0_3, %c0_4] : memref<56x128xbf16, #tpu.memory_space<vmem>>, vector<56x128xbf16>
    tpu.vector_store %arg3[%c0_3, %c0_4], %3 {strides = array<i32>} : memref<56x128xbf16, #tpu.memory_space<vmem>>, vector<56x128xbf16>,
    return
  }
  func.func @transform_0(%arg0: i32) -> (i32, i32) {
    %c0_i32 = arith.constant 0 : i32
    %c0_i32_0 = arith.constant 0 : i32
    return %arg0, %c0_i32 : i32, i32
  }
  func.func @transform_1(%arg0: i32) -> (i32, i32) {
    %c0_i32 = arith.constant 0 : i32
    %c0_i32_0 = arith.constant 0 : i32
    %c0_i32_1 = arith.constant 0 : i32
    return %c0_i32, %c0_i32_0 : i32, i32
  }
  func.func @transform_2(%arg0: i32) -> (i32, i32) {
    %c0_i32 = arith.constant 0 : i32
    %c0_i32_0 = arith.constant 0 : i32
    return %arg0, %c0_i32 : i32, i32
  }
}

module attributes {stable_mosaic.version = 11 : i64} {
  func.func @_bn_stats_kernel(%arg0: i32, %arg1: memref<128x32xbf16, #tpu.memory_space<vmem>>, %arg2: memref<1x32xf32, #tpu.memory_space<vmem>>, %arg3: memref<1x32xf32, #tpu.memory_space<vmem>>, %arg4: memref<1x32xf32, #tpu.memory_space<vmem>>, %arg5: memref<1x32xf32, #tpu.memory_space<vmem>>) attributes {dimension_semantics = [#tpu.dimension_semantics<arbitrary>], iteration_bounds = array<i64: 1>, scalar_prefetch = 0 : i64, scratch_operands = 2 : i64, tpu.core_type = #tpu.core_type<tc>, window_params = [{transform_indices = @transform_0, window_bounds = array<i64: 128, 32>}, {pipeline_mode = #tpu.pipeline_mode<synchronous>, transform_indices = @transform_1, window_bounds = array<i64: 1, 32>}, {pipeline_mode = #tpu.pipeline_mode<synchronous>, transform_indices = @transform_2, window_bounds = array<i64: 1, 32>}]} {
    %c0_i32 = arith.constant 0 : i32
    %0 = arith.cmpi eq, %arg0, %c0_i32 : i32
    %1 = arith.extui %0 : i1 to i32
    %c0_i32_0 = arith.constant 0 : i32
    %2 = arith.cmpi ne, %1, %c0_i32_0 : i32
    scf.if %2 {
      %cst_13 = arith.constant 0.000000e+00 : f32
      %19 = vector.broadcast %cst_13 : f32 to vector<1x32xf32>
      %c0_14 = arith.constant 0 : index
      %c0_15 = arith.constant 0 : index
      %20 = vector.load %arg4[%c0_14, %c0_15] : memref<1x32xf32, #tpu.memory_space<vmem>>, vector<1x32xf32>
      tpu.vector_store %arg4[%c0_14, %c0_15], %19 {strides = array<i32>} : memref<1x32xf32, #tpu.memory_space<vmem>>, vector<1x32xf32>,
      %cst_16 = arith.constant 0.000000e+00 : f32
      %21 = vector.broadcast %cst_16 : f32 to vector<1x32xf32>
      %c0_17 = arith.constant 0 : index
      %c0_18 = arith.constant 0 : index
      %22 = vector.load %arg5[%c0_17, %c0_18] : memref<1x32xf32, #tpu.memory_space<vmem>>, vector<1x32xf32>
      tpu.vector_store %arg5[%c0_17, %c0_18], %21 {strides = array<i32>} : memref<1x32xf32, #tpu.memory_space<vmem>>, vector<1x32xf32>,
    } else {
    }
    %c0 = arith.constant 0 : index
    %c0_1 = arith.constant 0 : index
    %3 = vector.load %arg1[%c0, %c0_1] : memref<128x32xbf16, #tpu.memory_space<vmem>>, vector<128x32xbf16>
    %4 = arith.extf %3 : vector<128x32xbf16> to vector<128x32xf32>
    %c0_2 = arith.constant 0 : index
    %c0_3 = arith.constant 0 : index
    %5 = vector.load %arg4[%c0_2, %c0_3] : memref<1x32xf32, #tpu.memory_space<vmem>>, vector<1x32xf32>
    %cst = arith.constant dense<0.000000e+00> : vector<32xf32>
    %6 = vector.multi_reduction <add>, %4, %cst [0] : vector<128x32xf32> to vector<32xf32>
    %7 = vector.shape_cast %6 : vector<32xf32> to vector<1x32xf32>
    %8 = arith.addf %5, %7 : vector<1x32xf32>
    %c0_4 = arith.constant 0 : index
    %c0_5 = arith.constant 0 : index
    %9 = vector.load %arg4[%c0_4, %c0_5] : memref<1x32xf32, #tpu.memory_space<vmem>>, vector<1x32xf32>
    tpu.vector_store %arg4[%c0_4, %c0_5], %8 {strides = array<i32>} : memref<1x32xf32, #tpu.memory_space<vmem>>, vector<1x32xf32>,
    %c0_6 = arith.constant 0 : index
    %c0_7 = arith.constant 0 : index
    %10 = vector.load %arg5[%c0_6, %c0_7] : memref<1x32xf32, #tpu.memory_space<vmem>>, vector<1x32xf32>
    %11 = arith.mulf %4, %4 : vector<128x32xf32>
    %cst_8 = arith.constant dense<0.000000e+00> : vector<32xf32>
    %12 = vector.multi_reduction <add>, %11, %cst_8 [0] : vector<128x32xf32> to vector<32xf32>
    %13 = vector.shape_cast %12 : vector<32xf32> to vector<1x32xf32>
    %14 = arith.addf %10, %13 : vector<1x32xf32>
    %c0_9 = arith.constant 0 : index
    %c0_10 = arith.constant 0 : index
    %15 = vector.load %arg5[%c0_9, %c0_10] : memref<1x32xf32, #tpu.memory_space<vmem>>, vector<1x32xf32>
    tpu.vector_store %arg5[%c0_9, %c0_10], %14 {strides = array<i32>} : memref<1x32xf32, #tpu.memory_space<vmem>>, vector<1x32xf32>,
    %c0_i32_11 = arith.constant 0 : i32
    %16 = arith.cmpi eq, %arg0, %c0_i32_11 : i32
    %17 = arith.extui %16 : i1 to i32
    %c0_i32_12 = arith.constant 0 : i32
    %18 = arith.cmpi ne, %17, %c0_i32_12 : i32
    scf.if %18 {
      %c0_13 = arith.constant 0 : index
      %c0_14 = arith.constant 0 : index
      %19 = vector.load %arg4[%c0_13, %c0_14] : memref<1x32xf32, #tpu.memory_space<vmem>>, vector<1x32xf32>
      %cst_15 = arith.constant 7.812500e-03 : f32
      %20 = vector.broadcast %cst_15 : f32 to vector<1x32xf32>
      %21 = arith.mulf %19, %20 : vector<1x32xf32>
      %c0_16 = arith.constant 0 : index
      %c0_17 = arith.constant 0 : index
      %22 = vector.load %arg5[%c0_16, %c0_17] : memref<1x32xf32, #tpu.memory_space<vmem>>, vector<1x32xf32>
      %cst_18 = arith.constant 7.812500e-03 : f32
      %23 = vector.broadcast %cst_18 : f32 to vector<1x32xf32>
      %24 = arith.mulf %22, %23 : vector<1x32xf32>
      %25 = arith.mulf %21, %21 : vector<1x32xf32>
      %26 = arith.subf %24, %25 : vector<1x32xf32>
      %cst_19 = arith.constant 0.000000e+00 : f32
      %27 = vector.broadcast %cst_19 : f32 to vector<1x32xf32>
      %28 = arith.maximumf %26, %27 : vector<1x32xf32>
      %c0_20 = arith.constant 0 : index
      %c0_21 = arith.constant 0 : index
      %29 = vector.load %arg2[%c0_20, %c0_21] : memref<1x32xf32, #tpu.memory_space<vmem>>, vector<1x32xf32>
      tpu.vector_store %arg2[%c0_20, %c0_21], %21 {strides = array<i32>} : memref<1x32xf32, #tpu.memory_space<vmem>>, vector<1x32xf32>,
      %cst_22 = arith.constant 9.99999974E-6 : f32
      %30 = vector.broadcast %cst_22 : f32 to vector<1x32xf32>
      %31 = arith.addf %28, %30 : vector<1x32xf32>
      %32 = math.rsqrt %31 : vector<1x32xf32>
      %c0_23 = arith.constant 0 : index
      %c0_24 = arith.constant 0 : index
      %33 = vector.load %arg3[%c0_23, %c0_24] : memref<1x32xf32, #tpu.memory_space<vmem>>, vector<1x32xf32>
      tpu.vector_store %arg3[%c0_23, %c0_24], %32 {strides = array<i32>} : memref<1x32xf32, #tpu.memory_space<vmem>>, vector<1x32xf32>,
    } else {
    }
    return
  }
  func.func @transform_0(%arg0: i32) -> (i32, i32) {
    %c0_i32 = arith.constant 0 : i32
    %c0_i32_0 = arith.constant 0 : i32
    return %arg0, %c0_i32 : i32, i32
  }
  func.func @transform_1(%arg0: i32) -> (i32, i32) {
    %c0_i32 = arith.constant 0 : i32
    %c0_i32_0 = arith.constant 0 : i32
    %c0_i32_1 = arith.constant 0 : i32
    return %c0_i32, %c0_i32_0 : i32, i32
  }
  func.func @transform_2(%arg0: i32) -> (i32, i32) {
    %c0_i32 = arith.constant 0 : i32
    %c0_i32_0 = arith.constant 0 : i32
    %c0_i32_1 = arith.constant 0 : i32
    return %c0_i32, %c0_i32_0 : i32, i32
  }
}

module attributes {stable_mosaic.version = 11 : i64} {
  func.func @_bn_norm_relu_kernel(%arg0: i32, %arg1: memref<128x32xbf16, #tpu.memory_space<vmem>>, %arg2: memref<1x32xf32, #tpu.memory_space<vmem>>, %arg3: memref<1x32xf32, #tpu.memory_space<vmem>>, %arg4: memref<1x32xf32, #tpu.memory_space<vmem>>, %arg5: memref<1x32xf32, #tpu.memory_space<vmem>>, %arg6: memref<128x32xbf16, #tpu.memory_space<vmem>>) attributes {dimension_semantics = [#tpu.dimension_semantics<parallel>], iteration_bounds = array<i64: 1>, scalar_prefetch = 0 : i64, scratch_operands = 0 : i64, tpu.core_type = #tpu.core_type<tc>, window_params = [{transform_indices = @transform_0, window_bounds = array<i64: 128, 32>}, {pipeline_mode = #tpu.pipeline_mode<synchronous>, transform_indices = @transform_1, window_bounds = array<i64: 1, 32>}, {pipeline_mode = #tpu.pipeline_mode<synchronous>, transform_indices = @transform_2, window_bounds = array<i64: 1, 32>}, {pipeline_mode = #tpu.pipeline_mode<synchronous>, transform_indices = @transform_3, window_bounds = array<i64: 1, 32>}, {pipeline_mode = #tpu.pipeline_mode<synchronous>, transform_indices = @transform_4, window_bounds = array<i64: 1, 32>}, {transform_indices = @transform_5, window_bounds = array<i64: 128, 32>}]} {
    %c0 = arith.constant 0 : index
    %c0_0 = arith.constant 0 : index
    %0 = vector.load %arg1[%c0, %c0_0] : memref<128x32xbf16, #tpu.memory_space<vmem>>, vector<128x32xbf16>
    %1 = arith.extf %0 : vector<128x32xbf16> to vector<128x32xf32>
    %c0_1 = arith.constant 0 : index
    %c0_2 = arith.constant 0 : index
    %2 = vector.load %arg3[%c0_1, %c0_2] : memref<1x32xf32, #tpu.memory_space<vmem>>, vector<1x32xf32>
    %c0_3 = arith.constant 0 : index
    %c0_4 = arith.constant 0 : index
    %3 = vector.load %arg4[%c0_3, %c0_4] : memref<1x32xf32, #tpu.memory_space<vmem>>, vector<1x32xf32>
    %4 = arith.mulf %2, %3 : vector<1x32xf32>
    %c0_5 = arith.constant 0 : index
    %c0_6 = arith.constant 0 : index
    %5 = vector.load %arg2[%c0_5, %c0_6] : memref<1x32xf32, #tpu.memory_space<vmem>>, vector<1x32xf32>
    %6 = vector.broadcast %5 : vector<1x32xf32> to vector<128x32xf32>
    %7 = arith.subf %1, %6 : vector<128x32xf32>
    %8 = vector.broadcast %4 : vector<1x32xf32> to vector<128x32xf32>
    %9 = arith.mulf %7, %8 : vector<128x32xf32>
    %c0_7 = arith.constant 0 : index
    %c0_8 = arith.constant 0 : index
    %10 = vector.load %arg5[%c0_7, %c0_8] : memref<1x32xf32, #tpu.memory_space<vmem>>, vector<1x32xf32>
    %11 = vector.broadcast %10 : vector<1x32xf32> to vector<128x32xf32>
    %12 = arith.addf %9, %11 : vector<128x32xf32>
    %cst = arith.constant 0.000000e+00 : f32
    %13 = vector.broadcast %cst : f32 to vector<128x32xf32>
    %14 = arith.maximumf %12, %13 : vector<128x32xf32>
    %15 = arith.truncf %14 : vector<128x32xf32> to vector<128x32xbf16>
    %c0_9 = arith.constant 0 : index
    %c0_10 = arith.constant 0 : index
    %16 = vector.load %arg6[%c0_9, %c0_10] : memref<128x32xbf16, #tpu.memory_space<vmem>>, vector<128x32xbf16>
    tpu.vector_store %arg6[%c0_9, %c0_10], %15 {strides = array<i32>} : memref<128x32xbf16, #tpu.memory_space<vmem>>, vector<128x32xbf16>,
    return
  }
  func.func @transform_0(%arg0: i32) -> (i32, i32) {
    %c0_i32 = arith.constant 0 : i32
    %c0_i32_0 = arith.constant 0 : i32
    return %arg0, %c0_i32 : i32, i32
  }
  func.func @transform_1(%arg0: i32) -> (i32, i32) {
    %c0_i32 = arith.constant 0 : i32
    %c0_i32_0 = arith.constant 0 : i32
    %c0_i32_1 = arith.constant 0 : i32
    return %c0_i32, %c0_i32_0 : i32, i32
  }
  func.func @transform_2(%arg0: i32) -> (i32, i32) {
    %c0_i32 = arith.constant 0 : i32
    %c0_i32_0 = arith.constant 0 : i32
    %c0_i32_1 = arith.constant 0 : i32
    return %c0_i32, %c0_i32_0 : i32, i32
  }
  func.func @transform_3(%arg0: i32) -> (i32, i32) {
    %c0_i32 = arith.constant 0 : i32
    %c0_i32_0 = arith.constant 0 : i32
    %c0_i32_1 = arith.constant 0 : i32
    return %c0_i32, %c0_i32_0 : i32, i32
  }
  func.func @transform_4(%arg0: i32) -> (i32, i32) {
    %c0_i32 = arith.constant 0 : i32
    %c0_i32_0 = arith.constant 0 : i32
    %c0_i32_1 = arith.constant 0 : i32
    return %c0_i32, %c0_i32_0 : i32, i32
  }
  func.func @transform_5(%arg0: i32) -> (i32, i32) {
    %c0_i32 = arith.constant 0 : i32
    %c0_i32_0 = arith.constant 0 : i32
    return %arg0, %c0_i32 : i32, i32
  }
}

module attributes {stable_mosaic.version = 11 : i64} {
  func.func @_matmul_kernel(%arg0: i32, %arg1: memref<168x128xbf16, #tpu.memory_space<vmem>>, %arg2: memref<128x128xbf16, #tpu.memory_space<vmem>>, %arg3: memref<168x128xbf16, #tpu.memory_space<vmem>>) attributes {dimension_semantics = [#tpu.dimension_semantics<parallel>], iteration_bounds = array<i64: 1>, scalar_prefetch = 0 : i64, scratch_operands = 0 : i64, tpu.core_type = #tpu.core_type<tc>, window_params = [{transform_indices = @transform_0, window_bounds = array<i64: 168, 128>}, {pipeline_mode = #tpu.pipeline_mode<synchronous>, transform_indices = @transform_1, window_bounds = array<i64: 128, 128>}, {transform_indices = @transform_2, window_bounds = array<i64: 168, 128>}]} {
    %c0 = arith.constant 0 : index
    %c0_0 = arith.constant 0 : index
    %0 = vector.load %arg1[%c0, %c0_0] : memref<168x128xbf16, #tpu.memory_space<vmem>>, vector<168x128xbf16>
    %c0_1 = arith.constant 0 : index
    %c0_2 = arith.constant 0 : index
    %1 = vector.load %arg2[%c0_1, %c0_2] : memref<128x128xbf16, #tpu.memory_space<vmem>>, vector<128x128xbf16>
    %cst = arith.constant dense<0.000000e+00> : vector<168x128xf32>
    %2 = tpu.matmul %0, %1, %cst {dimension_numbers = #tpu.dot_dimension_numbers<[1], [0], [0], [1], [0, 0, 1, 1], [], []>} : vector<168x128xbf16>, vector<128x128xbf16>, vector<168x128xf32> -> vector<168x128xf32>
    %3 = arith.truncf %2 : vector<168x128xf32> to vector<168x128xbf16>
    %c0_3 = arith.constant 0 : index
    %c0_4 = arith.constant 0 : index
    %4 = vector.load %arg3[%c0_3, %c0_4] : memref<168x128xbf16, #tpu.memory_space<vmem>>, vector<168x128xbf16>
    tpu.vector_store %arg3[%c0_3, %c0_4], %3 {strides = array<i32>} : memref<168x128xbf16, #tpu.memory_space<vmem>>, vector<168x128xbf16>,
    return
  }
  func.func @transform_0(%arg0: i32) -> (i32, i32) {
    %c0_i32 = arith.constant 0 : i32
    %c0_i32_0 = arith.constant 0 : i32
    return %arg0, %c0_i32 : i32, i32
  }
  func.func @transform_1(%arg0: i32) -> (i32, i32) {
    %c0_i32 = arith.constant 0 : i32
    %c0_i32_0 = arith.constant 0 : i32
    %c0_i32_1 = arith.constant 0 : i32
    return %c0_i32, %c0_i32_0 : i32, i32
  }
  func.func @transform_2(%arg0: i32) -> (i32, i32) {
    %c0_i32 = arith.constant 0 : i32
    %c0_i32_0 = arith.constant 0 : i32
    return %arg0, %c0_i32 : i32, i32
  }
}

module attributes {stable_mosaic.version = 11 : i64} {
  func.func @_bn_stats_kernel(%arg0: i32, %arg1: memref<512x16xbf16, #tpu.memory_space<vmem>>, %arg2: memref<1x16xf32, #tpu.memory_space<vmem>>, %arg3: memref<1x16xf32, #tpu.memory_space<vmem>>, %arg4: memref<1x16xf32, #tpu.memory_space<vmem>>, %arg5: memref<1x16xf32, #tpu.memory_space<vmem>>) attributes {dimension_semantics = [#tpu.dimension_semantics<arbitrary>], iteration_bounds = array<i64: 1>, scalar_prefetch = 0 : i64, scratch_operands = 2 : i64, tpu.core_type = #tpu.core_type<tc>, window_params = [{transform_indices = @transform_0, window_bounds = array<i64: 512, 16>}, {pipeline_mode = #tpu.pipeline_mode<synchronous>, transform_indices = @transform_1, window_bounds = array<i64: 1, 16>}, {pipeline_mode = #tpu.pipeline_mode<synchronous>, transform_indices = @transform_2, window_bounds = array<i64: 1, 16>}]} {
    %c0_i32 = arith.constant 0 : i32
    %0 = arith.cmpi eq, %arg0, %c0_i32 : i32
    %1 = arith.extui %0 : i1 to i32
    %c0_i32_0 = arith.constant 0 : i32
    %2 = arith.cmpi ne, %1, %c0_i32_0 : i32
    scf.if %2 {
      %cst_13 = arith.constant 0.000000e+00 : f32
      %19 = vector.broadcast %cst_13 : f32 to vector<1x16xf32>
      %c0_14 = arith.constant 0 : index
      %c0_15 = arith.constant 0 : index
      %20 = vector.load %arg4[%c0_14, %c0_15] : memref<1x16xf32, #tpu.memory_space<vmem>>, vector<1x16xf32>
      tpu.vector_store %arg4[%c0_14, %c0_15], %19 {strides = array<i32>} : memref<1x16xf32, #tpu.memory_space<vmem>>, vector<1x16xf32>,
      %cst_16 = arith.constant 0.000000e+00 : f32
      %21 = vector.broadcast %cst_16 : f32 to vector<1x16xf32>
      %c0_17 = arith.constant 0 : index
      %c0_18 = arith.constant 0 : index
      %22 = vector.load %arg5[%c0_17, %c0_18] : memref<1x16xf32, #tpu.memory_space<vmem>>, vector<1x16xf32>
      tpu.vector_store %arg5[%c0_17, %c0_18], %21 {strides = array<i32>} : memref<1x16xf32, #tpu.memory_space<vmem>>, vector<1x16xf32>,
    } else {
    }
    %c0 = arith.constant 0 : index
    %c0_1 = arith.constant 0 : index
    %3 = vector.load %arg1[%c0, %c0_1] : memref<512x16xbf16, #tpu.memory_space<vmem>>, vector<512x16xbf16>
    %4 = arith.extf %3 : vector<512x16xbf16> to vector<512x16xf32>
    %c0_2 = arith.constant 0 : index
    %c0_3 = arith.constant 0 : index
    %5 = vector.load %arg4[%c0_2, %c0_3] : memref<1x16xf32, #tpu.memory_space<vmem>>, vector<1x16xf32>
    %cst = arith.constant dense<0.000000e+00> : vector<16xf32>
    %6 = vector.multi_reduction <add>, %4, %cst [0] : vector<512x16xf32> to vector<16xf32>
    %7 = vector.shape_cast %6 : vector<16xf32> to vector<1x16xf32>
    %8 = arith.addf %5, %7 : vector<1x16xf32>
    %c0_4 = arith.constant 0 : index
    %c0_5 = arith.constant 0 : index
    %9 = vector.load %arg4[%c0_4, %c0_5] : memref<1x16xf32, #tpu.memory_space<vmem>>, vector<1x16xf32>
    tpu.vector_store %arg4[%c0_4, %c0_5], %8 {strides = array<i32>} : memref<1x16xf32, #tpu.memory_space<vmem>>, vector<1x16xf32>,
    %c0_6 = arith.constant 0 : index
    %c0_7 = arith.constant 0 : index
    %10 = vector.load %arg5[%c0_6, %c0_7] : memref<1x16xf32, #tpu.memory_space<vmem>>, vector<1x16xf32>
    %11 = arith.mulf %4, %4 : vector<512x16xf32>
    %cst_8 = arith.constant dense<0.000000e+00> : vector<16xf32>
    %12 = vector.multi_reduction <add>, %11, %cst_8 [0] : vector<512x16xf32> to vector<16xf32>
    %13 = vector.shape_cast %12 : vector<16xf32> to vector<1x16xf32>
    %14 = arith.addf %10, %13 : vector<1x16xf32>
    %c0_9 = arith.constant 0 : index
    %c0_10 = arith.constant 0 : index
    %15 = vector.load %arg5[%c0_9, %c0_10] : memref<1x16xf32, #tpu.memory_space<vmem>>, vector<1x16xf32>
    tpu.vector_store %arg5[%c0_9, %c0_10], %14 {strides = array<i32>} : memref<1x16xf32, #tpu.memory_space<vmem>>, vector<1x16xf32>,
    %c0_i32_11 = arith.constant 0 : i32
    %16 = arith.cmpi eq, %arg0, %c0_i32_11 : i32
    %17 = arith.extui %16 : i1 to i32
    %c0_i32_12 = arith.constant 0 : i32
    %18 = arith.cmpi ne, %17, %c0_i32_12 : i32
    scf.if %18 {
      %c0_13 = arith.constant 0 : index
      %c0_14 = arith.constant 0 : index
      %19 = vector.load %arg4[%c0_13, %c0_14] : memref<1x16xf32, #tpu.memory_space<vmem>>, vector<1x16xf32>
      %cst_15 = arith.constant 0.001953125 : f32
      %20 = vector.broadcast %cst_15 : f32 to vector<1x16xf32>
      %21 = arith.mulf %19, %20 : vector<1x16xf32>
      %c0_16 = arith.constant 0 : index
      %c0_17 = arith.constant 0 : index
      %22 = vector.load %arg5[%c0_16, %c0_17] : memref<1x16xf32, #tpu.memory_space<vmem>>, vector<1x16xf32>
      %cst_18 = arith.constant 0.001953125 : f32
      %23 = vector.broadcast %cst_18 : f32 to vector<1x16xf32>
      %24 = arith.mulf %22, %23 : vector<1x16xf32>
      %25 = arith.mulf %21, %21 : vector<1x16xf32>
      %26 = arith.subf %24, %25 : vector<1x16xf32>
      %cst_19 = arith.constant 0.000000e+00 : f32
      %27 = vector.broadcast %cst_19 : f32 to vector<1x16xf32>
      %28 = arith.maximumf %26, %27 : vector<1x16xf32>
      %c0_20 = arith.constant 0 : index
      %c0_21 = arith.constant 0 : index
      %29 = vector.load %arg2[%c0_20, %c0_21] : memref<1x16xf32, #tpu.memory_space<vmem>>, vector<1x16xf32>
      tpu.vector_store %arg2[%c0_20, %c0_21], %21 {strides = array<i32>} : memref<1x16xf32, #tpu.memory_space<vmem>>, vector<1x16xf32>,
      %cst_22 = arith.constant 9.99999974E-6 : f32
      %30 = vector.broadcast %cst_22 : f32 to vector<1x16xf32>
      %31 = arith.addf %28, %30 : vector<1x16xf32>
      %32 = math.rsqrt %31 : vector<1x16xf32>
      %c0_23 = arith.constant 0 : index
      %c0_24 = arith.constant 0 : index
      %33 = vector.load %arg3[%c0_23, %c0_24] : memref<1x16xf32, #tpu.memory_space<vmem>>, vector<1x16xf32>
      tpu.vector_store %arg3[%c0_23, %c0_24], %32 {strides = array<i32>} : memref<1x16xf32, #tpu.memory_space<vmem>>, vector<1x16xf32>,
    } else {
    }
    return
  }
  func.func @transform_0(%arg0: i32) -> (i32, i32) {
    %c0_i32 = arith.constant 0 : i32
    %c0_i32_0 = arith.constant 0 : i32
    return %arg0, %c0_i32 : i32, i32
  }
  func.func @transform_1(%arg0: i32) -> (i32, i32) {
    %c0_i32 = arith.constant 0 : i32
    %c0_i32_0 = arith.constant 0 : i32
    %c0_i32_1 = arith.constant 0 : i32
    return %c0_i32, %c0_i32_0 : i32, i32
  }
  func.func @transform_2(%arg0: i32) -> (i32, i32) {
    %c0_i32 = arith.constant 0 : i32
    %c0_i32_0 = arith.constant 0 : i32
    %c0_i32_1 = arith.constant 0 : i32
    return %c0_i32, %c0_i32_0 : i32, i32
  }
}

module attributes {stable_mosaic.version = 11 : i64} {
  func.func @_bn_norm_relu_kernel(%arg0: i32, %arg1: memref<512x16xbf16, #tpu.memory_space<vmem>>, %arg2: memref<1x16xf32, #tpu.memory_space<vmem>>, %arg3: memref<1x16xf32, #tpu.memory_space<vmem>>, %arg4: memref<1x16xf32, #tpu.memory_space<vmem>>, %arg5: memref<1x16xf32, #tpu.memory_space<vmem>>, %arg6: memref<512x16xbf16, #tpu.memory_space<vmem>>) attributes {dimension_semantics = [#tpu.dimension_semantics<parallel>], iteration_bounds = array<i64: 1>, scalar_prefetch = 0 : i64, scratch_operands = 0 : i64, tpu.core_type = #tpu.core_type<tc>, window_params = [{transform_indices = @transform_0, window_bounds = array<i64: 512, 16>}, {pipeline_mode = #tpu.pipeline_mode<synchronous>, transform_indices = @transform_1, window_bounds = array<i64: 1, 16>}, {pipeline_mode = #tpu.pipeline_mode<synchronous>, transform_indices = @transform_2, window_bounds = array<i64: 1, 16>}, {pipeline_mode = #tpu.pipeline_mode<synchronous>, transform_indices = @transform_3, window_bounds = array<i64: 1, 16>}, {pipeline_mode = #tpu.pipeline_mode<synchronous>, transform_indices = @transform_4, window_bounds = array<i64: 1, 16>}, {transform_indices = @transform_5, window_bounds = array<i64: 512, 16>}]} {
    %c0 = arith.constant 0 : index
    %c0_0 = arith.constant 0 : index
    %0 = vector.load %arg1[%c0, %c0_0] : memref<512x16xbf16, #tpu.memory_space<vmem>>, vector<512x16xbf16>
    %1 = arith.extf %0 : vector<512x16xbf16> to vector<512x16xf32>
    %c0_1 = arith.constant 0 : index
    %c0_2 = arith.constant 0 : index
    %2 = vector.load %arg3[%c0_1, %c0_2] : memref<1x16xf32, #tpu.memory_space<vmem>>, vector<1x16xf32>
    %c0_3 = arith.constant 0 : index
    %c0_4 = arith.constant 0 : index
    %3 = vector.load %arg4[%c0_3, %c0_4] : memref<1x16xf32, #tpu.memory_space<vmem>>, vector<1x16xf32>
    %4 = arith.mulf %2, %3 : vector<1x16xf32>
    %c0_5 = arith.constant 0 : index
    %c0_6 = arith.constant 0 : index
    %5 = vector.load %arg2[%c0_5, %c0_6] : memref<1x16xf32, #tpu.memory_space<vmem>>, vector<1x16xf32>
    %6 = vector.broadcast %5 : vector<1x16xf32> to vector<512x16xf32>
    %7 = arith.subf %1, %6 : vector<512x16xf32>
    %8 = vector.broadcast %4 : vector<1x16xf32> to vector<512x16xf32>
    %9 = arith.mulf %7, %8 : vector<512x16xf32>
    %c0_7 = arith.constant 0 : index
    %c0_8 = arith.constant 0 : index
    %10 = vector.load %arg5[%c0_7, %c0_8] : memref<1x16xf32, #tpu.memory_space<vmem>>, vector<1x16xf32>
    %11 = vector.broadcast %10 : vector<1x16xf32> to vector<512x16xf32>
    %12 = arith.addf %9, %11 : vector<512x16xf32>
    %cst = arith.constant 0.000000e+00 : f32
    %13 = vector.broadcast %cst : f32 to vector<512x16xf32>
    %14 = arith.maximumf %12, %13 : vector<512x16xf32>
    %15 = arith.truncf %14 : vector<512x16xf32> to vector<512x16xbf16>
    %c0_9 = arith.constant 0 : index
    %c0_10 = arith.constant 0 : index
    %16 = vector.load %arg6[%c0_9, %c0_10] : memref<512x16xbf16, #tpu.memory_space<vmem>>, vector<512x16xbf16>
    tpu.vector_store %arg6[%c0_9, %c0_10], %15 {strides = array<i32>} : memref<512x16xbf16, #tpu.memory_space<vmem>>, vector<512x16xbf16>,
    return
  }
  func.func @transform_0(%arg0: i32) -> (i32, i32) {
    %c0_i32 = arith.constant 0 : i32
    %c0_i32_0 = arith.constant 0 : i32
    return %arg0, %c0_i32 : i32, i32
  }
  func.func @transform_1(%arg0: i32) -> (i32, i32) {
    %c0_i32 = arith.constant 0 : i32
    %c0_i32_0 = arith.constant 0 : i32
    %c0_i32_1 = arith.constant 0 : i32
    return %c0_i32, %c0_i32_0 : i32, i32
  }
  func.func @transform_2(%arg0: i32) -> (i32, i32) {
    %c0_i32 = arith.constant 0 : i32
    %c0_i32_0 = arith.constant 0 : i32
    %c0_i32_1 = arith.constant 0 : i32
    return %c0_i32, %c0_i32_0 : i32, i32
  }
  func.func @transform_3(%arg0: i32) -> (i32, i32) {
    %c0_i32 = arith.constant 0 : i32
    %c0_i32_0 = arith.constant 0 : i32
    %c0_i32_1 = arith.constant 0 : i32
    return %c0_i32, %c0_i32_0 : i32, i32
  }
  func.func @transform_4(%arg0: i32) -> (i32, i32) {
    %c0_i32 = arith.constant 0 : i32
    %c0_i32_0 = arith.constant 0 : i32
    %c0_i32_1 = arith.constant 0 : i32
    return %c0_i32, %c0_i32_0 : i32, i32
  }
  func.func @transform_5(%arg0: i32) -> (i32, i32) {
    %c0_i32 = arith.constant 0 : i32
    %c0_i32_0 = arith.constant 0 : i32
    return %arg0, %c0_i32 : i32, i32
  }
}

module attributes {stable_mosaic.version = 11 : i64} {
  func.func @_matmul_kernel(%arg0: i32, %arg1: memref<584x128xbf16, #tpu.memory_space<vmem>>, %arg2: memref<128x128xbf16, #tpu.memory_space<vmem>>, %arg3: memref<584x128xbf16, #tpu.memory_space<vmem>>) attributes {dimension_semantics = [#tpu.dimension_semantics<parallel>], iteration_bounds = array<i64: 1>, scalar_prefetch = 0 : i64, scratch_operands = 0 : i64, tpu.core_type = #tpu.core_type<tc>, window_params = [{transform_indices = @transform_0, window_bounds = array<i64: 584, 128>}, {pipeline_mode = #tpu.pipeline_mode<synchronous>, transform_indices = @transform_1, window_bounds = array<i64: 128, 128>}, {transform_indices = @transform_2, window_bounds = array<i64: 584, 128>}]} {
    %c0 = arith.constant 0 : index
    %c0_0 = arith.constant 0 : index
    %0 = vector.load %arg1[%c0, %c0_0] : memref<584x128xbf16, #tpu.memory_space<vmem>>, vector<584x128xbf16>
    %c0_1 = arith.constant 0 : index
    %c0_2 = arith.constant 0 : index
    %1 = vector.load %arg2[%c0_1, %c0_2] : memref<128x128xbf16, #tpu.memory_space<vmem>>, vector<128x128xbf16>
    %cst = arith.constant dense<0.000000e+00> : vector<584x128xf32>
    %2 = tpu.matmul %0, %1, %cst {dimension_numbers = #tpu.dot_dimension_numbers<[1], [0], [0], [1], [0, 0, 1, 1], [], []>} : vector<584x128xbf16>, vector<128x128xbf16>, vector<584x128xf32> -> vector<584x128xf32>
    %3 = arith.truncf %2 : vector<584x128xf32> to vector<584x128xbf16>
    %c0_3 = arith.constant 0 : index
    %c0_4 = arith.constant 0 : index
    %4 = vector.load %arg3[%c0_3, %c0_4] : memref<584x128xbf16, #tpu.memory_space<vmem>>, vector<584x128xbf16>
    tpu.vector_store %arg3[%c0_3, %c0_4], %3 {strides = array<i32>} : memref<584x128xbf16, #tpu.memory_space<vmem>>, vector<584x128xbf16>,
    return
  }
  func.func @transform_0(%arg0: i32) -> (i32, i32) {
    %c0_i32 = arith.constant 0 : i32
    %c0_i32_0 = arith.constant 0 : i32
    return %arg0, %c0_i32 : i32, i32
  }
  func.func @transform_1(%arg0: i32) -> (i32, i32) {
    %c0_i32 = arith.constant 0 : i32
    %c0_i32_0 = arith.constant 0 : i32
    %c0_i32_1 = arith.constant 0 : i32
    return %c0_i32, %c0_i32_0 : i32, i32
  }
  func.func @transform_2(%arg0: i32) -> (i32, i32) {
    %c0_i32 = arith.constant 0 : i32
    %c0_i32_0 = arith.constant 0 : i32
    return %arg0, %c0_i32 : i32, i32
  }
}

module attributes {stable_mosaic.version = 11 : i64} {
  func.func @_bn_stats_kernel(%arg0: i32, %arg1: memref<2048x8xbf16, #tpu.memory_space<vmem>>, %arg2: memref<1x8xf32, #tpu.memory_space<vmem>>, %arg3: memref<1x8xf32, #tpu.memory_space<vmem>>, %arg4: memref<1x8xf32, #tpu.memory_space<vmem>>, %arg5: memref<1x8xf32, #tpu.memory_space<vmem>>) attributes {dimension_semantics = [#tpu.dimension_semantics<arbitrary>], iteration_bounds = array<i64: 1>, scalar_prefetch = 0 : i64, scratch_operands = 2 : i64, tpu.core_type = #tpu.core_type<tc>, window_params = [{transform_indices = @transform_0, window_bounds = array<i64: 2048, 8>}, {pipeline_mode = #tpu.pipeline_mode<synchronous>, transform_indices = @transform_1, window_bounds = array<i64: 1, 8>}, {pipeline_mode = #tpu.pipeline_mode<synchronous>, transform_indices = @transform_2, window_bounds = array<i64: 1, 8>}]} {
    %c0_i32 = arith.constant 0 : i32
    %0 = arith.cmpi eq, %arg0, %c0_i32 : i32
    %1 = arith.extui %0 : i1 to i32
    %c0_i32_0 = arith.constant 0 : i32
    %2 = arith.cmpi ne, %1, %c0_i32_0 : i32
    scf.if %2 {
      %cst_13 = arith.constant 0.000000e+00 : f32
      %19 = vector.broadcast %cst_13 : f32 to vector<1x8xf32>
      %c0_14 = arith.constant 0 : index
      %c0_15 = arith.constant 0 : index
      %20 = vector.load %arg4[%c0_14, %c0_15] : memref<1x8xf32, #tpu.memory_space<vmem>>, vector<1x8xf32>
      tpu.vector_store %arg4[%c0_14, %c0_15], %19 {strides = array<i32>} : memref<1x8xf32, #tpu.memory_space<vmem>>, vector<1x8xf32>,
      %cst_16 = arith.constant 0.000000e+00 : f32
      %21 = vector.broadcast %cst_16 : f32 to vector<1x8xf32>
      %c0_17 = arith.constant 0 : index
      %c0_18 = arith.constant 0 : index
      %22 = vector.load %arg5[%c0_17, %c0_18] : memref<1x8xf32, #tpu.memory_space<vmem>>, vector<1x8xf32>
      tpu.vector_store %arg5[%c0_17, %c0_18], %21 {strides = array<i32>} : memref<1x8xf32, #tpu.memory_space<vmem>>, vector<1x8xf32>,
    } else {
    }
    %c0 = arith.constant 0 : index
    %c0_1 = arith.constant 0 : index
    %3 = vector.load %arg1[%c0, %c0_1] : memref<2048x8xbf16, #tpu.memory_space<vmem>>, vector<2048x8xbf16>
    %4 = arith.extf %3 : vector<2048x8xbf16> to vector<2048x8xf32>
    %c0_2 = arith.constant 0 : index
    %c0_3 = arith.constant 0 : index
    %5 = vector.load %arg4[%c0_2, %c0_3] : memref<1x8xf32, #tpu.memory_space<vmem>>, vector<1x8xf32>
    %cst = arith.constant dense<0.000000e+00> : vector<8xf32>
    %6 = vector.multi_reduction <add>, %4, %cst [0] : vector<2048x8xf32> to vector<8xf32>
    %7 = vector.shape_cast %6 : vector<8xf32> to vector<1x8xf32>
    %8 = arith.addf %5, %7 : vector<1x8xf32>
    %c0_4 = arith.constant 0 : index
    %c0_5 = arith.constant 0 : index
    %9 = vector.load %arg4[%c0_4, %c0_5] : memref<1x8xf32, #tpu.memory_space<vmem>>, vector<1x8xf32>
    tpu.vector_store %arg4[%c0_4, %c0_5], %8 {strides = array<i32>} : memref<1x8xf32, #tpu.memory_space<vmem>>, vector<1x8xf32>,
    %c0_6 = arith.constant 0 : index
    %c0_7 = arith.constant 0 : index
    %10 = vector.load %arg5[%c0_6, %c0_7] : memref<1x8xf32, #tpu.memory_space<vmem>>, vector<1x8xf32>
    %11 = arith.mulf %4, %4 : vector<2048x8xf32>
    %cst_8 = arith.constant dense<0.000000e+00> : vector<8xf32>
    %12 = vector.multi_reduction <add>, %11, %cst_8 [0] : vector<2048x8xf32> to vector<8xf32>
    %13 = vector.shape_cast %12 : vector<8xf32> to vector<1x8xf32>
    %14 = arith.addf %10, %13 : vector<1x8xf32>
    %c0_9 = arith.constant 0 : index
    %c0_10 = arith.constant 0 : index
    %15 = vector.load %arg5[%c0_9, %c0_10] : memref<1x8xf32, #tpu.memory_space<vmem>>, vector<1x8xf32>
    tpu.vector_store %arg5[%c0_9, %c0_10], %14 {strides = array<i32>} : memref<1x8xf32, #tpu.memory_space<vmem>>, vector<1x8xf32>,
    %c0_i32_11 = arith.constant 0 : i32
    %16 = arith.cmpi eq, %arg0, %c0_i32_11 : i32
    %17 = arith.extui %16 : i1 to i32
    %c0_i32_12 = arith.constant 0 : i32
    %18 = arith.cmpi ne, %17, %c0_i32_12 : i32
    scf.if %18 {
      %c0_13 = arith.constant 0 : index
      %c0_14 = arith.constant 0 : index
      %19 = vector.load %arg4[%c0_13, %c0_14] : memref<1x8xf32, #tpu.memory_space<vmem>>, vector<1x8xf32>
      %cst_15 = arith.constant 4.8828125E-4 : f32
      %20 = vector.broadcast %cst_15 : f32 to vector<1x8xf32>
      %21 = arith.mulf %19, %20 : vector<1x8xf32>
      %c0_16 = arith.constant 0 : index
      %c0_17 = arith.constant 0 : index
      %22 = vector.load %arg5[%c0_16, %c0_17] : memref<1x8xf32, #tpu.memory_space<vmem>>, vector<1x8xf32>
      %cst_18 = arith.constant 4.8828125E-4 : f32
      %23 = vector.broadcast %cst_18 : f32 to vector<1x8xf32>
      %24 = arith.mulf %22, %23 : vector<1x8xf32>
      %25 = arith.mulf %21, %21 : vector<1x8xf32>
      %26 = arith.subf %24, %25 : vector<1x8xf32>
      %cst_19 = arith.constant 0.000000e+00 : f32
      %27 = vector.broadcast %cst_19 : f32 to vector<1x8xf32>
      %28 = arith.maximumf %26, %27 : vector<1x8xf32>
      %c0_20 = arith.constant 0 : index
      %c0_21 = arith.constant 0 : index
      %29 = vector.load %arg2[%c0_20, %c0_21] : memref<1x8xf32, #tpu.memory_space<vmem>>, vector<1x8xf32>
      tpu.vector_store %arg2[%c0_20, %c0_21], %21 {strides = array<i32>} : memref<1x8xf32, #tpu.memory_space<vmem>>, vector<1x8xf32>,
      %cst_22 = arith.constant 9.99999974E-6 : f32
      %30 = vector.broadcast %cst_22 : f32 to vector<1x8xf32>
      %31 = arith.addf %28, %30 : vector<1x8xf32>
      %32 = math.rsqrt %31 : vector<1x8xf32>
      %c0_23 = arith.constant 0 : index
      %c0_24 = arith.constant 0 : index
      %33 = vector.load %arg3[%c0_23, %c0_24] : memref<1x8xf32, #tpu.memory_space<vmem>>, vector<1x8xf32>
      tpu.vector_store %arg3[%c0_23, %c0_24], %32 {strides = array<i32>} : memref<1x8xf32, #tpu.memory_space<vmem>>, vector<1x8xf32>,
    } else {
    }
    return
  }
  func.func @transform_0(%arg0: i32) -> (i32, i32) {
    %c0_i32 = arith.constant 0 : i32
    %c0_i32_0 = arith.constant 0 : i32
    return %arg0, %c0_i32 : i32, i32
  }
  func.func @transform_1(%arg0: i32) -> (i32, i32) {
    %c0_i32 = arith.constant 0 : i32
    %c0_i32_0 = arith.constant 0 : i32
    %c0_i32_1 = arith.constant 0 : i32
    return %c0_i32, %c0_i32_0 : i32, i32
  }
  func.func @transform_2(%arg0: i32) -> (i32, i32) {
    %c0_i32 = arith.constant 0 : i32
    %c0_i32_0 = arith.constant 0 : i32
    %c0_i32_1 = arith.constant 0 : i32
    return %c0_i32, %c0_i32_0 : i32, i32
  }
}

module attributes {stable_mosaic.version = 11 : i64} {
  func.func @_bn_norm_relu_kernel(%arg0: i32, %arg1: memref<2048x8xbf16, #tpu.memory_space<vmem>>, %arg2: memref<1x8xf32, #tpu.memory_space<vmem>>, %arg3: memref<1x8xf32, #tpu.memory_space<vmem>>, %arg4: memref<1x8xf32, #tpu.memory_space<vmem>>, %arg5: memref<1x8xf32, #tpu.memory_space<vmem>>, %arg6: memref<2048x8xbf16, #tpu.memory_space<vmem>>) attributes {dimension_semantics = [#tpu.dimension_semantics<parallel>], iteration_bounds = array<i64: 1>, scalar_prefetch = 0 : i64, scratch_operands = 0 : i64, tpu.core_type = #tpu.core_type<tc>, window_params = [{transform_indices = @transform_0, window_bounds = array<i64: 2048, 8>}, {pipeline_mode = #tpu.pipeline_mode<synchronous>, transform_indices = @transform_1, window_bounds = array<i64: 1, 8>}, {pipeline_mode = #tpu.pipeline_mode<synchronous>, transform_indices = @transform_2, window_bounds = array<i64: 1, 8>}, {pipeline_mode = #tpu.pipeline_mode<synchronous>, transform_indices = @transform_3, window_bounds = array<i64: 1, 8>}, {pipeline_mode = #tpu.pipeline_mode<synchronous>, transform_indices = @transform_4, window_bounds = array<i64: 1, 8>}, {transform_indices = @transform_5, window_bounds = array<i64: 2048, 8>}]} {
    %c0 = arith.constant 0 : index
    %c0_0 = arith.constant 0 : index
    %0 = vector.load %arg1[%c0, %c0_0] : memref<2048x8xbf16, #tpu.memory_space<vmem>>, vector<2048x8xbf16>
    %1 = arith.extf %0 : vector<2048x8xbf16> to vector<2048x8xf32>
    %c0_1 = arith.constant 0 : index
    %c0_2 = arith.constant 0 : index
    %2 = vector.load %arg3[%c0_1, %c0_2] : memref<1x8xf32, #tpu.memory_space<vmem>>, vector<1x8xf32>
    %c0_3 = arith.constant 0 : index
    %c0_4 = arith.constant 0 : index
    %3 = vector.load %arg4[%c0_3, %c0_4] : memref<1x8xf32, #tpu.memory_space<vmem>>, vector<1x8xf32>
    %4 = arith.mulf %2, %3 : vector<1x8xf32>
    %c0_5 = arith.constant 0 : index
    %c0_6 = arith.constant 0 : index
    %5 = vector.load %arg2[%c0_5, %c0_6] : memref<1x8xf32, #tpu.memory_space<vmem>>, vector<1x8xf32>
    %6 = vector.broadcast %5 : vector<1x8xf32> to vector<2048x8xf32>
    %7 = arith.subf %1, %6 : vector<2048x8xf32>
    %8 = vector.broadcast %4 : vector<1x8xf32> to vector<2048x8xf32>
    %9 = arith.mulf %7, %8 : vector<2048x8xf32>
    %c0_7 = arith.constant 0 : index
    %c0_8 = arith.constant 0 : index
    %10 = vector.load %arg5[%c0_7, %c0_8] : memref<1x8xf32, #tpu.memory_space<vmem>>, vector<1x8xf32>
    %11 = vector.broadcast %10 : vector<1x8xf32> to vector<2048x8xf32>
    %12 = arith.addf %9, %11 : vector<2048x8xf32>
    %cst = arith.constant 0.000000e+00 : f32
    %13 = vector.broadcast %cst : f32 to vector<2048x8xf32>
    %14 = arith.maximumf %12, %13 : vector<2048x8xf32>
    %15 = arith.truncf %14 : vector<2048x8xf32> to vector<2048x8xbf16>
    %c0_9 = arith.constant 0 : index
    %c0_10 = arith.constant 0 : index
    %16 = vector.load %arg6[%c0_9, %c0_10] : memref<2048x8xbf16, #tpu.memory_space<vmem>>, vector<2048x8xbf16>
    tpu.vector_store %arg6[%c0_9, %c0_10], %15 {strides = array<i32>} : memref<2048x8xbf16, #tpu.memory_space<vmem>>, vector<2048x8xbf16>,
    return
  }
  func.func @transform_0(%arg0: i32) -> (i32, i32) {
    %c0_i32 = arith.constant 0 : i32
    %c0_i32_0 = arith.constant 0 : i32
    return %arg0, %c0_i32 : i32, i32
  }
  func.func @transform_1(%arg0: i32) -> (i32, i32) {
    %c0_i32 = arith.constant 0 : i32
    %c0_i32_0 = arith.constant 0 : i32
    %c0_i32_1 = arith.constant 0 : i32
    return %c0_i32, %c0_i32_0 : i32, i32
  }
  func.func @transform_2(%arg0: i32) -> (i32, i32) {
    %c0_i32 = arith.constant 0 : i32
    %c0_i32_0 = arith.constant 0 : i32
    %c0_i32_1 = arith.constant 0 : i32
    return %c0_i32, %c0_i32_0 : i32, i32
  }
  func.func @transform_3(%arg0: i32) -> (i32, i32) {
    %c0_i32 = arith.constant 0 : i32
    %c0_i32_0 = arith.constant 0 : i32
    %c0_i32_1 = arith.constant 0 : i32
    return %c0_i32, %c0_i32_0 : i32, i32
  }
  func.func @transform_4(%arg0: i32) -> (i32, i32) {
    %c0_i32 = arith.constant 0 : i32
    %c0_i32_0 = arith.constant 0 : i32
    %c0_i32_1 = arith.constant 0 : i32
    return %c0_i32, %c0_i32_0 : i32, i32
  }
  func.func @transform_5(%arg0: i32) -> (i32, i32) {
    %c0_i32 = arith.constant 0 : i32
    %c0_i32_0 = arith.constant 0 : i32
    return %arg0, %c0_i32 : i32, i32
  }
}

module attributes {stable_mosaic.version = 11 : i64} {
  func.func @_matmul_kernel(%arg0: i32, %arg1: memref<1024x128xbf16, #tpu.memory_space<vmem>>, %arg2: memref<128x128xbf16, #tpu.memory_space<vmem>>, %arg3: memref<1024x128xbf16, #tpu.memory_space<vmem>>) attributes {dimension_semantics = [#tpu.dimension_semantics<parallel>], iteration_bounds = array<i64: 3>, scalar_prefetch = 0 : i64, scratch_operands = 0 : i64, tpu.core_type = #tpu.core_type<tc>, window_params = [{transform_indices = @transform_0, window_bounds = array<i64: 1024, 128>}, {pipeline_mode = #tpu.pipeline_mode<synchronous>, transform_indices = @transform_1, window_bounds = array<i64: 128, 128>}, {transform_indices = @transform_2, window_bounds = array<i64: 1024, 128>}]} {
    %c0 = arith.constant 0 : index
    %c0_0 = arith.constant 0 : index
    %0 = vector.load %arg1[%c0, %c0_0] : memref<1024x128xbf16, #tpu.memory_space<vmem>>, vector<1024x128xbf16>
    %c0_1 = arith.constant 0 : index
    %c0_2 = arith.constant 0 : index
    %1 = vector.load %arg2[%c0_1, %c0_2] : memref<128x128xbf16, #tpu.memory_space<vmem>>, vector<128x128xbf16>
    %cst = arith.constant dense<0.000000e+00> : vector<1024x128xf32>
    %2 = tpu.matmul %0, %1, %cst {dimension_numbers = #tpu.dot_dimension_numbers<[1], [0], [0], [1], [0, 0, 1, 1], [], []>} : vector<1024x128xbf16>, vector<128x128xbf16>, vector<1024x128xf32> -> vector<1024x128xf32>
    %3 = math.tanh %2 : vector<1024x128xf32>
    %4 = arith.truncf %3 : vector<1024x128xf32> to vector<1024x128xbf16>
    %c0_3 = arith.constant 0 : index
    %c0_4 = arith.constant 0 : index
    %5 = vector.load %arg3[%c0_3, %c0_4] : memref<1024x128xbf16, #tpu.memory_space<vmem>>, vector<1024x128xbf16>
    tpu.vector_store %arg3[%c0_3, %c0_4], %4 {strides = array<i32>} : memref<1024x128xbf16, #tpu.memory_space<vmem>>, vector<1024x128xbf16>,
    return
  }
  func.func @transform_0(%arg0: i32) -> (i32, i32) {
    %c0_i32 = arith.constant 0 : i32
    %c0_i32_0 = arith.constant 0 : i32
    return %arg0, %c0_i32 : i32, i32
  }
  func.func @transform_1(%arg0: i32) -> (i32, i32) {
    %c0_i32 = arith.constant 0 : i32
    %c0_i32_0 = arith.constant 0 : i32
    %c0_i32_1 = arith.constant 0 : i32
    return %c0_i32, %c0_i32_0 : i32, i32
  }
  func.func @transform_2(%arg0: i32) -> (i32, i32) {
    %c0_i32 = arith.constant 0 : i32
    %c0_i32_0 = arith.constant 0 : i32
    return %arg0, %c0_i32 : i32, i32
  }
}

</mosaic_0001>

<llo_original>
// kernel: netg_forward.15
$region0: #{netg_forward.15}
  #allocation0 [shape = 'u32[]', space=smem, size = 0x4, offset = 0x4, fixed_abs, tag = 'smem constant byte address 0x4 - core index']
  #allocation1 [shape = 'u32[144,128]{1,0:T(1,128)}', space=vmem, size = 0x12000, scoped, tag = 'internal scratch']
  %s0 = inlined_call_operand.vmem [shape: bf16[32,64], index: 0, kind: input, shape index: {}]
  %s1 = inlined_call_operand.vmem [shape: f32[1,64], index: 1, kind: input, shape index: {}]
  %s2 = inlined_call_operand.vmem [shape: f32[1,64], index: 2, kind: input, shape index: {}]
  %s3 = inlined_call_operand.hbm [shape: f32[1,64], index: 3, kind: input, shape index: {}]
  %s4 = inlined_call_operand.hbm [shape: f32[1,64], index: 4, kind: input, shape index: {}]
  %s5 = inlined_call_operand.vmem [shape: bf16[32,64], index: 5, kind: output, shape index: {}]
  %s6 = sld [smem:[#allocation0]]
  $region38: #{netg_forward.15} parent=0
    _
  %s8 = ssub.s32 1, %s6
  %s9 = scalar_select 0, %s8, %s6
  $region1: #{netg_forward.15} parent=0
    #allocation2 [shape = 'u8[512]{0}', space=vmem, size = 0x400, scoped, tag = 'input window, operand 3, single buffered']
    #allocation3 [shape = 's32[1]{0}', space=sflag, size = 0x4, scoped, tag = 'scoped memory for netg_forward.15']
    #allocation4 [shape = 'u8[512]{0}', space=vmem, size = 0x400, scoped, tag = 'input window, operand 4, single buffered']
    #allocation5 [shape = 's32[1]{0}', space=sflag, size = 0x4, scoped, tag = 'scoped memory for netg_forward.15']
    %10 = vsyncpa [#allocation3], 0
    %11 = vsyncpa [#allocation5], 0
    // Predicated region
    $region2: #{netg_forward.15} parent=1 // pred_check
      _
    $region3: #{netg_forward.15} parent=1 // pred_check_branch
      %13 = sbr.rel (0) target = $region5
    $region4: #{netg_forward.15} parent=1 // pred_region
      _
    $region5: #{netg_forward.15} parent=1 // pred_fallthru
      _
    // Predicated region
    $region6: #{netg_forward.15} parent=1 // pred_check
      _
    $region7: #{netg_forward.15} parent=1 // pred_check_branch
      %15 = sbr.rel (0) target = $region9
    $region8: #{netg_forward.15} parent=1 // pred_region
      _
    $region9: #{netg_forward.15} parent=1 // pred_fallthru
      _
    // Predicated region
    $region10: #{netg_forward.15} parent=1 // pred_check
      _
    $region11: #{netg_forward.15} parent=1 // pred_check_branch
      %17 = sbr.rel (0) target = $region13
    $region12: #{netg_forward.15} parent=1 // pred_region
      _
    $region13: #{netg_forward.15} parent=1 // pred_fallthru
      _
    // Predicated region
    $region14: #{netg_forward.15} parent=1 // pred_check
      _
    $region15: #{netg_forward.15} parent=1 // pred_check_branch
      %19 = sbr.rel (0) target = $region17
    $region16: #{netg_forward.15} parent=1 // pred_region
      %s21 = ssub.s32 16, 16
      %22 = vsyncadd [#allocation3], %s21
      %s24 = sshll.u32 [#allocation2], 4
      %s25 = int_to_ptr.vmem [resolvable:$true] %s24
      %27 = dma.hbm_to_vmem [thread:$0]  %s3, 16, %s25, [#allocation3]
    $region17: #{netg_forward.15} parent=1 // pred_fallthru
      _
    // Predicated region
    $region18: #{netg_forward.15} parent=1 // pred_check
      _
    $region19: #{netg_forward.15} parent=1 // pred_check_branch
      %29 = sbr.rel (0) target = $region21
    $region20: #{netg_forward.15} parent=1 // pred_region
      %s31 = ssub.s32 16, 16
      %32 = vsyncadd [#allocation5], %s31
      %s34 = sshll.u32 [#allocation4], 4
      %s35 = int_to_ptr.vmem [resolvable:$true] %s34
      %37 = dma.hbm_to_vmem [thread:$0]  %s4, 16, %s35, [#allocation5]
    $region21: #{netg_forward.15} parent=1 // pred_fallthru
      _
    // Predicated region
    $region22: #{netg_forward.15} parent=1 // pred_check
      _
    $region23: #{netg_forward.15} parent=1 // pred_check_branch
      %39 = sbr.rel (0) target = $region25
    $region24: #{netg_forward.15} parent=1 // pred_region
      %40 = dma.done [#allocation3], 16
    $region25: #{netg_forward.15} parent=1 // pred_fallthru
      _
    // Predicated region
    $region26: #{netg_forward.15} parent=1 // pred_check
      _
    $region27: #{netg_forward.15} parent=1 // pred_check_branch
      %42 = sbr.rel (0) target = $region29
    $region28: #{netg_forward.15} parent=1 // pred_region
      %43 = dma.done [#allocation5], 16
    $region29: #{netg_forward.15} parent=1 // pred_fallthru
      _
    %v44 = vld [vmem:[%s0] sm:$0xf]
    %v45 = vld [vmem:[%s0 + $0x4] sm:$0xf]
    %v46 = vld [vmem:[%s0 + $0x8] sm:$0xf]
    %v47 = vld [vmem:[%s0 + $0xc] sm:$0xf]
    %v48 = vunpack.c.l.bf16 %v44
    %v49 = vunpack.c.l.bf16 %v45
    %v50 = vunpack.c.l.bf16 %v46
    %v51 = vunpack.c.l.bf16 %v47
    %v52 = vld [vmem:[%s2] sm:$0x1]
    %v53 = vld [vmem:[#allocation2] sm:$0x1]
    %v54 = vmul.f32 %v52, %v53
    %v55 = vld [vmem:[%s1] sm:$0x1]
    %v57 = vlaneseq
    %v58 = vshrl.u32 %v57, 7
    %v59 = vsub.s32 0, %v58
    %v60 = vrot.slane %v55, %v59
    %v62 = vsub.f32 %v48, %v60
    %v63 = vsub.f32 %v49, %v60
    %v64 = vsub.f32 %v50, %v60
    %v65 = vsub.f32 %v51, %v60
    %v67 = vlaneseq
    %v68 = vshrl.u32 %v67, 7
    %v69 = vsub.s32 0, %v68
    %v70 = vrot.slane %v54, %v69
    %v72 = vmul.f32 %v62, %v70
    %v73 = vmul.f32 %v63, %v70
    %v74 = vmul.f32 %v64, %v70
    %v75 = vmul.f32 %v65, %v70
    %v76 = vld [vmem:[#allocation4] sm:$0x1]
    %v78 = vlaneseq
    %v79 = vshrl.u32 %v78, 7
    %v80 = vsub.s32 0, %v79
    %v81 = vrot.slane %v76, %v80
    %v83 = vadd.f32 %v72, %v81
    %v84 = vadd.f32 %v73, %v81
    %v85 = vadd.f32 %v74, %v81
    %v86 = vadd.f32 %v75, %v81
    %v87 = vmax.f32 %v83, 0.0
    %v88 = vmax.f32 %v84, 0.0
    %v89 = vmax.f32 %v85, 0.0
    %v90 = vmax.f32 %v86, 0.0
    %v91 = vpack.c.bf16 %v88, %v87
    %v92 = vpack.c.bf16 %v90, %v89
    %v95 = vunpack.c.l.b16 %v91
    %v96 = vunpack.c.h.b16 %v91
    %v97 = vunpack.c.l.b16 %v92
    %v98 = vunpack.c.h.b16 %v92
    %v99 = vpack.c.b16 %v95, %v95
    %v100 = vpack.c.b16 %v96, %v96
    %v101 = vpack.c.b16 %v97, %v97
    %v102 = vpack.c.b16 %v98, %v98
    %vm107 = vcmask 519168
    %108 = vst.msk [vmem:[%s5] sm:$0xf] %vm107, %v99
    %109 = vst.msk [vmem:[%s5 + $0x4] sm:$0xf] %vm107, %v100
    %110 = vst.msk [vmem:[%s5 + $0x8] sm:$0xf] %vm107, %v101
    %111 = vst.msk [vmem:[%s5 + $0xc] sm:$0xf] %vm107, %v102
    // Predicated region
    $region30: #{netg_forward.15} parent=1 // pred_check
      _
    $region31: #{netg_forward.15} parent=1 // pred_check_branch
      %113 = sbr.rel (0) target = $region33
    $region32: #{netg_forward.15} parent=1 // pred_region
      _
    $region33: #{netg_forward.15} parent=1 // pred_fallthru
      _
    // Predicated region
    $region34: #{netg_forward.15} parent=1 // pred_check
      _
    $region35: #{netg_forward.15} parent=1 // pred_check_branch
      %115 = sbr.rel (0) target = $region37
    $region36: #{netg_forward.15} parent=1 // pred_region
      _
    $region37: #{netg_forward.15} parent=1 // pred_fallthru
      _
    %116 = vsyncpa [#allocation3], 1
    %117 = vsyncpa [#allocation5], 1

// kernel: netg_forward.14
$region0: #{netg_forward.14}
  #allocation0 [shape = 'u32[]', space=smem, size = 0x4, offset = 0x4, fixed_abs, tag = 'smem constant byte address 0x4 - core index']
  #allocation1 [shape = 'u32[144,128]{1,0:T(1,128)}', space=vmem, size = 0x12000, scoped, tag = 'internal scratch']
  #allocation2 [shape = 'f32[1,64]{1,0:T(1,128)}', space=vmem, size = 0x200, scoped, tag = 'scratch operand']
  #allocation3 [shape = 'f32[1,64]{1,0:T(1,128)}', space=vmem, size = 0x200, scoped, tag = 'scratch operand']
  %s0 = inlined_call_operand.vmem [shape: bf16[32,64], index: 0, kind: input, shape index: {}]
  %s1 = inlined_call_operand.vmem [shape: f32[1,64], index: 1, kind: output, shape index: {0}]
  %s2 = inlined_call_operand.vmem [shape: f32[1,64], index: 2, kind: output, shape index: {1}]
  %3 = xla_tuple %s1, %s2
  %s4 = sld [smem:[#allocation0]]
  $region30: #{netg_forward.14} parent=0
    _
  %s6 = ssub.s32 1, %s4
  %s7 = scalar_select 0, %s6, %s4
  // Predicated region
  $region2: #{netg_forward.14} parent=0 // pred_check
    _
  $region3: #{netg_forward.14} parent=0 // pred_check_branch
    %9 = sbr.rel (0) target = $region5
  $region4: #{netg_forward.14} parent=0 // pred_region
    _
  $region5: #{netg_forward.14} parent=0 // pred_fallthru
    _
  %p10 = scmp.eq.s32.totalorder 0, 0
  // Predicated region
  $region6: #{netg_forward.14} parent=0 // pred_check
    %p11 = pneg %p10
  $region7: #{netg_forward.14} parent=0 // pred_check_branch
    %13 = sbr.rel (%p11) target = $region9
  $region8: #{netg_forward.14} parent=0 // pred_region
    %vm14 = vcmask 516096
    %15 = vst.msk [vmem:[#allocation2] sm:$0x1] %vm14, 0.0
    %16 = vst.msk [vmem:[#allocation3] sm:$0x1] %vm14, 0.0
  $region9: #{netg_forward.14} parent=0 // pred_fallthru
    _
  %v17 = vld [vmem:[%s0] sm:$0xf]
  %v18 = vld [vmem:[%s0 + $0x4] sm:$0xf]
  %v19 = vld [vmem:[%s0 + $0x8] sm:$0xf]
  %v20 = vld [vmem:[%s0 + $0xc] sm:$0xf]
  %v21 = vunpack.c.l.bf16 %v17
  %v22 = vunpack.c.l.bf16 %v18
  %v23 = vunpack.c.l.bf16 %v19
  %v24 = vunpack.c.l.bf16 %v20
  %v25 = vld [vmem:[#allocation2] sm:$0x1]
  %vm26 = vcmask 523264
  %v27 = vsel %vm26, %v21, 0.0
  %v28 = vsel %vm26, %v22, 0.0
  %v29 = vadd.f32 %v27, %v28
  %v30 = vsel %vm26, %v23, 0.0
  %v31 = vadd.f32 %v29, %v30
  %v32 = vsel %vm26, %v24, 0.0
  %v33 = vadd.f32 %v31, %v32
  %v34 = vrot.slane %v33, 4
  %v35 = vadd.f32 %v33, %v34
  %v36 = vrot.slane %v35, 2
  %v37 = vadd.f32 %v35, %v36
  %v38 = vrot.slane %v37, 1
  %v39 = vadd.f32 %v37, %v38
  %v40 = vadd.f32 %v25, %v39
  %vm41 = vcmask 516096
  %42 = vst.msk [vmem:[#allocation2] sm:$0x1] %vm41, %v40
  %v43 = vld [vmem:[#allocation3] sm:$0x1]
  %v44 = vmul.f32 %v21, %v21
  %v45 = vmul.f32 %v22, %v22
  %v46 = vmul.f32 %v23, %v23
  %v47 = vmul.f32 %v24, %v24
  %v48 = vsel %vm26, %v44, 0.0
  %v49 = vsel %vm26, %v45, 0.0
  %v50 = vadd.f32 %v48, %v49
  %v51 = vsel %vm26, %v46, 0.0
  %v52 = vadd.f32 %v50, %v51
  %v53 = vsel %vm26, %v47, 0.0
  %v54 = vadd.f32 %v52, %v53
  %v55 = vrot.slane %v54, 4
  %v56 = vadd.f32 %v54, %v55
  %v57 = vrot.slane %v56, 2
  %v58 = vadd.f32 %v56, %v57
  %v59 = vrot.slane %v58, 1
  %v60 = vadd.f32 %v58, %v59
  %v61 = vadd.f32 %v43, %v60
  %62 = vst.msk [vmem:[#allocation3] sm:$0x1] %vm41, %v61
  // Predicated region
  $region10: #{netg_forward.14} parent=0 // pred_check
    %p63 = pneg %p10
  $region11: #{netg_forward.14} parent=0 // pred_check_branch
    %65 = sbr.rel (%p63) target = $region13
  $region12: #{netg_forward.14} parent=0 // pred_region
    %v66 = vld [vmem:[#allocation2] sm:$0x1]
    %v67 = vmul.f32 %v66, 0.03125
    %v68 = vld [vmem:[#allocation3] sm:$0x1]
    %v69 = vmul.f32 %v68, 0.03125
    %v70 = vmul.f32 %v67, %v67
    %v71 = vsub.f32 %v69, %v70
    %v72 = vmax.f32 %v71, 0.0
    %73 = vst.msk [vmem:[%s1] sm:$0x1] %vm41, %v67
    %v74 = vadd.f32 %v72, 1e-05
    %v75 = vrsqrt.pop %v74
    %76 = vst.msk [vmem:[%s2] sm:$0x1] %vm41, %v75
  $region13: #{netg_forward.14} parent=0 // pred_fallthru
    _
  // Predicated region
  $region14: #{netg_forward.14} parent=0 // pred_check
    _
  $region15: #{netg_forward.14} parent=0 // pred_check_branch
    %78 = sbr.rel (0) target = $region17
  $region16: #{netg_forward.14} parent=0 // pred_region
    _
  $region17: #{netg_forward.14} parent=0 // pred_fallthru
    _
  // Predicated region
  $region18: #{netg_forward.14} parent=0 // pred_check
    _
  $region19: #{netg_forward.14} parent=0 // pred_check_branch
    %80 = sbr.rel (0) target = $region21
  $region20: #{netg_forward.14} parent=0 // pred_region
    _
  $region21: #{netg_forward.14} parent=0 // pred_fallthru
    _
  // Predicated region
  $region22: #{netg_forward.14} parent=0 // pred_check
    _
  $region23: #{netg_forward.14} parent=0 // pred_check_branch
    %82 = sbr.rel (0) target = $region25
  $region24: #{netg_forward.14} parent=0 // pred_region
    _
  $region25: #{netg_forward.14} parent=0 // pred_fallthru
    _
  // Predicated region
  $region26: #{netg_forward.14} parent=0 // pred_check
    _
  $region27: #{netg_forward.14} parent=0 // pred_check_branch
    %84 = sbr.rel (0) target = $region29
  $region28: #{netg_forward.14} parent=0 // pred_region
    _
  $region29: #{netg_forward.14} parent=0 // pred_fallthru
    _

// kernel: netg_forward.13
$region0: #{netg_forward.13}
  #allocation0 [shape = 'u32[]', space=smem, size = 0x4, offset = 0x4, fixed_abs, tag = 'smem constant byte address 0x4 - core index']
  #allocation1 [shape = 'u32[144,128]{1,0:T(1,128)}', space=vmem, size = 0x12000, scoped, tag = 'internal scratch']
  %s0 = inlined_call_operand.vmem [shape: bf16[8,128], index: 0, kind: input, shape index: {}]
  %s1 = inlined_call_operand.vmem [shape: bf16[128,1024], index: 1, kind: input, shape index: {}]
  %s2 = inlined_call_operand.vmem [shape: bf16[8,1024], index: 2, kind: output, shape index: {}]
  %s3 = sld [smem:[#allocation0]]
  $region18: #{netg_forward.13} parent=0
    _
  %s5 = ssub.s32 1, %s3
  %s6 = scalar_select 0, %s5, %s3
  // Predicated region
  $region2: #{netg_forward.13} parent=0 // pred_check
    _
  $region3: #{netg_forward.13} parent=0 // pred_check_branch
    %8 = sbr.rel (0) target = $region5
  $region4: #{netg_forward.13} parent=0 // pred_region
    _
  $region5: #{netg_forward.13} parent=0 // pred_fallthru
    _
  // Predicated region
  $region6: #{netg_forward.13} parent=0 // pred_check
    _
  $region7: #{netg_forward.13} parent=0 // pred_check_branch
    %10 = sbr.rel (0) target = $region9
  $region8: #{netg_forward.13} parent=0 // pred_region
    _
  $region9: #{netg_forward.13} parent=0 // pred_fallthru
    _
  %v12 = vld [vmem:[%s0] sm:$0xf]
  %v13 = vld [vmem:[%s1] sm:$0xff]
  %v14 = vld [vmem:[%s1 + $0x8] sm:$0xff]
  %v15 = vld [vmem:[%s1 + $0x10] sm:$0xff]
  %v16 = vld [vmem:[%s1 + $0x18] sm:$0xff]
  %v17 = vld [vmem:[%s1 + $0x20] sm:$0xff]
  %v18 = vld [vmem:[%s1 + $0x28] sm:$0xff]
  %v19 = vld [vmem:[%s1 + $0x30] sm:$0xff]
  %v20 = vld [vmem:[%s1 + $0x38] sm:$0xff]
  %v21 = vld [vmem:[%s1 + $0x40] sm:$0xff]
  %v22 = vld [vmem:[%s1 + $0x48] sm:$0xff]
  %v23 = vld [vmem:[%s1 + $0x50] sm:$0xff]
  %v24 = vld [vmem:[%s1 + $0x58] sm:$0xff]
  %v25 = vld [vmem:[%s1 + $0x60] sm:$0xff]
  %v26 = vld [vmem:[%s1 + $0x68] sm:$0xff]
  %v27 = vld [vmem:[%s1 + $0x70] sm:$0xff]
  %v28 = vld [vmem:[%s1 + $0x78] sm:$0xff]
  %v29 = vld [vmem:[%s1 + $0x80] sm:$0xff]
  %v30 = vld [vmem:[%s1 + $0x88] sm:$0xff]
  %v31 = vld [vmem:[%s1 + $0x90] sm:$0xff]
  %v32 = vld [vmem:[%s1 + $0x98] sm:$0xff]
  %v33 = vld [vmem:[%s1 + $0xa0] sm:$0xff]
  %v34 = vld [vmem:[%s1 + $0xa8] sm:$0xff]
  %v35 = vld [vmem:[%s1 + $0xb0] sm:$0xff]
  %v36 = vld [vmem:[%s1 + $0xb8] sm:$0xff]
  %v37 = vld [vmem:[%s1 + $0xc0] sm:$0xff]
  %v38 = vld [vmem:[%s1 + $0xc8] sm:$0xff]
  %v39 = vld [vmem:[%s1 + $0xd0] sm:$0xff]
  %v40 = vld [vmem:[%s1 + $0xd8] sm:$0xff]
  %v41 = vld [vmem:[%s1 + $0xe0] sm:$0xff]
  %v42 = vld [vmem:[%s1 + $0xe8] sm:$0xff]
  %v43 = vld [vmem:[%s1 + $0xf0] sm:$0xff]
  %v44 = vld [vmem:[%s1 + $0xf8] sm:$0xff]
  %v45 = vld [vmem:[%s1 + $0x100] sm:$0xff]
  %v46 = vld [vmem:[%s1 + $0x108] sm:$0xff]
  %v47 = vld [vmem:[%s1 + $0x110] sm:$0xff]
  %v48 = vld [vmem:[%s1 + $0x118] sm:$0xff]
  %v49 = vld [vmem:[%s1 + $0x120] sm:$0xff]
  %v50 = vld [vmem:[%s1 + $0x128] sm:$0xff]
  %v51 = vld [vmem:[%s1 + $0x130] sm:$0xff]
  %v52 = vld [vmem:[%s1 + $0x138] sm:$0xff]
  %v53 = vld [vmem:[%s1 + $0x140] sm:$0xff]
  %v54 = vld [vmem:[%s1 + $0x148] sm:$0xff]
  %v55 = vld [vmem:[%s1 + $0x150] sm:$0xff]
  %v56 = vld [vmem:[%s1 + $0x158] sm:$0xff]
  %v57 = vld [vmem:[%s1 + $0x160] sm:$0xff]
  %v58 = vld [vmem:[%s1 + $0x168] sm:$0xff]
  %v59 = vld [vmem:[%s1 + $0x170] sm:$0xff]
  %v60 = vld [vmem:[%s1 + $0x178] sm:$0xff]
  %v61 = vld [vmem:[%s1 + $0x180] sm:$0xff]
  %v62 = vld [vmem:[%s1 + $0x188] sm:$0xff]
  %v63 = vld [vmem:[%s1 + $0x190] sm:$0xff]
  %v64 = vld [vmem:[%s1 + $0x198] sm:$0xff]
  %v65 = vld [vmem:[%s1 + $0x1a0] sm:$0xff]
  %v66 = vld [vmem:[%s1 + $0x1a8] sm:$0xff]
  %v67 = vld [vmem:[%s1 + $0x1b0] sm:$0xff]
  %v68 = vld [vmem:[%s1 + $0x1b8] sm:$0xff]
  %v69 = vld [vmem:[%s1 + $0x1c0] sm:$0xff]
  %v70 = vld [vmem:[%s1 + $0x1c8] sm:$0xff]
  %v71 = vld [vmem:[%s1 + $0x1d0] sm:$0xff]
  %v72 = vld [vmem:[%s1 + $0x1d8] sm:$0xff]
  %v73 = vld [vmem:[%s1 + $0x1e0] sm:$0xff]
  %v74 = vld [vmem:[%s1 + $0x1e8] sm:$0xff]
  %v75 = vld [vmem:[%s1 + $0x1f0] sm:$0xff]
  %v76 = vld [vmem:[%s1 + $0x1f8] sm:$0xff]
  %v141 = vunpack.c.l.b16 %v13
  %v142 = vunpack.c.h.b16 %v13
  %v143 = vunpack.c.l.b16 %v14
  %v144 = vunpack.c.h.b16 %v14
  %v145 = vunpack.c.l.b16 %v15
  %v146 = vunpack.c.h.b16 %v15
  %v147 = vunpack.c.l.b16 %v16
  %v148 = vunpack.c.h.b16 %v16
  %v149 = vunpack.c.l.b16 %v17
  %v150 = vunpack.c.h.b16 %v17
  %v151 = vunpack.c.l.b16 %v18
  %v152 = vunpack.c.h.b16 %v18
  %v153 = vunpack.c.l.b16 %v19
  %v154 = vunpack.c.h.b16 %v19
  %v155 = vunpack.c.l.b16 %v20
  %v156 = vunpack.c.h.b16 %v20
  %v157 = vunpack.c.l.b16 %v21
  %v158 = vunpack.c.h.b16 %v21
  %v159 = vunpack.c.l.b16 %v22
  %v160 = vunpack.c.h.b16 %v22
  %v161 = vunpack.c.l.b16 %v23
  %v162 = vunpack.c.h.b16 %v23
  %v163 = vunpack.c.l.b16 %v24
  %v164 = vunpack.c.h.b16 %v24
  %v165 = vunpack.c.l.b16 %v25
  %v166 = vunpack.c.h.b16 %v25
  %v167 = vunpack.c.l.b16 %v26
  %v168 = vunpack.c.h.b16 %v26
  %v169 = vunpack.c.l.b16 %v27
  %v170 = vunpack.c.h.b16 %v27
  %v171 = vunpack.c.l.b16 %v28
  %v172 = vunpack.c.h.b16 %v28
  %v173 = vunpack.c.l.b16 %v29
  %v174 = vunpack.c.h.b16 %v29
  %v175 = vunpack.c.l.b16 %v30
  %v176 = vunpack.c.h.b16 %v30
  %v177 = vunpack.c.l.b16 %v31
  %v178 = vunpack.c.h.b16 %v31
  %v179 = vunpack.c.l.b16 %v32
  %v180 = vunpack.c.h.b16 %v32
  %v181 = vunpack.c.l.b16 %v33
  %v182 = vunpack.c.h.b16 %v33
  %v183 = vunpack.c.l.b16 %v34
  %v184 = vunpack.c.h.b16 %v34
  %v185 = vunpack.c.l.b16 %v35
  %v186 = vunpack.c.h.b16 %v35
  %v187 = vunpack.c.l.b16 %v36
  %v188 = vunpack.c.h.b16 %v36
  %v189 = vunpack.c.l.b16 %v37
  %v190 = vunpack.c.h.b16 %v37
  %v191 = vunpack.c.l.b16 %v38
  %v192 = vunpack.c.h.b16 %v38
  %v193 = vunpack.c.l.b16 %v39
  %v194 = vunpack.c.h.b16 %v39
  %v195 = vunpack.c.l.b16 %v40
  %v196 = vunpack.c.h.b16 %v40
  %v197 = vunpack.c.l.b16 %v41
  %v198 = vunpack.c.h.b16 %v41
  %v199 = vunpack.c.l.b16 %v42
  %v200 = vunpack.c.h.b16 %v42
  %v201 = vunpack.c.l.b16 %v43
  %v202 = vunpack.c.h.b16 %v43
  %v203 = vunpack.c.l.b16 %v44
  %v204 = vunpack.c.h.b16 %v44
  %v205 = vunpack.c.l.b16 %v45
  %v206 = vunpack.c.h.b16 %v45
  %v207 = vunpack.c.l.b16 %v46
  %v208 = vunpack.c.h.b16 %v46
  %v209 = vunpack.c.l.b16 %v47
  %v210 = vunpack.c.h.b16 %v47
  %v211 = vunpack.c.l.b16 %v48
  %v212 = vunpack.c.h.b16 %v48
  %v213 = vunpack.c.l.b16 %v49
  %v214 = vunpack.c.h.b16 %v49
  %v215 = vunpack.c.l.b16 %v50
  %v216 = vunpack.c.h.b16 %v50
  %v217 = vunpack.c.l.b16 %v51
  %v218 = vunpack.c.h.b16 %v51
  %v219 = vunpack.c.l.b16 %v52
  %v220 = vunpack.c.h.b16 %v52
  %v221 = vunpack.c.l.b16 %v53
  %v222 = vunpack.c.h.b16 %v53
  %v223 = vunpack.c.l.b16 %v54
  %v224 = vunpack.c.h.b16 %v54
  %v225 = vunpack.c.l.b16 %v55
  %v226 = vunpack.c.h.b16 %v55
  %v227 = vunpack.c.l.b16 %v56
  %v228 = vunpack.c.h.b16 %v56
  %v229 = vunpack.c.l.b16 %v57
  %v230 = vunpack.c.h.b16 %v57
  %v231 = vunpack.c.l.b16 %v58
  %v232 = vunpack.c.h.b16 %v58
  %v233 = vunpack.c.l.b16 %v59
  %v234 = vunpack.c.h.b16 %v59
  %v235 = vunpack.c.l.b16 %v60
  %v236 = vunpack.c.h.b16 %v60
  %v237 = vunpack.c.l.b16 %v61
  %v238 = vunpack.c.h.b16 %v61
  %v239 = vunpack.c.l.b16 %v62
  %v240 = vunpack.c.h.b16 %v62
  %v241 = vunpack.c.l.b16 %v63
  %v242 = vunpack.c.h.b16 %v63
  %v243 = vunpack.c.l.b16 %v64
  %v244 = vunpack.c.h.b16 %v64
  %v245 = vunpack.c.l.b16 %v65
  %v246 = vunpack.c.h.b16 %v65
  %v247 = vunpack.c.l.b16 %v66
  %v248 = vunpack.c.h.b16 %v66
  %v249 = vunpack.c.l.b16 %v67
  %v250 = vunpack.c.h.b16 %v67
  %v251 = vunpack.c.l.b16 %v68
  %v252 = vunpack.c.h.b16 %v68
  %v253 = vunpack.c.l.b16 %v69
  %v254 = vunpack.c.h.b16 %v69
  %v255 = vunpack.c.l.b16 %v70
  %v256 = vunpack.c.h.b16 %v70
  %v257 = vunpack.c.l.b16 %v71
  %v258 = vunpack.c.h.b16 %v71
  %v259 = vunpack.c.l.b16 %v72
  %v260 = vunpack.c.h.b16 %v72
  %v261 = vunpack.c.l.b16 %v73
  %v262 = vunpack.c.h.b16 %v73
  %v263 = vunpack.c.l.b16 %v74
  %v264 = vunpack.c.h.b16 %v74
  %v265 = vunpack.c.l.b16 %v75
  %v266 = vunpack.c.h.b16 %v75
  %v267 = vunpack.c.l.b16 %v76
  %v268 = vunpack.c.h.b16 %v76
  %v269 = vpack.c.b16 %v149, %v141
  %v270 = vpack.c.b16 %v150, %v142
  %v271 = vpack.c.b16 %v151, %v143
  %v272 = vpack.c.b16 %v152, %v144
  %v273 = vpack.c.b16 %v153, %v145
  %v274 = vpack.c.b16 %v154, %v146
  %v275 = vpack.c.b16 %v155, %v147
  %v276 = vpack.c.b16 %v156, %v148
  %v277 = vpack.c.b16 %v165, %v157
  %v278 = vpack.c.b16 %v166, %v158
  %v279 = vpack.c.b16 %v167, %v159
  %v280 = vpack.c.b16 %v168, %v160
  %v281 = vpack.c.b16 %v169, %v161
  %v282 = vpack.c.b16 %v170, %v162
  %v283 = vpack.c.b16 %v171, %v163
  %v284 = vpack.c.b16 %v172, %v164
  %v285 = vpack.c.b16 %v181, %v173
  %v286 = vpack.c.b16 %v182, %v174
  %v287 = vpack.c.b16 %v183, %v175
  %v288 = vpack.c.b16 %v184, %v176
  %v289 = vpack.c.b16 %v185, %v177
  %v290 = vpack.c.b16 %v186, %v178
  %v291 = vpack.c.b16 %v187, %v179
  %v292 = vpack.c.b16 %v188, %v180
  %v293 = vpack.c.b16 %v197, %v189
  %v294 = vpack.c.b16 %v198, %v190
  %v295 = vpack.c.b16 %v199, %v191
  %v296 = vpack.c.b16 %v200, %v192
  %v297 = vpack.c.b16 %v201, %v193
  %v298 = vpack.c.b16 %v202, %v194
  %v299 = vpack.c.b16 %v203, %v195
  %v300 = vpack.c.b16 %v204, %v196
  %v301 = vpack.c.b16 %v213, %v205
  %v302 = vpack.c.b16 %v214, %v206
  %v303 = vpack.c.b16 %v215, %v207
  %v304 = vpack.c.b16 %v216, %v208
  %v305 = vpack.c.b16 %v217, %v209
  %v306 = vpack.c.b16 %v218, %v210
  %v307 = vpack.c.b16 %v219, %v211
  %v308 = vpack.c.b16 %v220, %v212
  %v309 = vpack.c.b16 %v229, %v221
  %v310 = vpack.c.b16 %v230, %v222
  %v311 = vpack.c.b16 %v231, %v223
  %v312 = vpack.c.b16 %v232, %v224
  %v313 = vpack.c.b16 %v233, %v225
  %v314 = vpack.c.b16 %v234, %v226
  %v315 = vpack.c.b16 %v235, %v227
  %v316 = vpack.c.b16 %v236, %v228
  %v317 = vpack.c.b16 %v245, %v237
  %v318 = vpack.c.b16 %v246, %v238
  %v319 = vpack.c.b16 %v247, %v239
  %v320 = vpack.c.b16 %v248, %v240
  %v321 = vpack.c.b16 %v249, %v241
  %v322 = vpack.c.b16 %v250, %v242
  %v323 = vpack.c.b16 %v251, %v243
  %v324 = vpack.c.b16 %v252, %v244
  %v325 = vpack.c.b16 %v261, %v253
  %v326 = vpack.c.b16 %v262, %v254
  %v327 = vpack.c.b16 %v263, %v255
  %v328 = vpack.c.b16 %v264, %v256
  %v329 = vpack.c.b16 %v265, %v257
  %v330 = vpack.c.b16 %v266, %v258
  %v331 = vpack.c.b16 %v267, %v259
  %v332 = vpack.c.b16 %v268, %v260
  %397 = vmatprep.subr.bf16.mxu0 %v270
  %398 = vmatpush1.bf16.msra.mxu0 %v269
  %399 = vmatprep.subr.bf16.mxu0 %v278
  %400 = vmatpush1.bf16.msra.mxu0 %v277
  %401 = vmatprep.subr.bf16.mxu0 %v286
  %402 = vmatpush1.bf16.msra.mxu0 %v285
  %403 = vmatprep.subr.bf16.mxu0 %v294
  %404 = vmatpush1.bf16.msra.mxu0 %v293
  %405 = vmatprep.subr.bf16.mxu0 %v302
  %406 = vmatpush1.bf16.msra.mxu0 %v301
  %407 = vmatprep.subr.bf16.mxu0 %v310
  %408 = vmatpush1.bf16.msra.mxu0 %v309
  %409 = vmatprep.subr.bf16.mxu0 %v318
  %410 = vmatpush1.bf16.msra.mxu0 %v317
  %411 = vmatprep.subr.bf16.mxu0 %v326
  %412 = vmatpush1.bf16.msra.mxu0 %v325
  %413 = vmatprep.subr.bf16.mxu0 0
  %414 = vmatpush1.bf16.msra.mxu0 0
  %415 = vmatprep.subr.bf16.mxu0 0
  %416 = vmatpush1.bf16.msra.mxu0 0
  %417 = vmatprep.subr.bf16.mxu0 0
  %418 = vmatpush1.bf16.msra.mxu0 0
  %419 = vmatprep.subr.bf16.mxu0 0
  %420 = vmatpush1.bf16.msra.mxu0 0
  %421 = vmatprep.subr.bf16.mxu0 0
  %422 = vmatpush1.bf16.msra.mxu0 0
  %423 = vmatprep.subr.bf16.mxu0 0
  %424 = vmatpush1.bf16.msra.mxu0 0
  %425 = vmatprep.subr.bf16.mxu0 0
  %426 = vmatpush1.bf16.msra.mxu0 0
  %427 = vmatprep.subr.bf16.mxu0 0
  %428 = vmatpush1.bf16.msra.mxu0 0
  %429 = vmatprep.mubr.bf16.mxu0 0
  %430 = vmatmul.mubr.bf16.gmra.mrb[0].mxu0 %v12
  %v431 = vpop.f32.mrb[0].mxu0
  %v432 = vadd.f32 0.0, %v431
  %v433 = vpop.f32.mrb[0].mxu0
  %v434 = vadd.f32 0.0, %v433
  %v435 = vpop.f32.mrb[0].mxu0
  %v436 = vpop.f32.mrb[0].mxu0
  %437 = vdwg.mxu0
  %438 = vmatprep.subr.bf16.mxu0 %v272
  %439 = vmatpush1.bf16.msra.mxu0 %v271
  %440 = vmatprep.subr.bf16.mxu0 %v280
  %441 = vmatpush1.bf16.msra.mxu0 %v279
  %442 = vmatprep.subr.bf16.mxu0 %v288
  %443 = vmatpush1.bf16.msra.mxu0 %v287
  %444 = vmatprep.subr.bf16.mxu0 %v296
  %445 = vmatpush1.bf16.msra.mxu0 %v295
  %446 = vmatprep.subr.bf16.mxu0 %v304
  %447 = vmatpush1.bf16.msra.mxu0 %v303
  %448 = vmatprep.subr.bf16.mxu0 %v312
  %449 = vmatpush1.bf16.msra.mxu0 %v311
  %450 = vmatprep.subr.bf16.mxu0 %v320
  %451 = vmatpush1.bf16.msra.mxu0 %v319
  %452 = vmatprep.subr.bf16.mxu0 %v328
  %453 = vmatpush1.bf16.msra.mxu0 %v327
  %454 = vmatprep.subr.bf16.mxu0 0
  %455 = vmatpush1.bf16.msra.mxu0 0
  %456 = vmatprep.subr.bf16.mxu0 0
  %457 = vmatpush1.bf16.msra.mxu0 0
  %458 = vmatprep.subr.bf16.mxu0 0
  %459 = vmatpush1.bf16.msra.mxu0 0
  %460 = vmatprep.subr.bf16.mxu0 0
  %461 = vmatpush1.bf16.msra.mxu0 0
  %462 = vmatprep.subr.bf16.mxu0 0
  %463 = vmatpush1.bf16.msra.mxu0 0
  %464 = vmatprep.subr.bf16.mxu0 0
  %465 = vmatpush1.bf16.msra.mxu0 0
  %466 = vmatprep.subr.bf16.mxu0 0
  %467 = vmatpush1.bf16.msra.mxu0 0
  %468 = vmatprep.subr.bf16.mxu0 0
  %469 = vmatpush1.bf16.msra.mxu0 0
  %470 = vmatprep.mubr.bf16.mxu0 0
  %471 = vmatmul.mubr.bf16.gmra.mrb[0].mxu0 %v12
  %v472 = vpop.f32.mrb[0].mxu0
  %v473 = vadd.f32 0.0, %v472
  %v474 = vpop.f32.mrb[0].mxu0
  %v475 = vadd.f32 0.0, %v474
  %v476 = vpop.f32.mrb[0].mxu0
  %v477 = vpop.f32.mrb[0].mxu0
  %478 = vdwg.mxu0
  %479 = vmatprep.subr.bf16.mxu0 %v274
  %480 = vmatpush1.bf16.msra.mxu0 %v273
  %481 = vmatprep.subr.bf16.mxu0 %v282
  %482 = vmatpush1.bf16.msra.mxu0 %v281
  %483 = vmatprep.subr.bf16.mxu0 %v290
  %484 = vmatpush1.bf16.msra.mxu0 %v289
  %485 = vmatprep.subr.bf16.mxu0 %v298
  %486 = vmatpush1.bf16.msra.mxu0 %v297
  %487 = vmatprep.subr.bf16.mxu0 %v306
  %488 = vmatpush1.bf16.msra.mxu0 %v305
  %489 = vmatprep.subr.bf16.mxu0 %v314
  %490 = vmatpush1.bf16.msra.mxu0 %v313
  %491 = vmatprep.subr.bf16.mxu0 %v322
  %492 = vmatpush1.bf16.msra.mxu0 %v321
  %493 = vmatprep.subr.bf16.mxu0 %v330
  %494 = vmatpush1.bf16.msra.mxu0 %v329
  %495 = vmatprep.subr.bf16.mxu0 0
  %496 = vmatpush1.bf16.msra.mxu0 0
  %497 = vmatprep.subr.bf16.mxu0 0
  %498 = vmatpush1.bf16.msra.mxu0 0
  %499 = vmatprep.subr.bf16.mxu0 0
  %500 = vmatpush1.bf16.msra.mxu0 0
  %501 = vmatprep.subr.bf16.mxu0 0
  %502 = vmatpush1.bf16.msra.mxu0 0
  %503 = vmatprep.subr.bf16.mxu0 0
  %504 = vmatpush1.bf16.msra.mxu0 0
  %505 = vmatprep.subr.bf16.mxu0 0
  %506 = vmatpush1.bf16.msra.mxu0 0
  %507 = vmatprep.subr.bf16.mxu0 0
  %508 = vmatpush1.bf16.msra.mxu0 0
  %509 = vmatprep.subr.bf16.mxu0 0
  %510 = vmatpush1.bf16.msra.mxu0 0
  %511 = vmatprep.mubr.bf16.mxu0 0
  %512 = vmatmul.mubr.bf16.gmra.mrb[0].mxu0 %v12
  %v513 = vpop.f32.mrb[0].mxu0
  %v514 = vadd.f32 0.0, %v513
  %v515 = vpop.f32.mrb[0].mxu0
  %v516 = vadd.f32 0.0, %v515
  %v517 = vpop.f32.mrb[0].mxu0
  %v518 = vpop.f32.mrb[0].mxu0
  %519 = vdwg.mxu0
  %520 = vmatprep.subr.bf16.mxu0 %v276
  %521 = vmatpush1.bf16.msra.mxu0 %v275
  %522 = vmatprep.subr.bf16.mxu0 %v284
  %523 = vmatpush1.bf16.msra.mxu0 %v283
  %524 = vmatprep.subr.bf16.mxu0 %v292
  %525 = vmatpush1.bf16.msra.mxu0 %v291
  %526 = vmatprep.subr.bf16.mxu0 %v300
  %527 = vmatpush1.bf16.msra.mxu0 %v299
  %528 = vmatprep.subr.bf16.mxu0 %v308
  %529 = vmatpush1.bf16.msra.mxu0 %v307
  %530 = vmatprep.subr.bf16.mxu0 %v316
  %531 = vmatpush1.bf16.msra.mxu0 %v315
  %532 = vmatprep.subr.bf16.mxu0 %v324
  %533 = vmatpush1.bf16.msra.mxu0 %v323
  %534 = vmatprep.subr.bf16.mxu0 %v332
  %535 = vmatpush1.bf16.msra.mxu0 %v331
  %536 = vmatprep.subr.bf16.mxu0 0
  %537 = vmatpush1.bf16.msra.mxu0 0
  %538 = vmatprep.subr.bf16.mxu0 0
  %539 = vmatpush1.bf16.msra.mxu0 0
  %540 = vmatprep.subr.bf16.mxu0 0
  %541 = vmatpush1.bf16.msra.mxu0 0
  %542 = vmatprep.subr.bf16.mxu0 0
  %543 = vmatpush1.bf16.msra.mxu0 0
  %544 = vmatprep.subr.bf16.mxu0 0
  %545 = vmatpush1.bf16.msra.mxu0 0
  %546 = vmatprep.subr.bf16.mxu0 0
  %547 = vmatpush1.bf16.msra.mxu0 0
  %548 = vmatprep.subr.bf16.mxu0 0
  %549 = vmatpush1.bf16.msra.mxu0 0
  %550 = vmatprep.subr.bf16.mxu0 0
  %551 = vmatpush1.bf16.msra.mxu0 0
  %552 = vmatprep.mubr.bf16.mxu0 0
  %553 = vmatmul.mubr.bf16.gmra.mrb[0].mxu0 %v12
  %v554 = vpop.f32.mrb[0].mxu0
  %v555 = vadd.f32 0.0, %v554
  %v556 = vpop.f32.mrb[0].mxu0
  %v557 = vadd.f32 0.0, %v556
  %v558 = vpop.f32.mrb[0].mxu0
  %v559 = vpop.f32.mrb[0].mxu0
  %560 = vdwg.mxu0
  %v561 = vpack.c.bf16 %v432, %v432
  %v562 = vpack.c.bf16 %v434, %v434
  %v563 = vpack.c.bf16 %v473, %v473
  %v564 = vpack.c.bf16 %v475, %v475
  %v565 = vpack.c.bf16 %v514, %v514
  %v566 = vpack.c.bf16 %v516, %v516
  %v567 = vpack.c.bf16 %v555, %v555
  %v568 = vpack.c.bf16 %v557, %v557
  %v577 = vunpack.c.l.b16 %v561
  %v578 = vunpack.c.l.b16 %v562
  %v579 = vunpack.c.l.b16 %v563
  %v580 = vunpack.c.l.b16 %v564
  %v581 = vunpack.c.l.b16 %v565
  %v582 = vunpack.c.l.b16 %v566
  %v583 = vunpack.c.l.b16 %v567
  %v584 = vunpack.c.l.b16 %v568
  %v585 = vpack.c.b16 %v578, %v577
  %v586 = vpack.c.b16 %v580, %v579
  %v587 = vpack.c.b16 %v582, %v581
  %v588 = vpack.c.b16 %v584, %v583
  %593 = vst [vmem:[%s2] sm:$0xff] %v585
  %594 = vst [vmem:[%s2 + $0x8] sm:$0xff] %v586
  %595 = vst [vmem:[%s2 + $0x10] sm:$0xff] %v587
  %596 = vst [vmem:[%s2 + $0x18] sm:$0xff] %v588
  // Predicated region
  $region10: #{netg_forward.13} parent=0 // pred_check
    _
  $region11: #{netg_forward.13} parent=0 // pred_check_branch
    %598 = sbr.rel (0) target = $region13
  $region12: #{netg_forward.13} parent=0 // pred_region
    _
  $region13: #{netg_forward.13} parent=0 // pred_fallthru
    _
  // Predicated region
  $region14: #{netg_forward.13} parent=0 // pred_check
    _
  $region15: #{netg_forward.13} parent=0 // pred_check_branch
    %600 = sbr.rel (0) target = $region17
  $region16: #{netg_forward.13} parent=0 // pred_region
    _
  $region17: #{netg_forward.13} parent=0 // pred_fallthru
    _

// kernel: netg_forward.16
$region0: #{netg_forward.16}
  #allocation0 [shape = 'u32[]', space=smem, size = 0x4, offset = 0x4, fixed_abs, tag = 'smem constant byte address 0x4 - core index']
  #allocation1 [shape = 'u32[144,128]{1,0:T(1,128)}', space=vmem, size = 0x12000, scoped, tag = 'internal scratch']
  %s0 = inlined_call_operand.vmem [shape: bf16[56,256], index: 0, kind: input, shape index: {}]
  %s1 = inlined_call_operand.vmem [shape: bf16[256,128], index: 1, kind: input, shape index: {}]
  %s2 = inlined_call_operand.vmem [shape: bf16[56,128], index: 2, kind: output, shape index: {}]
  %s3 = sld [smem:[#allocation0]]
  $region18: #{netg_forward.16} parent=0
    _
  %s5 = ssub.s32 1, %s3
  %s6 = scalar_select 0, %s5, %s3
  // Predicated region
  $region2: #{netg_forward.16} parent=0 // pred_check
    _
  $region3: #{netg_forward.16} parent=0 // pred_check_branch
    %8 = sbr.rel (0) target = $region5
  $region4: #{netg_forward.16} parent=0 // pred_region
    _
  $region5: #{netg_forward.16} parent=0 // pred_fallthru
    _
  // Predicated region
  $region6: #{netg_forward.16} parent=0 // pred_check
    _
  $region7: #{netg_forward.16} parent=0 // pred_check_branch
    %10 = sbr.rel (0) target = $region9
  $region8: #{netg_forward.16} parent=0 // pred_region
    _
  $region9: #{netg_forward.16} parent=0 // pred_fallthru
    _
  %v12 = vld [vmem:[%s0] sm:$0xff]
  %v13 = vld [vmem:[%s0 + $0x8] sm:$0xff]
  %v14 = vld [vmem:[%s0 + $0x10] sm:$0xff]
  %v15 = vld [vmem:[%s0 + $0x18] sm:$0xff]
  %v16 = vld [vmem:[%s0 + $0x20] sm:$0xff]
  %v17 = vld [vmem:[%s0 + $0x28] sm:$0xff]
  %v18 = vld [vmem:[%s0 + $0x30] sm:$0xff]
  %v19 = vld [vmem:[%s1] sm:$0xf]
  %v20 = vld [vmem:[%s1 + $0x4] sm:$0xf]
  %v21 = vld [vmem:[%s1 + $0x8] sm:$0xf]
  %v22 = vld [vmem:[%s1 + $0xc] sm:$0xf]
  %v23 = vld [vmem:[%s1 + $0x10] sm:$0xf]
  %v24 = vld [vmem:[%s1 + $0x14] sm:$0xf]
  %v25 = vld [vmem:[%s1 + $0x18] sm:$0xf]
  %v26 = vld [vmem:[%s1 + $0x1c] sm:$0xf]
  %v27 = vld [vmem:[%s1 + $0x20] sm:$0xf]
  %v28 = vld [vmem:[%s1 + $0x24] sm:$0xf]
  %v29 = vld [vmem:[%s1 + $0x28] sm:$0xf]
  %v30 = vld [vmem:[%s1 + $0x2c] sm:$0xf]
  %v31 = vld [vmem:[%s1 + $0x30] sm:$0xf]
  %v32 = vld [vmem:[%s1 + $0x34] sm:$0xf]
  %v33 = vld [vmem:[%s1 + $0x38] sm:$0xf]
  %v34 = vld [vmem:[%s1 + $0x3c] sm:$0xf]
  %v35 = vld [vmem:[%s1 + $0x40] sm:$0xf]
  %v36 = vld [vmem:[%s1 + $0x44] sm:$0xf]
  %v37 = vld [vmem:[%s1 + $0x48] sm:$0xf]
  %v38 = vld [vmem:[%s1 + $0x4c] sm:$0xf]
  %v39 = vld [vmem:[%s1 + $0x50] sm:$0xf]
  %v40 = vld [vmem:[%s1 + $0x54] sm:$0xf]
  %v41 = vld [vmem:[%s1 + $0x58] sm:$0xf]
  %v42 = vld [vmem:[%s1 + $0x5c] sm:$0xf]
  %v43 = vld [vmem:[%s1 + $0x60] sm:$0xf]
  %v44 = vld [vmem:[%s1 + $0x64] sm:$0xf]
  %v45 = vld [vmem:[%s1 + $0x68] sm:$0xf]
  %v46 = vld [vmem:[%s1 + $0x6c] sm:$0xf]
  %v47 = vld [vmem:[%s1 + $0x70] sm:$0xf]
  %v48 = vld [vmem:[%s1 + $0x74] sm:$0xf]
  %v49 = vld [vmem:[%s1 + $0x78] sm:$0xf]
  %v50 = vld [vmem:[%s1 + $0x7c] sm:$0xf]
  %v58 = vunpack.c.l.b16 %v12
  %v59 = vunpack.c.h.b16 %v12
  %v60 = vunpack.c.l.b16 %v13
  %v61 = vunpack.c.h.b16 %v13
  %v62 = vunpack.c.l.b16 %v14
  %v63 = vunpack.c.h.b16 %v14
  %v64 = vunpack.c.l.b16 %v15
  %v65 = vunpack.c.h.b16 %v15
  %v66 = vunpack.c.l.b16 %v16
  %v67 = vunpack.c.h.b16 %v16
  %v68 = vunpack.c.l.b16 %v17
  %v69 = vunpack.c.h.b16 %v17
  %v70 = vunpack.c.l.b16 %v18
  %v71 = vunpack.c.h.b16 %v18
  %v72 = vpack.c.b16 %v60, %v58
  %v73 = vpack.c.b16 %v61, %v59
  %v74 = vpack.c.b16 %v64, %v62
  %v75 = vpack.c.b16 %v65, %v63
  %v76 = vpack.c.b16 %v68, %v66
  %v77 = vpack.c.b16 %v69, %v67
  %v78 = vpack.c.b16 %v70, %v70
  %v79 = vpack.c.b16 %v71, %v71
  %v120 = vunpack.c.l.b16 %v19
  %v121 = vunpack.c.l.b16 %v20
  %v122 = vunpack.c.l.b16 %v21
  %v123 = vunpack.c.l.b16 %v22
  %v124 = vunpack.c.l.b16 %v23
  %v125 = vunpack.c.l.b16 %v24
  %v126 = vunpack.c.l.b16 %v25
  %v127 = vunpack.c.l.b16 %v26
  %v128 = vunpack.c.l.b16 %v27
  %v129 = vunpack.c.l.b16 %v28
  %v130 = vunpack.c.l.b16 %v29
  %v131 = vunpack.c.l.b16 %v30
  %v132 = vunpack.c.l.b16 %v31
  %v133 = vunpack.c.l.b16 %v32
  %v134 = vunpack.c.l.b16 %v33
  %v135 = vunpack.c.l.b16 %v34
  %v136 = vunpack.c.l.b16 %v35
  %v137 = vunpack.c.l.b16 %v36
  %v138 = vunpack.c.l.b16 %v37
  %v139 = vunpack.c.l.b16 %v38
  %v140 = vunpack.c.l.b16 %v39
  %v141 = vunpack.c.l.b16 %v40
  %v142 = vunpack.c.l.b16 %v41
  %v143 = vunpack.c.l.b16 %v42
  %v144 = vunpack.c.l.b16 %v43
  %v145 = vunpack.c.l.b16 %v44
  %v146 = vunpack.c.l.b16 %v45
  %v147 = vunpack.c.l.b16 %v46
  %v148 = vunpack.c.l.b16 %v47
  %v149 = vunpack.c.l.b16 %v48
  %v150 = vunpack.c.l.b16 %v49
  %v151 = vunpack.c.l.b16 %v50
  %v152 = vpack.c.b16 %v121, %v120
  %v153 = vpack.c.b16 %v123, %v122
  %v154 = vpack.c.b16 %v125, %v124
  %v155 = vpack.c.b16 %v127, %v126
  %v156 = vpack.c.b16 %v129, %v128
  %v157 = vpack.c.b16 %v131, %v130
  %v158 = vpack.c.b16 %v133, %v132
  %v159 = vpack.c.b16 %v135, %v134
  %v160 = vpack.c.b16 %v137, %v136
  %v161 = vpack.c.b16 %v139, %v138
  %v162 = vpack.c.b16 %v141, %v140
  %v163 = vpack.c.b16 %v143, %v142
  %v164 = vpack.c.b16 %v145, %v144
  %v165 = vpack.c.b16 %v147, %v146
  %v166 = vpack.c.b16 %v149, %v148
  %v167 = vpack.c.b16 %v151, %v150
  %184 = vmatprep.subr.bf16.mxu0 0
  %185 = vmatpush1.bf16.msra.mxu0 %v152
  %186 = vmatprep.subr.bf16.mxu0 0
  %187 = vmatpush1.bf16.msra.mxu0 %v153
  %188 = vmatprep.subr.bf16.mxu0 0
  %189 = vmatpush1.bf16.msra.mxu0 %v154
  %190 = vmatprep.subr.bf16.mxu0 0
  %191 = vmatpush1.bf16.msra.mxu0 %v155
  %192 = vmatprep.subr.bf16.mxu0 0
  %193 = vmatpush1.bf16.msra.mxu0 %v156
  %194 = vmatprep.subr.bf16.mxu0 0
  %195 = vmatpush1.bf16.msra.mxu0 %v157
  %196 = vmatprep.subr.bf16.mxu0 0
  %197 = vmatpush1.bf16.msra.mxu0 %v158
  %198 = vmatprep.subr.bf16.mxu0 0
  %199 = vmatpush1.bf16.msra.mxu0 %v159
  %200 = vmatprep.subr.bf16.mxu0 0
  %201 = vmatpush1.bf16.msra.mxu0 %v160
  %202 = vmatprep.subr.bf16.mxu0 0
  %203 = vmatpush1.bf16.msra.mxu0 %v161
  %204 = vmatprep.subr.bf16.mxu0 0
  %205 = vmatpush1.bf16.msra.mxu0 %v162
  %206 = vmatprep.subr.bf16.mxu0 0
  %207 = vmatpush1.bf16.msra.mxu0 %v163
  %208 = vmatprep.subr.bf16.mxu0 0
  %209 = vmatpush1.bf16.msra.mxu0 %v164
  %210 = vmatprep.subr.bf16.mxu0 0
  %211 = vmatpush1.bf16.msra.mxu0 %v165
  %212 = vmatprep.subr.bf16.mxu0 0
  %213 = vmatpush1.bf16.msra.mxu0 %v166
  %214 = vmatprep.subr.bf16.mxu0 0
  %215 = vmatpush1.bf16.msra.mxu0 %v167
  %216 = vmatprep.mubr.bf16.mxu0 %v73
  %217 = vmatmul.mubr.bf16.gmra.mrb[0].mxu0 %v72
  %v218 = vpop.f32.mrb[0].mxu0
  %v219 = vadd.f32 0.0, %v218
  %v220 = vpop.f32.mrb[0].mxu0
  %v221 = vpop.f32.mrb[0].mxu0
  %v222 = vadd.f32 0.0, %v221
  %v223 = vpop.f32.mrb[0].mxu0
  %224 = vmatprep.mubr.bf16.mxu0 %v75
  %225 = vmatmul.mubr.bf16.gmra.mrb[0].mxu0 %v74
  %v226 = vpop.f32.mrb[0].mxu0
  %v227 = vadd.f32 0.0, %v226
  %v228 = vpop.f32.mrb[0].mxu0
  %v229 = vpop.f32.mrb[0].mxu0
  %v230 = vadd.f32 0.0, %v229
  %v231 = vpop.f32.mrb[0].mxu0
  %232 = vmatprep.mubr.bf16.mxu0 %v77
  %233 = vmatmul.mubr.bf16.gmra.mrb[0].mxu0 %v76
  %v234 = vpop.f32.mrb[0].mxu0
  %v235 = vadd.f32 0.0, %v234
  %v236 = vpop.f32.mrb[0].mxu0
  %v237 = vpop.f32.mrb[0].mxu0
  %v238 = vadd.f32 0.0, %v237
  %v239 = vpop.f32.mrb[0].mxu0
  %240 = vmatprep.mubr.bf16.mxu0 %v79
  %241 = vmatmul.mubr.bf16.gmra.mrb[0].mxu0 %v78
  %v242 = vpop.f32.mrb[0].mxu0
  %v243 = vadd.f32 0.0, %v242
  %v244 = vpop.f32.mrb[0].mxu0
  %v245 = vpop.f32.mrb[0].mxu0
  %v246 = vpop.f32.mrb[0].mxu0
  %247 = vdwg.mxu0
  %v248 = vpack.c.bf16 %v222, %v219
  %v249 = vpack.c.bf16 %v230, %v227
  %v250 = vpack.c.bf16 %v238, %v235
  %v251 = vpack.c.bf16 %v243, %v243
  %v256 = vunpack.c.l.b16 %v248
  %v257 = vunpack.c.h.b16 %v248
  %v258 = vunpack.c.l.b16 %v249
  %v259 = vunpack.c.h.b16 %v249
  %v260 = vunpack.c.l.b16 %v250
  %v261 = vunpack.c.h.b16 %v250
  %v262 = vunpack.c.l.b16 %v251
  %v263 = vpack.c.b16 %v256, %v256
  %v264 = vpack.c.b16 %v257, %v257
  %v265 = vpack.c.b16 %v258, %v258
  %v266 = vpack.c.b16 %v259, %v259
  %v267 = vpack.c.b16 %v260, %v260
  %v268 = vpack.c.b16 %v261, %v261
  %v269 = vpack.c.b16 %v262, %v262
  %277 = vst [vmem:[%s2] sm:$0xf] %v263
  %278 = vst [vmem:[%s2 + $0x4] sm:$0xf] %v264
  %279 = vst [vmem:[%s2 + $0x8] sm:$0xf] %v265
  %280 = vst [vmem:[%s2 + $0xc] sm:$0xf] %v266
  %281 = vst [vmem:[%s2 + $0x10] sm:$0xf] %v267
  %282 = vst [vmem:[%s2 + $0x14] sm:$0xf] %v268
  %283 = vst [vmem:[%s2 + $0x18] sm:$0xf] %v269
  // Predicated region
  $region10: #{netg_forward.16} parent=0 // pred_check
    _
  $region11: #{netg_forward.16} parent=0 // pred_check_branch
    %285 = sbr.rel (0) target = $region13
  $region12: #{netg_forward.16} parent=0 // pred_region
    _
  $region13: #{netg_forward.16} parent=0 // pred_fallthru
    _
  // Predicated region
  $region14: #{netg_forward.16} parent=0 // pred_check
    _
  $region15: #{netg_forward.16} parent=0 // pred_check_branch
    %287 = sbr.rel (0) target = $region17
  $region16: #{netg_forward.16} parent=0 // pred_region
    _
  $region17: #{netg_forward.16} parent=0 // pred_fallthru
    _

// kernel: netg_forward.17
$region0: #{netg_forward.17}
  #allocation0 [shape = 'u32[]', space=smem, size = 0x4, offset = 0x4, fixed_abs, tag = 'smem constant byte address 0x4 - core index']
  #allocation1 [shape = 'u32[144,128]{1,0:T(1,128)}', space=vmem, size = 0x12000, scoped, tag = 'internal scratch']
  #allocation2 [shape = 'f32[1,32]{1,0:T(1,128)}', space=vmem, size = 0x200, scoped, tag = 'scratch operand']
  #allocation3 [shape = 'f32[1,32]{1,0:T(1,128)}', space=vmem, size = 0x200, scoped, tag = 'scratch operand']
  %s0 = inlined_call_operand.vmem [shape: bf16[128,32], index: 0, kind: input, shape index: {}]
  %s1 = inlined_call_operand.vmem [shape: f32[1,32], index: 1, kind: output, shape index: {0}]
  %s2 = inlined_call_operand.vmem [shape: f32[1,32], index: 2, kind: output, shape index: {1}]
  %3 = xla_tuple %s1, %s2
  %s4 = sld [smem:[#allocation0]]
  $region30: #{netg_forward.17} parent=0
    _
  %s6 = ssub.s32 1, %s4
  %s7 = scalar_select 0, %s6, %s4
  // Predicated region
  $region2: #{netg_forward.17} parent=0 // pred_check
    _
  $region3: #{netg_forward.17} parent=0 // pred_check_branch
    %9 = sbr.rel (0) target = $region5
  $region4: #{netg_forward.17} parent=0 // pred_region
    _
  $region5: #{netg_forward.17} parent=0 // pred_fallthru
    _
  %p10 = scmp.eq.s32.totalorder 0, 0
  // Predicated region
  $region6: #{netg_forward.17} parent=0 // pred_check
    %p11 = pneg %p10
  $region7: #{netg_forward.17} parent=0 // pred_check_branch
    %13 = sbr.rel (%p11) target = $region9
  $region8: #{netg_forward.17} parent=0 // pred_region
    %vm14 = vcmask 253952
    %15 = vst.msk [vmem:[#allocation2] sm:$0x1] %vm14, 0.0
    %16 = vst.msk [vmem:[#allocation3] sm:$0x1] %vm14, 0.0
  $region9: #{netg_forward.17} parent=0 // pred_fallthru
    _
  %v17 = vld [vmem:[%s0] sm:$0xf]
  %v18 = vld [vmem:[%s0 + $0x4] sm:$0xf]
  %v19 = vld [vmem:[%s0 + $0x8] sm:$0xf]
  %v20 = vld [vmem:[%s0 + $0xc] sm:$0xf]
  %v21 = vld [vmem:[%s0 + $0x10] sm:$0xf]
  %v22 = vld [vmem:[%s0 + $0x14] sm:$0xf]
  %v23 = vld [vmem:[%s0 + $0x18] sm:$0xf]
  %v24 = vld [vmem:[%s0 + $0x1c] sm:$0xf]
  %v25 = vld [vmem:[%s0 + $0x20] sm:$0xf]
  %v26 = vld [vmem:[%s0 + $0x24] sm:$0xf]
  %v27 = vld [vmem:[%s0 + $0x28] sm:$0xf]
  %v28 = vld [vmem:[%s0 + $0x2c] sm:$0xf]
  %v29 = vld [vmem:[%s0 + $0x30] sm:$0xf]
  %v30 = vld [vmem:[%s0 + $0x34] sm:$0xf]
  %v31 = vld [vmem:[%s0 + $0x38] sm:$0xf]
  %v32 = vld [vmem:[%s0 + $0x3c] sm:$0xf]
  %v33 = vunpack.c.l.bf16 %v17
  %v34 = vunpack.c.l.bf16 %v18
  %v35 = vunpack.c.l.bf16 %v19
  %v36 = vunpack.c.l.bf16 %v20
  %v37 = vunpack.c.l.bf16 %v21
  %v38 = vunpack.c.l.bf16 %v22
  %v39 = vunpack.c.l.bf16 %v23
  %v40 = vunpack.c.l.bf16 %v24
  %v41 = vunpack.c.l.bf16 %v25
  %v42 = vunpack.c.l.bf16 %v26
  %v43 = vunpack.c.l.bf16 %v27
  %v44 = vunpack.c.l.bf16 %v28
  %v45 = vunpack.c.l.bf16 %v29
  %v46 = vunpack.c.l.bf16 %v30
  %v47 = vunpack.c.l.bf16 %v31
  %v48 = vunpack.c.l.bf16 %v32
  %v49 = vld [vmem:[#allocation2] sm:$0x1]
  %vm50 = vcmask 261120
  %v51 = vsel %vm50, %v33, 0.0
  %v52 = vsel %vm50, %v34, 0.0
  %v53 = vadd.f32 %v51, %v52
  %v54 = vsel %vm50, %v35, 0.0
  %v55 = vadd.f32 %v53, %v54
  %v56 = vsel %vm50, %v36, 0.0
  %v57 = vadd.f32 %v55, %v56
  %v58 = vsel %vm50, %v37, 0.0
  %v59 = vadd.f32 %v57, %v58
  %v60 = vsel %vm50, %v38, 0.0
  %v61 = vadd.f32 %v59, %v60
  %v62 = vsel %vm50, %v39, 0.0
  %v63 = vadd.f32 %v61, %v62
  %v64 = vsel %vm50, %v40, 0.0
  %v65 = vadd.f32 %v63, %v64
  %v66 = vsel %vm50, %v41, 0.0
  %v67 = vadd.f32 %v65, %v66
  %v68 = vsel %vm50, %v42, 0.0
  %v69 = vadd.f32 %v67, %v68
  %v70 = vsel %vm50, %v43, 0.0
  %v71 = vadd.f32 %v69, %v70
  %v72 = vsel %vm50, %v44, 0.0
  %v73 = vadd.f32 %v71, %v72
  %v74 = vsel %vm50, %v45, 0.0
  %v75 = vadd.f32 %v73, %v74
  %v76 = vsel %vm50, %v46, 0.0
  %v77 = vadd.f32 %v75, %v76
  %v78 = vsel %vm50, %v47, 0.0
  %v79 = vadd.f32 %v77, %v78
  %v80 = vsel %vm50, %v48, 0.0
  %v81 = vadd.f32 %v79, %v80
  %v82 = vrot.slane %v81, 4
  %v83 = vadd.f32 %v81, %v82
  %v84 = vrot.slane %v83, 2
  %v85 = vadd.f32 %v83, %v84
  %v86 = vrot.slane %v85, 1
  %v87 = vadd.f32 %v85, %v86
  %v88 = vadd.f32 %v49, %v87
  %vm89 = vcmask 253952
  %90 = vst.msk [vmem:[#allocation2] sm:$0x1] %vm89, %v88
  %v91 = vld [vmem:[#allocation3] sm:$0x1]
  %v92 = vmul.f32 %v33, %v33
  %v93 = vmul.f32 %v34, %v34
  %v94 = vmul.f32 %v35, %v35
  %v95 = vmul.f32 %v36, %v36
  %v96 = vmul.f32 %v37, %v37
  %v97 = vmul.f32 %v38, %v38
  %v98 = vmul.f32 %v39, %v39
  %v99 = vmul.f32 %v40, %v40
  %v100 = vmul.f32 %v41, %v41
  %v101 = vmul.f32 %v42, %v42
  %v102 = vmul.f32 %v43, %v43
  %v103 = vmul.f32 %v44, %v44
  %v104 = vmul.f32 %v45, %v45
  %v105 = vmul.f32 %v46, %v46
  %v106 = vmul.f32 %v47, %v47
  %v107 = vmul.f32 %v48, %v48
  %v108 = vsel %vm50, %v92, 0.0
  %v109 = vsel %vm50, %v93, 0.0
  %v110 = vadd.f32 %v108, %v109
  %v111 = vsel %vm50, %v94, 0.0
  %v112 = vadd.f32 %v110, %v111
  %v113 = vsel %vm50, %v95, 0.0
  %v114 = vadd.f32 %v112, %v113
  %v115 = vsel %vm50, %v96, 0.0
  %v116 = vadd.f32 %v114, %v115
  %v117 = vsel %vm50, %v97, 0.0
  %v118 = vadd.f32 %v116, %v117
  %v119 = vsel %vm50, %v98, 0.0
  %v120 = vadd.f32 %v118, %v119
  %v121 = vsel %vm50, %v99, 0.0
  %v122 = vadd.f32 %v120, %v121
  %v123 = vsel %vm50, %v100, 0.0
  %v124 = vadd.f32 %v122, %v123
  %v125 = vsel %vm50, %v101, 0.0
  %v126 = vadd.f32 %v124, %v125
  %v127 = vsel %vm50, %v102, 0.0
  %v128 = vadd.f32 %v126, %v127
  %v129 = vsel %vm50, %v103, 0.0
  %v130 = vadd.f32 %v128, %v129
  %v131 = vsel %vm50, %v104, 0.0
  %v132 = vadd.f32 %v130, %v131
  %v133 = vsel %vm50, %v105, 0.0
  %v134 = vadd.f32 %v132, %v133
  %v135 = vsel %vm50, %v106, 0.0
  %v136 = vadd.f32 %v134, %v135
  %v137 = vsel %vm50, %v107, 0.0
  %v138 = vadd.f32 %v136, %v137
  %v139 = vrot.slane %v138, 4
  %v140 = vadd.f32 %v138, %v139
  %v141 = vrot.slane %v140, 2
  %v142 = vadd.f32 %v140, %v141
  %v143 = vrot.slane %v142, 1
  %v144 = vadd.f32 %v142, %v143
  %v145 = vadd.f32 %v91, %v144
  %146 = vst.msk [vmem:[#allocation3] sm:$0x1] %vm89, %v145
  // Predicated region
  $region10: #{netg_forward.17} parent=0 // pred_check
    %p147 = pneg %p10
  $region11: #{netg_forward.17} parent=0 // pred_check_branch
    %149 = sbr.rel (%p147) target = $region13
  $region12: #{netg_forward.17} parent=0 // pred_region
    %v150 = vld [vmem:[#allocation2] sm:$0x1]
    %v151 = vmul.f32 %v150, 0.0078125
    %v152 = vld [vmem:[#allocation3] sm:$0x1]
    %v153 = vmul.f32 %v152, 0.0078125
    %v154 = vmul.f32 %v151, %v151
    %v155 = vsub.f32 %v153, %v154
    %v156 = vmax.f32 %v155, 0.0
    %157 = vst.msk [vmem:[%s1] sm:$0x1] %vm89, %v151
    %v158 = vadd.f32 %v156, 1e-05
    %v159 = vrsqrt.pop %v158
    %160 = vst.msk [vmem:[%s2] sm:$0x1] %vm89, %v159
  $region13: #{netg_forward.17} parent=0 // pred_fallthru
    _
  // Predicated region
  $region14: #{netg_forward.17} parent=0 // pred_check
    _
  $region15: #{netg_forward.17} parent=0 // pred_check_branch
    %162 = sbr.rel (0) target = $region17
  $region16: #{netg_forward.17} parent=0 // pred_region
    _
  $region17: #{netg_forward.17} parent=0 // pred_fallthru
    _
  // Predicated region
  $region18: #{netg_forward.17} parent=0 // pred_check
    _
  $region19: #{netg_forward.17} parent=0 // pred_check_branch
    %164 = sbr.rel (0) target = $region21
  $region20: #{netg_forward.17} parent=0 // pred_region
    _
  $region21: #{netg_forward.17} parent=0 // pred_fallthru
    _
  // Predicated region
  $region22: #{netg_forward.17} parent=0 // pred_check
    _
  $region23: #{netg_forward.17} parent=0 // pred_check_branch
    %166 = sbr.rel (0) target = $region25
  $region24: #{netg_forward.17} parent=0 // pred_region
    _
  $region25: #{netg_forward.17} parent=0 // pred_fallthru
    _
  // Predicated region
  $region26: #{netg_forward.17} parent=0 // pred_check
    _
  $region27: #{netg_forward.17} parent=0 // pred_check_branch
    %168 = sbr.rel (0) target = $region29
  $region28: #{netg_forward.17} parent=0 // pred_region
    _
  $region29: #{netg_forward.17} parent=0 // pred_fallthru
    _

// kernel: netg_forward.18
$region0: #{netg_forward.18}
  #allocation0 [shape = 'u32[]', space=smem, size = 0x4, offset = 0x4, fixed_abs, tag = 'smem constant byte address 0x4 - core index']
  #allocation1 [shape = 'u32[144,128]{1,0:T(1,128)}', space=vmem, size = 0x12000, scoped, tag = 'internal scratch']
  %s0 = inlined_call_operand.vmem [shape: bf16[128,32], index: 0, kind: input, shape index: {}]
  %s1 = inlined_call_operand.vmem [shape: f32[1,32], index: 1, kind: input, shape index: {}]
  %s2 = inlined_call_operand.vmem [shape: f32[1,32], index: 2, kind: input, shape index: {}]
  %s3 = inlined_call_operand.hbm [shape: f32[1,32], index: 3, kind: input, shape index: {}]
  %s4 = inlined_call_operand.hbm [shape: f32[1,32], index: 4, kind: input, shape index: {}]
  %s5 = inlined_call_operand.vmem [shape: bf16[128,32], index: 5, kind: output, shape index: {}]
  %s6 = sld [smem:[#allocation0]]
  $region38: #{netg_forward.18} parent=0
    _
  %s8 = ssub.s32 1, %s6
  %s9 = scalar_select 0, %s8, %s6
  $region1: #{netg_forward.18} parent=0
    #allocation2 [shape = 'u8[512]{0}', space=vmem, size = 0x400, scoped, tag = 'input window, operand 3, single buffered']
    #allocation3 [shape = 's32[1]{0}', space=sflag, size = 0x4, scoped, tag = 'scoped memory for netg_forward.18']
    #allocation4 [shape = 'u8[512]{0}', space=vmem, size = 0x400, scoped, tag = 'input window, operand 4, single buffered']
    #allocation5 [shape = 's32[1]{0}', space=sflag, size = 0x4, scoped, tag = 'scoped memory for netg_forward.18']
    %10 = vsyncpa [#allocation3], 0
    %11 = vsyncpa [#allocation5], 0
    // Predicated region
    $region2: #{netg_forward.18} parent=1 // pred_check
      _
    $region3: #{netg_forward.18} parent=1 // pred_check_branch
      %13 = sbr.rel (0) target = $region5
    $region4: #{netg_forward.18} parent=1 // pred_region
      _
    $region5: #{netg_forward.18} parent=1 // pred_fallthru
      _
    // Predicated region
    $region6: #{netg_forward.18} parent=1 // pred_check
      _
    $region7: #{netg_forward.18} parent=1 // pred_check_branch
      %15 = sbr.rel (0) target = $region9
    $region8: #{netg_forward.18} parent=1 // pred_region
      _
    $region9: #{netg_forward.18} parent=1 // pred_fallthru
      _
    // Predicated region
    $region10: #{netg_forward.18} parent=1 // pred_check
      _
    $region11: #{netg_forward.18} parent=1 // pred_check_branch
      %17 = sbr.rel (0) target = $region13
    $region12: #{netg_forward.18} parent=1 // pred_region
      _
    $region13: #{netg_forward.18} parent=1 // pred_fallthru
      _
    // Predicated region
    $region14: #{netg_forward.18} parent=1 // pred_check
      _
    $region15: #{netg_forward.18} parent=1 // pred_check_branch
      %19 = sbr.rel (0) target = $region17
    $region16: #{netg_forward.18} parent=1 // pred_region
      %s21 = ssub.s32 16, 16
      %22 = vsyncadd [#allocation3], %s21
      %s24 = sshll.u32 [#allocation2], 4
      %s25 = int_to_ptr.vmem [resolvable:$true] %s24
      %27 = dma.hbm_to_vmem [thread:$0]  %s3, 16, %s25, [#allocation3]
    $region17: #{netg_forward.18} parent=1 // pred_fallthru
      _
    // Predicated region
    $region18: #{netg_forward.18} parent=1 // pred_check
      _
    $region19: #{netg_forward.18} parent=1 // pred_check_branch
      %29 = sbr.rel (0) target = $region21
    $region20: #{netg_forward.18} parent=1 // pred_region
      %s31 = ssub.s32 16, 16
      %32 = vsyncadd [#allocation5], %s31
      %s34 = sshll.u32 [#allocation4], 4
      %s35 = int_to_ptr.vmem [resolvable:$true] %s34
      %37 = dma.hbm_to_vmem [thread:$0]  %s4, 16, %s35, [#allocation5]
    $region21: #{netg_forward.18} parent=1 // pred_fallthru
      _
    // Predicated region
    $region22: #{netg_forward.18} parent=1 // pred_check
      _
    $region23: #{netg_forward.18} parent=1 // pred_check_branch
      %39 = sbr.rel (0) target = $region25
    $region24: #{netg_forward.18} parent=1 // pred_region
      %40 = dma.done [#allocation3], 16
    $region25: #{netg_forward.18} parent=1 // pred_fallthru
      _
    // Predicated region
    $region26: #{netg_forward.18} parent=1 // pred_check
      _
    $region27: #{netg_forward.18} parent=1 // pred_check_branch
      %42 = sbr.rel (0) target = $region29
    $region28: #{netg_forward.18} parent=1 // pred_region
      %43 = dma.done [#allocation5], 16
    $region29: #{netg_forward.18} parent=1 // pred_fallthru
      _
    %v44 = vld [vmem:[%s0] sm:$0xf]
    %v45 = vld [vmem:[%s0 + $0x4] sm:$0xf]
    %v46 = vld [vmem:[%s0 + $0x8] sm:$0xf]
    %v47 = vld [vmem:[%s0 + $0xc] sm:$0xf]
    %v48 = vld [vmem:[%s0 + $0x10] sm:$0xf]
    %v49 = vld [vmem:[%s0 + $0x14] sm:$0xf]
    %v50 = vld [vmem:[%s0 + $0x18] sm:$0xf]
    %v51 = vld [vmem:[%s0 + $0x1c] sm:$0xf]
    %v52 = vld [vmem:[%s0 + $0x20] sm:$0xf]
    %v53 = vld [vmem:[%s0 + $0x24] sm:$0xf]
    %v54 = vld [vmem:[%s0 + $0x28] sm:$0xf]
    %v55 = vld [vmem:[%s0 + $0x2c] sm:$0xf]
    %v56 = vld [vmem:[%s0 + $0x30] sm:$0xf]
    %v57 = vld [vmem:[%s0 + $0x34] sm:$0xf]
    %v58 = vld [vmem:[%s0 + $0x38] sm:$0xf]
    %v59 = vld [vmem:[%s0 + $0x3c] sm:$0xf]
    %v60 = vunpack.c.l.bf16 %v44
    %v61 = vunpack.c.l.bf16 %v45
    %v62 = vunpack.c.l.bf16 %v46
    %v63 = vunpack.c.l.bf16 %v47
    %v64 = vunpack.c.l.bf16 %v48
    %v65 = vunpack.c.l.bf16 %v49
    %v66 = vunpack.c.l.bf16 %v50
    %v67 = vunpack.c.l.bf16 %v51
    %v68 = vunpack.c.l.bf16 %v52
    %v69 = vunpack.c.l.bf16 %v53
    %v70 = vunpack.c.l.bf16 %v54
    %v71 = vunpack.c.l.bf16 %v55
    %v72 = vunpack.c.l.bf16 %v56
    %v73 = vunpack.c.l.bf16 %v57
    %v74 = vunpack.c.l.bf16 %v58
    %v75 = vunpack.c.l.bf16 %v59
    %v76 = vld [vmem:[%s2] sm:$0x1]
    %v77 = vld [vmem:[#allocation2] sm:$0x1]
    %v78 = vmul.f32 %v76, %v77
    %v79 = vld [vmem:[%s1] sm:$0x1]
    %v81 = vlaneseq
    %v82 = vshrl.u32 %v81, 7
    %v83 = vsub.s32 0, %v82
    %v84 = vrot.slane %v79, %v83
    %v86 = vsub.f32 %v60, %v84
    %v87 = vsub.f32 %v61, %v84
    %v88 = vsub.f32 %v62, %v84
    %v89 = vsub.f32 %v63, %v84
    %v90 = vsub.f32 %v64, %v84
    %v91 = vsub.f32 %v65, %v84
    %v92 = vsub.f32 %v66, %v84
    %v93 = vsub.f32 %v67, %v84
    %v94 = vsub.f32 %v68, %v84
    %v95 = vsub.f32 %v69, %v84
    %v96 = vsub.f32 %v70, %v84
    %v97 = vsub.f32 %v71, %v84
    %v98 = vsub.f32 %v72, %v84
    %v99 = vsub.f32 %v73, %v84
    %v100 = vsub.f32 %v74, %v84
    %v101 = vsub.f32 %v75, %v84
    %v103 = vlaneseq
    %v104 = vshrl.u32 %v103, 7
    %v105 = vsub.s32 0, %v104
    %v106 = vrot.slane %v78, %v105
    %v108 = vmul.f32 %v86, %v106
    %v109 = vmul.f32 %v87, %v106
    %v110 = vmul.f32 %v88, %v106
    %v111 = vmul.f32 %v89, %v106
    %v112 = vmul.f32 %v90, %v106
    %v113 = vmul.f32 %v91, %v106
    %v114 = vmul.f32 %v92, %v106
    %v115 = vmul.f32 %v93, %v106
    %v116 = vmul.f32 %v94, %v106
    %v117 = vmul.f32 %v95, %v106
    %v118 = vmul.f32 %v96, %v106
    %v119 = vmul.f32 %v97, %v106
    %v120 = vmul.f32 %v98, %v106
    %v121 = vmul.f32 %v99, %v106
    %v122 = vmul.f32 %v100, %v106
    %v123 = vmul.f32 %v101, %v106
    %v124 = vld [vmem:[#allocation4] sm:$0x1]
    %v126 = vlaneseq
    %v127 = vshrl.u32 %v126, 7
    %v128 = vsub.s32 0, %v127
    %v129 = vrot.slane %v124, %v128
    %v131 = vadd.f32 %v108, %v129
    %v132 = vadd.f32 %v109, %v129
    %v133 = vadd.f32 %v110, %v129
    %v134 = vadd.f32 %v111, %v129
    %v135 = vadd.f32 %v112, %v129
    %v136 = vadd.f32 %v113, %v129
    %v137 = vadd.f32 %v114, %v129
    %v138 = vadd.f32 %v115, %v129
    %v139 = vadd.f32 %v116, %v129
    %v140 = vadd.f32 %v117, %v129
    %v141 = vadd.f32 %v118, %v129
    %v142 = vadd.f32 %v119, %v129
    %v143 = vadd.f32 %v120, %v129
    %v144 = vadd.f32 %v121, %v129
    %v145 = vadd.f32 %v122, %v129
    %v146 = vadd.f32 %v123, %v129
    %v147 = vmax.f32 %v131, 0.0
    %v148 = vmax.f32 %v132, 0.0
    %v149 = vmax.f32 %v133, 0.0
    %v150 = vmax.f32 %v134, 0.0
    %v151 = vmax.f32 %v135, 0.0
    %v152 = vmax.f32 %v136, 0.0
    %v153 = vmax.f32 %v137, 0.0
    %v154 = vmax.f32 %v138, 0.0
    %v155 = vmax.f32 %v139, 0.0
    %v156 = vmax.f32 %v140, 0.0
    %v157 = vmax.f32 %v141, 0.0
    %v158 = vmax.f32 %v142, 0.0
    %v159 = vmax.f32 %v143, 0.0
    %v160 = vmax.f32 %v144, 0.0
    %v161 = vmax.f32 %v145, 0.0
    %v162 = vmax.f32 %v146, 0.0
    %v163 = vpack.c.bf16 %v148, %v147
    %v164 = vpack.c.bf16 %v150, %v149
    %v165 = vpack.c.bf16 %v152, %v151
    %v166 = vpack.c.bf16 %v154, %v153
    %v167 = vpack.c.bf16 %v156, %v155
    %v168 = vpack.c.bf16 %v158, %v157
    %v169 = vpack.c.bf16 %v160, %v159
    %v170 = vpack.c.bf16 %v162, %v161
    %v179 = vunpack.c.l.b16 %v163
    %v180 = vunpack.c.h.b16 %v163
    %v181 = vunpack.c.l.b16 %v164
    %v182 = vunpack.c.h.b16 %v164
    %v183 = vunpack.c.l.b16 %v165
    %v184 = vunpack.c.h.b16 %v165
    %v185 = vunpack.c.l.b16 %v166
    %v186 = vunpack.c.h.b16 %v166
    %v187 = vunpack.c.l.b16 %v167
    %v188 = vunpack.c.h.b16 %v167
    %v189 = vunpack.c.l.b16 %v168
    %v190 = vunpack.c.h.b16 %v168
    %v191 = vunpack.c.l.b16 %v169
    %v192 = vunpack.c.h.b16 %v169
    %v193 = vunpack.c.l.b16 %v170
    %v194 = vunpack.c.h.b16 %v170
    %v195 = vpack.c.b16 %v179, %v179
    %v196 = vpack.c.b16 %v180, %v180
    %v197 = vpack.c.b16 %v181, %v181
    %v198 = vpack.c.b16 %v182, %v182
    %v199 = vpack.c.b16 %v183, %v183
    %v200 = vpack.c.b16 %v184, %v184
    %v201 = vpack.c.b16 %v185, %v185
    %v202 = vpack.c.b16 %v186, %v186
    %v203 = vpack.c.b16 %v187, %v187
    %v204 = vpack.c.b16 %v188, %v188
    %v205 = vpack.c.b16 %v189, %v189
    %v206 = vpack.c.b16 %v190, %v190
    %v207 = vpack.c.b16 %v191, %v191
    %v208 = vpack.c.b16 %v192, %v192
    %v209 = vpack.c.b16 %v193, %v193
    %v210 = vpack.c.b16 %v194, %v194
    %vm227 = vcmask 257024
    %228 = vst.msk [vmem:[%s5] sm:$0xf] %vm227, %v195
    %229 = vst.msk [vmem:[%s5 + $0x4] sm:$0xf] %vm227, %v196
    %230 = vst.msk [vmem:[%s5 + $0x8] sm:$0xf] %vm227, %v197
    %231 = vst.msk [vmem:[%s5 + $0xc] sm:$0xf] %vm227, %v198
    %232 = vst.msk [vmem:[%s5 + $0x10] sm:$0xf] %vm227, %v199
    %233 = vst.msk [vmem:[%s5 + $0x14] sm:$0xf] %vm227, %v200
    %234 = vst.msk [vmem:[%s5 + $0x18] sm:$0xf] %vm227, %v201
    %235 = vst.msk [vmem:[%s5 + $0x1c] sm:$0xf] %vm227, %v202
    %236 = vst.msk [vmem:[%s5 + $0x20] sm:$0xf] %vm227, %v203
    %237 = vst.msk [vmem:[%s5 + $0x24] sm:$0xf] %vm227, %v204
    %238 = vst.msk [vmem:[%s5 + $0x28] sm:$0xf] %vm227, %v205
    %239 = vst.msk [vmem:[%s5 + $0x2c] sm:$0xf] %vm227, %v206
    %240 = vst.msk [vmem:[%s5 + $0x30] sm:$0xf] %vm227, %v207
    %241 = vst.msk [vmem:[%s5 + $0x34] sm:$0xf] %vm227, %v208
    %242 = vst.msk [vmem:[%s5 + $0x38] sm:$0xf] %vm227, %v209
    %243 = vst.msk [vmem:[%s5 + $0x3c] sm:$0xf] %vm227, %v210
    // Predicated region
    $region30: #{netg_forward.18} parent=1 // pred_check
      _
    $region31: #{netg_forward.18} parent=1 // pred_check_branch
      %245 = sbr.rel (0) target = $region33
    $region32: #{netg_forward.18} parent=1 // pred_region
      _
    $region33: #{netg_forward.18} parent=1 // pred_fallthru
      _
    // Predicated region
    $region34: #{netg_forward.18} parent=1 // pred_check
      _
    $region35: #{netg_forward.18} parent=1 // pred_check_branch
      %247 = sbr.rel (0) target = $region37
    $region36: #{netg_forward.18} parent=1 // pred_region
      _
    $region37: #{netg_forward.18} parent=1 // pred_fallthru
      _
    %248 = vsyncpa [#allocation3], 1
    %249 = vsyncpa [#allocation5], 1

// kernel: netg_forward.19
$region0: #{netg_forward.19}
  #allocation0 [shape = 'u32[]', space=smem, size = 0x4, offset = 0x4, fixed_abs, tag = 'smem constant byte address 0x4 - core index']
  #allocation1 [shape = 'u32[144,128]{1,0:T(1,128)}', space=vmem, size = 0x12000, scoped, tag = 'internal scratch']
  %s0 = inlined_call_operand.vmem [shape: bf16[168,128], index: 0, kind: input, shape index: {}]
  %s1 = inlined_call_operand.vmem [shape: bf16[128,128], index: 1, kind: input, shape index: {}]
  %s2 = inlined_call_operand.vmem [shape: bf16[168,128], index: 2, kind: output, shape index: {}]
  %s3 = sld [smem:[#allocation0]]
  $region18: #{netg_forward.19} parent=0
    _
  %s5 = ssub.s32 1, %s3
  %s6 = scalar_select 0, %s5, %s3
  // Predicated region
  $region2: #{netg_forward.19} parent=0 // pred_check
    _
  $region3: #{netg_forward.19} parent=0 // pred_check_branch
    %8 = sbr.rel (0) target = $region5
  $region4: #{netg_forward.19} parent=0 // pred_region
    _
  $region5: #{netg_forward.19} parent=0 // pred_fallthru
    _
  // Predicated region
  $region6: #{netg_forward.19} parent=0 // pred_check
    _
  $region7: #{netg_forward.19} parent=0 // pred_check_branch
    %10 = sbr.rel (0) target = $region9
  $region8: #{netg_forward.19} parent=0 // pred_region
    _
  $region9: #{netg_forward.19} parent=0 // pred_fallthru
    _
  %v12 = vld [vmem:[%s0] sm:$0xf]
  %v13 = vld [vmem:[%s0 + $0x4] sm:$0xf]
  %v14 = vld [vmem:[%s0 + $0x8] sm:$0xf]
  %v15 = vld [vmem:[%s0 + $0xc] sm:$0xf]
  %v16 = vld [vmem:[%s0 + $0x10] sm:$0xf]
  %v17 = vld [vmem:[%s0 + $0x14] sm:$0xf]
  %v18 = vld [vmem:[%s0 + $0x18] sm:$0xf]
  %v19 = vld [vmem:[%s0 + $0x1c] sm:$0xf]
  %v20 = vld [vmem:[%s0 + $0x20] sm:$0xf]
  %v21 = vld [vmem:[%s0 + $0x24] sm:$0xf]
  %v22 = vld [vmem:[%s0 + $0x28] sm:$0xf]
  %v23 = vld [vmem:[%s0 + $0x2c] sm:$0xf]
  %v24 = vld [vmem:[%s0 + $0x30] sm:$0xf]
  %v25 = vld [vmem:[%s0 + $0x34] sm:$0xf]
  %v26 = vld [vmem:[%s0 + $0x38] sm:$0xf]
  %v27 = vld [vmem:[%s0 + $0x3c] sm:$0xf]
  %v28 = vld [vmem:[%s0 + $0x40] sm:$0xf]
  %v29 = vld [vmem:[%s0 + $0x44] sm:$0xf]
  %v30 = vld [vmem:[%s0 + $0x48] sm:$0xf]
  %v31 = vld [vmem:[%s0 + $0x4c] sm:$0xf]
  %v32 = vld [vmem:[%s0 + $0x50] sm:$0xf]
  %v33 = vld [vmem:[%s1] sm:$0xf]
  %v34 = vld [vmem:[%s1 + $0x4] sm:$0xf]
  %v35 = vld [vmem:[%s1 + $0x8] sm:$0xf]
  %v36 = vld [vmem:[%s1 + $0xc] sm:$0xf]
  %v37 = vld [vmem:[%s1 + $0x10] sm:$0xf]
  %v38 = vld [vmem:[%s1 + $0x14] sm:$0xf]
  %v39 = vld [vmem:[%s1 + $0x18] sm:$0xf]
  %v40 = vld [vmem:[%s1 + $0x1c] sm:$0xf]
  %v41 = vld [vmem:[%s1 + $0x20] sm:$0xf]
  %v42 = vld [vmem:[%s1 + $0x24] sm:$0xf]
  %v43 = vld [vmem:[%s1 + $0x28] sm:$0xf]
  %v44 = vld [vmem:[%s1 + $0x2c] sm:$0xf]
  %v45 = vld [vmem:[%s1 + $0x30] sm:$0xf]
  %v46 = vld [vmem:[%s1 + $0x34] sm:$0xf]
  %v47 = vld [vmem:[%s1 + $0x38] sm:$0xf]
  %v48 = vld [vmem:[%s1 + $0x3c] sm:$0xf]
  %v70 = vunpack.c.l.b16 %v12
  %v71 = vunpack.c.l.b16 %v13
  %v72 = vunpack.c.l.b16 %v14
  %v73 = vunpack.c.l.b16 %v15
  %v74 = vunpack.c.l.b16 %v16
  %v75 = vunpack.c.l.b16 %v17
  %v76 = vunpack.c.l.b16 %v18
  %v77 = vunpack.c.l.b16 %v19
  %v78 = vunpack.c.l.b16 %v20
  %v79 = vunpack.c.l.b16 %v21
  %v80 = vunpack.c.l.b16 %v22
  %v81 = vunpack.c.l.b16 %v23
  %v82 = vunpack.c.l.b16 %v24
  %v83 = vunpack.c.l.b16 %v25
  %v84 = vunpack.c.l.b16 %v26
  %v85 = vunpack.c.l.b16 %v27
  %v86 = vunpack.c.l.b16 %v28
  %v87 = vunpack.c.l.b16 %v29
  %v88 = vunpack.c.l.b16 %v30
  %v89 = vunpack.c.l.b16 %v31
  %v90 = vunpack.c.l.b16 %v32
  %v91 = vpack.c.b16 %v71, %v70
  %v92 = vpack.c.b16 %v73, %v72
  %v93 = vpack.c.b16 %v75, %v74
  %v94 = vpack.c.b16 %v77, %v76
  %v95 = vpack.c.b16 %v79, %v78
  %v96 = vpack.c.b16 %v81, %v80
  %v97 = vpack.c.b16 %v83, %v82
  %v98 = vpack.c.b16 %v85, %v84
  %v99 = vpack.c.b16 %v87, %v86
  %v100 = vpack.c.b16 %v89, %v88
  %v101 = vpack.c.b16 %v90, %v90
  %v129 = vunpack.c.l.b16 %v33
  %v130 = vunpack.c.l.b16 %v34
  %v131 = vunpack.c.l.b16 %v35
  %v132 = vunpack.c.l.b16 %v36
  %v133 = vunpack.c.l.b16 %v37
  %v134 = vunpack.c.l.b16 %v38
  %v135 = vunpack.c.l.b16 %v39
  %v136 = vunpack.c.l.b16 %v40
  %v137 = vunpack.c.l.b16 %v41
  %v138 = vunpack.c.l.b16 %v42
  %v139 = vunpack.c.l.b16 %v43
  %v140 = vunpack.c.l.b16 %v44
  %v141 = vunpack.c.l.b16 %v45
  %v142 = vunpack.c.l.b16 %v46
  %v143 = vunpack.c.l.b16 %v47
  %v144 = vunpack.c.l.b16 %v48
  %v145 = vpack.c.b16 %v130, %v129
  %v146 = vpack.c.b16 %v132, %v131
  %v147 = vpack.c.b16 %v134, %v133
  %v148 = vpack.c.b16 %v136, %v135
  %v149 = vpack.c.b16 %v138, %v137
  %v150 = vpack.c.b16 %v140, %v139
  %v151 = vpack.c.b16 %v142, %v141
  %v152 = vpack.c.b16 %v144, %v143
  %161 = vmatprep.subr.bf16.mxu0 0
  %162 = vmatpush1.bf16.msra.mxu0 %v145
  %163 = vmatprep.subr.bf16.mxu0 0
  %164 = vmatpush1.bf16.msra.mxu0 %v146
  %165 = vmatprep.subr.bf16.mxu0 0
  %166 = vmatpush1.bf16.msra.mxu0 %v147
  %167 = vmatprep.subr.bf16.mxu0 0
  %168 = vmatpush1.bf16.msra.mxu0 %v148
  %169 = vmatprep.subr.bf16.mxu0 0
  %170 = vmatpush1.bf16.msra.mxu0 %v149
  %171 = vmatprep.subr.bf16.mxu0 0
  %172 = vmatpush1.bf16.msra.mxu0 %v150
  %173 = vmatprep.subr.bf16.mxu0 0
  %174 = vmatpush1.bf16.msra.mxu0 %v151
  %175 = vmatprep.subr.bf16.mxu0 0
  %176 = vmatpush1.bf16.msra.mxu0 %v152
  %177 = vmatprep.subr.bf16.mxu0 0
  %178 = vmatpush1.bf16.msra.mxu0 0
  %179 = vmatprep.subr.bf16.mxu0 0
  %180 = vmatpush1.bf16.msra.mxu0 0
  %181 = vmatprep.subr.bf16.mxu0 0
  %182 = vmatpush1.bf16.msra.mxu0 0
  %183 = vmatprep.subr.bf16.mxu0 0
  %184 = vmatpush1.bf16.msra.mxu0 0
  %185 = vmatprep.subr.bf16.mxu0 0
  %186 = vmatpush1.bf16.msra.mxu0 0
  %187 = vmatprep.subr.bf16.mxu0 0
  %188 = vmatpush1.bf16.msra.mxu0 0
  %189 = vmatprep.subr.bf16.mxu0 0
  %190 = vmatpush1.bf16.msra.mxu0 0
  %191 = vmatprep.subr.bf16.mxu0 0
  %192 = vmatpush1.bf16.msra.mxu0 0
  %193 = vmatprep.mubr.bf16.mxu0 0
  %194 = vmatmul.mubr.bf16.gmra.mrb[0].mxu0 %v91
  %v195 = vpop.f32.mrb[0].mxu0
  %v196 = vadd.f32 0.0, %v195
  %v197 = vpop.f32.mrb[0].mxu0
  %v198 = vpop.f32.mrb[0].mxu0
  %v199 = vadd.f32 0.0, %v198
  %v200 = vpop.f32.mrb[0].mxu0
  %201 = vmatprep.mubr.bf16.mxu0 0
  %202 = vmatmul.mubr.bf16.gmra.mrb[0].mxu0 %v92
  %v203 = vpop.f32.mrb[0].mxu0
  %v204 = vadd.f32 0.0, %v203
  %v205 = vpop.f32.mrb[0].mxu0
  %v206 = vpop.f32.mrb[0].mxu0
  %v207 = vadd.f32 0.0, %v206
  %v208 = vpop.f32.mrb[0].mxu0
  %209 = vmatprep.mubr.bf16.mxu0 0
  %210 = vmatmul.mubr.bf16.gmra.mrb[0].mxu0 %v93
  %v211 = vpop.f32.mrb[0].mxu0
  %v212 = vadd.f32 0.0, %v211
  %v213 = vpop.f32.mrb[0].mxu0
  %v214 = vpop.f32.mrb[0].mxu0
  %v215 = vadd.f32 0.0, %v214
  %v216 = vpop.f32.mrb[0].mxu0
  %217 = vmatprep.mubr.bf16.mxu0 0
  %218 = vmatmul.mubr.bf16.gmra.mrb[0].mxu0 %v94
  %v219 = vpop.f32.mrb[0].mxu0
  %v220 = vadd.f32 0.0, %v219
  %v221 = vpop.f32.mrb[0].mxu0
  %v222 = vpop.f32.mrb[0].mxu0
  %v223 = vadd.f32 0.0, %v222
  %v224 = vpop.f32.mrb[0].mxu0
  %225 = vmatprep.mubr.bf16.mxu0 0
  %226 = vmatmul.mubr.bf16.gmra.mrb[0].mxu0 %v95
  %v227 = vpop.f32.mrb[0].mxu0
  %v228 = vadd.f32 0.0, %v227
  %v229 = vpop.f32.mrb[0].mxu0
  %v230 = vpop.f32.mrb[0].mxu0
  %v231 = vadd.f32 0.0, %v230
  %v232 = vpop.f32.mrb[0].mxu0
  %233 = vmatprep.mubr.bf16.mxu0 0
  %234 = vmatmul.mubr.bf16.gmra.mrb[0].mxu0 %v96
  %v235 = vpop.f32.mrb[0].mxu0
  %v236 = vadd.f32 0.0, %v235
  %v237 = vpop.f32.mrb[0].mxu0
  %v238 = vpop.f32.mrb[0].mxu0
  %v239 = vadd.f32 0.0, %v238
  %v240 = vpop.f32.mrb[0].mxu0
  %241 = vmatprep.mubr.bf16.mxu0 0
  %242 = vmatmul.mubr.bf16.gmra.mrb[0].mxu0 %v97
  %v243 = vpop.f32.mrb[0].mxu0
  %v244 = vadd.f32 0.0, %v243
  %v245 = vpop.f32.mrb[0].mxu0
  %v246 = vpop.f32.mrb[0].mxu0
  %v247 = vadd.f32 0.0, %v246
  %v248 = vpop.f32.mrb[0].mxu0
  %249 = vmatprep.mubr.bf16.mxu0 0
  %250 = vmatmul.mubr.bf16.gmra.mrb[0].mxu0 %v98
  %v251 = vpop.f32.mrb[0].mxu0
  %v252 = vadd.f32 0.0, %v251
  %v253 = vpop.f32.mrb[0].mxu0
  %v254 = vpop.f32.mrb[0].mxu0
  %v255 = vadd.f32 0.0, %v254
  %v256 = vpop.f32.mrb[0].mxu0
  %257 = vmatprep.mubr.bf16.mxu0 0
  %258 = vmatmul.mubr.bf16.gmra.mrb[0].mxu0 %v99
  %v259 = vpop.f32.mrb[0].mxu0
  %v260 = vadd.f32 0.0, %v259
  %v261 = vpop.f32.mrb[0].mxu0
  %v262 = vpop.f32.mrb[0].mxu0
  %v263 = vadd.f32 0.0, %v262
  %v264 = vpop.f32.mrb[0].mxu0
  %265 = vmatprep.mubr.bf16.mxu0 0
  %266 = vmatmul.mubr.bf16.gmra.mrb[0].mxu0 %v100
  %v267 = vpop.f32.mrb[0].mxu0
  %v268 = vadd.f32 0.0, %v267
  %v269 = vpop.f32.mrb[0].mxu0
  %v270 = vpop.f32.mrb[0].mxu0
  %v271 = vadd.f32 0.0, %v270
  %v272 = vpop.f32.mrb[0].mxu0
  %273 = vmatprep.mubr.bf16.mxu0 0
  %274 = vmatmul.mubr.bf16.gmra.mrb[0].mxu0 %v101
  %v275 = vpop.f32.mrb[0].mxu0
  %v276 = vadd.f32 0.0, %v275
  %v277 = vpop.f32.mrb[0].mxu0
  %v278 = vpop.f32.mrb[0].mxu0
  %v279 = vpop.f32.mrb[0].mxu0
  %280 = vdwg.mxu0
  %v281 = vpack.c.bf16 %v199, %v196
  %v282 = vpack.c.bf16 %v207, %v204
  %v283 = vpack.c.bf16 %v215, %v212
  %v284 = vpack.c.bf16 %v223, %v220
  %v285 = vpack.c.bf16 %v231, %v228
  %v286 = vpack.c.bf16 %v239, %v236
  %v287 = vpack.c.bf16 %v247, %v244
  %v288 = vpack.c.bf16 %v255, %v252
  %v289 = vpack.c.bf16 %v263, %v260
  %v290 = vpack.c.bf16 %v271, %v268
  %v291 = vpack.c.bf16 %v276, %v276
  %v303 = vunpack.c.l.b16 %v281
  %v304 = vunpack.c.h.b16 %v281
  %v305 = vunpack.c.l.b16 %v282
  %v306 = vunpack.c.h.b16 %v282
  %v307 = vunpack.c.l.b16 %v283
  %v308 = vunpack.c.h.b16 %v283
  %v309 = vunpack.c.l.b16 %v284
  %v310 = vunpack.c.h.b16 %v284
  %v311 = vunpack.c.l.b16 %v285
  %v312 = vunpack.c.h.b16 %v285
  %v313 = vunpack.c.l.b16 %v286
  %v314 = vunpack.c.h.b16 %v286
  %v315 = vunpack.c.l.b16 %v287
  %v316 = vunpack.c.h.b16 %v287
  %v317 = vunpack.c.l.b16 %v288
  %v318 = vunpack.c.h.b16 %v288
  %v319 = vunpack.c.l.b16 %v289
  %v320 = vunpack.c.h.b16 %v289
  %v321 = vunpack.c.l.b16 %v290
  %v322 = vunpack.c.h.b16 %v290
  %v323 = vunpack.c.l.b16 %v291
  %v324 = vpack.c.b16 %v303, %v303
  %v325 = vpack.c.b16 %v304, %v304
  %v326 = vpack.c.b16 %v305, %v305
  %v327 = vpack.c.b16 %v306, %v306
  %v328 = vpack.c.b16 %v307, %v307
  %v329 = vpack.c.b16 %v308, %v308
  %v330 = vpack.c.b16 %v309, %v309
  %v331 = vpack.c.b16 %v310, %v310
  %v332 = vpack.c.b16 %v311, %v311
  %v333 = vpack.c.b16 %v312, %v312
  %v334 = vpack.c.b16 %v313, %v313
  %v335 = vpack.c.b16 %v314, %v314
  %v336 = vpack.c.b16 %v315, %v315
  %v337 = vpack.c.b16 %v316, %v316
  %v338 = vpack.c.b16 %v317, %v317
  %v339 = vpack.c.b16 %v318, %v318
  %v340 = vpack.c.b16 %v319, %v319
  %v341 = vpack.c.b16 %v320, %v320
  %v342 = vpack.c.b16 %v321, %v321
  %v343 = vpack.c.b16 %v322, %v322
  %v344 = vpack.c.b16 %v323, %v323
  %366 = vst [vmem:[%s2] sm:$0xf] %v324
  %367 = vst [vmem:[%s2 + $0x4] sm:$0xf] %v325
  %368 = vst [vmem:[%s2 + $0x8] sm:$0xf] %v326
  %369 = vst [vmem:[%s2 + $0xc] sm:$0xf] %v327
  %370 = vst [vmem:[%s2 + $0x10] sm:$0xf] %v328
  %371 = vst [vmem:[%s2 + $0x14] sm:$0xf] %v329
  %372 = vst [vmem:[%s2 + $0x18] sm:$0xf] %v330
  %373 = vst [vmem:[%s2 + $0x1c] sm:$0xf] %v331
  %374 = vst [vmem:[%s2 + $0x20] sm:$0xf] %v332
  %375 = vst [vmem:[%s2 + $0x24] sm:$0xf] %v333
  %376 = vst [vmem:[%s2 + $0x28] sm:$0xf] %v334
  %377 = vst [vmem:[%s2 + $0x2c] sm:$0xf] %v335
  %378 = vst [vmem:[%s2 + $0x30] sm:$0xf] %v336
  %379 = vst [vmem:[%s2 + $0x34] sm:$0xf] %v337
  %380 = vst [vmem:[%s2 + $0x38] sm:$0xf] %v338
  %381 = vst [vmem:[%s2 + $0x3c] sm:$0xf] %v339
  %382 = vst [vmem:[%s2 + $0x40] sm:$0xf] %v340
  %383 = vst [vmem:[%s2 + $0x44] sm:$0xf] %v341
  %384 = vst [vmem:[%s2 + $0x48] sm:$0xf] %v342
  %385 = vst [vmem:[%s2 + $0x4c] sm:$0xf] %v343
  %386 = vst [vmem:[%s2 + $0x50] sm:$0xf] %v344
  // Predicated region
  $region10: #{netg_forward.19} parent=0 // pred_check
    _
  $region11: #{netg_forward.19} parent=0 // pred_check_branch
    %388 = sbr.rel (0) target = $region13
  $region12: #{netg_forward.19} parent=0 // pred_region
    _
  $region13: #{netg_forward.19} parent=0 // pred_fallthru
    _
  // Predicated region
  $region14: #{netg_forward.19} parent=0 // pred_check
    _
  $region15: #{netg_forward.19} parent=0 // pred_check_branch
    %390 = sbr.rel (0) target = $region17
  $region16: #{netg_forward.19} parent=0 // pred_region
    _
  $region17: #{netg_forward.19} parent=0 // pred_fallthru
    _

// kernel: netg_forward.20
$region0: #{netg_forward.20}
  #allocation0 [shape = 'u32[]', space=smem, size = 0x4, offset = 0x4, fixed_abs, tag = 'smem constant byte address 0x4 - core index']
  #allocation1 [shape = 'u32[144,128]{1,0:T(1,128)}', space=vmem, size = 0x12000, scoped, tag = 'internal scratch']
  #allocation2 [shape = 'f32[1,16]{1,0:T(1,128)}', space=vmem, size = 0x200, scoped, tag = 'scratch operand']
  #allocation3 [shape = 'f32[1,16]{1,0:T(1,128)}', space=vmem, size = 0x200, scoped, tag = 'scratch operand']
  %s0 = inlined_call_operand.vmem [shape: bf16[512,16], index: 0, kind: input, shape index: {}]
  %s1 = inlined_call_operand.vmem [shape: f32[1,16], index: 1, kind: output, shape index: {0}]
  %s2 = inlined_call_operand.vmem [shape: f32[1,16], index: 2, kind: output, shape index: {1}]
  %3 = xla_tuple %s1, %s2
  %s4 = sld [smem:[#allocation0]]
  $region30: #{netg_forward.20} parent=0
    _
  %s6 = ssub.s32 1, %s4
  %s7 = scalar_select 0, %s6, %s4
  // Predicated region
  $region2: #{netg_forward.20} parent=0 // pred_check
    _
  $region3: #{netg_forward.20} parent=0 // pred_check_branch
    %9 = sbr.rel (0) target = $region5
  $region4: #{netg_forward.20} parent=0 // pred_region
    _
  $region5: #{netg_forward.20} parent=0 // pred_fallthru
    _
  %p10 = scmp.eq.s32.totalorder 0, 0
  // Predicated region
  $region6: #{netg_forward.20} parent=0 // pred_check
    %p11 = pneg %p10
  $region7: #{netg_forward.20} parent=0 // pred_check_branch
    %13 = sbr.rel (%p11) target = $region9
  $region8: #{netg_forward.20} parent=0 // pred_region
    %vm14 = vcmask 122880
    %15 = vst.msk [vmem:[#allocation2] sm:$0x1] %vm14, 0.0
    %16 = vst.msk [vmem:[#allocation3] sm:$0x1] %vm14, 0.0
  $region9: #{netg_forward.20} parent=0 // pred_fallthru
    _
  %v17 = vld [vmem:[%s0] sm:$0xf]
  %v18 = vld [vmem:[%s0 + $0x4] sm:$0xf]
  %v19 = vld [vmem:[%s0 + $0x8] sm:$0xf]
  %v20 = vld [vmem:[%s0 + $0xc] sm:$0xf]
  %v21 = vld [vmem:[%s0 + $0x10] sm:$0xf]
  %v22 = vld [vmem:[%s0 + $0x14] sm:$0xf]
  %v23 = vld [vmem:[%s0 + $0x18] sm:$0xf]
  %v24 = vld [vmem:[%s0 + $0x1c] sm:$0xf]
  %v25 = vld [vmem:[%s0 + $0x20] sm:$0xf]
  %v26 = vld [vmem:[%s0 + $0x24] sm:$0xf]
  %v27 = vld [vmem:[%s0 + $0x28] sm:$0xf]
  %v28 = vld [vmem:[%s0 + $0x2c] sm:$0xf]
  %v29 = vld [vmem:[%s0 + $0x30] sm:$0xf]
  %v30 = vld [vmem:[%s0 + $0x34] sm:$0xf]
  %v31 = vld [vmem:[%s0 + $0x38] sm:$0xf]
  %v32 = vld [vmem:[%s0 + $0x3c] sm:$0xf]
  %v33 = vld [vmem:[%s0 + $0x40] sm:$0xf]
  %v34 = vld [vmem:[%s0 + $0x44] sm:$0xf]
  %v35 = vld [vmem:[%s0 + $0x48] sm:$0xf]
  %v36 = vld [vmem:[%s0 + $0x4c] sm:$0xf]
  %v37 = vld [vmem:[%s0 + $0x50] sm:$0xf]
  %v38 = vld [vmem:[%s0 + $0x54] sm:$0xf]
  %v39 = vld [vmem:[%s0 + $0x58] sm:$0xf]
  %v40 = vld [vmem:[%s0 + $0x5c] sm:$0xf]
  %v41 = vld [vmem:[%s0 + $0x60] sm:$0xf]
  %v42 = vld [vmem:[%s0 + $0x64] sm:$0xf]
  %v43 = vld [vmem:[%s0 + $0x68] sm:$0xf]
  %v44 = vld [vmem:[%s0 + $0x6c] sm:$0xf]
  %v45 = vld [vmem:[%s0 + $0x70] sm:$0xf]
  %v46 = vld [vmem:[%s0 + $0x74] sm:$0xf]
  %v47 = vld [vmem:[%s0 + $0x78] sm:$0xf]
  %v48 = vld [vmem:[%s0 + $0x7c] sm:$0xf]
  %v49 = vld [vmem:[%s0 + $0x80] sm:$0xf]
  %v50 = vld [vmem:[%s0 + $0x84] sm:$0xf]
  %v51 = vld [vmem:[%s0 + $0x88] sm:$0xf]
  %v52 = vld [vmem:[%s0 + $0x8c] sm:$0xf]
  %v53 = vld [vmem:[%s0 + $0x90] sm:$0xf]
  %v54 = vld [vmem:[%s0 + $0x94] sm:$0xf]
  %v55 = vld [vmem:[%s0 + $0x98] sm:$0xf]
  %v56 = vld [vmem:[%s0 + $0x9c] sm:$0xf]
  %v57 = vld [vmem:[%s0 + $0xa0] sm:$0xf]
  %v58 = vld [vmem:[%s0 + $0xa4] sm:$0xf]
  %v59 = vld [vmem:[%s0 + $0xa8] sm:$0xf]
  %v60 = vld [vmem:[%s0 + $0xac] sm:$0xf]
  %v61 = vld [vmem:[%s0 + $0xb0] sm:$0xf]
  %v62 = vld [vmem:[%s0 + $0xb4] sm:$0xf]
  %v63 = vld [vmem:[%s0 + $0xb8] sm:$0xf]
  %v64 = vld [vmem:[%s0 + $0xbc] sm:$0xf]
  %v65 = vld [vmem:[%s0 + $0xc0] sm:$0xf]
  %v66 = vld [vmem:[%s0 + $0xc4] sm:$0xf]
  %v67 = vld [vmem:[%s0 + $0xc8] sm:$0xf]
  %v68 = vld [vmem:[%s0 + $0xcc] sm:$0xf]
  %v69 = vld [vmem:[%s0 + $0xd0] sm:$0xf]
  %v70 = vld [vmem:[%s0 + $0xd4] sm:$0xf]
  %v71 = vld [vmem:[%s0 + $0xd8] sm:$0xf]
  %v72 = vld [vmem:[%s0 + $0xdc] sm:$0xf]
  %v73 = vld [vmem:[%s0 + $0xe0] sm:$0xf]
  %v74 = vld [vmem:[%s0 + $0xe4] sm:$0xf]
  %v75 = vld [vmem:[%s0 + $0xe8] sm:$0xf]
  %v76 = vld [vmem:[%s0 + $0xec] sm:$0xf]
  %v77 = vld [vmem:[%s0 + $0xf0] sm:$0xf]
  %v78 = vld [vmem:[%s0 + $0xf4] sm:$0xf]
  %v79 = vld [vmem:[%s0 + $0xf8] sm:$0xf]
  %v80 = vld [vmem:[%s0 + $0xfc] sm:$0xf]
  %v81 = vunpack.c.l.bf16 %v17
  %v82 = vunpack.c.l.bf16 %v18
  %v83 = vunpack.c.l.bf16 %v19
  %v84 = vunpack.c.l.bf16 %v20
  %v85 = vunpack.c.l.bf16 %v21
  %v86 = vunpack.c.l.bf16 %v22
  %v87 = vunpack.c.l.bf16 %v23
  %v88 = vunpack.c.l.bf16 %v24
  %v89 = vunpack.c.l.bf16 %v25
  %v90 = vunpack.c.l.bf16 %v26
  %v91 = vunpack.c.l.bf16 %v27
  %v92 = vunpack.c.l.bf16 %v28
  %v93 = vunpack.c.l.bf16 %v29
  %v94 = vunpack.c.l.bf16 %v30
  %v95 = vunpack.c.l.bf16 %v31
  %v96 = vunpack.c.l.bf16 %v32
  %v97 = vunpack.c.l.bf16 %v33
  %v98 = vunpack.c.l.bf16 %v34
  %v99 = vunpack.c.l.bf16 %v35
  %v100 = vunpack.c.l.bf16 %v36
  %v101 = vunpack.c.l.bf16 %v37
  %v102 = vunpack.c.l.bf16 %v38
  %v103 = vunpack.c.l.bf16 %v39
  %v104 = vunpack.c.l.bf16 %v40
  %v105 = vunpack.c.l.bf16 %v41
  %v106 = vunpack.c.l.bf16 %v42
  %v107 = vunpack.c.l.bf16 %v43
  %v108 = vunpack.c.l.bf16 %v44
  %v109 = vunpack.c.l.bf16 %v45
  %v110 = vunpack.c.l.bf16 %v46
  %v111 = vunpack.c.l.bf16 %v47
  %v112 = vunpack.c.l.bf16 %v48
  %v113 = vunpack.c.l.bf16 %v49
  %v114 = vunpack.c.l.bf16 %v50
  %v115 = vunpack.c.l.bf16 %v51
  %v116 = vunpack.c.l.bf16 %v52
  %v117 = vunpack.c.l.bf16 %v53
  %v118 = vunpack.c.l.bf16 %v54
  %v119 = vunpack.c.l.bf16 %v55
  %v120 = vunpack.c.l.bf16 %v56
  %v121 = vunpack.c.l.bf16 %v57
  %v122 = vunpack.c.l.bf16 %v58
  %v123 = vunpack.c.l.bf16 %v59
  %v124 = vunpack.c.l.bf16 %v60
  %v125 = vunpack.c.l.bf16 %v61
  %v126 = vunpack.c.l.bf16 %v62
  %v127 = vunpack.c.l.bf16 %v63
  %v128 = vunpack.c.l.bf16 %v64
  %v129 = vunpack.c.l.bf16 %v65
  %v130 = vunpack.c.l.bf16 %v66
  %v131 = vunpack.c.l.bf16 %v67
  %v132 = vunpack.c.l.bf16 %v68
  %v133 = vunpack.c.l.bf16 %v69
  %v134 = vunpack.c.l.bf16 %v70
  %v135 = vunpack.c.l.bf16 %v71
  %v136 = vunpack.c.l.bf16 %v72
  %v137 = vunpack.c.l.bf16 %v73
  %v138 = vunpack.c.l.bf16 %v74
  %v139 = vunpack.c.l.bf16 %v75
  %v140 = vunpack.c.l.bf16 %v76
  %v141 = vunpack.c.l.bf16 %v77
  %v142 = vunpack.c.l.bf16 %v78
  %v143 = vunpack.c.l.bf16 %v79
  %v144 = vunpack.c.l.bf16 %v80
  %v145 = vld [vmem:[#allocation2] sm:$0x1]
  %vm146 = vcmask 130048
  %v147 = vsel %vm146, %v81, 0.0
  %v148 = vsel %vm146, %v82, 0.0
  %v149 = vadd.f32 %v147, %v148
  %v150 = vsel %vm146, %v83, 0.0
  %v151 = vadd.f32 %v149, %v150
  %v152 = vsel %vm146, %v84, 0.0
  %v153 = vadd.f32 %v151, %v152
  %v154 = vsel %vm146, %v85, 0.0
  %v155 = vadd.f32 %v153, %v154
  %v156 = vsel %vm146, %v86, 0.0
  %v157 = vadd.f32 %v155, %v156
  %v158 = vsel %vm146, %v87, 0.0
  %v159 = vadd.f32 %v157, %v158
  %v160 = vsel %vm146, %v88, 0.0
  %v161 = vadd.f32 %v159, %v160
  %v162 = vsel %vm146, %v89, 0.0
  %v163 = vadd.f32 %v161, %v162
  %v164 = vsel %vm146, %v90, 0.0
  %v165 = vadd.f32 %v163, %v164
  %v166 = vsel %vm146, %v91, 0.0
  %v167 = vadd.f32 %v165, %v166
  %v168 = vsel %vm146, %v92, 0.0
  %v169 = vadd.f32 %v167, %v168
  %v170 = vsel %vm146, %v93, 0.0
  %v171 = vadd.f32 %v169, %v170
  %v172 = vsel %vm146, %v94, 0.0
  %v173 = vadd.f32 %v171, %v172
  %v174 = vsel %vm146, %v95, 0.0
  %v175 = vadd.f32 %v173, %v174
  %v176 = vsel %vm146, %v96, 0.0
  %v177 = vadd.f32 %v175, %v176
  %v178 = vsel %vm146, %v97, 0.0
  %v179 = vadd.f32 %v177, %v178
  %v180 = vsel %vm146, %v98, 0.0
  %v181 = vadd.f32 %v179, %v180
  %v182 = vsel %vm146, %v99, 0.0
  %v183 = vadd.f32 %v181, %v182
  %v184 = vsel %vm146, %v100, 0.0
  %v185 = vadd.f32 %v183, %v184
  %v186 = vsel %vm146, %v101, 0.0
  %v187 = vadd.f32 %v185, %v186
  %v188 = vsel %vm146, %v102, 0.0
  %v189 = vadd.f32 %v187, %v188
  %v190 = vsel %vm146, %v103, 0.0
  %v191 = vadd.f32 %v189, %v190
  %v192 = vsel %vm146, %v104, 0.0
  %v193 = vadd.f32 %v191, %v192
  %v194 = vsel %vm146, %v105, 0.0
  %v195 = vadd.f32 %v193, %v194
  %v196 = vsel %vm146, %v106, 0.0
  %v197 = vadd.f32 %v195, %v196
  %v198 = vsel %vm146, %v107, 0.0
  %v199 = vadd.f32 %v197, %v198
  %v200 = vsel %vm146, %v108, 0.0
  %v201 = vadd.f32 %v199, %v200
  %v202 = vsel %vm146, %v109, 0.0
  %v203 = vadd.f32 %v201, %v202
  %v204 = vsel %vm146, %v110, 0.0
  %v205 = vadd.f32 %v203, %v204
  %v206 = vsel %vm146, %v111, 0.0
  %v207 = vadd.f32 %v205, %v206
  %v208 = vsel %vm146, %v112, 0.0
  %v209 = vadd.f32 %v207, %v208
  %v210 = vsel %vm146, %v113, 0.0
  %v211 = vadd.f32 %v209, %v210
  %v212 = vsel %vm146, %v114, 0.0
  %v213 = vadd.f32 %v211, %v212
  %v214 = vsel %vm146, %v115, 0.0
  %v215 = vadd.f32 %v213, %v214
  %v216 = vsel %vm146, %v116, 0.0
  %v217 = vadd.f32 %v215, %v216
  %v218 = vsel %vm146, %v117, 0.0
  %v219 = vadd.f32 %v217, %v218
  %v220 = vsel %vm146, %v118, 0.0
  %v221 = vadd.f32 %v219, %v220
  %v222 = vsel %vm146, %v119, 0.0
  %v223 = vadd.f32 %v221, %v222
  %v224 = vsel %vm146, %v120, 0.0
  %v225 = vadd.f32 %v223, %v224
  %v226 = vsel %vm146, %v121, 0.0
  %v227 = vadd.f32 %v225, %v226
  %v228 = vsel %vm146, %v122, 0.0
  %v229 = vadd.f32 %v227, %v228
  %v230 = vsel %vm146, %v123, 0.0
  %v231 = vadd.f32 %v229, %v230
  %v232 = vsel %vm146, %v124, 0.0
  %v233 = vadd.f32 %v231, %v232
  %v234 = vsel %vm146, %v125, 0.0
  %v235 = vadd.f32 %v233, %v234
  %v236 = vsel %vm146, %v126, 0.0
  %v237 = vadd.f32 %v235, %v236
  %v238 = vsel %vm146, %v127, 0.0
  %v239 = vadd.f32 %v237, %v238
  %v240 = vsel %vm146, %v128, 0.0
  %v241 = vadd.f32 %v239, %v240
  %v242 = vsel %vm146, %v129, 0.0
  %v243 = vadd.f32 %v241, %v242
  %v244 = vsel %vm146, %v130, 0.0
  %v245 = vadd.f32 %v243, %v244
  %v246 = vsel %vm146, %v131, 0.0
  %v247 = vadd.f32 %v245, %v246
  %v248 = vsel %vm146, %v132, 0.0
  %v249 = vadd.f32 %v247, %v248
  %v250 = vsel %vm146, %v133, 0.0
  %v251 = vadd.f32 %v249, %v250
  %v252 = vsel %vm146, %v134, 0.0
  %v253 = vadd.f32 %v251, %v252
  %v254 = vsel %vm146, %v135, 0.0
  %v255 = vadd.f32 %v253, %v254
  %v256 = vsel %vm146, %v136, 0.0
  %v257 = vadd.f32 %v255, %v256
  %v258 = vsel %vm146, %v137, 0.0
  %v259 = vadd.f32 %v257, %v258
  %v260 = vsel %vm146, %v138, 0.0
  %v261 = vadd.f32 %v259, %v260
  %v262 = vsel %vm146, %v139, 0.0
  %v263 = vadd.f32 %v261, %v262
  %v264 = vsel %vm146, %v140, 0.0
  %v265 = vadd.f32 %v263, %v264
  %v266 = vsel %vm146, %v141, 0.0
  %v267 = vadd.f32 %v265, %v266
  %v268 = vsel %vm146, %v142, 0.0
  %v269 = vadd.f32 %v267, %v268
  %v270 = vsel %vm146, %v143, 0.0
  %v271 = vadd.f32 %v269, %v270
  %v272 = vsel %vm146, %v144, 0.0
  %v273 = vadd.f32 %v271, %v272
  %v274 = vrot.slane %v273, 4
  %v275 = vadd.f32 %v273, %v274
  %v276 = vrot.slane %v275, 2
  %v277 = vadd.f32 %v275, %v276
  %v278 = vrot.slane %v277, 1
  %v279 = vadd.f32 %v277, %v278
  %v280 = vadd.f32 %v145, %v279
  %vm281 = vcmask 122880
  %282 = vst.msk [vmem:[#allocation2] sm:$0x1] %vm281, %v280
  %v283 = vld [vmem:[#allocation3] sm:$0x1]
  %v284 = vmul.f32 %v81, %v81
  %v285 = vmul.f32 %v82, %v82
  %v286 = vmul.f32 %v83, %v83
  %v287 = vmul.f32 %v84, %v84
  %v288 = vmul.f32 %v85, %v85
  %v289 = vmul.f32 %v86, %v86
  %v290 = vmul.f32 %v87, %v87
  %v291 = vmul.f32 %v88, %v88
  %v292 = vmul.f32 %v89, %v89
  %v293 = vmul.f32 %v90, %v90
  %v294 = vmul.f32 %v91, %v91
  %v295 = vmul.f32 %v92, %v92
  %v296 = vmul.f32 %v93, %v93
  %v297 = vmul.f32 %v94, %v94
  %v298 = vmul.f32 %v95, %v95
  %v299 = vmul.f32 %v96, %v96
  %v300 = vmul.f32 %v97, %v97
  %v301 = vmul.f32 %v98, %v98
  %v302 = vmul.f32 %v99, %v99
  %v303 = vmul.f32 %v100, %v100
  %v304 = vmul.f32 %v101, %v101
  %v305 = vmul.f32 %v102, %v102
  %v306 = vmul.f32 %v103, %v103
  %v307 = vmul.f32 %v104, %v104
  %v308 = vmul.f32 %v105, %v105
  %v309 = vmul.f32 %v106, %v106
  %v310 = vmul.f32 %v107, %v107
  %v311 = vmul.f32 %v108, %v108
  %v312 = vmul.f32 %v109, %v109
  %v313 = vmul.f32 %v110, %v110
  %v314 = vmul.f32 %v111, %v111
  %v315 = vmul.f32 %v112, %v112
  %v316 = vmul.f32 %v113, %v113
  %v317 = vmul.f32 %v114, %v114
  %v318 = vmul.f32 %v115, %v115
  %v319 = vmul.f32 %v116, %v116
  %v320 = vmul.f32 %v117, %v117
  %v321 = vmul.f32 %v118, %v118
  %v322 = vmul.f32 %v119, %v119
  %v323 = vmul.f32 %v120, %v120
  %v324 = vmul.f32 %v121, %v121
  %v325 = vmul.f32 %v122, %v122
  %v326 = vmul.f32 %v123, %v123
  %v327 = vmul.f32 %v124, %v124
  %v328 = vmul.f32 %v125, %v125
  %v329 = vmul.f32 %v126, %v126
  %v330 = vmul.f32 %v127, %v127
  %v331 = vmul.f32 %v128, %v128
  %v332 = vmul.f32 %v129, %v129
  %v333 = vmul.f32 %v130, %v130
  %v334 = vmul.f32 %v131, %v131
  %v335 = vmul.f32 %v132, %v132
  %v336 = vmul.f32 %v133, %v133
  %v337 = vmul.f32 %v134, %v134
  %v338 = vmul.f32 %v135, %v135
  %v339 = vmul.f32 %v136, %v136
  %v340 = vmul.f32 %v137, %v137
  %v341 = vmul.f32 %v138, %v138
  %v342 = vmul.f32 %v139, %v139
  %v343 = vmul.f32 %v140, %v140
  %v344 = vmul.f32 %v141, %v141
  %v345 = vmul.f32 %v142, %v142
  %v346 = vmul.f32 %v143, %v143
  %v347 = vmul.f32 %v144, %v144
  %v348 = vsel %vm146, %v284, 0.0
  %v349 = vsel %vm146, %v285, 0.0
  %v350 = vadd.f32 %v348, %v349
  %v351 = vsel %vm146, %v286, 0.0
  %v352 = vadd.f32 %v350, %v351
  %v353 = vsel %vm146, %v287, 0.0
  %v354 = vadd.f32 %v352, %v353
  %v355 = vsel %vm146, %v288, 0.0
  %v356 = vadd.f32 %v354, %v355
  %v357 = vsel %vm146, %v289, 0.0
  %v358 = vadd.f32 %v356, %v357
  %v359 = vsel %vm146, %v290, 0.0
  %v360 = vadd.f32 %v358, %v359
  %v361 = vsel %vm146, %v291, 0.0
  %v362 = vadd.f32 %v360, %v361
  %v363 = vsel %vm146, %v292, 0.0
  %v364 = vadd.f32 %v362, %v363
  %v365 = vsel %vm146, %v293, 0.0
  %v366 = vadd.f32 %v364, %v365
  %v367 = vsel %vm146, %v294, 0.0
  %v368 = vadd.f32 %v366, %v367
  %v369 = vsel %vm146, %v295, 0.0
  %v370 = vadd.f32 %v368, %v369
  %v371 = vsel %vm146, %v296, 0.0
  %v372 = vadd.f32 %v370, %v371
  %v373 = vsel %vm146, %v297, 0.0
  %v374 = vadd.f32 %v372, %v373
  %v375 = vsel %vm146, %v298, 0.0
  %v376 = vadd.f32 %v374, %v375
  %v377 = vsel %vm146, %v299, 0.0
  %v378 = vadd.f32 %v376, %v377
  %v379 = vsel %vm146, %v300, 0.0
  %v380 = vadd.f32 %v378, %v379
  %v381 = vsel %vm146, %v301, 0.0
  %v382 = vadd.f32 %v380, %v381
  %v383 = vsel %vm146, %v302, 0.0
  %v384 = vadd.f32 %v382, %v383
  %v385 = vsel %vm146, %v303, 0.0
  %v386 = vadd.f32 %v384, %v385
  %v387 = vsel %vm146, %v304, 0.0
  %v388 = vadd.f32 %v386, %v387
  %v389 = vsel %vm146, %v305, 0.0
  %v390 = vadd.f32 %v388, %v389
  %v391 = vsel %vm146, %v306, 0.0
  %v392 = vadd.f32 %v390, %v391
  %v393 = vsel %vm146, %v307, 0.0
  %v394 = vadd.f32 %v392, %v393
  %v395 = vsel %vm146, %v308, 0.0
  %v396 = vadd.f32 %v394, %v395
  %v397 = vsel %vm146, %v309, 0.0
  %v398 = vadd.f32 %v396, %v397
  %v399 = vsel %vm146, %v310, 0.0
  %v400 = vadd.f32 %v398, %v399
  %v401 = vsel %vm146, %v311, 0.0
  %v402 = vadd.f32 %v400, %v401
  %v403 = vsel %vm146, %v312, 0.0
  %v404 = vadd.f32 %v402, %v403
  %v405 = vsel %vm146, %v313, 0.0
  %v406 = vadd.f32 %v404, %v405
  %v407 = vsel %vm146, %v314, 0.0
  %v408 = vadd.f32 %v406, %v407
  %v409 = vsel %vm146, %v315, 0.0
  %v410 = vadd.f32 %v408, %v409
  %v411 = vsel %vm146, %v316, 0.0
  %v412 = vadd.f32 %v410, %v411
  %v413 = vsel %vm146, %v317, 0.0
  %v414 = vadd.f32 %v412, %v413
  %v415 = vsel %vm146, %v318, 0.0
  %v416 = vadd.f32 %v414, %v415
  %v417 = vsel %vm146, %v319, 0.0
  %v418 = vadd.f32 %v416, %v417
  %v419 = vsel %vm146, %v320, 0.0
  %v420 = vadd.f32 %v418, %v419
  %v421 = vsel %vm146, %v321, 0.0
  %v422 = vadd.f32 %v420, %v421
  %v423 = vsel %vm146, %v322, 0.0
  %v424 = vadd.f32 %v422, %v423
  %v425 = vsel %vm146, %v323, 0.0
  %v426 = vadd.f32 %v424, %v425
  %v427 = vsel %vm146, %v324, 0.0
  %v428 = vadd.f32 %v426, %v427
  %v429 = vsel %vm146, %v325, 0.0
  %v430 = vadd.f32 %v428, %v429
  %v431 = vsel %vm146, %v326, 0.0
  %v432 = vadd.f32 %v430, %v431
  %v433 = vsel %vm146, %v327, 0.0
  %v434 = vadd.f32 %v432, %v433
  %v435 = vsel %vm146, %v328, 0.0
  %v436 = vadd.f32 %v434, %v435
  %v437 = vsel %vm146, %v329, 0.0
  %v438 = vadd.f32 %v436, %v437
  %v439 = vsel %vm146, %v330, 0.0
  %v440 = vadd.f32 %v438, %v439
  %v441 = vsel %vm146, %v331, 0.0
  %v442 = vadd.f32 %v440, %v441
  %v443 = vsel %vm146, %v332, 0.0
  %v444 = vadd.f32 %v442, %v443
  %v445 = vsel %vm146, %v333, 0.0
  %v446 = vadd.f32 %v444, %v445
  %v447 = vsel %vm146, %v334, 0.0
  %v448 = vadd.f32 %v446, %v447
  %v449 = vsel %vm146, %v335, 0.0
  %v450 = vadd.f32 %v448, %v449
  %v451 = vsel %vm146, %v336, 0.0
  %v452 = vadd.f32 %v450, %v451
  %v453 = vsel %vm146, %v337, 0.0
  %v454 = vadd.f32 %v452, %v453
  %v455 = vsel %vm146, %v338, 0.0
  %v456 = vadd.f32 %v454, %v455
  %v457 = vsel %vm146, %v339, 0.0
  %v458 = vadd.f32 %v456, %v457
  %v459 = vsel %vm146, %v340, 0.0
  %v460 = vadd.f32 %v458, %v459
  %v461 = vsel %vm146, %v341, 0.0
  %v462 = vadd.f32 %v460, %v461
  %v463 = vsel %vm146, %v342, 0.0
  %v464 = vadd.f32 %v462, %v463
  %v465 = vsel %vm146, %v343, 0.0
  %v466 = vadd.f32 %v464, %v465
  %v467 = vsel %vm146, %v344, 0.0
  %v468 = vadd.f32 %v466, %v467
  %v469 = vsel %vm146, %v345, 0.0
  %v470 = vadd.f32 %v468, %v469
  %v471 = vsel %vm146, %v346, 0.0
  %v472 = vadd.f32 %v470, %v471
  %v473 = vsel %vm146, %v347, 0.0
  %v474 = vadd.f32 %v472, %v473
  %v475 = vrot.slane %v474, 4
  %v476 = vadd.f32 %v474, %v475
  %v477 = vrot.slane %v476, 2
  %v478 = vadd.f32 %v476, %v477
  %v479 = vrot.slane %v478, 1
  %v480 = vadd.f32 %v478, %v479
  %v481 = vadd.f32 %v283, %v480
  %482 = vst.msk [vmem:[#allocation3] sm:$0x1] %vm281, %v481
  // Predicated region
  $region10: #{netg_forward.20} parent=0 // pred_check
    %p483 = pneg %p10
  $region11: #{netg_forward.20} parent=0 // pred_check_branch
    %485 = sbr.rel (%p483) target = $region13
  $region12: #{netg_forward.20} parent=0 // pred_region
    %v486 = vld [vmem:[#allocation2] sm:$0x1]
    %v487 = vmul.f32 %v486, 0.001953125
    %v488 = vld [vmem:[#allocation3] sm:$0x1]
    %v489 = vmul.f32 %v488, 0.001953125
    %v490 = vmul.f32 %v487, %v487
    %v491 = vsub.f32 %v489, %v490
    %v492 = vmax.f32 %v491, 0.0
    %493 = vst.msk [vmem:[%s1] sm:$0x1] %vm281, %v487
    %v494 = vadd.f32 %v492, 1e-05
    %v495 = vrsqrt.pop %v494
    %496 = vst.msk [vmem:[%s2] sm:$0x1] %vm281, %v495
  $region13: #{netg_forward.20} parent=0 // pred_fallthru
    _
  // Predicated region
  $region14: #{netg_forward.20} parent=0 // pred_check
    _
  $region15: #{netg_forward.20} parent=0 // pred_check_branch
    %498 = sbr.rel (0) target = $region17
  $region16: #{netg_forward.20} parent=0 // pred_region
    _
  $region17: #{netg_forward.20} parent=0 // pred_fallthru
    _
  // Predicated region
  $region18: #{netg_forward.20} parent=0 // pred_check
    _
  $region19: #{netg_forward.20} parent=0 // pred_check_branch
    %500 = sbr.rel (0) target = $region21
  $region20: #{netg_forward.20} parent=0 // pred_region
    _
  $region21: #{netg_forward.20} parent=0 // pred_fallthru
    _
  // Predicated region
  $region22: #{netg_forward.20} parent=0 // pred_check
    _
  $region23: #{netg_forward.20} parent=0 // pred_check_branch
    %502 = sbr.rel (0) target = $region25
  $region24: #{netg_forward.20} parent=0 // pred_region
    _
  $region25: #{netg_forward.20} parent=0 // pred_fallthru
    _
  // Predicated region
  $region26: #{netg_forward.20} parent=0 // pred_check
    _
  $region27: #{netg_forward.20} parent=0 // pred_check_branch
    %504 = sbr.rel (0) target = $region29
  $region28: #{netg_forward.20} parent=0 // pred_region
    _
  $region29: #{netg_forward.20} parent=0 // pred_fallthru
    _

// kernel: netg_forward.21
$region0: #{netg_forward.21}
  #allocation0 [shape = 'u32[]', space=smem, size = 0x4, offset = 0x4, fixed_abs, tag = 'smem constant byte address 0x4 - core index']
  #allocation1 [shape = 'u32[144,128]{1,0:T(1,128)}', space=vmem, size = 0x12000, scoped, tag = 'internal scratch']
  %s0 = inlined_call_operand.vmem [shape: bf16[512,16], index: 0, kind: input, shape index: {}]
  %s1 = inlined_call_operand.vmem [shape: f32[1,16], index: 1, kind: input, shape index: {}]
  %s2 = inlined_call_operand.vmem [shape: f32[1,16], index: 2, kind: input, shape index: {}]
  %s3 = inlined_call_operand.vmem [shape: f32[1,16], index: 3, kind: input, shape index: {}]
  %s4 = inlined_call_operand.vmem [shape: f32[1,16], index: 4, kind: input, shape index: {}]
  %s5 = inlined_call_operand.vmem [shape: bf16[512,16], index: 5, kind: output, shape index: {}]
  %s6 = sld [smem:[#allocation0]]
  $region30: #{netg_forward.21} parent=0
    _
  %s8 = ssub.s32 1, %s6
  %s9 = scalar_select 0, %s8, %s6
  // Predicated region
  $region2: #{netg_forward.21} parent=0 // pred_check
    _
  $region3: #{netg_forward.21} parent=0 // pred_check_branch
    %11 = sbr.rel (0) target = $region5
  $region4: #{netg_forward.21} parent=0 // pred_region
    _
  $region5: #{netg_forward.21} parent=0 // pred_fallthru
    _
  // Predicated region
  $region6: #{netg_forward.21} parent=0 // pred_check
    _
  $region7: #{netg_forward.21} parent=0 // pred_check_branch
    %13 = sbr.rel (0) target = $region9
  $region8: #{netg_forward.21} parent=0 // pred_region
    _
  $region9: #{netg_forward.21} parent=0 // pred_fallthru
    _
  // Predicated region
  $region10: #{netg_forward.21} parent=0 // pred_check
    _
  $region11: #{netg_forward.21} parent=0 // pred_check_branch
    %15 = sbr.rel (0) target = $region13
  $region12: #{netg_forward.21} parent=0 // pred_region
    _
  $region13: #{netg_forward.21} parent=0 // pred_fallthru
    _
  // Predicated region
  $region14: #{netg_forward.21} parent=0 // pred_check
    _
  $region15: #{netg_forward.21} parent=0 // pred_check_branch
    %17 = sbr.rel (0) target = $region17
  $region16: #{netg_forward.21} parent=0 // pred_region
    _
  $region17: #{netg_forward.21} parent=0 // pred_fallthru
    _
  // Predicated region
  $region18: #{netg_forward.21} parent=0 // pred_check
    _
  $region19: #{netg_forward.21} parent=0 // pred_check_branch
    %19 = sbr.rel (0) target = $region21
  $region20: #{netg_forward.21} parent=0 // pred_region
    _
  $region21: #{netg_forward.21} parent=0 // pred_fallthru
    _
  %v20 = vld [vmem:[%s0] sm:$0xf]
  %v21 = vld [vmem:[%s0 + $0x4] sm:$0xf]
  %v22 = vld [vmem:[%s0 + $0x8] sm:$0xf]
  %v23 = vld [vmem:[%s0 + $0xc] sm:$0xf]
  %v24 = vld [vmem:[%s0 + $0x10] sm:$0xf]
  %v25 = vld [vmem:[%s0 + $0x14] sm:$0xf]
  %v26 = vld [vmem:[%s0 + $0x18] sm:$0xf]
  %v27 = vld [vmem:[%s0 + $0x1c] sm:$0xf]
  %v28 = vld [vmem:[%s0 + $0x20] sm:$0xf]
  %v29 = vld [vmem:[%s0 + $0x24] sm:$0xf]
  %v30 = vld [vmem:[%s0 + $0x28] sm:$0xf]
  %v31 = vld [vmem:[%s0 + $0x2c] sm:$0xf]
  %v32 = vld [vmem:[%s0 + $0x30] sm:$0xf]
  %v33 = vld [vmem:[%s0 + $0x34] sm:$0xf]
  %v34 = vld [vmem:[%s0 + $0x38] sm:$0xf]
  %v35 = vld [vmem:[%s0 + $0x3c] sm:$0xf]
  %v36 = vld [vmem:[%s0 + $0x40] sm:$0xf]
  %v37 = vld [vmem:[%s0 + $0x44] sm:$0xf]
  %v38 = vld [vmem:[%s0 + $0x48] sm:$0xf]
  %v39 = vld [vmem:[%s0 + $0x4c] sm:$0xf]
  %v40 = vld [vmem:[%s0 + $0x50] sm:$0xf]
  %v41 = vld [vmem:[%s0 + $0x54] sm:$0xf]
  %v42 = vld [vmem:[%s0 + $0x58] sm:$0xf]
  %v43 = vld [vmem:[%s0 + $0x5c] sm:$0xf]
  %v44 = vld [vmem:[%s0 + $0x60] sm:$0xf]
  %v45 = vld [vmem:[%s0 + $0x64] sm:$0xf]
  %v46 = vld [vmem:[%s0 + $0x68] sm:$0xf]
  %v47 = vld [vmem:[%s0 + $0x6c] sm:$0xf]
  %v48 = vld [vmem:[%s0 + $0x70] sm:$0xf]
  %v49 = vld [vmem:[%s0 + $0x74] sm:$0xf]
  %v50 = vld [vmem:[%s0 + $0x78] sm:$0xf]
  %v51 = vld [vmem:[%s0 + $0x7c] sm:$0xf]
  %v52 = vld [vmem:[%s0 + $0x80] sm:$0xf]
  %v53 = vld [vmem:[%s0 + $0x84] sm:$0xf]
  %v54 = vld [vmem:[%s0 + $0x88] sm:$0xf]
  %v55 = vld [vmem:[%s0 + $0x8c] sm:$0xf]
  %v56 = vld [vmem:[%s0 + $0x90] sm:$0xf]
  %v57 = vld [vmem:[%s0 + $0x94] sm:$0xf]
  %v58 = vld [vmem:[%s0 + $0x98] sm:$0xf]
  %v59 = vld [vmem:[%s0 + $0x9c] sm:$0xf]
  %v60 = vld [vmem:[%s0 + $0xa0] sm:$0xf]
  %v61 = vld [vmem:[%s0 + $0xa4] sm:$0xf]
  %v62 = vld [vmem:[%s0 + $0xa8] sm:$0xf]
  %v63 = vld [vmem:[%s0 + $0xac] sm:$0xf]
  %v64 = vld [vmem:[%s0 + $0xb0] sm:$0xf]
  %v65 = vld [vmem:[%s0 + $0xb4] sm:$0xf]
  %v66 = vld [vmem:[%s0 + $0xb8] sm:$0xf]
  %v67 = vld [vmem:[%s0 + $0xbc] sm:$0xf]
  %v68 = vld [vmem:[%s0 + $0xc0] sm:$0xf]
  %v69 = vld [vmem:[%s0 + $0xc4] sm:$0xf]
  %v70 = vld [vmem:[%s0 + $0xc8] sm:$0xf]
  %v71 = vld [vmem:[%s0 + $0xcc] sm:$0xf]
  %v72 = vld [vmem:[%s0 + $0xd0] sm:$0xf]
  %v73 = vld [vmem:[%s0 + $0xd4] sm:$0xf]
  %v74 = vld [vmem:[%s0 + $0xd8] sm:$0xf]
  %v75 = vld [vmem:[%s0 + $0xdc] sm:$0xf]
  %v76 = vld [vmem:[%s0 + $0xe0] sm:$0xf]
  %v77 = vld [vmem:[%s0 + $0xe4] sm:$0xf]
  %v78 = vld [vmem:[%s0 + $0xe8] sm:$0xf]
  %v79 = vld [vmem:[%s0 + $0xec] sm:$0xf]
  %v80 = vld [vmem:[%s0 + $0xf0] sm:$0xf]
  %v81 = vld [vmem:[%s0 + $0xf4] sm:$0xf]
  %v82 = vld [vmem:[%s0 + $0xf8] sm:$0xf]
  %v83 = vld [vmem:[%s0 + $0xfc] sm:$0xf]
  %v84 = vunpack.c.l.bf16 %v20
  %v85 = vunpack.c.l.bf16 %v21
  %v86 = vunpack.c.l.bf16 %v22
  %v87 = vunpack.c.l.bf16 %v23
  %v88 = vunpack.c.l.bf16 %v24
  %v89 = vunpack.c.l.bf16 %v25
  %v90 = vunpack.c.l.bf16 %v26
  %v91 = vunpack.c.l.bf16 %v27
  %v92 = vunpack.c.l.bf16 %v28
  %v93 = vunpack.c.l.bf16 %v29
  %v94 = vunpack.c.l.bf16 %v30
  %v95 = vunpack.c.l.bf16 %v31
  %v96 = vunpack.c.l.bf16 %v32
  %v97 = vunpack.c.l.bf16 %v33
  %v98 = vunpack.c.l.bf16 %v34
  %v99 = vunpack.c.l.bf16 %v35
  %v100 = vunpack.c.l.bf16 %v36
  %v101 = vunpack.c.l.bf16 %v37
  %v102 = vunpack.c.l.bf16 %v38
  %v103 = vunpack.c.l.bf16 %v39
  %v104 = vunpack.c.l.bf16 %v40
  %v105 = vunpack.c.l.bf16 %v41
  %v106 = vunpack.c.l.bf16 %v42
  %v107 = vunpack.c.l.bf16 %v43
  %v108 = vunpack.c.l.bf16 %v44
  %v109 = vunpack.c.l.bf16 %v45
  %v110 = vunpack.c.l.bf16 %v46
  %v111 = vunpack.c.l.bf16 %v47
  %v112 = vunpack.c.l.bf16 %v48
  %v113 = vunpack.c.l.bf16 %v49
  %v114 = vunpack.c.l.bf16 %v50
  %v115 = vunpack.c.l.bf16 %v51
  %v116 = vunpack.c.l.bf16 %v52
  %v117 = vunpack.c.l.bf16 %v53
  %v118 = vunpack.c.l.bf16 %v54
  %v119 = vunpack.c.l.bf16 %v55
  %v120 = vunpack.c.l.bf16 %v56
  %v121 = vunpack.c.l.bf16 %v57
  %v122 = vunpack.c.l.bf16 %v58
  %v123 = vunpack.c.l.bf16 %v59
  %v124 = vunpack.c.l.bf16 %v60
  %v125 = vunpack.c.l.bf16 %v61
  %v126 = vunpack.c.l.bf16 %v62
  %v127 = vunpack.c.l.bf16 %v63
  %v128 = vunpack.c.l.bf16 %v64
  %v129 = vunpack.c.l.bf16 %v65
  %v130 = vunpack.c.l.bf16 %v66
  %v131 = vunpack.c.l.bf16 %v67
  %v132 = vunpack.c.l.bf16 %v68
  %v133 = vunpack.c.l.bf16 %v69
  %v134 = vunpack.c.l.bf16 %v70
  %v135 = vunpack.c.l.bf16 %v71
  %v136 = vunpack.c.l.bf16 %v72
  %v137 = vunpack.c.l.bf16 %v73
  %v138 = vunpack.c.l.bf16 %v74
  %v139 = vunpack.c.l.bf16 %v75
  %v140 = vunpack.c.l.bf16 %v76
  %v141 = vunpack.c.l.bf16 %v77
  %v142 = vunpack.c.l.bf16 %v78
  %v143 = vunpack.c.l.bf16 %v79
  %v144 = vunpack.c.l.bf16 %v80
  %v145 = vunpack.c.l.bf16 %v81
  %v146 = vunpack.c.l.bf16 %v82
  %v147 = vunpack.c.l.bf16 %v83
  %v148 = vld [vmem:[%s2] sm:$0x1]
  %v149 = vld [vmem:[%s3] sm:$0x1]
  %v150 = vmul.f32 %v148, %v149
  %v151 = vld [vmem:[%s1] sm:$0x1]
  %v153 = vlaneseq
  %v154 = vshrl.u32 %v153, 7
  %v155 = vsub.s32 0, %v154
  %v156 = vrot.slane %v151, %v155
  %v158 = vsub.f32 %v84, %v156
  %v159 = vsub.f32 %v85, %v156
  %v160 = vsub.f32 %v86, %v156
  %v161 = vsub.f32 %v87, %v156
  %v162 = vsub.f32 %v88, %v156
  %v163 = vsub.f32 %v89, %v156
  %v164 = vsub.f32 %v90, %v156
  %v165 = vsub.f32 %v91, %v156
  %v166 = vsub.f32 %v92, %v156
  %v167 = vsub.f32 %v93, %v156
  %v168 = vsub.f32 %v94, %v156
  %v169 = vsub.f32 %v95, %v156
  %v170 = vsub.f32 %v96, %v156
  %v171 = vsub.f32 %v97, %v156
  %v172 = vsub.f32 %v98, %v156
  %v173 = vsub.f32 %v99, %v156
  %v174 = vsub.f32 %v100, %v156
  %v175 = vsub.f32 %v101, %v156
  %v176 = vsub.f32 %v102, %v156
  %v177 = vsub.f32 %v103, %v156
  %v178 = vsub.f32 %v104, %v156
  %v179 = vsub.f32 %v105, %v156
  %v180 = vsub.f32 %v106, %v156
  %v181 = vsub.f32 %v107, %v156
  %v182 = vsub.f32 %v108, %v156
  %v183 = vsub.f32 %v109, %v156
  %v184 = vsub.f32 %v110, %v156
  %v185 = vsub.f32 %v111, %v156
  %v186 = vsub.f32 %v112, %v156
  %v187 = vsub.f32 %v113, %v156
  %v188 = vsub.f32 %v114, %v156
  %v189 = vsub.f32 %v115, %v156
  %v190 = vsub.f32 %v116, %v156
  %v191 = vsub.f32 %v117, %v156
  %v192 = vsub.f32 %v118, %v156
  %v193 = vsub.f32 %v119, %v156
  %v194 = vsub.f32 %v120, %v156
  %v195 = vsub.f32 %v121, %v156
  %v196 = vsub.f32 %v122, %v156
  %v197 = vsub.f32 %v123, %v156
  %v198 = vsub.f32 %v124, %v156
  %v199 = vsub.f32 %v125, %v156
  %v200 = vsub.f32 %v126, %v156
  %v201 = vsub.f32 %v127, %v156
  %v202 = vsub.f32 %v128, %v156
  %v203 = vsub.f32 %v129, %v156
  %v204 = vsub.f32 %v130, %v156
  %v205 = vsub.f32 %v131, %v156
  %v206 = vsub.f32 %v132, %v156
  %v207 = vsub.f32 %v133, %v156
  %v208 = vsub.f32 %v134, %v156
  %v209 = vsub.f32 %v135, %v156
  %v210 = vsub.f32 %v136, %v156
  %v211 = vsub.f32 %v137, %v156
  %v212 = vsub.f32 %v138, %v156
  %v213 = vsub.f32 %v139, %v156
  %v214 = vsub.f32 %v140, %v156
  %v215 = vsub.f32 %v141, %v156
  %v216 = vsub.f32 %v142, %v156
  %v217 = vsub.f32 %v143, %v156
  %v218 = vsub.f32 %v144, %v156
  %v219 = vsub.f32 %v145, %v156
  %v220 = vsub.f32 %v146, %v156
  %v221 = vsub.f32 %v147, %v156
  %v223 = vlaneseq
  %v224 = vshrl.u32 %v223, 7
  %v225 = vsub.s32 0, %v224
  %v226 = vrot.slane %v150, %v225
  %v228 = vmul.f32 %v158, %v226
  %v229 = vmul.f32 %v159, %v226
  %v230 = vmul.f32 %v160, %v226
  %v231 = vmul.f32 %v161, %v226
  %v232 = vmul.f32 %v162, %v226
  %v233 = vmul.f32 %v163, %v226
  %v234 = vmul.f32 %v164, %v226
  %v235 = vmul.f32 %v165, %v226
  %v236 = vmul.f32 %v166, %v226
  %v237 = vmul.f32 %v167, %v226
  %v238 = vmul.f32 %v168, %v226
  %v239 = vmul.f32 %v169, %v226
  %v240 = vmul.f32 %v170, %v226
  %v241 = vmul.f32 %v171, %v226
  %v242 = vmul.f32 %v172, %v226
  %v243 = vmul.f32 %v173, %v226
  %v244 = vmul.f32 %v174, %v226
  %v245 = vmul.f32 %v175, %v226
  %v246 = vmul.f32 %v176, %v226
  %v247 = vmul.f32 %v177, %v226
  %v248 = vmul.f32 %v178, %v226
  %v249 = vmul.f32 %v179, %v226
  %v250 = vmul.f32 %v180, %v226
  %v251 = vmul.f32 %v181, %v226
  %v252 = vmul.f32 %v182, %v226
  %v253 = vmul.f32 %v183, %v226
  %v254 = vmul.f32 %v184, %v226
  %v255 = vmul.f32 %v185, %v226
  %v256 = vmul.f32 %v186, %v226
  %v257 = vmul.f32 %v187, %v226
  %v258 = vmul.f32 %v188, %v226
  %v259 = vmul.f32 %v189, %v226
  %v260 = vmul.f32 %v190, %v226
  %v261 = vmul.f32 %v191, %v226
  %v262 = vmul.f32 %v192, %v226
  %v263 = vmul.f32 %v193, %v226
  %v264 = vmul.f32 %v194, %v226
  %v265 = vmul.f32 %v195, %v226
  %v266 = vmul.f32 %v196, %v226
  %v267 = vmul.f32 %v197, %v226
  %v268 = vmul.f32 %v198, %v226
  %v269 = vmul.f32 %v199, %v226
  %v270 = vmul.f32 %v200, %v226
  %v271 = vmul.f32 %v201, %v226
  %v272 = vmul.f32 %v202, %v226
  %v273 = vmul.f32 %v203, %v226
  %v274 = vmul.f32 %v204, %v226
  %v275 = vmul.f32 %v205, %v226
  %v276 = vmul.f32 %v206, %v226
  %v277 = vmul.f32 %v207, %v226
  %v278 = vmul.f32 %v208, %v226
  %v279 = vmul.f32 %v209, %v226
  %v280 = vmul.f32 %v210, %v226
  %v281 = vmul.f32 %v211, %v226
  %v282 = vmul.f32 %v212, %v226
  %v283 = vmul.f32 %v213, %v226
  %v284 = vmul.f32 %v214, %v226
  %v285 = vmul.f32 %v215, %v226
  %v286 = vmul.f32 %v216, %v226
  %v287 = vmul.f32 %v217, %v226
  %v288 = vmul.f32 %v218, %v226
  %v289 = vmul.f32 %v219, %v226
  %v290 = vmul.f32 %v220, %v226
  %v291 = vmul.f32 %v221, %v226
  %v292 = vld [vmem:[%s4] sm:$0x1]
  %v294 = vlaneseq
  %v295 = vshrl.u32 %v294, 7
  %v296 = vsub.s32 0, %v295
  %v297 = vrot.slane %v292, %v296
  %v299 = vadd.f32 %v228, %v297
  %v300 = vadd.f32 %v229, %v297
  %v301 = vadd.f32 %v230, %v297
  %v302 = vadd.f32 %v231, %v297
  %v303 = vadd.f32 %v232, %v297
  %v304 = vadd.f32 %v233, %v297
  %v305 = vadd.f32 %v234, %v297
  %v306 = vadd.f32 %v235, %v297
  %v307 = vadd.f32 %v236, %v297
  %v308 = vadd.f32 %v237, %v297
  %v309 = vadd.f32 %v238, %v297
  %v310 = vadd.f32 %v239, %v297
  %v311 = vadd.f32 %v240, %v297
  %v312 = vadd.f32 %v241, %v297
  %v313 = vadd.f32 %v242, %v297
  %v314 = vadd.f32 %v243, %v297
  %v315 = vadd.f32 %v244, %v297
  %v316 = vadd.f32 %v245, %v297
  %v317 = vadd.f32 %v246, %v297
  %v318 = vadd.f32 %v247, %v297
  %v319 = vadd.f32 %v248, %v297
  %v320 = vadd.f32 %v249, %v297
  %v321 = vadd.f32 %v250, %v297
  %v322 = vadd.f32 %v251, %v297
  %v323 = vadd.f32 %v252, %v297
  %v324 = vadd.f32 %v253, %v297
  %v325 = vadd.f32 %v254, %v297
  %v326 = vadd.f32 %v255, %v297
  %v327 = vadd.f32 %v256, %v297
  %v328 = vadd.f32 %v257, %v297
  %v329 = vadd.f32 %v258, %v297
  %v330 = vadd.f32 %v259, %v297
  %v331 = vadd.f32 %v260, %v297
  %v332 = vadd.f32 %v261, %v297
  %v333 = vadd.f32 %v262, %v297
  %v334 = vadd.f32 %v263, %v297
  %v335 = vadd.f32 %v264, %v297
  %v336 = vadd.f32 %v265, %v297
  %v337 = vadd.f32 %v266, %v297
  %v338 = vadd.f32 %v267, %v297
  %v339 = vadd.f32 %v268, %v297
  %v340 = vadd.f32 %v269, %v297
  %v341 = vadd.f32 %v270, %v297
  %v342 = vadd.f32 %v271, %v297
  %v343 = vadd.f32 %v272, %v297
  %v344 = vadd.f32 %v273, %v297
  %v345 = vadd.f32 %v274, %v297
  %v346 = vadd.f32 %v275, %v297
  %v347 = vadd.f32 %v276, %v297
  %v348 = vadd.f32 %v277, %v297
  %v349 = vadd.f32 %v278, %v297
  %v350 = vadd.f32 %v279, %v297
  %v351 = vadd.f32 %v280, %v297
  %v352 = vadd.f32 %v281, %v297
  %v353 = vadd.f32 %v282, %v297
  %v354 = vadd.f32 %v283, %v297
  %v355 = vadd.f32 %v284, %v297
  %v356 = vadd.f32 %v285, %v297
  %v357 = vadd.f32 %v286, %v297
  %v358 = vadd.f32 %v287, %v297
  %v359 = vadd.f32 %v288, %v297
  %v360 = vadd.f32 %v289, %v297
  %v361 = vadd.f32 %v290, %v297
  %v362 = vadd.f32 %v291, %v297
  %v363 = vmax.f32 %v299, 0.0
  %v364 = vmax.f32 %v300, 0.0
  %v365 = vmax.f32 %v301, 0.0
  %v366 = vmax.f32 %v302, 0.0
  %v367 = vmax.f32 %v303, 0.0
  %v368 = vmax.f32 %v304, 0.0
  %v369 = vmax.f32 %v305, 0.0
  %v370 = vmax.f32 %v306, 0.0
  %v371 = vmax.f32 %v307, 0.0
  %v372 = vmax.f32 %v308, 0.0
  %v373 = vmax.f32 %v309, 0.0
  %v374 = vmax.f32 %v310, 0.0
  %v375 = vmax.f32 %v311, 0.0
  %v376 = vmax.f32 %v312, 0.0
  %v377 = vmax.f32 %v313, 0.0
  %v378 = vmax.f32 %v314, 0.0
  %v379 = vmax.f32 %v315, 0.0
  %v380 = vmax.f32 %v316, 0.0
  %v381 = vmax.f32 %v317, 0.0
  %v382 = vmax.f32 %v318, 0.0
  %v383 = vmax.f32 %v319, 0.0
  %v384 = vmax.f32 %v320, 0.0
  %v385 = vmax.f32 %v321, 0.0
  %v386 = vmax.f32 %v322, 0.0
  %v387 = vmax.f32 %v323, 0.0
  %v388 = vmax.f32 %v324, 0.0
  %v389 = vmax.f32 %v325, 0.0
  %v390 = vmax.f32 %v326, 0.0
  %v391 = vmax.f32 %v327, 0.0
  %v392 = vmax.f32 %v328, 0.0
  %v393 = vmax.f32 %v329, 0.0
  %v394 = vmax.f32 %v330, 0.0
  %v395 = vmax.f32 %v331, 0.0
  %v396 = vmax.f32 %v332, 0.0
  %v397 = vmax.f32 %v333, 0.0
  %v398 = vmax.f32 %v334, 0.0
  %v399 = vmax.f32 %v335, 0.0
  %v400 = vmax.f32 %v336, 0.0
  %v401 = vmax.f32 %v337, 0.0
  %v402 = vmax.f32 %v338, 0.0
  %v403 = vmax.f32 %v339, 0.0
  %v404 = vmax.f32 %v340, 0.0
  %v405 = vmax.f32 %v341, 0.0
  %v406 = vmax.f32 %v342, 0.0
  %v407 = vmax.f32 %v343, 0.0
  %v408 = vmax.f32 %v344, 0.0
  %v409 = vmax.f32 %v345, 0.0
  %v410 = vmax.f32 %v346, 0.0
  %v411 = vmax.f32 %v347, 0.0
  %v412 = vmax.f32 %v348, 0.0
  %v413 = vmax.f32 %v349, 0.0
  %v414 = vmax.f32 %v350, 0.0
  %v415 = vmax.f32 %v351, 0.0
  %v416 = vmax.f32 %v352, 0.0
  %v417 = vmax.f32 %v353, 0.0
  %v418 = vmax.f32 %v354, 0.0
  %v419 = vmax.f32 %v355, 0.0
  %v420 = vmax.f32 %v356, 0.0
  %v421 = vmax.f32 %v357, 0.0
  %v422 = vmax.f32 %v358, 0.0
  %v423 = vmax.f32 %v359, 0.0
  %v424 = vmax.f32 %v360, 0.0
  %v425 = vmax.f32 %v361, 0.0
  %v426 = vmax.f32 %v362, 0.0
  %v427 = vpack.c.bf16 %v364, %v363
  %v428 = vpack.c.bf16 %v366, %v365
  %v429 = vpack.c.bf16 %v368, %v367
  %v430 = vpack.c.bf16 %v370, %v369
  %v431 = vpack.c.bf16 %v372, %v371
  %v432 = vpack.c.bf16 %v374, %v373
  %v433 = vpack.c.bf16 %v376, %v375
  %v434 = vpack.c.bf16 %v378, %v377
  %v435 = vpack.c.bf16 %v380, %v379
  %v436 = vpack.c.bf16 %v382, %v381
  %v437 = vpack.c.bf16 %v384, %v383
  %v438 = vpack.c.bf16 %v386, %v385
  %v439 = vpack.c.bf16 %v388, %v387
  %v440 = vpack.c.bf16 %v390, %v389
  %v441 = vpack.c.bf16 %v392, %v391
  %v442 = vpack.c.bf16 %v394, %v393
  %v443 = vpack.c.bf16 %v396, %v395
  %v444 = vpack.c.bf16 %v398, %v397
  %v445 = vpack.c.bf16 %v400, %v399
  %v446 = vpack.c.bf16 %v402, %v401
  %v447 = vpack.c.bf16 %v404, %v403
  %v448 = vpack.c.bf16 %v406, %v405
  %v449 = vpack.c.bf16 %v408, %v407
  %v450 = vpack.c.bf16 %v410, %v409
  %v451 = vpack.c.bf16 %v412, %v411
  %v452 = vpack.c.bf16 %v414, %v413
  %v453 = vpack.c.bf16 %v416, %v415
  %v454 = vpack.c.bf16 %v418, %v417
  %v455 = vpack.c.bf16 %v420, %v419
  %v456 = vpack.c.bf16 %v422, %v421
  %v457 = vpack.c.bf16 %v424, %v423
  %v458 = vpack.c.bf16 %v426, %v425
  %v491 = vunpack.c.l.b16 %v427
  %v492 = vunpack.c.h.b16 %v427
  %v493 = vunpack.c.l.b16 %v428
  %v494 = vunpack.c.h.b16 %v428
  %v495 = vunpack.c.l.b16 %v429
  %v496 = vunpack.c.h.b16 %v429
  %v497 = vunpack.c.l.b16 %v430
  %v498 = vunpack.c.h.b16 %v430
  %v499 = vunpack.c.l.b16 %v431
  %v500 = vunpack.c.h.b16 %v431
  %v501 = vunpack.c.l.b16 %v432
  %v502 = vunpack.c.h.b16 %v432
  %v503 = vunpack.c.l.b16 %v433
  %v504 = vunpack.c.h.b16 %v433
  %v505 = vunpack.c.l.b16 %v434
  %v506 = vunpack.c.h.b16 %v434
  %v507 = vunpack.c.l.b16 %v435
  %v508 = vunpack.c.h.b16 %v435
  %v509 = vunpack.c.l.b16 %v436
  %v510 = vunpack.c.h.b16 %v436
  %v511 = vunpack.c.l.b16 %v437
  %v512 = vunpack.c.h.b16 %v437
  %v513 = vunpack.c.l.b16 %v438
  %v514 = vunpack.c.h.b16 %v438
  %v515 = vunpack.c.l.b16 %v439
  %v516 = vunpack.c.h.b16 %v439
  %v517 = vunpack.c.l.b16 %v440
  %v518 = vunpack.c.h.b16 %v440
  %v519 = vunpack.c.l.b16 %v441
  %v520 = vunpack.c.h.b16 %v441
  %v521 = vunpack.c.l.b16 %v442
  %v522 = vunpack.c.h.b16 %v442
  %v523 = vunpack.c.l.b16 %v443
  %v524 = vunpack.c.h.b16 %v443
  %v525 = vunpack.c.l.b16 %v444
  %v526 = vunpack.c.h.b16 %v444
  %v527 = vunpack.c.l.b16 %v445
  %v528 = vunpack.c.h.b16 %v445
  %v529 = vunpack.c.l.b16 %v446
  %v530 = vunpack.c.h.b16 %v446
  %v531 = vunpack.c.l.b16 %v447
  %v532 = vunpack.c.h.b16 %v447
  %v533 = vunpack.c.l.b16 %v448
  %v534 = vunpack.c.h.b16 %v448
  %v535 = vunpack.c.l.b16 %v449
  %v536 = vunpack.c.h.b16 %v449
  %v537 = vunpack.c.l.b16 %v450
  %v538 = vunpack.c.h.b16 %v450
  %v539 = vunpack.c.l.b16 %v451
  %v540 = vunpack.c.h.b16 %v451
  %v541 = vunpack.c.l.b16 %v452
  %v542 = vunpack.c.h.b16 %v452
  %v543 = vunpack.c.l.b16 %v453
  %v544 = vunpack.c.h.b16 %v453
  %v545 = vunpack.c.l.b16 %v454
  %v546 = vunpack.c.h.b16 %v454
  %v547 = vunpack.c.l.b16 %v455
  %v548 = vunpack.c.h.b16 %v455
  %v549 = vunpack.c.l.b16 %v456
  %v550 = vunpack.c.h.b16 %v456
  %v551 = vunpack.c.l.b16 %v457
  %v552 = vunpack.c.h.b16 %v457
  %v553 = vunpack.c.l.b16 %v458
  %v554 = vunpack.c.h.b16 %v458
  %v555 = vpack.c.b16 %v491, %v491
  %v556 = vpack.c.b16 %v492, %v492
  %v557 = vpack.c.b16 %v493, %v493
  %v558 = vpack.c.b16 %v494, %v494
  %v559 = vpack.c.b16 %v495, %v495
  %v560 = vpack.c.b16 %v496, %v496
  %v561 = vpack.c.b16 %v497, %v497
  %v562 = vpack.c.b16 %v498, %v498
  %v563 = vpack.c.b16 %v499, %v499
  %v564 = vpack.c.b16 %v500, %v500
  %v565 = vpack.c.b16 %v501, %v501
  %v566 = vpack.c.b16 %v502, %v502
  %v567 = vpack.c.b16 %v503, %v503
  %v568 = vpack.c.b16 %v504, %v504
  %v569 = vpack.c.b16 %v505, %v505
  %v570 = vpack.c.b16 %v506, %v506
  %v571 = vpack.c.b16 %v507, %v507
  %v572 = vpack.c.b16 %v508, %v508
  %v573 = vpack.c.b16 %v509, %v509
  %v574 = vpack.c.b16 %v510, %v510
  %v575 = vpack.c.b16 %v511, %v511
  %v576 = vpack.c.b16 %v512, %v512
  %v577 = vpack.c.b16 %v513, %v513
  %v578 = vpack.c.b16 %v514, %v514
  %v579 = vpack.c.b16 %v515, %v515
  %v580 = vpack.c.b16 %v516, %v516
  %v581 = vpack.c.b16 %v517, %v517
  %v582 = vpack.c.b16 %v518, %v518
  %v583 = vpack.c.b16 %v519, %v519
  %v584 = vpack.c.b16 %v520, %v520
  %v585 = vpack.c.b16 %v521, %v521
  %v586 = vpack.c.b16 %v522, %v522
  %v587 = vpack.c.b16 %v523, %v523
  %v588 = vpack.c.b16 %v524, %v524
  %v589 = vpack.c.b16 %v525, %v525
  %v590 = vpack.c.b16 %v526, %v526
  %v591 = vpack.c.b16 %v527, %v527
  %v592 = vpack.c.b16 %v528, %v528
  %v593 = vpack.c.b16 %v529, %v529
  %v594 = vpack.c.b16 %v530, %v530
  %v595 = vpack.c.b16 %v531, %v531
  %v596 = vpack.c.b16 %v532, %v532
  %v597 = vpack.c.b16 %v533, %v533
  %v598 = vpack.c.b16 %v534, %v534
  %v599 = vpack.c.b16 %v535, %v535
  %v600 = vpack.c.b16 %v536, %v536
  %v601 = vpack.c.b16 %v537, %v537
  %v602 = vpack.c.b16 %v538, %v538
  %v603 = vpack.c.b16 %v539, %v539
  %v604 = vpack.c.b16 %v540, %v540
  %v605 = vpack.c.b16 %v541, %v541
  %v606 = vpack.c.b16 %v542, %v542
  %v607 = vpack.c.b16 %v543, %v543
  %v608 = vpack.c.b16 %v544, %v544
  %v609 = vpack.c.b16 %v545, %v545
  %v610 = vpack.c.b16 %v546, %v546
  %v611 = vpack.c.b16 %v547, %v547
  %v612 = vpack.c.b16 %v548, %v548
  %v613 = vpack.c.b16 %v549, %v549
  %v614 = vpack.c.b16 %v550, %v550
  %v615 = vpack.c.b16 %v551, %v551
  %v616 = vpack.c.b16 %v552, %v552
  %v617 = vpack.c.b16 %v553, %v553
  %v618 = vpack.c.b16 %v554, %v554
  %vm683 = vcmask 125952
  %684 = vst.msk [vmem:[%s5] sm:$0xf] %vm683, %v555
  %685 = vst.msk [vmem:[%s5 + $0x4] sm:$0xf] %vm683, %v556
  %686 = vst.msk [vmem:[%s5 + $0x8] sm:$0xf] %vm683, %v557
  %687 = vst.msk [vmem:[%s5 + $0xc] sm:$0xf] %vm683, %v558
  %688 = vst.msk [vmem:[%s5 + $0x10] sm:$0xf] %vm683, %v559
  %689 = vst.msk [vmem:[%s5 + $0x14] sm:$0xf] %vm683, %v560
  %690 = vst.msk [vmem:[%s5 + $0x18] sm:$0xf] %vm683, %v561
  %691 = vst.msk [vmem:[%s5 + $0x1c] sm:$0xf] %vm683, %v562
  %692 = vst.msk [vmem:[%s5 + $0x20] sm:$0xf] %vm683, %v563
  %693 = vst.msk [vmem:[%s5 + $0x24] sm:$0xf] %vm683, %v564
  %694 = vst.msk [vmem:[%s5 + $0x28] sm:$0xf] %vm683, %v565
  %695 = vst.msk [vmem:[%s5 + $0x2c] sm:$0xf] %vm683, %v566
  %696 = vst.msk [vmem:[%s5 + $0x30] sm:$0xf] %vm683, %v567
  %697 = vst.msk [vmem:[%s5 + $0x34] sm:$0xf] %vm683, %v568
  %698 = vst.msk [vmem:[%s5 + $0x38] sm:$0xf] %vm683, %v569
  %699 = vst.msk [vmem:[%s5 + $0x3c] sm:$0xf] %vm683, %v570
  %700 = vst.msk [vmem:[%s5 + $0x40] sm:$0xf] %vm683, %v571
  %701 = vst.msk [vmem:[%s5 + $0x44] sm:$0xf] %vm683, %v572
  %702 = vst.msk [vmem:[%s5 + $0x48] sm:$0xf] %vm683, %v573
  %703 = vst.msk [vmem:[%s5 + $0x4c] sm:$0xf] %vm683, %v574
  %704 = vst.msk [vmem:[%s5 + $0x50] sm:$0xf] %vm683, %v575
  %705 = vst.msk [vmem:[%s5 + $0x54] sm:$0xf] %vm683, %v576
  %706 = vst.msk [vmem:[%s5 + $0x58] sm:$0xf] %vm683, %v577
  %707 = vst.msk [vmem:[%s5 + $0x5c] sm:$0xf] %vm683, %v578
  %708 = vst.msk [vmem:[%s5 + $0x60] sm:$0xf] %vm683, %v579
  %709 = vst.msk [vmem:[%s5 + $0x64] sm:$0xf] %vm683, %v580
  %710 = vst.msk [vmem:[%s5 + $0x68] sm:$0xf] %vm683, %v581
  %711 = vst.msk [vmem:[%s5 + $0x6c] sm:$0xf] %vm683, %v582
  %712 = vst.msk [vmem:[%s5 + $0x70] sm:$0xf] %vm683, %v583
  %713 = vst.msk [vmem:[%s5 + $0x74] sm:$0xf] %vm683, %v584
  %714 = vst.msk [vmem:[%s5 + $0x78] sm:$0xf] %vm683, %v585
  %715 = vst.msk [vmem:[%s5 + $0x7c] sm:$0xf] %vm683, %v586
  %716 = vst.msk [vmem:[%s5 + $0x80] sm:$0xf] %vm683, %v587
  %717 = vst.msk [vmem:[%s5 + $0x84] sm:$0xf] %vm683, %v588
  %718 = vst.msk [vmem:[%s5 + $0x88] sm:$0xf] %vm683, %v589
  %719 = vst.msk [vmem:[%s5 + $0x8c] sm:$0xf] %vm683, %v590
  %720 = vst.msk [vmem:[%s5 + $0x90] sm:$0xf] %vm683, %v591
  %721 = vst.msk [vmem:[%s5 + $0x94] sm:$0xf] %vm683, %v592
  %722 = vst.msk [vmem:[%s5 + $0x98] sm:$0xf] %vm683, %v593
  %723 = vst.msk [vmem:[%s5 + $0x9c] sm:$0xf] %vm683, %v594
  %724 = vst.msk [vmem:[%s5 + $0xa0] sm:$0xf] %vm683, %v595
  %725 = vst.msk [vmem:[%s5 + $0xa4] sm:$0xf] %vm683, %v596
  %726 = vst.msk [vmem:[%s5 + $0xa8] sm:$0xf] %vm683, %v597
  %727 = vst.msk [vmem:[%s5 + $0xac] sm:$0xf] %vm683, %v598
  %728 = vst.msk [vmem:[%s5 + $0xb0] sm:$0xf] %vm683, %v599
  %729 = vst.msk [vmem:[%s5 + $0xb4] sm:$0xf] %vm683, %v600
  %730 = vst.msk [vmem:[%s5 + $0xb8] sm:$0xf] %vm683, %v601
  %731 = vst.msk [vmem:[%s5 + $0xbc] sm:$0xf] %vm683, %v602
  %732 = vst.msk [vmem:[%s5 + $0xc0] sm:$0xf] %vm683, %v603
  %733 = vst.msk [vmem:[%s5 + $0xc4] sm:$0xf] %vm683, %v604
  %734 = vst.msk [vmem:[%s5 + $0xc8] sm:$0xf] %vm683, %v605
  %735 = vst.msk [vmem:[%s5 + $0xcc] sm:$0xf] %vm683, %v606
  %736 = vst.msk [vmem:[%s5 + $0xd0] sm:$0xf] %vm683, %v607
  %737 = vst.msk [vmem:[%s5 + $0xd4] sm:$0xf] %vm683, %v608
  %738 = vst.msk [vmem:[%s5 + $0xd8] sm:$0xf] %vm683, %v609
  %739 = vst.msk [vmem:[%s5 + $0xdc] sm:$0xf] %vm683, %v610
  %740 = vst.msk [vmem:[%s5 + $0xe0] sm:$0xf] %vm683, %v611
  %741 = vst.msk [vmem:[%s5 + $0xe4] sm:$0xf] %vm683, %v612
  %742 = vst.msk [vmem:[%s5 + $0xe8] sm:$0xf] %vm683, %v613
  %743 = vst.msk [vmem:[%s5 + $0xec] sm:$0xf] %vm683, %v614
  %744 = vst.msk [vmem:[%s5 + $0xf0] sm:$0xf] %vm683, %v615
  %745 = vst.msk [vmem:[%s5 + $0xf4] sm:$0xf] %vm683, %v616
  %746 = vst.msk [vmem:[%s5 + $0xf8] sm:$0xf] %vm683, %v617
  %747 = vst.msk [vmem:[%s5 + $0xfc] sm:$0xf] %vm683, %v618
  // Predicated region
  $region22: #{netg_forward.21} parent=0 // pred_check
    _
  $region23: #{netg_forward.21} parent=0 // pred_check_branch
    %749 = sbr.rel (0) target = $region25
  $region24: #{netg_forward.21} parent=0 // pred_region
    _
  $region25: #{netg_forward.21} parent=0 // pred_fallthru
    _
  // Predicated region
  $region26: #{netg_forward.21} parent=0 // pred_check
    _
  $region27: #{netg_forward.21} parent=0 // pred_check_branch
    %751 = sbr.rel (0) target = $region29
  $region28: #{netg_forward.21} parent=0 // pred_region
    _
  $region29: #{netg_forward.21} parent=0 // pred_fallthru
    _

// kernel: netg_forward.22
$region0: #{netg_forward.22}
  #allocation0 [shape = 'u32[]', space=smem, size = 0x4, offset = 0x4, fixed_abs, tag = 'smem constant byte address 0x4 - core index']
  #allocation1 [shape = 'u32[144,128]{1,0:T(1,128)}', space=vmem, size = 0x12000, scoped, tag = 'internal scratch']
  %s0 = inlined_call_operand.vmem [shape: bf16[584,128], index: 0, kind: input, shape index: {}]
  %s1 = inlined_call_operand.vmem [shape: bf16[128,128], index: 1, kind: input, shape index: {}]
  %s2 = inlined_call_operand.vmem [shape: bf16[584,128], index: 2, kind: output, shape index: {}]
  %s3 = sld [smem:[#allocation0]]
  $region18: #{netg_forward.22} parent=0
    _
  %s5 = ssub.s32 1, %s3
  %s6 = scalar_select 0, %s5, %s3
  // Predicated region
  $region2: #{netg_forward.22} parent=0 // pred_check
    _
  $region3: #{netg_forward.22} parent=0 // pred_check_branch
    %8 = sbr.rel (0) target = $region5
  $region4: #{netg_forward.22} parent=0 // pred_region
    _
  $region5: #{netg_forward.22} parent=0 // pred_fallthru
    _
  // Predicated region
  $region6: #{netg_forward.22} parent=0 // pred_check
    _
  $region7: #{netg_forward.22} parent=0 // pred_check_branch
    %10 = sbr.rel (0) target = $region9
  $region8: #{netg_forward.22} parent=0 // pred_region
    _
  $region9: #{netg_forward.22} parent=0 // pred_fallthru
    _
  %v12 = vld [vmem:[%s0] sm:$0xf]
  %v13 = vld [vmem:[%s0 + $0x4] sm:$0xf]
  %v14 = vld [vmem:[%s0 + $0x8] sm:$0xf]
  %v15 = vld [vmem:[%s0 + $0xc] sm:$0xf]
  %v16 = vld [vmem:[%s0 + $0x10] sm:$0xf]
  %v17 = vld [vmem:[%s0 + $0x14] sm:$0xf]
  %v18 = vld [vmem:[%s0 + $0x18] sm:$0xf]
  %v19 = vld [vmem:[%s0 + $0x1c] sm:$0xf]
  %v20 = vld [vmem:[%s0 + $0x20] sm:$0xf]
  %v21 = vld [vmem:[%s0 + $0x24] sm:$0xf]
  %v22 = vld [vmem:[%s0 + $0x28] sm:$0xf]
  %v23 = vld [vmem:[%s0 + $0x2c] sm:$0xf]
  %v24 = vld [vmem:[%s0 + $0x30] sm:$0xf]
  %v25 = vld [vmem:[%s0 + $0x34] sm:$0xf]
  %v26 = vld [vmem:[%s0 + $0x38] sm:$0xf]
  %v27 = vld [vmem:[%s0 + $0x3c] sm:$0xf]
  %v28 = vld [vmem:[%s0 + $0x40] sm:$0xf]
  %v29 = vld [vmem:[%s0 + $0x44] sm:$0xf]
  %v30 = vld [vmem:[%s0 + $0x48] sm:$0xf]
  %v31 = vld [vmem:[%s0 + $0x4c] sm:$0xf]
  %v32 = vld [vmem:[%s0 + $0x50] sm:$0xf]
  %v33 = vld [vmem:[%s0 + $0x54] sm:$0xf]
  %v34 = vld [vmem:[%s0 + $0x58] sm:$0xf]
  %v35 = vld [vmem:[%s0 + $0x5c] sm:$0xf]
  %v36 = vld [vmem:[%s0 + $0x60] sm:$0xf]
  %v37 = vld [vmem:[%s0 + $0x64] sm:$0xf]
  %v38 = vld [vmem:[%s0 + $0x68] sm:$0xf]
  %v39 = vld [vmem:[%s0 + $0x6c] sm:$0xf]
  %v40 = vld [vmem:[%s0 + $0x70] sm:$0xf]
  %v41 = vld [vmem:[%s0 + $0x74] sm:$0xf]
  %v42 = vld [vmem:[%s0 + $0x78] sm:$0xf]
  %v43 = vld [vmem:[%s0 + $0x7c] sm:$0xf]
  %v44 = vld [vmem:[%s0 + $0x80] sm:$0xf]
  %v45 = vld [vmem:[%s0 + $0x84] sm:$0xf]
  %v46 = vld [vmem:[%s0 + $0x88] sm:$0xf]
  %v47 = vld [vmem:[%s0 + $0x8c] sm:$0xf]
  %v48 = vld [vmem:[%s0 + $0x90] sm:$0xf]
  %v49 = vld [vmem:[%s0 + $0x94] sm:$0xf]
  %v50 = vld [vmem:[%s0 + $0x98] sm:$0xf]
  %v51 = vld [vmem:[%s0 + $0x9c] sm:$0xf]
  %v52 = vld [vmem:[%s0 + $0xa0] sm:$0xf]
  %v53 = vld [vmem:[%s0 + $0xa4] sm:$0xf]
  %v54 = vld [vmem:[%s0 + $0xa8] sm:$0xf]
  %v55 = vld [vmem:[%s0 + $0xac] sm:$0xf]
  %v56 = vld [vmem:[%s0 + $0xb0] sm:$0xf]
  %v57 = vld [vmem:[%s0 + $0xb4] sm:$0xf]
  %v58 = vld [vmem:[%s0 + $0xb8] sm:$0xf]
  %v59 = vld [vmem:[%s0 + $0xbc] sm:$0xf]
  %v60 = vld [vmem:[%s0 + $0xc0] sm:$0xf]
  %v61 = vld [vmem:[%s0 + $0xc4] sm:$0xf]
  %v62 = vld [vmem:[%s0 + $0xc8] sm:$0xf]
  %v63 = vld [vmem:[%s0 + $0xcc] sm:$0xf]
  %v64 = vld [vmem:[%s0 + $0xd0] sm:$0xf]
  %v65 = vld [vmem:[%s0 + $0xd4] sm:$0xf]
  %v66 = vld [vmem:[%s0 + $0xd8] sm:$0xf]
  %v67 = vld [vmem:[%s0 + $0xdc] sm:$0xf]
  %v68 = vld [vmem:[%s0 + $0xe0] sm:$0xf]
  %v69 = vld [vmem:[%s0 + $0xe4] sm:$0xf]
  %v70 = vld [vmem:[%s0 + $0xe8] sm:$0xf]
  %v71 = vld [vmem:[%s0 + $0xec] sm:$0xf]
  %v72 = vld [vmem:[%s0 + $0xf0] sm:$0xf]
  %v73 = vld [vmem:[%s0 + $0xf4] sm:$0xf]
  %v74 = vld [vmem:[%s0 + $0xf8] sm:$0xf]
  %v75 = vld [vmem:[%s0 + $0xfc] sm:$0xf]
  %v76 = vld [vmem:[%s0 + $0x100] sm:$0xf]
  %v77 = vld [vmem:[%s0 + $0x104] sm:$0xf]
  %v78 = vld [vmem:[%s0 + $0x108] sm:$0xf]
  %v79 = vld [vmem:[%s0 + $0x10c] sm:$0xf]
  %v80 = vld [vmem:[%s0 + $0x110] sm:$0xf]
  %v81 = vld [vmem:[%s0 + $0x114] sm:$0xf]
  %v82 = vld [vmem:[%s0 + $0x118] sm:$0xf]
  %v83 = vld [vmem:[%s0 + $0x11c] sm:$0xf]
  %v84 = vld [vmem:[%s0 + $0x120] sm:$0xf]
  %v85 = vld [vmem:[%s1] sm:$0xf]
  %v86 = vld [vmem:[%s1 + $0x4] sm:$0xf]
  %v87 = vld [vmem:[%s1 + $0x8] sm:$0xf]
  %v88 = vld [vmem:[%s1 + $0xc] sm:$0xf]
  %v89 = vld [vmem:[%s1 + $0x10] sm:$0xf]
  %v90 = vld [vmem:[%s1 + $0x14] sm:$0xf]
  %v91 = vld [vmem:[%s1 + $0x18] sm:$0xf]
  %v92 = vld [vmem:[%s1 + $0x1c] sm:$0xf]
  %v93 = vld [vmem:[%s1 + $0x20] sm:$0xf]
  %v94 = vld [vmem:[%s1 + $0x24] sm:$0xf]
  %v95 = vld [vmem:[%s1 + $0x28] sm:$0xf]
  %v96 = vld [vmem:[%s1 + $0x2c] sm:$0xf]
  %v97 = vld [vmem:[%s1 + $0x30] sm:$0xf]
  %v98 = vld [vmem:[%s1 + $0x34] sm:$0xf]
  %v99 = vld [vmem:[%s1 + $0x38] sm:$0xf]
  %v100 = vld [vmem:[%s1 + $0x3c] sm:$0xf]
  %v174 = vunpack.c.l.b16 %v12
  %v175 = vunpack.c.l.b16 %v13
  %v176 = vunpack.c.l.b16 %v14
  %v177 = vunpack.c.l.b16 %v15
  %v178 = vunpack.c.l.b16 %v16
  %v179 = vunpack.c.l.b16 %v17
  %v180 = vunpack.c.l.b16 %v18
  %v181 = vunpack.c.l.b16 %v19
  %v182 = vunpack.c.l.b16 %v20
  %v183 = vunpack.c.l.b16 %v21
  %v184 = vunpack.c.l.b16 %v22
  %v185 = vunpack.c.l.b16 %v23
  %v186 = vunpack.c.l.b16 %v24
  %v187 = vunpack.c.l.b16 %v25
  %v188 = vunpack.c.l.b16 %v26
  %v189 = vunpack.c.l.b16 %v27
  %v190 = vunpack.c.l.b16 %v28
  %v191 = vunpack.c.l.b16 %v29
  %v192 = vunpack.c.l.b16 %v30
  %v193 = vunpack.c.l.b16 %v31
  %v194 = vunpack.c.l.b16 %v32
  %v195 = vunpack.c.l.b16 %v33
  %v196 = vunpack.c.l.b16 %v34
  %v197 = vunpack.c.l.b16 %v35
  %v198 = vunpack.c.l.b16 %v36
  %v199 = vunpack.c.l.b16 %v37
  %v200 = vunpack.c.l.b16 %v38
  %v201 = vunpack.c.l.b16 %v39
  %v202 = vunpack.c.l.b16 %v40
  %v203 = vunpack.c.l.b16 %v41
  %v204 = vunpack.c.l.b16 %v42
  %v205 = vunpack.c.l.b16 %v43
  %v206 = vunpack.c.l.b16 %v44
  %v207 = vunpack.c.l.b16 %v45
  %v208 = vunpack.c.l.b16 %v46
  %v209 = vunpack.c.l.b16 %v47
  %v210 = vunpack.c.l.b16 %v48
  %v211 = vunpack.c.l.b16 %v49
  %v212 = vunpack.c.l.b16 %v50
  %v213 = vunpack.c.l.b16 %v51
  %v214 = vunpack.c.l.b16 %v52
  %v215 = vunpack.c.l.b16 %v53
  %v216 = vunpack.c.l.b16 %v54
  %v217 = vunpack.c.l.b16 %v55
  %v218 = vunpack.c.l.b16 %v56
  %v219 = vunpack.c.l.b16 %v57
  %v220 = vunpack.c.l.b16 %v58
  %v221 = vunpack.c.l.b16 %v59
  %v222 = vunpack.c.l.b16 %v60
  %v223 = vunpack.c.l.b16 %v61
  %v224 = vunpack.c.l.b16 %v62
  %v225 = vunpack.c.l.b16 %v63
  %v226 = vunpack.c.l.b16 %v64
  %v227 = vunpack.c.l.b16 %v65
  %v228 = vunpack.c.l.b16 %v66
  %v229 = vunpack.c.l.b16 %v67
  %v230 = vunpack.c.l.b16 %v68
  %v231 = vunpack.c.l.b16 %v69
  %v232 = vunpack.c.l.b16 %v70
  %v233 = vunpack.c.l.b16 %v71
  %v234 = vunpack.c.l.b16 %v72
  %v235 = vunpack.c.l.b16 %v73
  %v236 = vunpack.c.l.b16 %v74
  %v237 = vunpack.c.l.b16 %v75
  %v238 = vunpack.c.l.b16 %v76
  %v239 = vunpack.c.l.b16 %v77
  %v240 = vunpack.c.l.b16 %v78
  %v241 = vunpack.c.l.b16 %v79
  %v242 = vunpack.c.l.b16 %v80
  %v243 = vunpack.c.l.b16 %v81
  %v244 = vunpack.c.l.b16 %v82
  %v245 = vunpack.c.l.b16 %v83
  %v246 = vunpack.c.l.b16 %v84
  %v247 = vpack.c.b16 %v175, %v174
  %v248 = vpack.c.b16 %v177, %v176
  %v249 = vpack.c.b16 %v179, %v178
  %v250 = vpack.c.b16 %v181, %v180
  %v251 = vpack.c.b16 %v183, %v182
  %v252 = vpack.c.b16 %v185, %v184
  %v253 = vpack.c.b16 %v187, %v186
  %v254 = vpack.c.b16 %v189, %v188
  %v255 = vpack.c.b16 %v191, %v190
  %v256 = vpack.c.b16 %v193, %v192
  %v257 = vpack.c.b16 %v195, %v194
  %v258 = vpack.c.b16 %v197, %v196
  %v259 = vpack.c.b16 %v199, %v198
  %v260 = vpack.c.b16 %v201, %v200
  %v261 = vpack.c.b16 %v203, %v202
  %v262 = vpack.c.b16 %v205, %v204
  %v263 = vpack.c.b16 %v207, %v206
  %v264 = vpack.c.b16 %v209, %v208
  %v265 = vpack.c.b16 %v211, %v210
  %v266 = vpack.c.b16 %v213, %v212
  %v267 = vpack.c.b16 %v215, %v214
  %v268 = vpack.c.b16 %v217, %v216
  %v269 = vpack.c.b16 %v219, %v218
  %v270 = vpack.c.b16 %v221, %v220
  %v271 = vpack.c.b16 %v223, %v222
  %v272 = vpack.c.b16 %v225, %v224
  %v273 = vpack.c.b16 %v227, %v226
  %v274 = vpack.c.b16 %v229, %v228
  %v275 = vpack.c.b16 %v231, %v230
  %v276 = vpack.c.b16 %v233, %v232
  %v277 = vpack.c.b16 %v235, %v234
  %v278 = vpack.c.b16 %v237, %v236
  %v279 = vpack.c.b16 %v239, %v238
  %v280 = vpack.c.b16 %v241, %v240
  %v281 = vpack.c.b16 %v243, %v242
  %v282 = vpack.c.b16 %v245, %v244
  %v283 = vpack.c.b16 %v246, %v246
  %v337 = vunpack.c.l.b16 %v85
  %v338 = vunpack.c.l.b16 %v86
  %v339 = vunpack.c.l.b16 %v87
  %v340 = vunpack.c.l.b16 %v88
  %v341 = vunpack.c.l.b16 %v89
  %v342 = vunpack.c.l.b16 %v90
  %v343 = vunpack.c.l.b16 %v91
  %v344 = vunpack.c.l.b16 %v92
  %v345 = vunpack.c.l.b16 %v93
  %v346 = vunpack.c.l.b16 %v94
  %v347 = vunpack.c.l.b16 %v95
  %v348 = vunpack.c.l.b16 %v96
  %v349 = vunpack.c.l.b16 %v97
  %v350 = vunpack.c.l.b16 %v98
  %v351 = vunpack.c.l.b16 %v99
  %v352 = vunpack.c.l.b16 %v100
  %v353 = vpack.c.b16 %v338, %v337
  %v354 = vpack.c.b16 %v340, %v339
  %v355 = vpack.c.b16 %v342, %v341
  %v356 = vpack.c.b16 %v344, %v343
  %v357 = vpack.c.b16 %v346, %v345
  %v358 = vpack.c.b16 %v348, %v347
  %v359 = vpack.c.b16 %v350, %v349
  %v360 = vpack.c.b16 %v352, %v351
  %369 = vmatprep.subr.bf16.mxu0 0
  %370 = vmatpush1.bf16.msra.mxu0 %v353
  %371 = vmatprep.subr.bf16.mxu0 0
  %372 = vmatpush1.bf16.msra.mxu0 %v354
  %373 = vmatprep.subr.bf16.mxu0 0
  %374 = vmatpush1.bf16.msra.mxu0 %v355
  %375 = vmatprep.subr.bf16.mxu0 0
  %376 = vmatpush1.bf16.msra.mxu0 %v356
  %377 = vmatprep.subr.bf16.mxu0 0
  %378 = vmatpush1.bf16.msra.mxu0 %v357
  %379 = vmatprep.subr.bf16.mxu0 0
  %380 = vmatpush1.bf16.msra.mxu0 %v358
  %381 = vmatprep.subr.bf16.mxu0 0
  %382 = vmatpush1.bf16.msra.mxu0 %v359
  %383 = vmatprep.subr.bf16.mxu0 0
  %384 = vmatpush1.bf16.msra.mxu0 %v360
  %385 = vmatprep.subr.bf16.mxu0 0
  %386 = vmatpush1.bf16.msra.mxu0 0
  %387 = vmatprep.subr.bf16.mxu0 0
  %388 = vmatpush1.bf16.msra.mxu0 0
  %389 = vmatprep.subr.bf16.mxu0 0
  %390 = vmatpush1.bf16.msra.mxu0 0
  %391 = vmatprep.subr.bf16.mxu0 0
  %392 = vmatpush1.bf16.msra.mxu0 0
  %393 = vmatprep.subr.bf16.mxu0 0
  %394 = vmatpush1.bf16.msra.mxu0 0
  %395 = vmatprep.subr.bf16.mxu0 0
  %396 = vmatpush1.bf16.msra.mxu0 0
  %397 = vmatprep.subr.bf16.mxu0 0
  %398 = vmatpush1.bf16.msra.mxu0 0
  %399 = vmatprep.subr.bf16.mxu0 0
  %400 = vmatpush1.bf16.msra.mxu0 0
  %401 = vmatprep.mubr.bf16.mxu0 0
  %402 = vmatmul.mubr.bf16.gmra.mrb[0].mxu0 %v247
  %v403 = vpop.f32.mrb[0].mxu0
  %v404 = vadd.f32 0.0, %v403
  %v405 = vpop.f32.mrb[0].mxu0
  %v406 = vpop.f32.mrb[0].mxu0
  %v407 = vadd.f32 0.0, %v406
  %v408 = vpop.f32.mrb[0].mxu0
  %409 = vmatprep.mubr.bf16.mxu0 0
  %410 = vmatmul.mubr.bf16.gmra.mrb[0].mxu0 %v248
  %v411 = vpop.f32.mrb[0].mxu0
  %v412 = vadd.f32 0.0, %v411
  %v413 = vpop.f32.mrb[0].mxu0
  %v414 = vpop.f32.mrb[0].mxu0
  %v415 = vadd.f32 0.0, %v414
  %v416 = vpop.f32.mrb[0].mxu0
  %417 = vmatprep.mubr.bf16.mxu0 0
  %418 = vmatmul.mubr.bf16.gmra.mrb[0].mxu0 %v249
  %v419 = vpop.f32.mrb[0].mxu0
  %v420 = vadd.f32 0.0, %v419
  %v421 = vpop.f32.mrb[0].mxu0
  %v422 = vpop.f32.mrb[0].mxu0
  %v423 = vadd.f32 0.0, %v422
  %v424 = vpop.f32.mrb[0].mxu0
  %425 = vmatprep.mubr.bf16.mxu0 0
  %426 = vmatmul.mubr.bf16.gmra.mrb[0].mxu0 %v250
  %v427 = vpop.f32.mrb[0].mxu0
  %v428 = vadd.f32 0.0, %v427
  %v429 = vpop.f32.mrb[0].mxu0
  %v430 = vpop.f32.mrb[0].mxu0
  %v431 = vadd.f32 0.0, %v430
  %v432 = vpop.f32.mrb[0].mxu0
  %433 = vmatprep.mubr.bf16.mxu0 0
  %434 = vmatmul.mubr.bf16.gmra.mrb[0].mxu0 %v251
  %v435 = vpop.f32.mrb[0].mxu0
  %v436 = vadd.f32 0.0, %v435
  %v437 = vpop.f32.mrb[0].mxu0
  %v438 = vpop.f32.mrb[0].mxu0
  %v439 = vadd.f32 0.0, %v438
  %v440 = vpop.f32.mrb[0].mxu0
  %441 = vmatprep.mubr.bf16.mxu0 0
  %442 = vmatmul.mubr.bf16.gmra.mrb[0].mxu0 %v252
  %v443 = vpop.f32.mrb[0].mxu0
  %v444 = vadd.f32 0.0, %v443
  %v445 = vpop.f32.mrb[0].mxu0
  %v446 = vpop.f32.mrb[0].mxu0
  %v447 = vadd.f32 0.0, %v446
  %v448 = vpop.f32.mrb[0].mxu0
  %449 = vmatprep.mubr.bf16.mxu0 0
  %450 = vmatmul.mubr.bf16.gmra.mrb[0].mxu0 %v253
  %v451 = vpop.f32.mrb[0].mxu0
  %v452 = vadd.f32 0.0, %v451
  %v453 = vpop.f32.mrb[0].mxu0
  %v454 = vpop.f32.mrb[0].mxu0
  %v455 = vadd.f32 0.0, %v454
  %v456 = vpop.f32.mrb[0].mxu0
  %457 = vmatprep.mubr.bf16.mxu0 0
  %458 = vmatmul.mubr.bf16.gmra.mrb[0].mxu0 %v254
  %v459 = vpop.f32.mrb[0].mxu0
  %v460 = vadd.f32 0.0, %v459
  %v461 = vpop.f32.mrb[0].mxu0
  %v462 = vpop.f32.mrb[0].mxu0
  %v463 = vadd.f32 0.0, %v462
  %v464 = vpop.f32.mrb[0].mxu0
  %465 = vmatprep.mubr.bf16.mxu0 0
  %466 = vmatmul.mubr.bf16.gmra.mrb[0].mxu0 %v255
  %v467 = vpop.f32.mrb[0].mxu0
  %v468 = vadd.f32 0.0, %v467
  %v469 = vpop.f32.mrb[0].mxu0
  %v470 = vpop.f32.mrb[0].mxu0
  %v471 = vadd.f32 0.0, %v470
  %v472 = vpop.f32.mrb[0].mxu0
  %473 = vmatprep.mubr.bf16.mxu0 0
  %474 = vmatmul.mubr.bf16.gmra.mrb[0].mxu0 %v256
  %v475 = vpop.f32.mrb[0].mxu0
  %v476 = vadd.f32 0.0, %v475
  %v477 = vpop.f32.mrb[0].mxu0
  %v478 = vpop.f32.mrb[0].mxu0
  %v479 = vadd.f32 0.0, %v478
  %v480 = vpop.f32.mrb[0].mxu0
  %481 = vmatprep.mubr.bf16.mxu0 0
  %482 = vmatmul.mubr.bf16.gmra.mrb[0].mxu0 %v257
  %v483 = vpop.f32.mrb[0].mxu0
  %v484 = vadd.f32 0.0, %v483
  %v485 = vpop.f32.mrb[0].mxu0
  %v486 = vpop.f32.mrb[0].mxu0
  %v487 = vadd.f32 0.0, %v486
  %v488 = vpop.f32.mrb[0].mxu0
  %489 = vmatprep.mubr.bf16.mxu0 0
  %490 = vmatmul.mubr.bf16.gmra.mrb[0].mxu0 %v258
  %v491 = vpop.f32.mrb[0].mxu0
  %v492 = vadd.f32 0.0, %v491
  %v493 = vpop.f32.mrb[0].mxu0
  %v494 = vpop.f32.mrb[0].mxu0
  %v495 = vadd.f32 0.0, %v494
  %v496 = vpop.f32.mrb[0].mxu0
  %497 = vmatprep.mubr.bf16.mxu0 0
  %498 = vmatmul.mubr.bf16.gmra.mrb[0].mxu0 %v259
  %v499 = vpop.f32.mrb[0].mxu0
  %v500 = vadd.f32 0.0, %v499
  %v501 = vpop.f32.mrb[0].mxu0
  %v502 = vpop.f32.mrb[0].mxu0
  %v503 = vadd.f32 0.0, %v502
  %v504 = vpop.f32.mrb[0].mxu0
  %505 = vmatprep.mubr.bf16.mxu0 0
  %506 = vmatmul.mubr.bf16.gmra.mrb[0].mxu0 %v260
  %v507 = vpop.f32.mrb[0].mxu0
  %v508 = vadd.f32 0.0, %v507
  %v509 = vpop.f32.mrb[0].mxu0
  %v510 = vpop.f32.mrb[0].mxu0
  %v511 = vadd.f32 0.0, %v510
  %v512 = vpop.f32.mrb[0].mxu0
  %513 = vmatprep.mubr.bf16.mxu0 0
  %514 = vmatmul.mubr.bf16.gmra.mrb[0].mxu0 %v261
  %v515 = vpop.f32.mrb[0].mxu0
  %v516 = vadd.f32 0.0, %v515
  %v517 = vpop.f32.mrb[0].mxu0
  %v518 = vpop.f32.mrb[0].mxu0
  %v519 = vadd.f32 0.0, %v518
  %v520 = vpop.f32.mrb[0].mxu0
  %521 = vmatprep.mubr.bf16.mxu0 0
  %522 = vmatmul.mubr.bf16.gmra.mrb[0].mxu0 %v262
  %v523 = vpop.f32.mrb[0].mxu0
  %v524 = vadd.f32 0.0, %v523
  %v525 = vpop.f32.mrb[0].mxu0
  %v526 = vpop.f32.mrb[0].mxu0
  %v527 = vadd.f32 0.0, %v526
  %v528 = vpop.f32.mrb[0].mxu0
  %529 = vmatprep.mubr.bf16.mxu0 0
  %530 = vmatmul.mubr.bf16.gmra.mrb[0].mxu0 %v263
  %v531 = vpop.f32.mrb[0].mxu0
  %v532 = vadd.f32 0.0, %v531
  %v533 = vpop.f32.mrb[0].mxu0
  %v534 = vpop.f32.mrb[0].mxu0
  %v535 = vadd.f32 0.0, %v534
  %v536 = vpop.f32.mrb[0].mxu0
  %537 = vmatprep.mubr.bf16.mxu0 0
  %538 = vmatmul.mubr.bf16.gmra.mrb[0].mxu0 %v264
  %v539 = vpop.f32.mrb[0].mxu0
  %v540 = vadd.f32 0.0, %v539
  %v541 = vpop.f32.mrb[0].mxu0
  %v542 = vpop.f32.mrb[0].mxu0
  %v543 = vadd.f32 0.0, %v542
  %v544 = vpop.f32.mrb[0].mxu0
  %545 = vmatprep.mubr.bf16.mxu0 0
  %546 = vmatmul.mubr.bf16.gmra.mrb[0].mxu0 %v265
  %v547 = vpop.f32.mrb[0].mxu0
  %v548 = vadd.f32 0.0, %v547
  %v549 = vpop.f32.mrb[0].mxu0
  %v550 = vpop.f32.mrb[0].mxu0
  %v551 = vadd.f32 0.0, %v550
  %v552 = vpop.f32.mrb[0].mxu0
  %553 = vmatprep.mubr.bf16.mxu0 0
  %554 = vmatmul.mubr.bf16.gmra.mrb[0].mxu0 %v266
  %v555 = vpop.f32.mrb[0].mxu0
  %v556 = vadd.f32 0.0, %v555
  %v557 = vpop.f32.mrb[0].mxu0
  %v558 = vpop.f32.mrb[0].mxu0
  %v559 = vadd.f32 0.0, %v558
  %v560 = vpop.f32.mrb[0].mxu0
  %561 = vmatprep.mubr.bf16.mxu0 0
  %562 = vmatmul.mubr.bf16.gmra.mrb[0].mxu0 %v267
  %v563 = vpop.f32.mrb[0].mxu0
  %v564 = vadd.f32 0.0, %v563
  %v565 = vpop.f32.mrb[0].mxu0
  %v566 = vpop.f32.mrb[0].mxu0
  %v567 = vadd.f32 0.0, %v566
  %v568 = vpop.f32.mrb[0].mxu0
  %569 = vmatprep.mubr.bf16.mxu0 0
  %570 = vmatmul.mubr.bf16.gmra.mrb[0].mxu0 %v268
  %v571 = vpop.f32.mrb[0].mxu0
  %v572 = vadd.f32 0.0, %v571
  %v573 = vpop.f32.mrb[0].mxu0
  %v574 = vpop.f32.mrb[0].mxu0
  %v575 = vadd.f32 0.0, %v574
  %v576 = vpop.f32.mrb[0].mxu0
  %577 = vmatprep.mubr.bf16.mxu0 0
  %578 = vmatmul.mubr.bf16.gmra.mrb[0].mxu0 %v269
  %v579 = vpop.f32.mrb[0].mxu0
  %v580 = vadd.f32 0.0, %v579
  %v581 = vpop.f32.mrb[0].mxu0
  %v582 = vpop.f32.mrb[0].mxu0
  %v583 = vadd.f32 0.0, %v582
  %v584 = vpop.f32.mrb[0].mxu0
  %585 = vmatprep.mubr.bf16.mxu0 0
  %586 = vmatmul.mubr.bf16.gmra.mrb[0].mxu0 %v270
  %v587 = vpop.f32.mrb[0].mxu0
  %v588 = vadd.f32 0.0, %v587
  %v589 = vpop.f32.mrb[0].mxu0
  %v590 = vpop.f32.mrb[0].mxu0
  %v591 = vadd.f32 0.0, %v590
  %v592 = vpop.f32.mrb[0].mxu0
  %593 = vmatprep.mubr.bf16.mxu0 0
  %594 = vmatmul.mubr.bf16.gmra.mrb[0].mxu0 %v271
  %v595 = vpop.f32.mrb[0].mxu0
  %v596 = vadd.f32 0.0, %v595
  %v597 = vpop.f32.mrb[0].mxu0
  %v598 = vpop.f32.mrb[0].mxu0
  %v599 = vadd.f32 0.0, %v598
  %v600 = vpop.f32.mrb[0].mxu0
  %601 = vmatprep.mubr.bf16.mxu0 0
  %602 = vmatmul.mubr.bf16.gmra.mrb[0].mxu0 %v272
  %v603 = vpop.f32.mrb[0].mxu0
  %v604 = vadd.f32 0.0, %v603
  %v605 = vpop.f32.mrb[0].mxu0
  %v606 = vpop.f32.mrb[0].mxu0
  %v607 = vadd.f32 0.0, %v606
  %v608 = vpop.f32.mrb[0].mxu0
  %609 = vmatprep.mubr.bf16.mxu0 0
  %610 = vmatmul.mubr.bf16.gmra.mrb[0].mxu0 %v273
  %v611 = vpop.f32.mrb[0].mxu0
  %v612 = vadd.f32 0.0, %v611
  %v613 = vpop.f32.mrb[0].mxu0
  %v614 = vpop.f32.mrb[0].mxu0
  %v615 = vadd.f32 0.0, %v614
  %v616 = vpop.f32.mrb[0].mxu0
  %617 = vmatprep.mubr.bf16.mxu0 0
  %618 = vmatmul.mubr.bf16.gmra.mrb[0].mxu0 %v274
  %v619 = vpop.f32.mrb[0].mxu0
  %v620 = vadd.f32 0.0, %v619
  %v621 = vpop.f32.mrb[0].mxu0
  %v622 = vpop.f32.mrb[0].mxu0
  %v623 = vadd.f32 0.0, %v622
  %v624 = vpop.f32.mrb[0].mxu0
  %625 = vmatprep.mubr.bf16.mxu0 0
  %626 = vmatmul.mubr.bf16.gmra.mrb[0].mxu0 %v275
  %v627 = vpop.f32.mrb[0].mxu0
  %v628 = vadd.f32 0.0, %v627
  %v629 = vpop.f32.mrb[0].mxu0
  %v630 = vpop.f32.mrb[0].mxu0
  %v631 = vadd.f32 0.0, %v630
  %v632 = vpop.f32.mrb[0].mxu0
  %633 = vmatprep.mubr.bf16.mxu0 0
  %634 = vmatmul.mubr.bf16.gmra.mrb[0].mxu0 %v276
  %v635 = vpop.f32.mrb[0].mxu0
  %v636 = vadd.f32 0.0, %v635
  %v637 = vpop.f32.mrb[0].mxu0
  %v638 = vpop.f32.mrb[0].mxu0
  %v639 = vadd.f32 0.0, %v638
  %v640 = vpop.f32.mrb[0].mxu0
  %641 = vmatprep.mubr.bf16.mxu0 0
  %642 = vmatmul.mubr.bf16.gmra.mrb[0].mxu0 %v277
  %v643 = vpop.f32.mrb[0].mxu0
  %v644 = vadd.f32 0.0, %v643
  %v645 = vpop.f32.mrb[0].mxu0
  %v646 = vpop.f32.mrb[0].mxu0
  %v647 = vadd.f32 0.0, %v646
  %v648 = vpop.f32.mrb[0].mxu0
  %649 = vmatprep.mubr.bf16.mxu0 0
  %650 = vmatmul.mubr.bf16.gmra.mrb[0].mxu0 %v278
  %v651 = vpop.f32.mrb[0].mxu0
  %v652 = vadd.f32 0.0, %v651
  %v653 = vpop.f32.mrb[0].mxu0
  %v654 = vpop.f32.mrb[0].mxu0
  %v655 = vadd.f32 0.0, %v654
  %v656 = vpop.f32.mrb[0].mxu0
  %657 = vmatprep.mubr.bf16.mxu0 0
  %658 = vmatmul.mubr.bf16.gmra.mrb[0].mxu0 %v279
  %v659 = vpop.f32.mrb[0].mxu0
  %v660 = vadd.f32 0.0, %v659
  %v661 = vpop.f32.mrb[0].mxu0
  %v662 = vpop.f32.mrb[0].mxu0
  %v663 = vadd.f32 0.0, %v662
  %v664 = vpop.f32.mrb[0].mxu0
  %665 = vmatprep.mubr.bf16.mxu0 0
  %666 = vmatmul.mubr.bf16.gmra.mrb[0].mxu0 %v280
  %v667 = vpop.f32.mrb[0].mxu0
  %v668 = vadd.f32 0.0, %v667
  %v669 = vpop.f32.mrb[0].mxu0
  %v670 = vpop.f32.mrb[0].mxu0
  %v671 = vadd.f32 0.0, %v670
  %v672 = vpop.f32.mrb[0].mxu0
  %673 = vmatprep.mubr.bf16.mxu0 0
  %674 = vmatmul.mubr.bf16.gmra.mrb[0].mxu0 %v281
  %v675 = vpop.f32.mrb[0].mxu0
  %v676 = vadd.f32 0.0, %v675
  %v677 = vpop.f32.mrb[0].mxu0
  %v678 = vpop.f32.mrb[0].mxu0
  %v679 = vadd.f32 0.0, %v678
  %v680 = vpop.f32.mrb[0].mxu0
  %681 = vmatprep.mubr.bf16.mxu0 0
  %682 = vmatmul.mubr.bf16.gmra.mrb[0].mxu0 %v282
  %v683 = vpop.f32.mrb[0].mxu0
  %v684 = vadd.f32 0.0, %v683
  %v685 = vpop.f32.mrb[0].mxu0
  %v686 = vpop.f32.mrb[0].mxu0
  %v687 = vadd.f32 0.0, %v686
  %v688 = vpop.f32.mrb[0].mxu0
  %689 = vmatprep.mubr.bf16.mxu0 0
  %690 = vmatmul.mubr.bf16.gmra.mrb[0].mxu0 %v283
  %v691 = vpop.f32.mrb[0].mxu0
  %v692 = vadd.f32 0.0, %v691
  %v693 = vpop.f32.mrb[0].mxu0
  %v694 = vpop.f32.mrb[0].mxu0
  %v695 = vpop.f32.mrb[0].mxu0
  %696 = vdwg.mxu0
  %v697 = vpack.c.bf16 %v407, %v404
  %v698 = vpack.c.bf16 %v415, %v412
  %v699 = vpack.c.bf16 %v423, %v420
  %v700 = vpack.c.bf16 %v431, %v428
  %v701 = vpack.c.bf16 %v439, %v436
  %v702 = vpack.c.bf16 %v447, %v444
  %v703 = vpack.c.bf16 %v455, %v452
  %v704 = vpack.c.bf16 %v463, %v460
  %v705 = vpack.c.bf16 %v471, %v468
  %v706 = vpack.c.bf16 %v479, %v476
  %v707 = vpack.c.bf16 %v487, %v484
  %v708 = vpack.c.bf16 %v495, %v492
  %v709 = vpack.c.bf16 %v503, %v500
  %v710 = vpack.c.bf16 %v511, %v508
  %v711 = vpack.c.bf16 %v519, %v516
  %v712 = vpack.c.bf16 %v527, %v524
  %v713 = vpack.c.bf16 %v535, %v532
  %v714 = vpack.c.bf16 %v543, %v540
  %v715 = vpack.c.bf16 %v551, %v548
  %v716 = vpack.c.bf16 %v559, %v556
  %v717 = vpack.c.bf16 %v567, %v564
  %v718 = vpack.c.bf16 %v575, %v572
  %v719 = vpack.c.bf16 %v583, %v580
  %v720 = vpack.c.bf16 %v591, %v588
  %v721 = vpack.c.bf16 %v599, %v596
  %v722 = vpack.c.bf16 %v607, %v604
  %v723 = vpack.c.bf16 %v615, %v612
  %v724 = vpack.c.bf16 %v623, %v620
  %v725 = vpack.c.bf16 %v631, %v628
  %v726 = vpack.c.bf16 %v639, %v636
  %v727 = vpack.c.bf16 %v647, %v644
  %v728 = vpack.c.bf16 %v655, %v652
  %v729 = vpack.c.bf16 %v663, %v660
  %v730 = vpack.c.bf16 %v671, %v668
  %v731 = vpack.c.bf16 %v679, %v676
  %v732 = vpack.c.bf16 %v687, %v684
  %v733 = vpack.c.bf16 %v692, %v692
  %v771 = vunpack.c.l.b16 %v697
  %v772 = vunpack.c.h.b16 %v697
  %v773 = vunpack.c.l.b16 %v698
  %v774 = vunpack.c.h.b16 %v698
  %v775 = vunpack.c.l.b16 %v699
  %v776 = vunpack.c.h.b16 %v699
  %v777 = vunpack.c.l.b16 %v700
  %v778 = vunpack.c.h.b16 %v700
  %v779 = vunpack.c.l.b16 %v701
  %v780 = vunpack.c.h.b16 %v701
  %v781 = vunpack.c.l.b16 %v702
  %v782 = vunpack.c.h.b16 %v702
  %v783 = vunpack.c.l.b16 %v703
  %v784 = vunpack.c.h.b16 %v703
  %v785 = vunpack.c.l.b16 %v704
  %v786 = vunpack.c.h.b16 %v704
  %v787 = vunpack.c.l.b16 %v705
  %v788 = vunpack.c.h.b16 %v705
  %v789 = vunpack.c.l.b16 %v706
  %v790 = vunpack.c.h.b16 %v706
  %v791 = vunpack.c.l.b16 %v707
  %v792 = vunpack.c.h.b16 %v707
  %v793 = vunpack.c.l.b16 %v708
  %v794 = vunpack.c.h.b16 %v708
  %v795 = vunpack.c.l.b16 %v709
  %v796 = vunpack.c.h.b16 %v709
  %v797 = vunpack.c.l.b16 %v710
  %v798 = vunpack.c.h.b16 %v710
  %v799 = vunpack.c.l.b16 %v711
  %v800 = vunpack.c.h.b16 %v711
  %v801 = vunpack.c.l.b16 %v712
  %v802 = vunpack.c.h.b16 %v712
  %v803 = vunpack.c.l.b16 %v713
  %v804 = vunpack.c.h.b16 %v713
  %v805 = vunpack.c.l.b16 %v714
  %v806 = vunpack.c.h.b16 %v714
  %v807 = vunpack.c.l.b16 %v715
  %v808 = vunpack.c.h.b16 %v715
  %v809 = vunpack.c.l.b16 %v716
  %v810 = vunpack.c.h.b16 %v716
  %v811 = vunpack.c.l.b16 %v717
  %v812 = vunpack.c.h.b16 %v717
  %v813 = vunpack.c.l.b16 %v718
  %v814 = vunpack.c.h.b16 %v718
  %v815 = vunpack.c.l.b16 %v719
  %v816 = vunpack.c.h.b16 %v719
  %v817 = vunpack.c.l.b16 %v720
  %v818 = vunpack.c.h.b16 %v720
  %v819 = vunpack.c.l.b16 %v721
  %v820 = vunpack.c.h.b16 %v721
  %v821 = vunpack.c.l.b16 %v722
  %v822 = vunpack.c.h.b16 %v722
  %v823 = vunpack.c.l.b16 %v723
  %v824 = vunpack.c.h.b16 %v723
  %v825 = vunpack.c.l.b16 %v724
  %v826 = vunpack.c.h.b16 %v724
  %v827 = vunpack.c.l.b16 %v725
  %v828 = vunpack.c.h.b16 %v725
  %v829 = vunpack.c.l.b16 %v726
  %v830 = vunpack.c.h.b16 %v726
  %v831 = vunpack.c.l.b16 %v727
  %v832 = vunpack.c.h.b16 %v727
  %v833 = vunpack.c.l.b16 %v728
  %v834 = vunpack.c.h.b16 %v728
  %v835 = vunpack.c.l.b16 %v729
  %v836 = vunpack.c.h.b16 %v729
  %v837 = vunpack.c.l.b16 %v730
  %v838 = vunpack.c.h.b16 %v730
  %v839 = vunpack.c.l.b16 %v731
  %v840 = vunpack.c.h.b16 %v731
  %v841 = vunpack.c.l.b16 %v732
  %v842 = vunpack.c.h.b16 %v732
  %v843 = vunpack.c.l.b16 %v733
  %v844 = vpack.c.b16 %v771, %v771
  %v845 = vpack.c.b16 %v772, %v772
  %v846 = vpack.c.b16 %v773, %v773
  %v847 = vpack.c.b16 %v774, %v774
  %v848 = vpack.c.b16 %v775, %v775
  %v849 = vpack.c.b16 %v776, %v776
  %v850 = vpack.c.b16 %v777, %v777
  %v851 = vpack.c.b16 %v778, %v778
  %v852 = vpack.c.b16 %v779, %v779
  %v853 = vpack.c.b16 %v780, %v780
  %v854 = vpack.c.b16 %v781, %v781
  %v855 = vpack.c.b16 %v782, %v782
  %v856 = vpack.c.b16 %v783, %v783
  %v857 = vpack.c.b16 %v784, %v784
  %v858 = vpack.c.b16 %v785, %v785
  %v859 = vpack.c.b16 %v786, %v786
  %v860 = vpack.c.b16 %v787, %v787
  %v861 = vpack.c.b16 %v788, %v788
  %v862 = vpack.c.b16 %v789, %v789
  %v863 = vpack.c.b16 %v790, %v790
  %v864 = vpack.c.b16 %v791, %v791
  %v865 = vpack.c.b16 %v792, %v792
  %v866 = vpack.c.b16 %v793, %v793
  %v867 = vpack.c.b16 %v794, %v794
  %v868 = vpack.c.b16 %v795, %v795
  %v869 = vpack.c.b16 %v796, %v796
  %v870 = vpack.c.b16 %v797, %v797
  %v871 = vpack.c.b16 %v798, %v798
  %v872 = vpack.c.b16 %v799, %v799
  %v873 = vpack.c.b16 %v800, %v800
  %v874 = vpack.c.b16 %v801, %v801
  %v875 = vpack.c.b16 %v802, %v802
  %v876 = vpack.c.b16 %v803, %v803
  %v877 = vpack.c.b16 %v804, %v804
  %v878 = vpack.c.b16 %v805, %v805
  %v879 = vpack.c.b16 %v806, %v806
  %v880 = vpack.c.b16 %v807, %v807
  %v881 = vpack.c.b16 %v808, %v808
  %v882 = vpack.c.b16 %v809, %v809
  %v883 = vpack.c.b16 %v810, %v810
  %v884 = vpack.c.b16 %v811, %v811
  %v885 = vpack.c.b16 %v812, %v812
  %v886 = vpack.c.b16 %v813, %v813
  %v887 = vpack.c.b16 %v814, %v814
  %v888 = vpack.c.b16 %v815, %v815
  %v889 = vpack.c.b16 %v816, %v816
  %v890 = vpack.c.b16 %v817, %v817
  %v891 = vpack.c.b16 %v818, %v818
  %v892 = vpack.c.b16 %v819, %v819
  %v893 = vpack.c.b16 %v820, %v820
  %v894 = vpack.c.b16 %v821, %v821
  %v895 = vpack.c.b16 %v822, %v822
  %v896 = vpack.c.b16 %v823, %v823
  %v897 = vpack.c.b16 %v824, %v824
  %v898 = vpack.c.b16 %v825, %v825
  %v899 = vpack.c.b16 %v826, %v826
  %v900 = vpack.c.b16 %v827, %v827
  %v901 = vpack.c.b16 %v828, %v828
  %v902 = vpack.c.b16 %v829, %v829
  %v903 = vpack.c.b16 %v830, %v830
  %v904 = vpack.c.b16 %v831, %v831
  %v905 = vpack.c.b16 %v832, %v832
  %v906 = vpack.c.b16 %v833, %v833
  %v907 = vpack.c.b16 %v834, %v834
  %v908 = vpack.c.b16 %v835, %v835
  %v909 = vpack.c.b16 %v836, %v836
  %v910 = vpack.c.b16 %v837, %v837
  %v911 = vpack.c.b16 %v838, %v838
  %v912 = vpack.c.b16 %v839, %v839
  %v913 = vpack.c.b16 %v840, %v840
  %v914 = vpack.c.b16 %v841, %v841
  %v915 = vpack.c.b16 %v842, %v842
  %v916 = vpack.c.b16 %v843, %v843
  %990 = vst [vmem:[%s2] sm:$0xf] %v844
  %991 = vst [vmem:[%s2 + $0x4] sm:$0xf] %v845
  %992 = vst [vmem:[%s2 + $0x8] sm:$0xf] %v846
  %993 = vst [vmem:[%s2 + $0xc] sm:$0xf] %v847
  %994 = vst [vmem:[%s2 + $0x10] sm:$0xf] %v848
  %995 = vst [vmem:[%s2 + $0x14] sm:$0xf] %v849
  %996 = vst [vmem:[%s2 + $0x18] sm:$0xf] %v850
  %997 = vst [vmem:[%s2 + $0x1c] sm:$0xf] %v851
  %998 = vst [vmem:[%s2 + $0x20] sm:$0xf] %v852
  %999 = vst [vmem:[%s2 + $0x24] sm:$0xf] %v853
  %1000 = vst [vmem:[%s2 + $0x28] sm:$0xf] %v854
  %1001 = vst [vmem:[%s2 + $0x2c] sm:$0xf] %v855
  %1002 = vst [vmem:[%s2 + $0x30] sm:$0xf] %v856
  %1003 = vst [vmem:[%s2 + $0x34] sm:$0xf] %v857
  %1004 = vst [vmem:[%s2 + $0x38] sm:$0xf] %v858
  %1005 = vst [vmem:[%s2 + $0x3c] sm:$0xf] %v859
  %1006 = vst [vmem:[%s2 + $0x40] sm:$0xf] %v860
  %1007 = vst [vmem:[%s2 + $0x44] sm:$0xf] %v861
  %1008 = vst [vmem:[%s2 + $0x48] sm:$0xf] %v862
  %1009 = vst [vmem:[%s2 + $0x4c] sm:$0xf] %v863
  %1010 = vst [vmem:[%s2 + $0x50] sm:$0xf] %v864
  %1011 = vst [vmem:[%s2 + $0x54] sm:$0xf] %v865
  %1012 = vst [vmem:[%s2 + $0x58] sm:$0xf] %v866
  %1013 = vst [vmem:[%s2 + $0x5c] sm:$0xf] %v867
  %1014 = vst [vmem:[%s2 + $0x60] sm:$0xf] %v868
  %1015 = vst [vmem:[%s2 + $0x64] sm:$0xf] %v869
  %1016 = vst [vmem:[%s2 + $0x68] sm:$0xf] %v870
  %1017 = vst [vmem:[%s2 + $0x6c] sm:$0xf] %v871
  %1018 = vst [vmem:[%s2 + $0x70] sm:$0xf] %v872
  %1019 = vst [vmem:[%s2 + $0x74] sm:$0xf] %v873
  %1020 = vst [vmem:[%s2 + $0x78] sm:$0xf] %v874
  %1021 = vst [vmem:[%s2 + $0x7c] sm:$0xf] %v875
  %1022 = vst [vmem:[%s2 + $0x80] sm:$0xf] %v876
  %1023 = vst [vmem:[%s2 + $0x84] sm:$0xf] %v877
  %1024 = vst [vmem:[%s2 + $0x88] sm:$0xf] %v878
  %1025 = vst [vmem:[%s2 + $0x8c] sm:$0xf] %v879
  %1026 = vst [vmem:[%s2 + $0x90] sm:$0xf] %v880
  %1027 = vst [vmem:[%s2 + $0x94] sm:$0xf] %v881
  %1028 = vst [vmem:[%s2 + $0x98] sm:$0xf] %v882
  %1029 = vst [vmem:[%s2 + $0x9c] sm:$0xf] %v883
  %1030 = vst [vmem:[%s2 + $0xa0] sm:$0xf] %v884
  %1031 = vst [vmem:[%s2 + $0xa4] sm:$0xf] %v885
  %1032 = vst [vmem:[%s2 + $0xa8] sm:$0xf] %v886
  %1033 = vst [vmem:[%s2 + $0xac] sm:$0xf] %v887
  %1034 = vst [vmem:[%s2 + $0xb0] sm:$0xf] %v888
  %1035 = vst [vmem:[%s2 + $0xb4] sm:$0xf] %v889
  %1036 = vst [vmem:[%s2 + $0xb8] sm:$0xf] %v890
  %1037 = vst [vmem:[%s2 + $0xbc] sm:$0xf] %v891
  %1038 = vst [vmem:[%s2 + $0xc0] sm:$0xf] %v892
  %1039 = vst [vmem:[%s2 + $0xc4] sm:$0xf] %v893
  %1040 = vst [vmem:[%s2 + $0xc8] sm:$0xf] %v894
  %1041 = vst [vmem:[%s2 + $0xcc] sm:$0xf] %v895
  %1042 = vst [vmem:[%s2 + $0xd0] sm:$0xf] %v896
  %1043 = vst [vmem:[%s2 + $0xd4] sm:$0xf] %v897
  %1044 = vst [vmem:[%s2 + $0xd8] sm:$0xf] %v898
  %1045 = vst [vmem:[%s2 + $0xdc] sm:$0xf] %v899
  %1046 = vst [vmem:[%s2 + $0xe0] sm:$0xf] %v900
  %1047 = vst [vmem:[%s2 + $0xe4] sm:$0xf] %v901
  %1048 = vst [vmem:[%s2 + $0xe8] sm:$0xf] %v902
  %1049 = vst [vmem:[%s2 + $0xec] sm:$0xf] %v903
  %1050 = vst [vmem:[%s2 + $0xf0] sm:$0xf] %v904
  %1051 = vst [vmem:[%s2 + $0xf4] sm:$0xf] %v905
  %1052 = vst [vmem:[%s2 + $0xf8] sm:$0xf] %v906
  %1053 = vst [vmem:[%s2 + $0xfc] sm:$0xf] %v907
  %1054 = vst [vmem:[%s2 + $0x100] sm:$0xf] %v908
  %1055 = vst [vmem:[%s2 + $0x104] sm:$0xf] %v909
  %1056 = vst [vmem:[%s2 + $0x108] sm:$0xf] %v910
  %1057 = vst [vmem:[%s2 + $0x10c] sm:$0xf] %v911
  %1058 = vst [vmem:[%s2 + $0x110] sm:$0xf] %v912
  %1059 = vst [vmem:[%s2 + $0x114] sm:$0xf] %v913
  %1060 = vst [vmem:[%s2 + $0x118] sm:$0xf] %v914
  %1061 = vst [vmem:[%s2 + $0x11c] sm:$0xf] %v915
  %1062 = vst [vmem:[%s2 + $0x120] sm:$0xf] %v916
  // Predicated region
  $region10: #{netg_forward.22} parent=0 // pred_check
    _
  $region11: #{netg_forward.22} parent=0 // pred_check_branch
    %1064 = sbr.rel (0) target = $region13
  $region12: #{netg_forward.22} parent=0 // pred_region
    _
  $region13: #{netg_forward.22} parent=0 // pred_fallthru
    _
  // Predicated region
  $region14: #{netg_forward.22} parent=0 // pred_check
    _
  $region15: #{netg_forward.22} parent=0 // pred_check_branch
    %1066 = sbr.rel (0) target = $region17
  $region16: #{netg_forward.22} parent=0 // pred_region
    _
  $region17: #{netg_forward.22} parent=0 // pred_fallthru
    _

// kernel: netg_forward.23
$region0: #{netg_forward.23}
  #allocation0 [shape = 'u32[]', space=smem, size = 0x4, offset = 0x4, fixed_abs, tag = 'smem constant byte address 0x4 - core index']
  #allocation1 [shape = 'u32[144,128]{1,0:T(1,128)}', space=vmem, size = 0x12000, scoped, tag = 'internal scratch']
  #allocation2 [shape = 'f32[1,8]{1,0:T(1,128)}', space=vmem, size = 0x200, scoped, tag = 'scratch operand']
  #allocation3 [shape = 'f32[1,8]{1,0:T(1,128)}', space=vmem, size = 0x200, scoped, tag = 'scratch operand']
  %s0 = inlined_call_operand.vmem [shape: bf16[2048,8], index: 0, kind: input, shape index: {}]
  %s1 = inlined_call_operand.vmem [shape: f32[1,8], index: 1, kind: output, shape index: {0}]
  %s2 = inlined_call_operand.vmem [shape: f32[1,8], index: 2, kind: output, shape index: {1}]
  %3 = xla_tuple %s1, %s2
  %s4 = sld [smem:[#allocation0]]
  $region30: #{netg_forward.23} parent=0
    _
  %s6 = ssub.s32 1, %s4
  %s7 = scalar_select 0, %s6, %s4
  // Predicated region
  $region2: #{netg_forward.23} parent=0 // pred_check
    _
  $region3: #{netg_forward.23} parent=0 // pred_check_branch
    %9 = sbr.rel (0) target = $region5
  $region4: #{netg_forward.23} parent=0 // pred_region
    _
  $region5: #{netg_forward.23} parent=0 // pred_fallthru
    _
  %p10 = scmp.eq.s32.totalorder 0, 0
  // Predicated region
  $region6: #{netg_forward.23} parent=0 // pred_check
    %p11 = pneg %p10
  $region7: #{netg_forward.23} parent=0 // pred_check_branch
    %13 = sbr.rel (%p11) target = $region9
  $region8: #{netg_forward.23} parent=0 // pred_region
    %vm14 = vcmask 57344
    %15 = vst.msk [vmem:[#allocation2] sm:$0x1] %vm14, 0.0
    %16 = vst.msk [vmem:[#allocation3] sm:$0x1] %vm14, 0.0
  $region9: #{netg_forward.23} parent=0 // pred_fallthru
    _
  %v17 = vld [vmem:[%s0] sm:$0xf]
  %v18 = vld [vmem:[%s0 + $0x4] sm:$0xf]
  %v19 = vld [vmem:[%s0 + $0x8] sm:$0xf]
  %v20 = vld [vmem:[%s0 + $0xc] sm:$0xf]
  %v21 = vld [vmem:[%s0 + $0x10] sm:$0xf]
  %v22 = vld [vmem:[%s0 + $0x14] sm:$0xf]
  %v23 = vld [vmem:[%s0 + $0x18] sm:$0xf]
  %v24 = vld [vmem:[%s0 + $0x1c] sm:$0xf]
  %v25 = vld [vmem:[%s0 + $0x20] sm:$0xf]
  %v26 = vld [vmem:[%s0 + $0x24] sm:$0xf]
  %v27 = vld [vmem:[%s0 + $0x28] sm:$0xf]
  %v28 = vld [vmem:[%s0 + $0x2c] sm:$0xf]
  %v29 = vld [vmem:[%s0 + $0x30] sm:$0xf]
  %v30 = vld [vmem:[%s0 + $0x34] sm:$0xf]
  %v31 = vld [vmem:[%s0 + $0x38] sm:$0xf]
  %v32 = vld [vmem:[%s0 + $0x3c] sm:$0xf]
  %v33 = vld [vmem:[%s0 + $0x40] sm:$0xf]
  %v34 = vld [vmem:[%s0 + $0x44] sm:$0xf]
  %v35 = vld [vmem:[%s0 + $0x48] sm:$0xf]
  %v36 = vld [vmem:[%s0 + $0x4c] sm:$0xf]
  %v37 = vld [vmem:[%s0 + $0x50] sm:$0xf]
  %v38 = vld [vmem:[%s0 + $0x54] sm:$0xf]
  %v39 = vld [vmem:[%s0 + $0x58] sm:$0xf]
  %v40 = vld [vmem:[%s0 + $0x5c] sm:$0xf]
  %v41 = vld [vmem:[%s0 + $0x60] sm:$0xf]
  %v42 = vld [vmem:[%s0 + $0x64] sm:$0xf]
  %v43 = vld [vmem:[%s0 + $0x68] sm:$0xf]
  %v44 = vld [vmem:[%s0 + $0x6c] sm:$0xf]
  %v45 = vld [vmem:[%s0 + $0x70] sm:$0xf]
  %v46 = vld [vmem:[%s0 + $0x74] sm:$0xf]
  %v47 = vld [vmem:[%s0 + $0x78] sm:$0xf]
  %v48 = vld [vmem:[%s0 + $0x7c] sm:$0xf]
  %v49 = vld [vmem:[%s0 + $0x80] sm:$0xf]
  %v50 = vld [vmem:[%s0 + $0x84] sm:$0xf]
  %v51 = vld [vmem:[%s0 + $0x88] sm:$0xf]
  %v52 = vld [vmem:[%s0 + $0x8c] sm:$0xf]
  %v53 = vld [vmem:[%s0 + $0x90] sm:$0xf]
  %v54 = vld [vmem:[%s0 + $0x94] sm:$0xf]
  %v55 = vld [vmem:[%s0 + $0x98] sm:$0xf]
  %v56 = vld [vmem:[%s0 + $0x9c] sm:$0xf]
  %v57 = vld [vmem:[%s0 + $0xa0] sm:$0xf]
  %v58 = vld [vmem:[%s0 + $0xa4] sm:$0xf]
  %v59 = vld [vmem:[%s0 + $0xa8] sm:$0xf]
  %v60 = vld [vmem:[%s0 + $0xac] sm:$0xf]
  %v61 = vld [vmem:[%s0 + $0xb0] sm:$0xf]
  %v62 = vld [vmem:[%s0 + $0xb4] sm:$0xf]
  %v63 = vld [vmem:[%s0 + $0xb8] sm:$0xf]
  %v64 = vld [vmem:[%s0 + $0xbc] sm:$0xf]
  %v65 = vld [vmem:[%s0 + $0xc0] sm:$0xf]
  %v66 = vld [vmem:[%s0 + $0xc4] sm:$0xf]
  %v67 = vld [vmem:[%s0 + $0xc8] sm:$0xf]
  %v68 = vld [vmem:[%s0 + $0xcc] sm:$0xf]
  %v69 = vld [vmem:[%s0 + $0xd0] sm:$0xf]
  %v70 = vld [vmem:[%s0 + $0xd4] sm:$0xf]
  %v71 = vld [vmem:[%s0 + $0xd8] sm:$0xf]
  %v72 = vld [vmem:[%s0 + $0xdc] sm:$0xf]
  %v73 = vld [vmem:[%s0 + $0xe0] sm:$0xf]
  %v74 = vld [vmem:[%s0 + $0xe4] sm:$0xf]
  %v75 = vld [vmem:[%s0 + $0xe8] sm:$0xf]
  %v76 = vld [vmem:[%s0 + $0xec] sm:$0xf]
  %v77 = vld [vmem:[%s0 + $0xf0] sm:$0xf]
  %v78 = vld [vmem:[%s0 + $0xf4] sm:$0xf]
  %v79 = vld [vmem:[%s0 + $0xf8] sm:$0xf]
  %v80 = vld [vmem:[%s0 + $0xfc] sm:$0xf]
  %v81 = vld [vmem:[%s0 + $0x100] sm:$0xf]
  %v82 = vld [vmem:[%s0 + $0x104] sm:$0xf]
  %v83 = vld [vmem:[%s0 + $0x108] sm:$0xf]
  %v84 = vld [vmem:[%s0 + $0x10c] sm:$0xf]
  %v85 = vld [vmem:[%s0 + $0x110] sm:$0xf]
  %v86 = vld [vmem:[%s0 + $0x114] sm:$0xf]
  %v87 = vld [vmem:[%s0 + $0x118] sm:$0xf]
  %v88 = vld [vmem:[%s0 + $0x11c] sm:$0xf]
  %v89 = vld [vmem:[%s0 + $0x120] sm:$0xf]
  %v90 = vld [vmem:[%s0 + $0x124] sm:$0xf]
  %v91 = vld [vmem:[%s0 + $0x128] sm:$0xf]
  %v92 = vld [vmem:[%s0 + $0x12c] sm:$0xf]
  %v93 = vld [vmem:[%s0 + $0x130] sm:$0xf]
  %v94 = vld [vmem:[%s0 + $0x134] sm:$0xf]
  %v95 = vld [vmem:[%s0 + $0x138] sm:$0xf]
  %v96 = vld [vmem:[%s0 + $0x13c] sm:$0xf]
  %v97 = vld [vmem:[%s0 + $0x140] sm:$0xf]
  %v98 = vld [vmem:[%s0 + $0x144] sm:$0xf]
  %v99 = vld [vmem:[%s0 + $0x148] sm:$0xf]
  %v100 = vld [vmem:[%s0 + $0x14c] sm:$0xf]
  %v101 = vld [vmem:[%s0 + $0x150] sm:$0xf]
  %v102 = vld [vmem:[%s0 + $0x154] sm:$0xf]
  %v103 = vld [vmem:[%s0 + $0x158] sm:$0xf]
  %v104 = vld [vmem:[%s0 + $0x15c] sm:$0xf]
  %v105 = vld [vmem:[%s0 + $0x160] sm:$0xf]
  %v106 = vld [vmem:[%s0 + $0x164] sm:$0xf]
  %v107 = vld [vmem:[%s0 + $0x168] sm:$0xf]
  %v108 = vld [vmem:[%s0 + $0x16c] sm:$0xf]
  %v109 = vld [vmem:[%s0 + $0x170] sm:$0xf]
  %v110 = vld [vmem:[%s0 + $0x174] sm:$0xf]
  %v111 = vld [vmem:[%s0 + $0x178] sm:$0xf]
  %v112 = vld [vmem:[%s0 + $0x17c] sm:$0xf]
  %v113 = vld [vmem:[%s0 + $0x180] sm:$0xf]
  %v114 = vld [vmem:[%s0 + $0x184] sm:$0xf]
  %v115 = vld [vmem:[%s0 + $0x188] sm:$0xf]
  %v116 = vld [vmem:[%s0 + $0x18c] sm:$0xf]
  %v117 = vld [vmem:[%s0 + $0x190] sm:$0xf]
  %v118 = vld [vmem:[%s0 + $0x194] sm:$0xf]
  %v119 = vld [vmem:[%s0 + $0x198] sm:$0xf]
  %v120 = vld [vmem:[%s0 + $0x19c] sm:$0xf]
  %v121 = vld [vmem:[%s0 + $0x1a0] sm:$0xf]
  %v122 = vld [vmem:[%s0 + $0x1a4] sm:$0xf]
  %v123 = vld [vmem:[%s0 + $0x1a8] sm:$0xf]
  %v124 = vld [vmem:[%s0 + $0x1ac] sm:$0xf]
  %v125 = vld [vmem:[%s0 + $0x1b0] sm:$0xf]
  %v126 = vld [vmem:[%s0 + $0x1b4] sm:$0xf]
  %v127 = vld [vmem:[%s0 + $0x1b8] sm:$0xf]
  %v128 = vld [vmem:[%s0 + $0x1bc] sm:$0xf]
  %v129 = vld [vmem:[%s0 + $0x1c0] sm:$0xf]
  %v130 = vld [vmem:[%s0 + $0x1c4] sm:$0xf]
  %v131 = vld [vmem:[%s0 + $0x1c8] sm:$0xf]
  %v132 = vld [vmem:[%s0 + $0x1cc] sm:$0xf]
  %v133 = vld [vmem:[%s0 + $0x1d0] sm:$0xf]
  %v134 = vld [vmem:[%s0 + $0x1d4] sm:$0xf]
  %v135 = vld [vmem:[%s0 + $0x1d8] sm:$0xf]
  %v136 = vld [vmem:[%s0 + $0x1dc] sm:$0xf]
  %v137 = vld [vmem:[%s0 + $0x1e0] sm:$0xf]
  %v138 = vld [vmem:[%s0 + $0x1e4] sm:$0xf]
  %v139 = vld [vmem:[%s0 + $0x1e8] sm:$0xf]
  %v140 = vld [vmem:[%s0 + $0x1ec] sm:$0xf]
  %v141 = vld [vmem:[%s0 + $0x1f0] sm:$0xf]
  %v142 = vld [vmem:[%s0 + $0x1f4] sm:$0xf]
  %v143 = vld [vmem:[%s0 + $0x1f8] sm:$0xf]
  %v144 = vld [vmem:[%s0 + $0x1fc] sm:$0xf]
  %v145 = vld [vmem:[%s0 + $0x200] sm:$0xf]
  %v146 = vld [vmem:[%s0 + $0x204] sm:$0xf]
  %v147 = vld [vmem:[%s0 + $0x208] sm:$0xf]
  %v148 = vld [vmem:[%s0 + $0x20c] sm:$0xf]
  %v149 = vld [vmem:[%s0 + $0x210] sm:$0xf]
  %v150 = vld [vmem:[%s0 + $0x214] sm:$0xf]
  %v151 = vld [vmem:[%s0 + $0x218] sm:$0xf]
  %v152 = vld [vmem:[%s0 + $0x21c] sm:$0xf]
  %v153 = vld [vmem:[%s0 + $0x220] sm:$0xf]
  %v154 = vld [vmem:[%s0 + $0x224] sm:$0xf]
  %v155 = vld [vmem:[%s0 + $0x228] sm:$0xf]
  %v156 = vld [vmem:[%s0 + $0x22c] sm:$0xf]
  %v157 = vld [vmem:[%s0 + $0x230] sm:$0xf]
  %v158 = vld [vmem:[%s0 + $0x234] sm:$0xf]
  %v159 = vld [vmem:[%s0 + $0x238] sm:$0xf]
  %v160 = vld [vmem:[%s0 + $0x23c] sm:$0xf]
  %v161 = vld [vmem:[%s0 + $0x240] sm:$0xf]
  %v162 = vld [vmem:[%s0 + $0x244] sm:$0xf]
  %v163 = vld [vmem:[%s0 + $0x248] sm:$0xf]
  %v164 = vld [vmem:[%s0 + $0x24c] sm:$0xf]
  %v165 = vld [vmem:[%s0 + $0x250] sm:$0xf]
  %v166 = vld [vmem:[%s0 + $0x254] sm:$0xf]
  %v167 = vld [vmem:[%s0 + $0x258] sm:$0xf]
  %v168 = vld [vmem:[%s0 + $0x25c] sm:$0xf]
  %v169 = vld [vmem:[%s0 + $0x260] sm:$0xf]
  %v170 = vld [vmem:[%s0 + $0x264] sm:$0xf]
  %v171 = vld [vmem:[%s0 + $0x268] sm:$0xf]
  %v172 = vld [vmem:[%s0 + $0x26c] sm:$0xf]
  %v173 = vld [vmem:[%s0 + $0x270] sm:$0xf]
  %v174 = vld [vmem:[%s0 + $0x274] sm:$0xf]
  %v175 = vld [vmem:[%s0 + $0x278] sm:$0xf]
  %v176 = vld [vmem:[%s0 + $0x27c] sm:$0xf]
  %v177 = vld [vmem:[%s0 + $0x280] sm:$0xf]
  %v178 = vld [vmem:[%s0 + $0x284] sm:$0xf]
  %v179 = vld [vmem:[%s0 + $0x288] sm:$0xf]
  %v180 = vld [vmem:[%s0 + $0x28c] sm:$0xf]
  %v181 = vld [vmem:[%s0 + $0x290] sm:$0xf]
  %v182 = vld [vmem:[%s0 + $0x294] sm:$0xf]
  %v183 = vld [vmem:[%s0 + $0x298] sm:$0xf]
  %v184 = vld [vmem:[%s0 + $0x29c] sm:$0xf]
  %v185 = vld [vmem:[%s0 + $0x2a0] sm:$0xf]
  %v186 = vld [vmem:[%s0 + $0x2a4] sm:$0xf]
  %v187 = vld [vmem:[%s0 + $0x2a8] sm:$0xf]
  %v188 = vld [vmem:[%s0 + $0x2ac] sm:$0xf]
  %v189 = vld [vmem:[%s0 + $0x2b0] sm:$0xf]
  %v190 = vld [vmem:[%s0 + $0x2b4] sm:$0xf]
  %v191 = vld [vmem:[%s0 + $0x2b8] sm:$0xf]
  %v192 = vld [vmem:[%s0 + $0x2bc] sm:$0xf]
  %v193 = vld [vmem:[%s0 + $0x2c0] sm:$0xf]
  %v194 = vld [vmem:[%s0 + $0x2c4] sm:$0xf]
  %v195 = vld [vmem:[%s0 + $0x2c8] sm:$0xf]
  %v196 = vld [vmem:[%s0 + $0x2cc] sm:$0xf]
  %v197 = vld [vmem:[%s0 + $0x2d0] sm:$0xf]
  %v198 = vld [vmem:[%s0 + $0x2d4] sm:$0xf]
  %v199 = vld [vmem:[%s0 + $0x2d8] sm:$0xf]
  %v200 = vld [vmem:[%s0 + $0x2dc] sm:$0xf]
  %v201 = vld [vmem:[%s0 + $0x2e0] sm:$0xf]
  %v202 = vld [vmem:[%s0 + $0x2e4] sm:$0xf]
  %v203 = vld [vmem:[%s0 + $0x2e8] sm:$0xf]
  %v204 = vld [vmem:[%s0 + $0x2ec] sm:$0xf]
  %v205 = vld [vmem:[%s0 + $0x2f0] sm:$0xf]
  %v206 = vld [vmem:[%s0 + $0x2f4] sm:$0xf]
  %v207 = vld [vmem:[%s0 + $0x2f8] sm:$0xf]
  %v208 = vld [vmem:[%s0 + $0x2fc] sm:$0xf]
  %v209 = vld [vmem:[%s0 + $0x300] sm:$0xf]
  %v210 = vld [vmem:[%s0 + $0x304] sm:$0xf]
  %v211 = vld [vmem:[%s0 + $0x308] sm:$0xf]
  %v212 = vld [vmem:[%s0 + $0x30c] sm:$0xf]
  %v213 = vld [vmem:[%s0 + $0x310] sm:$0xf]
  %v214 = vld [vmem:[%s0 + $0x314] sm:$0xf]
  %v215 = vld [vmem:[%s0 + $0x318] sm:$0xf]
  %v216 = vld [vmem:[%s0 + $0x31c] sm:$0xf]
  %v217 = vld [vmem:[%s0 + $0x320] sm:$0xf]
  %v218 = vld [vmem:[%s0 + $0x324] sm:$0xf]
  %v219 = vld [vmem:[%s0 + $0x328] sm:$0xf]
  %v220 = vld [vmem:[%s0 + $0x32c] sm:$0xf]
  %v221 = vld [vmem:[%s0 + $0x330] sm:$0xf]
  %v222 = vld [vmem:[%s0 + $0x334] sm:$0xf]
  %v223 = vld [vmem:[%s0 + $0x338] sm:$0xf]
  %v224 = vld [vmem:[%s0 + $0x33c] sm:$0xf]
  %v225 = vld [vmem:[%s0 + $0x340] sm:$0xf]
  %v226 = vld [vmem:[%s0 + $0x344] sm:$0xf]
  %v227 = vld [vmem:[%s0 + $0x348] sm:$0xf]
  %v228 = vld [vmem:[%s0 + $0x34c] sm:$0xf]
  %v229 = vld [vmem:[%s0 + $0x350] sm:$0xf]
  %v230 = vld [vmem:[%s0 + $0x354] sm:$0xf]
  %v231 = vld [vmem:[%s0 + $0x358] sm:$0xf]
  %v232 = vld [vmem:[%s0 + $0x35c] sm:$0xf]
  %v233 = vld [vmem:[%s0 + $0x360] sm:$0xf]
  %v234 = vld [vmem:[%s0 + $0x364] sm:$0xf]
  %v235 = vld [vmem:[%s0 + $0x368] sm:$0xf]
  %v236 = vld [vmem:[%s0 + $0x36c] sm:$0xf]
  %v237 = vld [vmem:[%s0 + $0x370] sm:$0xf]
  %v238 = vld [vmem:[%s0 + $0x374] sm:$0xf]
  %v239 = vld [vmem:[%s0 + $0x378] sm:$0xf]
  %v240 = vld [vmem:[%s0 + $0x37c] sm:$0xf]
  %v241 = vld [vmem:[%s0 + $0x380] sm:$0xf]
  %v242 = vld [vmem:[%s0 + $0x384] sm:$0xf]
  %v243 = vld [vmem:[%s0 + $0x388] sm:$0xf]
  %v244 = vld [vmem:[%s0 + $0x38c] sm:$0xf]
  %v245 = vld [vmem:[%s0 + $0x390] sm:$0xf]
  %v246 = vld [vmem:[%s0 + $0x394] sm:$0xf]
  %v247 = vld [vmem:[%s0 + $0x398] sm:$0xf]
  %v248 = vld [vmem:[%s0 + $0x39c] sm:$0xf]
  %v249 = vld [vmem:[%s0 + $0x3a0] sm:$0xf]
  %v250 = vld [vmem:[%s0 + $0x3a4] sm:$0xf]
  %v251 = vld [vmem:[%s0 + $0x3a8] sm:$0xf]
  %v252 = vld [vmem:[%s0 + $0x3ac] sm:$0xf]
  %v253 = vld [vmem:[%s0 + $0x3b0] sm:$0xf]
  %v254 = vld [vmem:[%s0 + $0x3b4] sm:$0xf]
  %v255 = vld [vmem:[%s0 + $0x3b8] sm:$0xf]
  %v256 = vld [vmem:[%s0 + $0x3bc] sm:$0xf]
  %v257 = vld [vmem:[%s0 + $0x3c0] sm:$0xf]
  %v258 = vld [vmem:[%s0 + $0x3c4] sm:$0xf]
  %v259 = vld [vmem:[%s0 + $0x3c8] sm:$0xf]
  %v260 = vld [vmem:[%s0 + $0x3cc] sm:$0xf]
  %v261 = vld [vmem:[%s0 + $0x3d0] sm:$0xf]
  %v262 = vld [vmem:[%s0 + $0x3d4] sm:$0xf]
  %v263 = vld [vmem:[%s0 + $0x3d8] sm:$0xf]
  %v264 = vld [vmem:[%s0 + $0x3dc] sm:$0xf]
  %v265 = vld [vmem:[%s0 + $0x3e0] sm:$0xf]
  %v266 = vld [vmem:[%s0 + $0x3e4] sm:$0xf]
  %v267 = vld [vmem:[%s0 + $0x3e8] sm:$0xf]
  %v268 = vld [vmem:[%s0 + $0x3ec] sm:$0xf]
  %v269 = vld [vmem:[%s0 + $0x3f0] sm:$0xf]
  %v270 = vld [vmem:[%s0 + $0x3f4] sm:$0xf]
  %v271 = vld [vmem:[%s0 + $0x3f8] sm:$0xf]
  %v272 = vld [vmem:[%s0 + $0x3fc] sm:$0xf]
  %v273 = vunpack.c.l.bf16 %v17
  %v274 = vunpack.c.l.bf16 %v18
  %v275 = vunpack.c.l.bf16 %v19
  %v276 = vunpack.c.l.bf16 %v20
  %v277 = vunpack.c.l.bf16 %v21
  %v278 = vunpack.c.l.bf16 %v22
  %v279 = vunpack.c.l.bf16 %v23
  %v280 = vunpack.c.l.bf16 %v24
  %v281 = vunpack.c.l.bf16 %v25
  %v282 = vunpack.c.l.bf16 %v26
  %v283 = vunpack.c.l.bf16 %v27
  %v284 = vunpack.c.l.bf16 %v28
  %v285 = vunpack.c.l.bf16 %v29
  %v286 = vunpack.c.l.bf16 %v30
  %v287 = vunpack.c.l.bf16 %v31
  %v288 = vunpack.c.l.bf16 %v32
  %v289 = vunpack.c.l.bf16 %v33
  %v290 = vunpack.c.l.bf16 %v34
  %v291 = vunpack.c.l.bf16 %v35
  %v292 = vunpack.c.l.bf16 %v36
  %v293 = vunpack.c.l.bf16 %v37
  %v294 = vunpack.c.l.bf16 %v38
  %v295 = vunpack.c.l.bf16 %v39
  %v296 = vunpack.c.l.bf16 %v40
  %v297 = vunpack.c.l.bf16 %v41
  %v298 = vunpack.c.l.bf16 %v42
  %v299 = vunpack.c.l.bf16 %v43
  %v300 = vunpack.c.l.bf16 %v44
  %v301 = vunpack.c.l.bf16 %v45
  %v302 = vunpack.c.l.bf16 %v46
  %v303 = vunpack.c.l.bf16 %v47
  %v304 = vunpack.c.l.bf16 %v48
  %v305 = vunpack.c.l.bf16 %v49
  %v306 = vunpack.c.l.bf16 %v50
  %v307 = vunpack.c.l.bf16 %v51
  %v308 = vunpack.c.l.bf16 %v52
  %v309 = vunpack.c.l.bf16 %v53
  %v310 = vunpack.c.l.bf16 %v54
  %v311 = vunpack.c.l.bf16 %v55
  %v312 = vunpack.c.l.bf16 %v56
  %v313 = vunpack.c.l.bf16 %v57
  %v314 = vunpack.c.l.bf16 %v58
  %v315 = vunpack.c.l.bf16 %v59
  %v316 = vunpack.c.l.bf16 %v60
  %v317 = vunpack.c.l.bf16 %v61
  %v318 = vunpack.c.l.bf16 %v62
  %v319 = vunpack.c.l.bf16 %v63
  %v320 = vunpack.c.l.bf16 %v64
  %v321 = vunpack.c.l.bf16 %v65
  %v322 = vunpack.c.l.bf16 %v66
  %v323 = vunpack.c.l.bf16 %v67
  %v324 = vunpack.c.l.bf16 %v68
  %v325 = vunpack.c.l.bf16 %v69
  %v326 = vunpack.c.l.bf16 %v70
  %v327 = vunpack.c.l.bf16 %v71
  %v328 = vunpack.c.l.bf16 %v72
  %v329 = vunpack.c.l.bf16 %v73
  %v330 = vunpack.c.l.bf16 %v74
  %v331 = vunpack.c.l.bf16 %v75
  %v332 = vunpack.c.l.bf16 %v76
  %v333 = vunpack.c.l.bf16 %v77
  %v334 = vunpack.c.l.bf16 %v78
  %v335 = vunpack.c.l.bf16 %v79
  %v336 = vunpack.c.l.bf16 %v80
  %v337 = vunpack.c.l.bf16 %v81
  %v338 = vunpack.c.l.bf16 %v82
  %v339 = vunpack.c.l.bf16 %v83
  %v340 = vunpack.c.l.bf16 %v84
  %v341 = vunpack.c.l.bf16 %v85
  %v342 = vunpack.c.l.bf16 %v86
  %v343 = vunpack.c.l.bf16 %v87
  %v344 = vunpack.c.l.bf16 %v88
  %v345 = vunpack.c.l.bf16 %v89
  %v346 = vunpack.c.l.bf16 %v90
  %v347 = vunpack.c.l.bf16 %v91
  %v348 = vunpack.c.l.bf16 %v92
  %v349 = vunpack.c.l.bf16 %v93
  %v350 = vunpack.c.l.bf16 %v94
  %v351 = vunpack.c.l.bf16 %v95
  %v352 = vunpack.c.l.bf16 %v96
  %v353 = vunpack.c.l.bf16 %v97
  %v354 = vunpack.c.l.bf16 %v98
  %v355 = vunpack.c.l.bf16 %v99
  %v356 = vunpack.c.l.bf16 %v100
  %v357 = vunpack.c.l.bf16 %v101
  %v358 = vunpack.c.l.bf16 %v102
  %v359 = vunpack.c.l.bf16 %v103
  %v360 = vunpack.c.l.bf16 %v104
  %v361 = vunpack.c.l.bf16 %v105
  %v362 = vunpack.c.l.bf16 %v106
  %v363 = vunpack.c.l.bf16 %v107
  %v364 = vunpack.c.l.bf16 %v108
  %v365 = vunpack.c.l.bf16 %v109
  %v366 = vunpack.c.l.bf16 %v110
  %v367 = vunpack.c.l.bf16 %v111
  %v368 = vunpack.c.l.bf16 %v112
  %v369 = vunpack.c.l.bf16 %v113
  %v370 = vunpack.c.l.bf16 %v114
  %v371 = vunpack.c.l.bf16 %v115
  %v372 = vunpack.c.l.bf16 %v116
  %v373 = vunpack.c.l.bf16 %v117
  %v374 = vunpack.c.l.bf16 %v118
  %v375 = vunpack.c.l.bf16 %v119
  %v376 = vunpack.c.l.bf16 %v120
  %v377 = vunpack.c.l.bf16 %v121
  %v378 = vunpack.c.l.bf16 %v122
  %v379 = vunpack.c.l.bf16 %v123
  %v380 = vunpack.c.l.bf16 %v124
  %v381 = vunpack.c.l.bf16 %v125
  %v382 = vunpack.c.l.bf16 %v126
  %v383 = vunpack.c.l.bf16 %v127
  %v384 = vunpack.c.l.bf16 %v128
  %v385 = vunpack.c.l.bf16 %v129
  %v386 = vunpack.c.l.bf16 %v130
  %v387 = vunpack.c.l.bf16 %v131
  %v388 = vunpack.c.l.bf16 %v132
  %v389 = vunpack.c.l.bf16 %v133
  %v390 = vunpack.c.l.bf16 %v134
  %v391 = vunpack.c.l.bf16 %v135
  %v392 = vunpack.c.l.bf16 %v136
  %v393 = vunpack.c.l.bf16 %v137
  %v394 = vunpack.c.l.bf16 %v138
  %v395 = vunpack.c.l.bf16 %v139
  %v396 = vunpack.c.l.bf16 %v140
  %v397 = vunpack.c.l.bf16 %v141
  %v398 = vunpack.c.l.bf16 %v142
  %v399 = vunpack.c.l.bf16 %v143
  %v400 = vunpack.c.l.bf16 %v144
  %v401 = vunpack.c.l.bf16 %v145
  %v402 = vunpack.c.l.bf16 %v146
  %v403 = vunpack.c.l.bf16 %v147
  %v404 = vunpack.c.l.bf16 %v148
  %v405 = vunpack.c.l.bf16 %v149
  %v406 = vunpack.c.l.bf16 %v150
  %v407 = vunpack.c.l.bf16 %v151
  %v408 = vunpack.c.l.bf16 %v152
  %v409 = vunpack.c.l.bf16 %v153
  %v410 = vunpack.c.l.bf16 %v154
  %v411 = vunpack.c.l.bf16 %v155
  %v412 = vunpack.c.l.bf16 %v156
  %v413 = vunpack.c.l.bf16 %v157
  %v414 = vunpack.c.l.bf16 %v158
  %v415 = vunpack.c.l.bf16 %v159
  %v416 = vunpack.c.l.bf16 %v160
  %v417 = vunpack.c.l.bf16 %v161
  %v418 = vunpack.c.l.bf16 %v162
  %v419 = vunpack.c.l.bf16 %v163
  %v420 = vunpack.c.l.bf16 %v164
  %v421 = vunpack.c.l.bf16 %v165
  %v422 = vunpack.c.l.bf16 %v166
  %v423 = vunpack.c.l.bf16 %v167
  %v424 = vunpack.c.l.bf16 %v168
  %v425 = vunpack.c.l.bf16 %v169
  %v426 = vunpack.c.l.bf16 %v170
  %v427 = vunpack.c.l.bf16 %v171
  %v428 = vunpack.c.l.bf16 %v172
  %v429 = vunpack.c.l.bf16 %v173
  %v430 = vunpack.c.l.bf16 %v174
  %v431 = vunpack.c.l.bf16 %v175
  %v432 = vunpack.c.l.bf16 %v176
  %v433 = vunpack.c.l.bf16 %v177
  %v434 = vunpack.c.l.bf16 %v178
  %v435 = vunpack.c.l.bf16 %v179
  %v436 = vunpack.c.l.bf16 %v180
  %v437 = vunpack.c.l.bf16 %v181
  %v438 = vunpack.c.l.bf16 %v182
  %v439 = vunpack.c.l.bf16 %v183
  %v440 = vunpack.c.l.bf16 %v184
  %v441 = vunpack.c.l.bf16 %v185
  %v442 = vunpack.c.l.bf16 %v186
  %v443 = vunpack.c.l.bf16 %v187
  %v444 = vunpack.c.l.bf16 %v188
  %v445 = vunpack.c.l.bf16 %v189
  %v446 = vunpack.c.l.bf16 %v190
  %v447 = vunpack.c.l.bf16 %v191
  %v448 = vunpack.c.l.bf16 %v192
  %v449 = vunpack.c.l.bf16 %v193
  %v450 = vunpack.c.l.bf16 %v194
  %v451 = vunpack.c.l.bf16 %v195
  %v452 = vunpack.c.l.bf16 %v196
  %v453 = vunpack.c.l.bf16 %v197
  %v454 = vunpack.c.l.bf16 %v198
  %v455 = vunpack.c.l.bf16 %v199
  %v456 = vunpack.c.l.bf16 %v200
  %v457 = vunpack.c.l.bf16 %v201
  %v458 = vunpack.c.l.bf16 %v202
  %v459 = vunpack.c.l.bf16 %v203
  %v460 = vunpack.c.l.bf16 %v204
  %v461 = vunpack.c.l.bf16 %v205
  %v462 = vunpack.c.l.bf16 %v206
  %v463 = vunpack.c.l.bf16 %v207
  %v464 = vunpack.c.l.bf16 %v208
  %v465 = vunpack.c.l.bf16 %v209
  %v466 = vunpack.c.l.bf16 %v210
  %v467 = vunpack.c.l.bf16 %v211
  %v468 = vunpack.c.l.bf16 %v212
  %v469 = vunpack.c.l.bf16 %v213
  %v470 = vunpack.c.l.bf16 %v214
  %v471 = vunpack.c.l.bf16 %v215
  %v472 = vunpack.c.l.bf16 %v216
  %v473 = vunpack.c.l.bf16 %v217
  %v474 = vunpack.c.l.bf16 %v218
  %v475 = vunpack.c.l.bf16 %v219
  %v476 = vunpack.c.l.bf16 %v220
  %v477 = vunpack.c.l.bf16 %v221
  %v478 = vunpack.c.l.bf16 %v222
  %v479 = vunpack.c.l.bf16 %v223
  %v480 = vunpack.c.l.bf16 %v224
  %v481 = vunpack.c.l.bf16 %v225
  %v482 = vunpack.c.l.bf16 %v226
  %v483 = vunpack.c.l.bf16 %v227
  %v484 = vunpack.c.l.bf16 %v228
  %v485 = vunpack.c.l.bf16 %v229
  %v486 = vunpack.c.l.bf16 %v230
  %v487 = vunpack.c.l.bf16 %v231
  %v488 = vunpack.c.l.bf16 %v232
  %v489 = vunpack.c.l.bf16 %v233
  %v490 = vunpack.c.l.bf16 %v234
  %v491 = vunpack.c.l.bf16 %v235
  %v492 = vunpack.c.l.bf16 %v236
  %v493 = vunpack.c.l.bf16 %v237
  %v494 = vunpack.c.l.bf16 %v238
  %v495 = vunpack.c.l.bf16 %v239
  %v496 = vunpack.c.l.bf16 %v240
  %v497 = vunpack.c.l.bf16 %v241
  %v498 = vunpack.c.l.bf16 %v242
  %v499 = vunpack.c.l.bf16 %v243
  %v500 = vunpack.c.l.bf16 %v244
  %v501 = vunpack.c.l.bf16 %v245
  %v502 = vunpack.c.l.bf16 %v246
  %v503 = vunpack.c.l.bf16 %v247
  %v504 = vunpack.c.l.bf16 %v248
  %v505 = vunpack.c.l.bf16 %v249
  %v506 = vunpack.c.l.bf16 %v250
  %v507 = vunpack.c.l.bf16 %v251
  %v508 = vunpack.c.l.bf16 %v252
  %v509 = vunpack.c.l.bf16 %v253
  %v510 = vunpack.c.l.bf16 %v254
  %v511 = vunpack.c.l.bf16 %v255
  %v512 = vunpack.c.l.bf16 %v256
  %v513 = vunpack.c.l.bf16 %v257
  %v514 = vunpack.c.l.bf16 %v258
  %v515 = vunpack.c.l.bf16 %v259
  %v516 = vunpack.c.l.bf16 %v260
  %v517 = vunpack.c.l.bf16 %v261
  %v518 = vunpack.c.l.bf16 %v262
  %v519 = vunpack.c.l.bf16 %v263
  %v520 = vunpack.c.l.bf16 %v264
  %v521 = vunpack.c.l.bf16 %v265
  %v522 = vunpack.c.l.bf16 %v266
  %v523 = vunpack.c.l.bf16 %v267
  %v524 = vunpack.c.l.bf16 %v268
  %v525 = vunpack.c.l.bf16 %v269
  %v526 = vunpack.c.l.bf16 %v270
  %v527 = vunpack.c.l.bf16 %v271
  %v528 = vunpack.c.l.bf16 %v272
  %v529 = vld [vmem:[#allocation2] sm:$0x1]
  %vm530 = vcmask 64512
  %v531 = vsel %vm530, %v273, 0.0
  %v532 = vsel %vm530, %v274, 0.0
  %v533 = vadd.f32 %v531, %v532
  %v534 = vsel %vm530, %v275, 0.0
  %v535 = vadd.f32 %v533, %v534
  %v536 = vsel %vm530, %v276, 0.0
  %v537 = vadd.f32 %v535, %v536
  %v538 = vsel %vm530, %v277, 0.0
  %v539 = vadd.f32 %v537, %v538
  %v540 = vsel %vm530, %v278, 0.0
  %v541 = vadd.f32 %v539, %v540
  %v542 = vsel %vm530, %v279, 0.0
  %v543 = vadd.f32 %v541, %v542
  %v544 = vsel %vm530, %v280, 0.0
  %v545 = vadd.f32 %v543, %v544
  %v546 = vsel %vm530, %v281, 0.0
  %v547 = vadd.f32 %v545, %v546
  %v548 = vsel %vm530, %v282, 0.0
  %v549 = vadd.f32 %v547, %v548
  %v550 = vsel %vm530, %v283, 0.0
  %v551 = vadd.f32 %v549, %v550
  %v552 = vsel %vm530, %v284, 0.0
  %v553 = vadd.f32 %v551, %v552
  %v554 = vsel %vm530, %v285, 0.0
  %v555 = vadd.f32 %v553, %v554
  %v556 = vsel %vm530, %v286, 0.0
  %v557 = vadd.f32 %v555, %v556
  %v558 = vsel %vm530, %v287, 0.0
  %v559 = vadd.f32 %v557, %v558
  %v560 = vsel %vm530, %v288, 0.0
  %v561 = vadd.f32 %v559, %v560
  %v562 = vsel %vm530, %v289, 0.0
  %v563 = vadd.f32 %v561, %v562
  %v564 = vsel %vm530, %v290, 0.0
  %v565 = vadd.f32 %v563, %v564
  %v566 = vsel %vm530, %v291, 0.0
  %v567 = vadd.f32 %v565, %v566
  %v568 = vsel %vm530, %v292, 0.0
  %v569 = vadd.f32 %v567, %v568
  %v570 = vsel %vm530, %v293, 0.0
  %v571 = vadd.f32 %v569, %v570
  %v572 = vsel %vm530, %v294, 0.0
  %v573 = vadd.f32 %v571, %v572
  %v574 = vsel %vm530, %v295, 0.0
  %v575 = vadd.f32 %v573, %v574
  %v576 = vsel %vm530, %v296, 0.0
  %v577 = vadd.f32 %v575, %v576
  %v578 = vsel %vm530, %v297, 0.0
  %v579 = vadd.f32 %v577, %v578
  %v580 = vsel %vm530, %v298, 0.0
  %v581 = vadd.f32 %v579, %v580
  %v582 = vsel %vm530, %v299, 0.0
  %v583 = vadd.f32 %v581, %v582
  %v584 = vsel %vm530, %v300, 0.0
  %v585 = vadd.f32 %v583, %v584
  %v586 = vsel %vm530, %v301, 0.0
  %v587 = vadd.f32 %v585, %v586
  %v588 = vsel %vm530, %v302, 0.0
  %v589 = vadd.f32 %v587, %v588
  %v590 = vsel %vm530, %v303, 0.0
  %v591 = vadd.f32 %v589, %v590
  %v592 = vsel %vm530, %v304, 0.0
  %v593 = vadd.f32 %v591, %v592
  %v594 = vsel %vm530, %v305, 0.0
  %v595 = vadd.f32 %v593, %v594
  %v596 = vsel %vm530, %v306, 0.0
  %v597 = vadd.f32 %v595, %v596
  %v598 = vsel %vm530, %v307, 0.0
  %v599 = vadd.f32 %v597, %v598
  %v600 = vsel %vm530, %v308, 0.0
  %v601 = vadd.f32 %v599, %v600
  %v602 = vsel %vm530, %v309, 0.0
  %v603 = vadd.f32 %v601, %v602
  %v604 = vsel %vm530, %v310, 0.0
  %v605 = vadd.f32 %v603, %v604
  %v606 = vsel %vm530, %v311, 0.0
  %v607 = vadd.f32 %v605, %v606
  %v608 = vsel %vm530, %v312, 0.0
  %v609 = vadd.f32 %v607, %v608
  %v610 = vsel %vm530, %v313, 0.0
  %v611 = vadd.f32 %v609, %v610
  %v612 = vsel %vm530, %v314, 0.0
  %v613 = vadd.f32 %v611, %v612
  %v614 = vsel %vm530, %v315, 0.0
  %v615 = vadd.f32 %v613, %v614
  %v616 = vsel %vm530, %v316, 0.0
  %v617 = vadd.f32 %v615, %v616
  %v618 = vsel %vm530, %v317, 0.0
  %v619 = vadd.f32 %v617, %v618
  %v620 = vsel %vm530, %v318, 0.0
  %v621 = vadd.f32 %v619, %v620
  %v622 = vsel %vm530, %v319, 0.0
  %v623 = vadd.f32 %v621, %v622
  %v624 = vsel %vm530, %v320, 0.0
  %v625 = vadd.f32 %v623, %v624
  %v626 = vsel %vm530, %v321, 0.0
  %v627 = vadd.f32 %v625, %v626
  %v628 = vsel %vm530, %v322, 0.0
  %v629 = vadd.f32 %v627, %v628
  %v630 = vsel %vm530, %v323, 0.0
  %v631 = vadd.f32 %v629, %v630
  %v632 = vsel %vm530, %v324, 0.0
  %v633 = vadd.f32 %v631, %v632
  %v634 = vsel %vm530, %v325, 0.0
  %v635 = vadd.f32 %v633, %v634
  %v636 = vsel %vm530, %v326, 0.0
  %v637 = vadd.f32 %v635, %v636
  %v638 = vsel %vm530, %v327, 0.0
  %v639 = vadd.f32 %v637, %v638
  %v640 = vsel %vm530, %v328, 0.0
  %v641 = vadd.f32 %v639, %v640
  %v642 = vsel %vm530, %v329, 0.0
  %v643 = vadd.f32 %v641, %v642
  %v644 = vsel %vm530, %v330, 0.0
  %v645 = vadd.f32 %v643, %v644
  %v646 = vsel %vm530, %v331, 0.0
  %v647 = vadd.f32 %v645, %v646
  %v648 = vsel %vm530, %v332, 0.0
  %v649 = vadd.f32 %v647, %v648
  %v650 = vsel %vm530, %v333, 0.0
  %v651 = vadd.f32 %v649, %v650
  %v652 = vsel %vm530, %v334, 0.0
  %v653 = vadd.f32 %v651, %v652
  %v654 = vsel %vm530, %v335, 0.0
  %v655 = vadd.f32 %v653, %v654
  %v656 = vsel %vm530, %v336, 0.0
  %v657 = vadd.f32 %v655, %v656
  %v658 = vsel %vm530, %v337, 0.0
  %v659 = vadd.f32 %v657, %v658
  %v660 = vsel %vm530, %v338, 0.0
  %v661 = vadd.f32 %v659, %v660
  %v662 = vsel %vm530, %v339, 0.0
  %v663 = vadd.f32 %v661, %v662
  %v664 = vsel %vm530, %v340, 0.0
  %v665 = vadd.f32 %v663, %v664
  %v666 = vsel %vm530, %v341, 0.0
  %v667 = vadd.f32 %v665, %v666
  %v668 = vsel %vm530, %v342, 0.0
  %v669 = vadd.f32 %v667, %v668
  %v670 = vsel %vm530, %v343, 0.0
  %v671 = vadd.f32 %v669, %v670
  %v672 = vsel %vm530, %v344, 0.0
  %v673 = vadd.f32 %v671, %v672
  %v674 = vsel %vm530, %v345, 0.0
  %v675 = vadd.f32 %v673, %v674
  %v676 = vsel %vm530, %v346, 0.0
  %v677 = vadd.f32 %v675, %v676
  %v678 = vsel %vm530, %v347, 0.0
  %v679 = vadd.f32 %v677, %v678
  %v680 = vsel %vm530, %v348, 0.0
  %v681 = vadd.f32 %v679, %v680
  %v682 = vsel %vm530, %v349, 0.0
  %v683 = vadd.f32 %v681, %v682
  %v684 = vsel %vm530, %v350, 0.0
  %v685 = vadd.f32 %v683, %v684
  %v686 = vsel %vm530, %v351, 0.0
  %v687 = vadd.f32 %v685, %v686
  %v688 = vsel %vm530, %v352, 0.0
  %v689 = vadd.f32 %v687, %v688
  %v690 = vsel %vm530, %v353, 0.0
  %v691 = vadd.f32 %v689, %v690
  %v692 = vsel %vm530, %v354, 0.0
  %v693 = vadd.f32 %v691, %v692
  %v694 = vsel %vm530, %v355, 0.0
  %v695 = vadd.f32 %v693, %v694
  %v696 = vsel %vm530, %v356, 0.0
  %v697 = vadd.f32 %v695, %v696
  %v698 = vsel %vm530, %v357, 0.0
  %v699 = vadd.f32 %v697, %v698
  %v700 = vsel %vm530, %v358, 0.0
  %v701 = vadd.f32 %v699, %v700
  %v702 = vsel %vm530, %v359, 0.0
  %v703 = vadd.f32 %v701, %v702
  %v704 = vsel %vm530, %v360, 0.0
  %v705 = vadd.f32 %v703, %v704
  %v706 = vsel %vm530, %v361, 0.0
  %v707 = vadd.f32 %v705, %v706
  %v708 = vsel %vm530, %v362, 0.0
  %v709 = vadd.f32 %v707, %v708
  %v710 = vsel %vm530, %v363, 0.0
  %v711 = vadd.f32 %v709, %v710
  %v712 = vsel %vm530, %v364, 0.0
  %v713 = vadd.f32 %v711, %v712
  %v714 = vsel %vm530, %v365, 0.0
  %v715 = vadd.f32 %v713, %v714
  %v716 = vsel %vm530, %v366, 0.0
  %v717 = vadd.f32 %v715, %v716
  %v718 = vsel %vm530, %v367, 0.0
  %v719 = vadd.f32 %v717, %v718
  %v720 = vsel %vm530, %v368, 0.0
  %v721 = vadd.f32 %v719, %v720
  %v722 = vsel %vm530, %v369, 0.0
  %v723 = vadd.f32 %v721, %v722
  %v724 = vsel %vm530, %v370, 0.0
  %v725 = vadd.f32 %v723, %v724
  %v726 = vsel %vm530, %v371, 0.0
  %v727 = vadd.f32 %v725, %v726
  %v728 = vsel %vm530, %v372, 0.0
  %v729 = vadd.f32 %v727, %v728
  %v730 = vsel %vm530, %v373, 0.0
  %v731 = vadd.f32 %v729, %v730
  %v732 = vsel %vm530, %v374, 0.0
  %v733 = vadd.f32 %v731, %v732
  %v734 = vsel %vm530, %v375, 0.0
  %v735 = vadd.f32 %v733, %v734
  %v736 = vsel %vm530, %v376, 0.0
  %v737 = vadd.f32 %v735, %v736
  %v738 = vsel %vm530, %v377, 0.0
  %v739 = vadd.f32 %v737, %v738
  %v740 = vsel %vm530, %v378, 0.0
  %v741 = vadd.f32 %v739, %v740
  %v742 = vsel %vm530, %v379, 0.0
  %v743 = vadd.f32 %v741, %v742
  %v744 = vsel %vm530, %v380, 0.0
  %v745 = vadd.f32 %v743, %v744
  %v746 = vsel %vm530, %v381, 0.0
  %v747 = vadd.f32 %v745, %v746
  %v748 = vsel %vm530, %v382, 0.0
  %v749 = vadd.f32 %v747, %v748
  %v750 = vsel %vm530, %v383, 0.0
  %v751 = vadd.f32 %v749, %v750
  %v752 = vsel %vm530, %v384, 0.0
  %v753 = vadd.f32 %v751, %v752
  %v754 = vsel %vm530, %v385, 0.0
  %v755 = vadd.f32 %v753, %v754
  %v756 = vsel %vm530, %v386, 0.0
  %v757 = vadd.f32 %v755, %v756
  %v758 = vsel %vm530, %v387, 0.0
  %v759 = vadd.f32 %v757, %v758
  %v760 = vsel %vm530, %v388, 0.0
  %v761 = vadd.f32 %v759, %v760
  %v762 = vsel %vm530, %v389, 0.0
  %v763 = vadd.f32 %v761, %v762
  %v764 = vsel %vm530, %v390, 0.0
  %v765 = vadd.f32 %v763, %v764
  %v766 = vsel %vm530, %v391, 0.0
  %v767 = vadd.f32 %v765, %v766
  %v768 = vsel %vm530, %v392, 0.0
  %v769 = vadd.f32 %v767, %v768
  %v770 = vsel %vm530, %v393, 0.0
  %v771 = vadd.f32 %v769, %v770
  %v772 = vsel %vm530, %v394, 0.0
  %v773 = vadd.f32 %v771, %v772
  %v774 = vsel %vm530, %v395, 0.0
  %v775 = vadd.f32 %v773, %v774
  %v776 = vsel %vm530, %v396, 0.0
  %v777 = vadd.f32 %v775, %v776
  %v778 = vsel %vm530, %v397, 0.0
  %v779 = vadd.f32 %v777, %v778
  %v780 = vsel %vm530, %v398, 0.0
  %v781 = vadd.f32 %v779, %v780
  %v782 = vsel %vm530, %v399, 0.0
  %v783 = vadd.f32 %v781, %v782
  %v784 = vsel %vm530, %v400, 0.0
  %v785 = vadd.f32 %v783, %v784
  %v786 = vsel %vm530, %v401, 0.0
  %v787 = vadd.f32 %v785, %v786
  %v788 = vsel %vm530, %v402, 0.0
  %v789 = vadd.f32 %v787, %v788
  %v790 = vsel %vm530, %v403, 0.0
  %v791 = vadd.f32 %v789, %v790
  %v792 = vsel %vm530, %v404, 0.0
  %v793 = vadd.f32 %v791, %v792
  %v794 = vsel %vm530, %v405, 0.0
  %v795 = vadd.f32 %v793, %v794
  %v796 = vsel %vm530, %v406, 0.0
  %v797 = vadd.f32 %v795, %v796
  %v798 = vsel %vm530, %v407, 0.0
  %v799 = vadd.f32 %v797, %v798
  %v800 = vsel %vm530, %v408, 0.0
  %v801 = vadd.f32 %v799, %v800
  %v802 = vsel %vm530, %v409, 0.0
  %v803 = vadd.f32 %v801, %v802
  %v804 = vsel %vm530, %v410, 0.0
  %v805 = vadd.f32 %v803, %v804
  %v806 = vsel %vm530, %v411, 0.0
  %v807 = vadd.f32 %v805, %v806
  %v808 = vsel %vm530, %v412, 0.0
  %v809 = vadd.f32 %v807, %v808
  %v810 = vsel %vm530, %v413, 0.0
  %v811 = vadd.f32 %v809, %v810
  %v812 = vsel %vm530, %v414, 0.0
  %v813 = vadd.f32 %v811, %v812
  %v814 = vsel %vm530, %v415, 0.0
  %v815 = vadd.f32 %v813, %v814
  %v816 = vsel %vm530, %v416, 0.0
  %v817 = vadd.f32 %v815, %v816
  %v818 = vsel %vm530, %v417, 0.0
  %v819 = vadd.f32 %v817, %v818
  %v820 = vsel %vm530, %v418, 0.0
  %v821 = vadd.f32 %v819, %v820
  %v822 = vsel %vm530, %v419, 0.0
  %v823 = vadd.f32 %v821, %v822
  %v824 = vsel %vm530, %v420, 0.0
  %v825 = vadd.f32 %v823, %v824
  %v826 = vsel %vm530, %v421, 0.0
  %v827 = vadd.f32 %v825, %v826
  %v828 = vsel %vm530, %v422, 0.0
  %v829 = vadd.f32 %v827, %v828
  %v830 = vsel %vm530, %v423, 0.0
  %v831 = vadd.f32 %v829, %v830
  %v832 = vsel %vm530, %v424, 0.0
  %v833 = vadd.f32 %v831, %v832
  %v834 = vsel %vm530, %v425, 0.0
  %v835 = vadd.f32 %v833, %v834
  %v836 = vsel %vm530, %v426, 0.0
  %v837 = vadd.f32 %v835, %v836
  %v838 = vsel %vm530, %v427, 0.0
  %v839 = vadd.f32 %v837, %v838
  %v840 = vsel %vm530, %v428, 0.0
  %v841 = vadd.f32 %v839, %v840
  %v842 = vsel %vm530, %v429, 0.0
  %v843 = vadd.f32 %v841, %v842
  %v844 = vsel %vm530, %v430, 0.0
  %v845 = vadd.f32 %v843, %v844
  %v846 = vsel %vm530, %v431, 0.0
  %v847 = vadd.f32 %v845, %v846
  %v848 = vsel %vm530, %v432, 0.0
  %v849 = vadd.f32 %v847, %v848
  %v850 = vsel %vm530, %v433, 0.0
  %v851 = vadd.f32 %v849, %v850
  %v852 = vsel %vm530, %v434, 0.0
  %v853 = vadd.f32 %v851, %v852
  %v854 = vsel %vm530, %v435, 0.0
  %v855 = vadd.f32 %v853, %v854
  %v856 = vsel %vm530, %v436, 0.0
  %v857 = vadd.f32 %v855, %v856
  %v858 = vsel %vm530, %v437, 0.0
  %v859 = vadd.f32 %v857, %v858
  %v860 = vsel %vm530, %v438, 0.0
  %v861 = vadd.f32 %v859, %v860
  %v862 = vsel %vm530, %v439, 0.0
  %v863 = vadd.f32 %v861, %v862
  %v864 = vsel %vm530, %v440, 0.0
  %v865 = vadd.f32 %v863, %v864
  %v866 = vsel %vm530, %v441, 0.0
  %v867 = vadd.f32 %v865, %v866
  %v868 = vsel %vm530, %v442, 0.0
  %v869 = vadd.f32 %v867, %v868
  %v870 = vsel %vm530, %v443, 0.0
  %v871 = vadd.f32 %v869, %v870
  %v872 = vsel %vm530, %v444, 0.0
  %v873 = vadd.f32 %v871, %v872
  %v874 = vsel %vm530, %v445, 0.0
  %v875 = vadd.f32 %v873, %v874
  %v876 = vsel %vm530, %v446, 0.0
  %v877 = vadd.f32 %v875, %v876
  %v878 = vsel %vm530, %v447, 0.0
  %v879 = vadd.f32 %v877, %v878
  %v880 = vsel %vm530, %v448, 0.0
  %v881 = vadd.f32 %v879, %v880
  %v882 = vsel %vm530, %v449, 0.0
  %v883 = vadd.f32 %v881, %v882
  %v884 = vsel %vm530, %v450, 0.0
  %v885 = vadd.f32 %v883, %v884
  %v886 = vsel %vm530, %v451, 0.0
  %v887 = vadd.f32 %v885, %v886
  %v888 = vsel %vm530, %v452, 0.0
  %v889 = vadd.f32 %v887, %v888
  %v890 = vsel %vm530, %v453, 0.0
  %v891 = vadd.f32 %v889, %v890
  %v892 = vsel %vm530, %v454, 0.0
  %v893 = vadd.f32 %v891, %v892
  %v894 = vsel %vm530, %v455, 0.0
  %v895 = vadd.f32 %v893, %v894
  %v896 = vsel %vm530, %v456, 0.0
  %v897 = vadd.f32 %v895, %v896
  %v898 = vsel %vm530, %v457, 0.0
  %v899 = vadd.f32 %v897, %v898
  %v900 = vsel %vm530, %v458, 0.0
  %v901 = vadd.f32 %v899, %v900
  %v902 = vsel %vm530, %v459, 0.0
  %v903 = vadd.f32 %v901, %v902
  %v904 = vsel %vm530, %v460, 0.0
  %v905 = vadd.f32 %v903, %v904
  %v906 = vsel %vm530, %v461, 0.0
  %v907 = vadd.f32 %v905, %v906
  %v908 = vsel %vm530, %v462, 0.0
  %v909 = vadd.f32 %v907, %v908
  %v910 = vsel %vm530, %v463, 0.0
  %v911 = vadd.f32 %v909, %v910
  %v912 = vsel %vm530, %v464, 0.0
  %v913 = vadd.f32 %v911, %v912
  %v914 = vsel %vm530, %v465, 0.0
  %v915 = vadd.f32 %v913, %v914
  %v916 = vsel %vm530, %v466, 0.0
  %v917 = vadd.f32 %v915, %v916
  %v918 = vsel %vm530, %v467, 0.0
  %v919 = vadd.f32 %v917, %v918
  %v920 = vsel %vm530, %v468, 0.0
  %v921 = vadd.f32 %v919, %v920
  %v922 = vsel %vm530, %v469, 0.0
  %v923 = vadd.f32 %v921, %v922
  %v924 = vsel %vm530, %v470, 0.0
  %v925 = vadd.f32 %v923, %v924
  %v926 = vsel %vm530, %v471, 0.0
  %v927 = vadd.f32 %v925, %v926
  %v928 = vsel %vm530, %v472, 0.0
  %v929 = vadd.f32 %v927, %v928
  %v930 = vsel %vm530, %v473, 0.0
  %v931 = vadd.f32 %v929, %v930
  %v932 = vsel %vm530, %v474, 0.0
  %v933 = vadd.f32 %v931, %v932
  %v934 = vsel %vm530, %v475, 0.0
  %v935 = vadd.f32 %v933, %v934
  %v936 = vsel %vm530, %v476, 0.0
  %v937 = vadd.f32 %v935, %v936
  %v938 = vsel %vm530, %v477, 0.0
  %v939 = vadd.f32 %v937, %v938
  %v940 = vsel %vm530, %v478, 0.0
  %v941 = vadd.f32 %v939, %v940
  %v942 = vsel %vm530, %v479, 0.0
  %v943 = vadd.f32 %v941, %v942
  %v944 = vsel %vm530, %v480, 0.0
  %v945 = vadd.f32 %v943, %v944
  %v946 = vsel %vm530, %v481, 0.0
  %v947 = vadd.f32 %v945, %v946
  %v948 = vsel %vm530, %v482, 0.0
  %v949 = vadd.f32 %v947, %v948
  %v950 = vsel %vm530, %v483, 0.0
  %v951 = vadd.f32 %v949, %v950
  %v952 = vsel %vm530, %v484, 0.0
  %v953 = vadd.f32 %v951, %v952
  %v954 = vsel %vm530, %v485, 0.0
  %v955 = vadd.f32 %v953, %v954
  %v956 = vsel %vm530, %v486, 0.0
  %v957 = vadd.f32 %v955, %v956
  %v958 = vsel %vm530, %v487, 0.0
  %v959 = vadd.f32 %v957, %v958
  %v960 = vsel %vm530, %v488, 0.0
  %v961 = vadd.f32 %v959, %v960
  %v962 = vsel %vm530, %v489, 0.0
  %v963 = vadd.f32 %v961, %v962
  %v964 = vsel %vm530, %v490, 0.0
  %v965 = vadd.f32 %v963, %v964
  %v966 = vsel %vm530, %v491, 0.0
  %v967 = vadd.f32 %v965, %v966
  %v968 = vsel %vm530, %v492, 0.0
  %v969 = vadd.f32 %v967, %v968
  %v970 = vsel %vm530, %v493, 0.0
  %v971 = vadd.f32 %v969, %v970
  %v972 = vsel %vm530, %v494, 0.0
  %v973 = vadd.f32 %v971, %v972
  %v974 = vsel %vm530, %v495, 0.0
  %v975 = vadd.f32 %v973, %v974
  %v976 = vsel %vm530, %v496, 0.0
  %v977 = vadd.f32 %v975, %v976
  %v978 = vsel %vm530, %v497, 0.0
  %v979 = vadd.f32 %v977, %v978
  %v980 = vsel %vm530, %v498, 0.0
  %v981 = vadd.f32 %v979, %v980
  %v982 = vsel %vm530, %v499, 0.0
  %v983 = vadd.f32 %v981, %v982
  %v984 = vsel %vm530, %v500, 0.0
  %v985 = vadd.f32 %v983, %v984
  %v986 = vsel %vm530, %v501, 0.0
  %v987 = vadd.f32 %v985, %v986
  %v988 = vsel %vm530, %v502, 0.0
  %v989 = vadd.f32 %v987, %v988
  %v990 = vsel %vm530, %v503, 0.0
  %v991 = vadd.f32 %v989, %v990
  %v992 = vsel %vm530, %v504, 0.0
  %v993 = vadd.f32 %v991, %v992
  %v994 = vsel %vm530, %v505, 0.0
  %v995 = vadd.f32 %v993, %v994
  %v996 = vsel %vm530, %v506, 0.0
  %v997 = vadd.f32 %v995, %v996
  %v998 = vsel %vm530, %v507, 0.0
  %v999 = vadd.f32 %v997, %v998
  %v1000 = vsel %vm530, %v508, 0.0
  %v1001 = vadd.f32 %v999, %v1000
  %v1002 = vsel %vm530, %v509, 0.0
  %v1003 = vadd.f32 %v1001, %v1002
  %v1004 = vsel %vm530, %v510, 0.0
  %v1005 = vadd.f32 %v1003, %v1004
  %v1006 = vsel %vm530, %v511, 0.0
  %v1007 = vadd.f32 %v1005, %v1006
  %v1008 = vsel %vm530, %v512, 0.0
  %v1009 = vadd.f32 %v1007, %v1008
  %v1010 = vsel %vm530, %v513, 0.0
  %v1011 = vadd.f32 %v1009, %v1010
  %v1012 = vsel %vm530, %v514, 0.0
  %v1013 = vadd.f32 %v1011, %v1012
  %v1014 = vsel %vm530, %v515, 0.0
  %v1015 = vadd.f32 %v1013, %v1014
  %v1016 = vsel %vm530, %v516, 0.0
  %v1017 = vadd.f32 %v1015, %v1016
  %v1018 = vsel %vm530, %v517, 0.0
  %v1019 = vadd.f32 %v1017, %v1018
  %v1020 = vsel %vm530, %v518, 0.0
  %v1021 = vadd.f32 %v1019, %v1020
  %v1022 = vsel %vm530, %v519, 0.0
  %v1023 = vadd.f32 %v1021, %v1022
  %v1024 = vsel %vm530, %v520, 0.0
  %v1025 = vadd.f32 %v1023, %v1024
  %v1026 = vsel %vm530, %v521, 0.0
  %v1027 = vadd.f32 %v1025, %v1026
  %v1028 = vsel %vm530, %v522, 0.0
  %v1029 = vadd.f32 %v1027, %v1028
  %v1030 = vsel %vm530, %v523, 0.0
  %v1031 = vadd.f32 %v1029, %v1030
  %v1032 = vsel %vm530, %v524, 0.0
  %v1033 = vadd.f32 %v1031, %v1032
  %v1034 = vsel %vm530, %v525, 0.0
  %v1035 = vadd.f32 %v1033, %v1034
  %v1036 = vsel %vm530, %v526, 0.0
  %v1037 = vadd.f32 %v1035, %v1036
  %v1038 = vsel %vm530, %v527, 0.0
  %v1039 = vadd.f32 %v1037, %v1038
  %v1040 = vsel %vm530, %v528, 0.0
  %v1041 = vadd.f32 %v1039, %v1040
  %v1042 = vrot.slane %v1041, 4
  %v1043 = vadd.f32 %v1041, %v1042
  %v1044 = vrot.slane %v1043, 2
  %v1045 = vadd.f32 %v1043, %v1044
  %v1046 = vrot.slane %v1045, 1
  %v1047 = vadd.f32 %v1045, %v1046
  %v1048 = vadd.f32 %v529, %v1047
  %vm1049 = vcmask 57344
  %1050 = vst.msk [vmem:[#allocation2] sm:$0x1] %vm1049, %v1048
  %v1051 = vld [vmem:[#allocation3] sm:$0x1]
  %v1052 = vmul.f32 %v273, %v273
  %v1053 = vmul.f32 %v274, %v274
  %v1054 = vmul.f32 %v275, %v275
  %v1055 = vmul.f32 %v276, %v276
  %v1056 = vmul.f32 %v277, %v277
  %v1057 = vmul.f32 %v278, %v278
  %v1058 = vmul.f32 %v279, %v279
  %v1059 = vmul.f32 %v280, %v280
  %v1060 = vmul.f32 %v281, %v281
  %v1061 = vmul.f32 %v282, %v282
  %v1062 = vmul.f32 %v283, %v283
  %v1063 = vmul.f32 %v284, %v284
  %v1064 = vmul.f32 %v285, %v285
  %v1065 = vmul.f32 %v286, %v286
  %v1066 = vmul.f32 %v287, %v287
  %v1067 = vmul.f32 %v288, %v288
  %v1068 = vmul.f32 %v289, %v289
  %v1069 = vmul.f32 %v290, %v290
  %v1070 = vmul.f32 %v291, %v291
  %v1071 = vmul.f32 %v292, %v292
  %v1072 = vmul.f32 %v293, %v293
  %v1073 = vmul.f32 %v294, %v294
  %v1074 = vmul.f32 %v295, %v295
  %v1075 = vmul.f32 %v296, %v296
  %v1076 = vmul.f32 %v297, %v297
  %v1077 = vmul.f32 %v298, %v298
  %v1078 = vmul.f32 %v299, %v299
  %v1079 = vmul.f32 %v300, %v300
  %v1080 = vmul.f32 %v301, %v301
  %v1081 = vmul.f32 %v302, %v302
  %v1082 = vmul.f32 %v303, %v303
  %v1083 = vmul.f32 %v304, %v304
  %v1084 = vmul.f32 %v305, %v305
  %v1085 = vmul.f32 %v306, %v306
  %v1086 = vmul.f32 %v307, %v307
  %v1087 = vmul.f32 %v308, %v308
  %v1088 = vmul.f32 %v309, %v309
  %v1089 = vmul.f32 %v310, %v310
  %v1090 = vmul.f32 %v311, %v311
  %v1091 = vmul.f32 %v312, %v312
  %v1092 = vmul.f32 %v313, %v313
  %v1093 = vmul.f32 %v314, %v314
  %v1094 = vmul.f32 %v315, %v315
  %v1095 = vmul.f32 %v316, %v316
  %v1096 = vmul.f32 %v317, %v317
  %v1097 = vmul.f32 %v318, %v318
  %v1098 = vmul.f32 %v319, %v319
  %v1099 = vmul.f32 %v320, %v320
  %v1100 = vmul.f32 %v321, %v321
  %v1101 = vmul.f32 %v322, %v322
  %v1102 = vmul.f32 %v323, %v323
  %v1103 = vmul.f32 %v324, %v324
  %v1104 = vmul.f32 %v325, %v325
  %v1105 = vmul.f32 %v326, %v326
  %v1106 = vmul.f32 %v327, %v327
  %v1107 = vmul.f32 %v328, %v328
  %v1108 = vmul.f32 %v329, %v329
  %v1109 = vmul.f32 %v330, %v330
  %v1110 = vmul.f32 %v331, %v331
  %v1111 = vmul.f32 %v332, %v332
  %v1112 = vmul.f32 %v333, %v333
  %v1113 = vmul.f32 %v334, %v334
  %v1114 = vmul.f32 %v335, %v335
  %v1115 = vmul.f32 %v336, %v336
  %v1116 = vmul.f32 %v337, %v337
  %v1117 = vmul.f32 %v338, %v338
  %v1118 = vmul.f32 %v339, %v339
  %v1119 = vmul.f32 %v340, %v340
  %v1120 = vmul.f32 %v341, %v341
  %v1121 = vmul.f32 %v342, %v342
  %v1122 = vmul.f32 %v343, %v343
  %v1123 = vmul.f32 %v344, %v344
  %v1124 = vmul.f32 %v345, %v345
  %v1125 = vmul.f32 %v346, %v346
  %v1126 = vmul.f32 %v347, %v347
  %v1127 = vmul.f32 %v348, %v348
  %v1128 = vmul.f32 %v349, %v349
  %v1129 = vmul.f32 %v350, %v350
  %v1130 = vmul.f32 %v351, %v351
  %v1131 = vmul.f32 %v352, %v352
  %v1132 = vmul.f32 %v353, %v353
  %v1133 = vmul.f32 %v354, %v354
  %v1134 = vmul.f32 %v355, %v355
  %v1135 = vmul.f32 %v356, %v356
  %v1136 = vmul.f32 %v357, %v357
  %v1137 = vmul.f32 %v358, %v358
  %v1138 = vmul.f32 %v359, %v359
  %v1139 = vmul.f32 %v360, %v360
  %v1140 = vmul.f32 %v361, %v361
  %v1141 = vmul.f32 %v362, %v362
  %v1142 = vmul.f32 %v363, %v363
  %v1143 = vmul.f32 %v364, %v364
  %v1144 = vmul.f32 %v365, %v365
  %v1145 = vmul.f32 %v366, %v366
  %v1146 = vmul.f32 %v367, %v367
  %v1147 = vmul.f32 %v368, %v368
  %v1148 = vmul.f32 %v369, %v369
  %v1149 = vmul.f32 %v370, %v370
  %v1150 = vmul.f32 %v371, %v371
  %v1151 = vmul.f32 %v372, %v372
  %v1152 = vmul.f32 %v373, %v373
  %v1153 = vmul.f32 %v374, %v374
  %v1154 = vmul.f32 %v375, %v375
  %v1155 = vmul.f32 %v376, %v376
  %v1156 = vmul.f32 %v377, %v377
  %v1157 = vmul.f32 %v378, %v378
  %v1158 = vmul.f32 %v379, %v379
  %v1159 = vmul.f32 %v380, %v380
  %v1160 = vmul.f32 %v381, %v381
  %v1161 = vmul.f32 %v382, %v382
  %v1162 = vmul.f32 %v383, %v383
  %v1163 = vmul.f32 %v384, %v384
  %v1164 = vmul.f32 %v385, %v385
  %v1165 = vmul.f32 %v386, %v386
  %v1166 = vmul.f32 %v387, %v387
  %v1167 = vmul.f32 %v388, %v388
  %v1168 = vmul.f32 %v389, %v389
  %v1169 = vmul.f32 %v390, %v390
  %v1170 = vmul.f32 %v391, %v391
  %v1171 = vmul.f32 %v392, %v392
  %v1172 = vmul.f32 %v393, %v393
  %v1173 = vmul.f32 %v394, %v394
  %v1174 = vmul.f32 %v395, %v395
  %v1175 = vmul.f32 %v396, %v396
  %v1176 = vmul.f32 %v397, %v397
  %v1177 = vmul.f32 %v398, %v398
  %v1178 = vmul.f32 %v399, %v399
  %v1179 = vmul.f32 %v400, %v400
  %v1180 = vmul.f32 %v401, %v401
  %v1181 = vmul.f32 %v402, %v402
  %v1182 = vmul.f32 %v403, %v403
  %v1183 = vmul.f32 %v404, %v404
  %v1184 = vmul.f32 %v405, %v405
  %v1185 = vmul.f32 %v406, %v406
  %v1186 = vmul.f32 %v407, %v407
  %v1187 = vmul.f32 %v408, %v408
  %v1188 = vmul.f32 %v409, %v409
  %v1189 = vmul.f32 %v410, %v410
  %v1190 = vmul.f32 %v411, %v411
  %v1191 = vmul.f32 %v412, %v412
  %v1192 = vmul.f32 %v413, %v413
  %v1193 = vmul.f32 %v414, %v414
  %v1194 = vmul.f32 %v415, %v415
  %v1195 = vmul.f32 %v416, %v416
  %v1196 = vmul.f32 %v417, %v417
  %v1197 = vmul.f32 %v418, %v418
  %v1198 = vmul.f32 %v419, %v419
  %v1199 = vmul.f32 %v420, %v420
  %v1200 = vmul.f32 %v421, %v421
  %v1201 = vmul.f32 %v422, %v422
  %v1202 = vmul.f32 %v423, %v423
  %v1203 = vmul.f32 %v424, %v424
  %v1204 = vmul.f32 %v425, %v425
  %v1205 = vmul.f32 %v426, %v426
  %v1206 = vmul.f32 %v427, %v427
  %v1207 = vmul.f32 %v428, %v428
  %v1208 = vmul.f32 %v429, %v429
  %v1209 = vmul.f32 %v430, %v430
  %v1210 = vmul.f32 %v431, %v431
  %v1211 = vmul.f32 %v432, %v432
  %v1212 = vmul.f32 %v433, %v433
  %v1213 = vmul.f32 %v434, %v434
  %v1214 = vmul.f32 %v435, %v435
  %v1215 = vmul.f32 %v436, %v436
  %v1216 = vmul.f32 %v437, %v437
  %v1217 = vmul.f32 %v438, %v438
  %v1218 = vmul.f32 %v439, %v439
  %v1219 = vmul.f32 %v440, %v440
  %v1220 = vmul.f32 %v441, %v441
  %v1221 = vmul.f32 %v442, %v442
  %v1222 = vmul.f32 %v443, %v443
  %v1223 = vmul.f32 %v444, %v444
  %v1224 = vmul.f32 %v445, %v445
  %v1225 = vmul.f32 %v446, %v446
  %v1226 = vmul.f32 %v447, %v447
  %v1227 = vmul.f32 %v448, %v448
  %v1228 = vmul.f32 %v449, %v449
  %v1229 = vmul.f32 %v450, %v450
  %v1230 = vmul.f32 %v451, %v451
  %v1231 = vmul.f32 %v452, %v452
  %v1232 = vmul.f32 %v453, %v453
  %v1233 = vmul.f32 %v454, %v454
  %v1234 = vmul.f32 %v455, %v455
  %v1235 = vmul.f32 %v456, %v456
  %v1236 = vmul.f32 %v457, %v457
  %v1237 = vmul.f32 %v458, %v458
  %v1238 = vmul.f32 %v459, %v459
  %v1239 = vmul.f32 %v460, %v460
  %v1240 = vmul.f32 %v461, %v461
  %v1241 = vmul.f32 %v462, %v462
  %v1242 = vmul.f32 %v463, %v463
  %v1243 = vmul.f32 %v464, %v464
  %v1244 = vmul.f32 %v465, %v465
  %v1245 = vmul.f32 %v466, %v466
  %v1246 = vmul.f32 %v467, %v467
  %v1247 = vmul.f32 %v468, %v468
  %v1248 = vmul.f32 %v469, %v469
  %v1249 = vmul.f32 %v470, %v470
  %v1250 = vmul.f32 %v471, %v471
  %v1251 = vmul.f32 %v472, %v472
  %v1252 = vmul.f32 %v473, %v473
  %v1253 = vmul.f32 %v474, %v474
  %v1254 = vmul.f32 %v475, %v475
  %v1255 = vmul.f32 %v476, %v476
  %v1256 = vmul.f32 %v477, %v477
  %v1257 = vmul.f32 %v478, %v478
  %v1258 = vmul.f32 %v479, %v479
  %v1259 = vmul.f32 %v480, %v480
  %v1260 = vmul.f32 %v481, %v481
  %v1261 = vmul.f32 %v482, %v482
  %v1262 = vmul.f32 %v483, %v483
  %v1263 = vmul.f32 %v484, %v484
  %v1264 = vmul.f32 %v485, %v485
  %v1265 = vmul.f32 %v486, %v486
  %v1266 = vmul.f32 %v487, %v487
  %v1267 = vmul.f32 %v488, %v488
  %v1268 = vmul.f32 %v489, %v489
  %v1269 = vmul.f32 %v490, %v490
  %v1270 = vmul.f32 %v491, %v491
  %v1271 = vmul.f32 %v492, %v492
  %v1272 = vmul.f32 %v493, %v493
  %v1273 = vmul.f32 %v494, %v494
  %v1274 = vmul.f32 %v495, %v495
  %v1275 = vmul.f32 %v496, %v496
  %v1276 = vmul.f32 %v497, %v497
  %v1277 = vmul.f32 %v498, %v498
  %v1278 = vmul.f32 %v499, %v499
  %v1279 = vmul.f32 %v500, %v500
  %v1280 = vmul.f32 %v501, %v501
  %v1281 = vmul.f32 %v502, %v502
  %v1282 = vmul.f32 %v503, %v503
  %v1283 = vmul.f32 %v504, %v504
  %v1284 = vmul.f32 %v505, %v505
  %v1285 = vmul.f32 %v506, %v506
  %v1286 = vmul.f32 %v507, %v507
  %v1287 = vmul.f32 %v508, %v508
  %v1288 = vmul.f32 %v509, %v509
  %v1289 = vmul.f32 %v510, %v510
  %v1290 = vmul.f32 %v511, %v511
  %v1291 = vmul.f32 %v512, %v512
  %v1292 = vmul.f32 %v513, %v513
  %v1293 = vmul.f32 %v514, %v514
  %v1294 = vmul.f32 %v515, %v515
  %v1295 = vmul.f32 %v516, %v516
  %v1296 = vmul.f32 %v517, %v517
  %v1297 = vmul.f32 %v518, %v518
  %v1298 = vmul.f32 %v519, %v519
  %v1299 = vmul.f32 %v520, %v520
  %v1300 = vmul.f32 %v521, %v521
  %v1301 = vmul.f32 %v522, %v522
  %v1302 = vmul.f32 %v523, %v523
  %v1303 = vmul.f32 %v524, %v524
  %v1304 = vmul.f32 %v525, %v525
  %v1305 = vmul.f32 %v526, %v526
  %v1306 = vmul.f32 %v527, %v527
  %v1307 = vmul.f32 %v528, %v528
  %v1308 = vsel %vm530, %v1052, 0.0
  %v1309 = vsel %vm530, %v1053, 0.0
  %v1310 = vadd.f32 %v1308, %v1309
  %v1311 = vsel %vm530, %v1054, 0.0
  %v1312 = vadd.f32 %v1310, %v1311
  %v1313 = vsel %vm530, %v1055, 0.0
  %v1314 = vadd.f32 %v1312, %v1313
  %v1315 = vsel %vm530, %v1056, 0.0
  %v1316 = vadd.f32 %v1314, %v1315
  %v1317 = vsel %vm530, %v1057, 0.0
  %v1318 = vadd.f32 %v1316, %v1317
  %v1319 = vsel %vm530, %v1058, 0.0
  %v1320 = vadd.f32 %v1318, %v1319
  %v1321 = vsel %vm530, %v1059, 0.0
  %v1322 = vadd.f32 %v1320, %v1321
  %v1323 = vsel %vm530, %v1060, 0.0
  %v1324 = vadd.f32 %v1322, %v1323
  %v1325 = vsel %vm530, %v1061, 0.0
  %v1326 = vadd.f32 %v1324, %v1325
  %v1327 = vsel %vm530, %v1062, 0.0
  %v1328 = vadd.f32 %v1326, %v1327
  %v1329 = vsel %vm530, %v1063, 0.0
  %v1330 = vadd.f32 %v1328, %v1329
  %v1331 = vsel %vm530, %v1064, 0.0
  %v1332 = vadd.f32 %v1330, %v1331
  %v1333 = vsel %vm530, %v1065, 0.0
  %v1334 = vadd.f32 %v1332, %v1333
  %v1335 = vsel %vm530, %v1066, 0.0
  %v1336 = vadd.f32 %v1334, %v1335
  %v1337 = vsel %vm530, %v1067, 0.0
  %v1338 = vadd.f32 %v1336, %v1337
  %v1339 = vsel %vm530, %v1068, 0.0
  %v1340 = vadd.f32 %v1338, %v1339
  %v1341 = vsel %vm530, %v1069, 0.0
  %v1342 = vadd.f32 %v1340, %v1341
  %v1343 = vsel %vm530, %v1070, 0.0
  %v1344 = vadd.f32 %v1342, %v1343
  %v1345 = vsel %vm530, %v1071, 0.0
  %v1346 = vadd.f32 %v1344, %v1345
  %v1347 = vsel %vm530, %v1072, 0.0
  %v1348 = vadd.f32 %v1346, %v1347
  %v1349 = vsel %vm530, %v1073, 0.0
  %v1350 = vadd.f32 %v1348, %v1349
  %v1351 = vsel %vm530, %v1074, 0.0
  %v1352 = vadd.f32 %v1350, %v1351
  %v1353 = vsel %vm530, %v1075, 0.0
  %v1354 = vadd.f32 %v1352, %v1353
  %v1355 = vsel %vm530, %v1076, 0.0
  %v1356 = vadd.f32 %v1354, %v1355
  %v1357 = vsel %vm530, %v1077, 0.0
  %v1358 = vadd.f32 %v1356, %v1357
  %v1359 = vsel %vm530, %v1078, 0.0
  %v1360 = vadd.f32 %v1358, %v1359
  %v1361 = vsel %vm530, %v1079, 0.0
  %v1362 = vadd.f32 %v1360, %v1361
  %v1363 = vsel %vm530, %v1080, 0.0
  %v1364 = vadd.f32 %v1362, %v1363
  %v1365 = vsel %vm530, %v1081, 0.0
  %v1366 = vadd.f32 %v1364, %v1365
  %v1367 = vsel %vm530, %v1082, 0.0
  %v1368 = vadd.f32 %v1366, %v1367
  %v1369 = vsel %vm530, %v1083, 0.0
  %v1370 = vadd.f32 %v1368, %v1369
  %v1371 = vsel %vm530, %v1084, 0.0
  %v1372 = vadd.f32 %v1370, %v1371
  %v1373 = vsel %vm530, %v1085, 0.0
  %v1374 = vadd.f32 %v1372, %v1373
  %v1375 = vsel %vm530, %v1086, 0.0
  %v1376 = vadd.f32 %v1374, %v1375
  %v1377 = vsel %vm530, %v1087, 0.0
  %v1378 = vadd.f32 %v1376, %v1377
  %v1379 = vsel %vm530, %v1088, 0.0
  %v1380 = vadd.f32 %v1378, %v1379
  %v1381 = vsel %vm530, %v1089, 0.0
  %v1382 = vadd.f32 %v1380, %v1381
  %v1383 = vsel %vm530, %v1090, 0.0
  %v1384 = vadd.f32 %v1382, %v1383
  %v1385 = vsel %vm530, %v1091, 0.0
  %v1386 = vadd.f32 %v1384, %v1385
  %v1387 = vsel %vm530, %v1092, 0.0
  %v1388 = vadd.f32 %v1386, %v1387
  %v1389 = vsel %vm530, %v1093, 0.0
  %v1390 = vadd.f32 %v1388, %v1389
  %v1391 = vsel %vm530, %v1094, 0.0
  %v1392 = vadd.f32 %v1390, %v1391
  %v1393 = vsel %vm530, %v1095, 0.0
  %v1394 = vadd.f32 %v1392, %v1393
  %v1395 = vsel %vm530, %v1096, 0.0
  %v1396 = vadd.f32 %v1394, %v1395
  %v1397 = vsel %vm530, %v1097, 0.0
  %v1398 = vadd.f32 %v1396, %v1397
  %v1399 = vsel %vm530, %v1098, 0.0
  %v1400 = vadd.f32 %v1398, %v1399
  %v1401 = vsel %vm530, %v1099, 0.0
  %v1402 = vadd.f32 %v1400, %v1401
  %v1403 = vsel %vm530, %v1100, 0.0
  %v1404 = vadd.f32 %v1402, %v1403
  %v1405 = vsel %vm530, %v1101, 0.0
  %v1406 = vadd.f32 %v1404, %v1405
  %v1407 = vsel %vm530, %v1102, 0.0
  %v1408 = vadd.f32 %v1406, %v1407
  %v1409 = vsel %vm530, %v1103, 0.0
  %v1410 = vadd.f32 %v1408, %v1409
  %v1411 = vsel %vm530, %v1104, 0.0
  %v1412 = vadd.f32 %v1410, %v1411
  %v1413 = vsel %vm530, %v1105, 0.0
  %v1414 = vadd.f32 %v1412, %v1413
  %v1415 = vsel %vm530, %v1106, 0.0
  %v1416 = vadd.f32 %v1414, %v1415
  %v1417 = vsel %vm530, %v1107, 0.0
  %v1418 = vadd.f32 %v1416, %v1417
  %v1419 = vsel %vm530, %v1108, 0.0
  %v1420 = vadd.f32 %v1418, %v1419
  %v1421 = vsel %vm530, %v1109, 0.0
  %v1422 = vadd.f32 %v1420, %v1421
  %v1423 = vsel %vm530, %v1110, 0.0
  %v1424 = vadd.f32 %v1422, %v1423
  %v1425 = vsel %vm530, %v1111, 0.0
  %v1426 = vadd.f32 %v1424, %v1425
  %v1427 = vsel %vm530, %v1112, 0.0
  %v1428 = vadd.f32 %v1426, %v1427
  %v1429 = vsel %vm530, %v1113, 0.0
  %v1430 = vadd.f32 %v1428, %v1429
  %v1431 = vsel %vm530, %v1114, 0.0
  %v1432 = vadd.f32 %v1430, %v1431
  %v1433 = vsel %vm530, %v1115, 0.0
  %v1434 = vadd.f32 %v1432, %v1433
  %v1435 = vsel %vm530, %v1116, 0.0
  %v1436 = vadd.f32 %v1434, %v1435
  %v1437 = vsel %vm530, %v1117, 0.0
  %v1438 = vadd.f32 %v1436, %v1437
  %v1439 = vsel %vm530, %v1118, 0.0
  %v1440 = vadd.f32 %v1438, %v1439
  %v1441 = vsel %vm530, %v1119, 0.0
  %v1442 = vadd.f32 %v1440, %v1441
  %v1443 = vsel %vm530, %v1120, 0.0
  %v1444 = vadd.f32 %v1442, %v1443
  %v1445 = vsel %vm530, %v1121, 0.0
  %v1446 = vadd.f32 %v1444, %v1445
  %v1447 = vsel %vm530, %v1122, 0.0
  %v1448 = vadd.f32 %v1446, %v1447
  %v1449 = vsel %vm530, %v1123, 0.0
  %v1450 = vadd.f32 %v1448, %v1449
  %v1451 = vsel %vm530, %v1124, 0.0
  %v1452 = vadd.f32 %v1450, %v1451
  %v1453 = vsel %vm530, %v1125, 0.0
  %v1454 = vadd.f32 %v1452, %v1453
  %v1455 = vsel %vm530, %v1126, 0.0
  %v1456 = vadd.f32 %v1454, %v1455
  %v1457 = vsel %vm530, %v1127, 0.0
  %v1458 = vadd.f32 %v1456, %v1457
  %v1459 = vsel %vm530, %v1128, 0.0
  %v1460 = vadd.f32 %v1458, %v1459
  %v1461 = vsel %vm530, %v1129, 0.0
  %v1462 = vadd.f32 %v1460, %v1461
  %v1463 = vsel %vm530, %v1130, 0.0
  %v1464 = vadd.f32 %v1462, %v1463
  %v1465 = vsel %vm530, %v1131, 0.0
  %v1466 = vadd.f32 %v1464, %v1465
  %v1467 = vsel %vm530, %v1132, 0.0
  %v1468 = vadd.f32 %v1466, %v1467
  %v1469 = vsel %vm530, %v1133, 0.0
  %v1470 = vadd.f32 %v1468, %v1469
  %v1471 = vsel %vm530, %v1134, 0.0
  %v1472 = vadd.f32 %v1470, %v1471
  %v1473 = vsel %vm530, %v1135, 0.0
  %v1474 = vadd.f32 %v1472, %v1473
  %v1475 = vsel %vm530, %v1136, 0.0
  %v1476 = vadd.f32 %v1474, %v1475
  %v1477 = vsel %vm530, %v1137, 0.0
  %v1478 = vadd.f32 %v1476, %v1477
  %v1479 = vsel %vm530, %v1138, 0.0
  %v1480 = vadd.f32 %v1478, %v1479
  %v1481 = vsel %vm530, %v1139, 0.0
  %v1482 = vadd.f32 %v1480, %v1481
  %v1483 = vsel %vm530, %v1140, 0.0
  %v1484 = vadd.f32 %v1482, %v1483
  %v1485 = vsel %vm530, %v1141, 0.0
  %v1486 = vadd.f32 %v1484, %v1485
  %v1487 = vsel %vm530, %v1142, 0.0
  %v1488 = vadd.f32 %v1486, %v1487
  %v1489 = vsel %vm530, %v1143, 0.0
  %v1490 = vadd.f32 %v1488, %v1489
  %v1491 = vsel %vm530, %v1144, 0.0
  %v1492 = vadd.f32 %v1490, %v1491
  %v1493 = vsel %vm530, %v1145, 0.0
  %v1494 = vadd.f32 %v1492, %v1493
  %v1495 = vsel %vm530, %v1146, 0.0
  %v1496 = vadd.f32 %v1494, %v1495
  %v1497 = vsel %vm530, %v1147, 0.0
  %v1498 = vadd.f32 %v1496, %v1497
  %v1499 = vsel %vm530, %v1148, 0.0
  %v1500 = vadd.f32 %v1498, %v1499
  %v1501 = vsel %vm530, %v1149, 0.0
  %v1502 = vadd.f32 %v1500, %v1501
  %v1503 = vsel %vm530, %v1150, 0.0
  %v1504 = vadd.f32 %v1502, %v1503
  %v1505 = vsel %vm530, %v1151, 0.0
  %v1506 = vadd.f32 %v1504, %v1505
  %v1507 = vsel %vm530, %v1152, 0.0
  %v1508 = vadd.f32 %v1506, %v1507
  %v1509 = vsel %vm530, %v1153, 0.0
  %v1510 = vadd.f32 %v1508, %v1509
  %v1511 = vsel %vm530, %v1154, 0.0
  %v1512 = vadd.f32 %v1510, %v1511
  %v1513 = vsel %vm530, %v1155, 0.0
  %v1514 = vadd.f32 %v1512, %v1513
  %v1515 = vsel %vm530, %v1156, 0.0
  %v1516 = vadd.f32 %v1514, %v1515
  %v1517 = vsel %vm530, %v1157, 0.0
  %v1518 = vadd.f32 %v1516, %v1517
  %v1519 = vsel %vm530, %v1158, 0.0
  %v1520 = vadd.f32 %v1518, %v1519
  %v1521 = vsel %vm530, %v1159, 0.0
  %v1522 = vadd.f32 %v1520, %v1521
  %v1523 = vsel %vm530, %v1160, 0.0
  %v1524 = vadd.f32 %v1522, %v1523
  %v1525 = vsel %vm530, %v1161, 0.0
  %v1526 = vadd.f32 %v1524, %v1525
  %v1527 = vsel %vm530, %v1162, 0.0
  %v1528 = vadd.f32 %v1526, %v1527
  %v1529 = vsel %vm530, %v1163, 0.0
  %v1530 = vadd.f32 %v1528, %v1529
  %v1531 = vsel %vm530, %v1164, 0.0
  %v1532 = vadd.f32 %v1530, %v1531
  %v1533 = vsel %vm530, %v1165, 0.0
  %v1534 = vadd.f32 %v1532, %v1533
  %v1535 = vsel %vm530, %v1166, 0.0
  %v1536 = vadd.f32 %v1534, %v1535
  %v1537 = vsel %vm530, %v1167, 0.0
  %v1538 = vadd.f32 %v1536, %v1537
  %v1539 = vsel %vm530, %v1168, 0.0
  %v1540 = vadd.f32 %v1538, %v1539
  %v1541 = vsel %vm530, %v1169, 0.0
  %v1542 = vadd.f32 %v1540, %v1541
  %v1543 = vsel %vm530, %v1170, 0.0
  %v1544 = vadd.f32 %v1542, %v1543
  %v1545 = vsel %vm530, %v1171, 0.0
  %v1546 = vadd.f32 %v1544, %v1545
  %v1547 = vsel %vm530, %v1172, 0.0
  %v1548 = vadd.f32 %v1546, %v1547
  %v1549 = vsel %vm530, %v1173, 0.0
  %v1550 = vadd.f32 %v1548, %v1549
  %v1551 = vsel %vm530, %v1174, 0.0
  %v1552 = vadd.f32 %v1550, %v1551
  %v1553 = vsel %vm530, %v1175, 0.0
  %v1554 = vadd.f32 %v1552, %v1553
  %v1555 = vsel %vm530, %v1176, 0.0
  %v1556 = vadd.f32 %v1554, %v1555
  %v1557 = vsel %vm530, %v1177, 0.0
  %v1558 = vadd.f32 %v1556, %v1557
  %v1559 = vsel %vm530, %v1178, 0.0
  %v1560 = vadd.f32 %v1558, %v1559
  %v1561 = vsel %vm530, %v1179, 0.0
  %v1562 = vadd.f32 %v1560, %v1561
  %v1563 = vsel %vm530, %v1180, 0.0
  %v1564 = vadd.f32 %v1562, %v1563
  %v1565 = vsel %vm530, %v1181, 0.0
  %v1566 = vadd.f32 %v1564, %v1565
  %v1567 = vsel %vm530, %v1182, 0.0
  %v1568 = vadd.f32 %v1566, %v1567
  %v1569 = vsel %vm530, %v1183, 0.0
  %v1570 = vadd.f32 %v1568, %v1569
  %v1571 = vsel %vm530, %v1184, 0.0
  %v1572 = vadd.f32 %v1570, %v1571
  %v1573 = vsel %vm530, %v1185, 0.0
  %v1574 = vadd.f32 %v1572, %v1573
  %v1575 = vsel %vm530, %v1186, 0.0
  %v1576 = vadd.f32 %v1574, %v1575
  %v1577 = vsel %vm530, %v1187, 0.0
  %v1578 = vadd.f32 %v1576, %v1577
  %v1579 = vsel %vm530, %v1188, 0.0
  %v1580 = vadd.f32 %v1578, %v1579
  %v1581 = vsel %vm530, %v1189, 0.0
  %v1582 = vadd.f32 %v1580, %v1581
  %v1583 = vsel %vm530, %v1190, 0.0
  %v1584 = vadd.f32 %v1582, %v1583
  %v1585 = vsel %vm530, %v1191, 0.0
  %v1586 = vadd.f32 %v1584, %v1585
  %v1587 = vsel %vm530, %v1192, 0.0
  %v1588 = vadd.f32 %v1586, %v1587
  %v1589 = vsel %vm530, %v1193, 0.0
  %v1590 = vadd.f32 %v1588, %v1589
  %v1591 = vsel %vm530, %v1194, 0.0
  %v1592 = vadd.f32 %v1590, %v1591
  %v1593 = vsel %vm530, %v1195, 0.0
  %v1594 = vadd.f32 %v1592, %v1593
  %v1595 = vsel %vm530, %v1196, 0.0
  %v1596 = vadd.f32 %v1594, %v1595
  %v1597 = vsel %vm530, %v1197, 0.0
  %v1598 = vadd.f32 %v1596, %v1597
  %v1599 = vsel %vm530, %v1198, 0.0
  %v1600 = vadd.f32 %v1598, %v1599
  %v1601 = vsel %vm530, %v1199, 0.0
  %v1602 = vadd.f32 %v1600, %v1601
  %v1603 = vsel %vm530, %v1200, 0.0
  %v1604 = vadd.f32 %v1602, %v1603
  %v1605 = vsel %vm530, %v1201, 0.0
  %v1606 = vadd.f32 %v1604, %v1605
  %v1607 = vsel %vm530, %v1202, 0.0
  %v1608 = vadd.f32 %v1606, %v1607
  %v1609 = vsel %vm530, %v1203, 0.0
  %v1610 = vadd.f32 %v1608, %v1609
  %v1611 = vsel %vm530, %v1204, 0.0
  %v1612 = vadd.f32 %v1610, %v1611
  %v1613 = vsel %vm530, %v1205, 0.0
  %v1614 = vadd.f32 %v1612, %v1613
  %v1615 = vsel %vm530, %v1206, 0.0
  %v1616 = vadd.f32 %v1614, %v1615
  %v1617 = vsel %vm530, %v1207, 0.0
  %v1618 = vadd.f32 %v1616, %v1617
  %v1619 = vsel %vm530, %v1208, 0.0
  %v1620 = vadd.f32 %v1618, %v1619
  %v1621 = vsel %vm530, %v1209, 0.0
  %v1622 = vadd.f32 %v1620, %v1621
  %v1623 = vsel %vm530, %v1210, 0.0
  %v1624 = vadd.f32 %v1622, %v1623
  %v1625 = vsel %vm530, %v1211, 0.0
  %v1626 = vadd.f32 %v1624, %v1625
  %v1627 = vsel %vm530, %v1212, 0.0
  %v1628 = vadd.f32 %v1626, %v1627
  %v1629 = vsel %vm530, %v1213, 0.0
  %v1630 = vadd.f32 %v1628, %v1629
  %v1631 = vsel %vm530, %v1214, 0.0
  %v1632 = vadd.f32 %v1630, %v1631
  %v1633 = vsel %vm530, %v1215, 0.0
  %v1634 = vadd.f32 %v1632, %v1633
  %v1635 = vsel %vm530, %v1216, 0.0
  %v1636 = vadd.f32 %v1634, %v1635
  %v1637 = vsel %vm530, %v1217, 0.0
  %v1638 = vadd.f32 %v1636, %v1637
  %v1639 = vsel %vm530, %v1218, 0.0
  %v1640 = vadd.f32 %v1638, %v1639
  %v1641 = vsel %vm530, %v1219, 0.0
  %v1642 = vadd.f32 %v1640, %v1641
  %v1643 = vsel %vm530, %v1220, 0.0
  %v1644 = vadd.f32 %v1642, %v1643
  %v1645 = vsel %vm530, %v1221, 0.0
  %v1646 = vadd.f32 %v1644, %v1645
  %v1647 = vsel %vm530, %v1222, 0.0
  %v1648 = vadd.f32 %v1646, %v1647
  %v1649 = vsel %vm530, %v1223, 0.0
  %v1650 = vadd.f32 %v1648, %v1649
  %v1651 = vsel %vm530, %v1224, 0.0
  %v1652 = vadd.f32 %v1650, %v1651
  %v1653 = vsel %vm530, %v1225, 0.0
  %v1654 = vadd.f32 %v1652, %v1653
  %v1655 = vsel %vm530, %v1226, 0.0
  %v1656 = vadd.f32 %v1654, %v1655
  %v1657 = vsel %vm530, %v1227, 0.0
  %v1658 = vadd.f32 %v1656, %v1657
  %v1659 = vsel %vm530, %v1228, 0.0
  %v1660 = vadd.f32 %v1658, %v1659
  %v1661 = vsel %vm530, %v1229, 0.0
  %v1662 = vadd.f32 %v1660, %v1661
  %v1663 = vsel %vm530, %v1230, 0.0
  %v1664 = vadd.f32 %v1662, %v1663
  %v1665 = vsel %vm530, %v1231, 0.0
  %v1666 = vadd.f32 %v1664, %v1665
  %v1667 = vsel %vm530, %v1232, 0.0
  %v1668 = vadd.f32 %v1666, %v1667
  %v1669 = vsel %vm530, %v1233, 0.0
  %v1670 = vadd.f32 %v1668, %v1669
  %v1671 = vsel %vm530, %v1234, 0.0
  %v1672 = vadd.f32 %v1670, %v1671
  %v1673 = vsel %vm530, %v1235, 0.0
  %v1674 = vadd.f32 %v1672, %v1673
  %v1675 = vsel %vm530, %v1236, 0.0
  %v1676 = vadd.f32 %v1674, %v1675
  %v1677 = vsel %vm530, %v1237, 0.0
  %v1678 = vadd.f32 %v1676, %v1677
  %v1679 = vsel %vm530, %v1238, 0.0
  %v1680 = vadd.f32 %v1678, %v1679
  %v1681 = vsel %vm530, %v1239, 0.0
  %v1682 = vadd.f32 %v1680, %v1681
  %v1683 = vsel %vm530, %v1240, 0.0
  %v1684 = vadd.f32 %v1682, %v1683
  %v1685 = vsel %vm530, %v1241, 0.0
  %v1686 = vadd.f32 %v1684, %v1685
  %v1687 = vsel %vm530, %v1242, 0.0
  %v1688 = vadd.f32 %v1686, %v1687
  %v1689 = vsel %vm530, %v1243, 0.0
  %v1690 = vadd.f32 %v1688, %v1689
  %v1691 = vsel %vm530, %v1244, 0.0
  %v1692 = vadd.f32 %v1690, %v1691
  %v1693 = vsel %vm530, %v1245, 0.0
  %v1694 = vadd.f32 %v1692, %v1693
  %v1695 = vsel %vm530, %v1246, 0.0
  %v1696 = vadd.f32 %v1694, %v1695
  %v1697 = vsel %vm530, %v1247, 0.0
  %v1698 = vadd.f32 %v1696, %v1697
  %v1699 = vsel %vm530, %v1248, 0.0
  %v1700 = vadd.f32 %v1698, %v1699
  %v1701 = vsel %vm530, %v1249, 0.0
  %v1702 = vadd.f32 %v1700, %v1701
  %v1703 = vsel %vm530, %v1250, 0.0
  %v1704 = vadd.f32 %v1702, %v1703
  %v1705 = vsel %vm530, %v1251, 0.0
  %v1706 = vadd.f32 %v1704, %v1705
  %v1707 = vsel %vm530, %v1252, 0.0
  %v1708 = vadd.f32 %v1706, %v1707
  %v1709 = vsel %vm530, %v1253, 0.0
  %v1710 = vadd.f32 %v1708, %v1709
  %v1711 = vsel %vm530, %v1254, 0.0
  %v1712 = vadd.f32 %v1710, %v1711
  %v1713 = vsel %vm530, %v1255, 0.0
  %v1714 = vadd.f32 %v1712, %v1713
  %v1715 = vsel %vm530, %v1256, 0.0
  %v1716 = vadd.f32 %v1714, %v1715
  %v1717 = vsel %vm530, %v1257, 0.0
  %v1718 = vadd.f32 %v1716, %v1717
  %v1719 = vsel %vm530, %v1258, 0.0
  %v1720 = vadd.f32 %v1718, %v1719
  %v1721 = vsel %vm530, %v1259, 0.0
  %v1722 = vadd.f32 %v1720, %v1721
  %v1723 = vsel %vm530, %v1260, 0.0
  %v1724 = vadd.f32 %v1722, %v1723
  %v1725 = vsel %vm530, %v1261, 0.0
  %v1726 = vadd.f32 %v1724, %v1725
  %v1727 = vsel %vm530, %v1262, 0.0
  %v1728 = vadd.f32 %v1726, %v1727
  %v1729 = vsel %vm530, %v1263, 0.0
  %v1730 = vadd.f32 %v1728, %v1729
  %v1731 = vsel %vm530, %v1264, 0.0
  %v1732 = vadd.f32 %v1730, %v1731
  %v1733 = vsel %vm530, %v1265, 0.0
  %v1734 = vadd.f32 %v1732, %v1733
  %v1735 = vsel %vm530, %v1266, 0.0
  %v1736 = vadd.f32 %v1734, %v1735
  %v1737 = vsel %vm530, %v1267, 0.0
  %v1738 = vadd.f32 %v1736, %v1737
  %v1739 = vsel %vm530, %v1268, 0.0
  %v1740 = vadd.f32 %v1738, %v1739
  %v1741 = vsel %vm530, %v1269, 0.0
  %v1742 = vadd.f32 %v1740, %v1741
  %v1743 = vsel %vm530, %v1270, 0.0
  %v1744 = vadd.f32 %v1742, %v1743
  %v1745 = vsel %vm530, %v1271, 0.0
  %v1746 = vadd.f32 %v1744, %v1745
  %v1747 = vsel %vm530, %v1272, 0.0
  %v1748 = vadd.f32 %v1746, %v1747
  %v1749 = vsel %vm530, %v1273, 0.0
  %v1750 = vadd.f32 %v1748, %v1749
  %v1751 = vsel %vm530, %v1274, 0.0
  %v1752 = vadd.f32 %v1750, %v1751
  %v1753 = vsel %vm530, %v1275, 0.0
  %v1754 = vadd.f32 %v1752, %v1753
  %v1755 = vsel %vm530, %v1276, 0.0
  %v1756 = vadd.f32 %v1754, %v1755
  %v1757 = vsel %vm530, %v1277, 0.0
  %v1758 = vadd.f32 %v1756, %v1757
  %v1759 = vsel %vm530, %v1278, 0.0
  %v1760 = vadd.f32 %v1758, %v1759
  %v1761 = vsel %vm530, %v1279, 0.0
  %v1762 = vadd.f32 %v1760, %v1761
  %v1763 = vsel %vm530, %v1280, 0.0
  %v1764 = vadd.f32 %v1762, %v1763
  %v1765 = vsel %vm530, %v1281, 0.0
  %v1766 = vadd.f32 %v1764, %v1765
  %v1767 = vsel %vm530, %v1282, 0.0
  %v1768 = vadd.f32 %v1766, %v1767
  %v1769 = vsel %vm530, %v1283, 0.0
  %v1770 = vadd.f32 %v1768, %v1769
  %v1771 = vsel %vm530, %v1284, 0.0
  %v1772 = vadd.f32 %v1770, %v1771
  %v1773 = vsel %vm530, %v1285, 0.0
  %v1774 = vadd.f32 %v1772, %v1773
  %v1775 = vsel %vm530, %v1286, 0.0
  %v1776 = vadd.f32 %v1774, %v1775
  %v1777 = vsel %vm530, %v1287, 0.0
  %v1778 = vadd.f32 %v1776, %v1777
  %v1779 = vsel %vm530, %v1288, 0.0
  %v1780 = vadd.f32 %v1778, %v1779
  %v1781 = vsel %vm530, %v1289, 0.0
  %v1782 = vadd.f32 %v1780, %v1781
  %v1783 = vsel %vm530, %v1290, 0.0
  %v1784 = vadd.f32 %v1782, %v1783
  %v1785 = vsel %vm530, %v1291, 0.0
  %v1786 = vadd.f32 %v1784, %v1785
  %v1787 = vsel %vm530, %v1292, 0.0
  %v1788 = vadd.f32 %v1786, %v1787
  %v1789 = vsel %vm530, %v1293, 0.0
  %v1790 = vadd.f32 %v1788, %v1789
  %v1791 = vsel %vm530, %v1294, 0.0
  %v1792 = vadd.f32 %v1790, %v1791
  %v1793 = vsel %vm530, %v1295, 0.0
  %v1794 = vadd.f32 %v1792, %v1793
  %v1795 = vsel %vm530, %v1296, 0.0
  %v1796 = vadd.f32 %v1794, %v1795
  %v1797 = vsel %vm530, %v1297, 0.0
  %v1798 = vadd.f32 %v1796, %v1797
  %v1799 = vsel %vm530, %v1298, 0.0
  %v1800 = vadd.f32 %v1798, %v1799
  %v1801 = vsel %vm530, %v1299, 0.0
  %v1802 = vadd.f32 %v1800, %v1801
  %v1803 = vsel %vm530, %v1300, 0.0
  %v1804 = vadd.f32 %v1802, %v1803
  %v1805 = vsel %vm530, %v1301, 0.0
  %v1806 = vadd.f32 %v1804, %v1805
  %v1807 = vsel %vm530, %v1302, 0.0
  %v1808 = vadd.f32 %v1806, %v1807
  %v1809 = vsel %vm530, %v1303, 0.0
  %v1810 = vadd.f32 %v1808, %v1809
  %v1811 = vsel %vm530, %v1304, 0.0
  %v1812 = vadd.f32 %v1810, %v1811
  %v1813 = vsel %vm530, %v1305, 0.0
  %v1814 = vadd.f32 %v1812, %v1813
  %v1815 = vsel %vm530, %v1306, 0.0
  %v1816 = vadd.f32 %v1814, %v1815
  %v1817 = vsel %vm530, %v1307, 0.0
  %v1818 = vadd.f32 %v1816, %v1817
  %v1819 = vrot.slane %v1818, 4
  %v1820 = vadd.f32 %v1818, %v1819
  %v1821 = vrot.slane %v1820, 2
  %v1822 = vadd.f32 %v1820, %v1821
  %v1823 = vrot.slane %v1822, 1
  %v1824 = vadd.f32 %v1822, %v1823
  %v1825 = vadd.f32 %v1051, %v1824
  %1826 = vst.msk [vmem:[#allocation3] sm:$0x1] %vm1049, %v1825
  // Predicated region
  $region10: #{netg_forward.23} parent=0 // pred_check
    %p1827 = pneg %p10
  $region11: #{netg_forward.23} parent=0 // pred_check_branch
    %1829 = sbr.rel (%p1827) target = $region13
  $region12: #{netg_forward.23} parent=0 // pred_region
    %v1830 = vld [vmem:[#allocation2] sm:$0x1]
    %v1831 = vmul.f32 %v1830, 0.00048828125
    %v1832 = vld [vmem:[#allocation3] sm:$0x1]
    %v1833 = vmul.f32 %v1832, 0.00048828125
    %v1834 = vmul.f32 %v1831, %v1831
    %v1835 = vsub.f32 %v1833, %v1834
    %v1836 = vmax.f32 %v1835, 0.0
    %1837 = vst.msk [vmem:[%s1] sm:$0x1] %vm1049, %v1831
    %v1838 = vadd.f32 %v1836, 1e-05
    %v1839 = vrsqrt.pop %v1838
    %1840 = vst.msk [vmem:[%s2] sm:$0x1] %vm1049, %v1839
  $region13: #{netg_forward.23} parent=0 // pred_fallthru
    _
  // Predicated region
  $region14: #{netg_forward.23} parent=0 // pred_check
    _
  $region15: #{netg_forward.23} parent=0 // pred_check_branch
    %1842 = sbr.rel (0) target = $region17
  $region16: #{netg_forward.23} parent=0 // pred_region
    _
  $region17: #{netg_forward.23} parent=0 // pred_fallthru
    _
  // Predicated region
  $region18: #{netg_forward.23} parent=0 // pred_check
    _
  $region19: #{netg_forward.23} parent=0 // pred_check_branch
    %1844 = sbr.rel (0) target = $region21
  $region20: #{netg_forward.23} parent=0 // pred_region
    _
  $region21: #{netg_forward.23} parent=0 // pred_fallthru
    _
  // Predicated region
  $region22: #{netg_forward.23} parent=0 // pred_check
    _
  $region23: #{netg_forward.23} parent=0 // pred_check_branch
    %1846 = sbr.rel (0) target = $region25
  $region24: #{netg_forward.23} parent=0 // pred_region
    _
  $region25: #{netg_forward.23} parent=0 // pred_fallthru
    _
  // Predicated region
  $region26: #{netg_forward.23} parent=0 // pred_check
    _
  $region27: #{netg_forward.23} parent=0 // pred_check_branch
    %1848 = sbr.rel (0) target = $region29
  $region28: #{netg_forward.23} parent=0 // pred_region
    _
  $region29: #{netg_forward.23} parent=0 // pred_fallthru
    _

// kernel: netg_forward.24
$region0: #{netg_forward.24}
  #allocation0 [shape = 'u32[]', space=smem, size = 0x4, offset = 0x4, fixed_abs, tag = 'smem constant byte address 0x4 - core index']
  #allocation1 [shape = 'u32[144,128]{1,0:T(1,128)}', space=vmem, size = 0x12000, scoped, tag = 'internal scratch']
  %s0 = inlined_call_operand.vmem [shape: bf16[2048,8], index: 0, kind: input, shape index: {}]
  %s1 = inlined_call_operand.vmem [shape: f32[1,8], index: 1, kind: input, shape index: {}]
  %s2 = inlined_call_operand.vmem [shape: f32[1,8], index: 2, kind: input, shape index: {}]
  %s3 = inlined_call_operand.vmem [shape: f32[1,8], index: 3, kind: input, shape index: {}]
  %s4 = inlined_call_operand.vmem [shape: f32[1,8], index: 4, kind: input, shape index: {}]
  %s5 = inlined_call_operand.vmem [shape: bf16[2048,8], index: 5, kind: output, shape index: {}]
  %s6 = sld [smem:[#allocation0]]
  $region30: #{netg_forward.24} parent=0
    _
  %s8 = ssub.s32 1, %s6
  %s9 = scalar_select 0, %s8, %s6
  // Predicated region
  $region2: #{netg_forward.24} parent=0 // pred_check
    _
  $region3: #{netg_forward.24} parent=0 // pred_check_branch
    %11 = sbr.rel (0) target = $region5
  $region4: #{netg_forward.24} parent=0 // pred_region
    _
  $region5: #{netg_forward.24} parent=0 // pred_fallthru
    _
  // Predicated region
  $region6: #{netg_forward.24} parent=0 // pred_check
    _
  $region7: #{netg_forward.24} parent=0 // pred_check_branch
    %13 = sbr.rel (0) target = $region9
  $region8: #{netg_forward.24} parent=0 // pred_region
    _
  $region9: #{netg_forward.24} parent=0 // pred_fallthru
    _
  // Predicated region
  $region10: #{netg_forward.24} parent=0 // pred_check
    _
  $region11: #{netg_forward.24} parent=0 // pred_check_branch
    %15 = sbr.rel (0) target = $region13
  $region12: #{netg_forward.24} parent=0 // pred_region
    _
  $region13: #{netg_forward.24} parent=0 // pred_fallthru
    _
  // Predicated region
  $region14: #{netg_forward.24} parent=0 // pred_check
    _
  $region15: #{netg_forward.24} parent=0 // pred_check_branch
    %17 = sbr.rel (0) target = $region17
  $region16: #{netg_forward.24} parent=0 // pred_region
    _
  $region17: #{netg_forward.24} parent=0 // pred_fallthru
    _
  // Predicated region
  $region18: #{netg_forward.24} parent=0 // pred_check
    _
  $region19: #{netg_forward.24} parent=0 // pred_check_branch
    %19 = sbr.rel (0) target = $region21
  $region20: #{netg_forward.24} parent=0 // pred_region
    _
  $region21: #{netg_forward.24} parent=0 // pred_fallthru
    _
  %v20 = vld [vmem:[%s0] sm:$0xf]
  %v21 = vld [vmem:[%s0 + $0x4] sm:$0xf]
  %v22 = vld [vmem:[%s0 + $0x8] sm:$0xf]
  %v23 = vld [vmem:[%s0 + $0xc] sm:$0xf]
  %v24 = vld [vmem:[%s0 + $0x10] sm:$0xf]
  %v25 = vld [vmem:[%s0 + $0x14] sm:$0xf]
  %v26 = vld [vmem:[%s0 + $0x18] sm:$0xf]
  %v27 = vld [vmem:[%s0 + $0x1c] sm:$0xf]
  %v28 = vld [vmem:[%s0 + $0x20] sm:$0xf]
  %v29 = vld [vmem:[%s0 + $0x24] sm:$0xf]
  %v30 = vld [vmem:[%s0 + $0x28] sm:$0xf]
  %v31 = vld [vmem:[%s0 + $0x2c] sm:$0xf]
  %v32 = vld [vmem:[%s0 + $0x30] sm:$0xf]
  %v33 = vld [vmem:[%s0 + $0x34] sm:$0xf]
  %v34 = vld [vmem:[%s0 + $0x38] sm:$0xf]
  %v35 = vld [vmem:[%s0 + $0x3c] sm:$0xf]
  %v36 = vld [vmem:[%s0 + $0x40] sm:$0xf]
  %v37 = vld [vmem:[%s0 + $0x44] sm:$0xf]
  %v38 = vld [vmem:[%s0 + $0x48] sm:$0xf]
  %v39 = vld [vmem:[%s0 + $0x4c] sm:$0xf]
  %v40 = vld [vmem:[%s0 + $0x50] sm:$0xf]
  %v41 = vld [vmem:[%s0 + $0x54] sm:$0xf]
  %v42 = vld [vmem:[%s0 + $0x58] sm:$0xf]
  %v43 = vld [vmem:[%s0 + $0x5c] sm:$0xf]
  %v44 = vld [vmem:[%s0 + $0x60] sm:$0xf]
  %v45 = vld [vmem:[%s0 + $0x64] sm:$0xf]
  %v46 = vld [vmem:[%s0 + $0x68] sm:$0xf]
  %v47 = vld [vmem:[%s0 + $0x6c] sm:$0xf]
  %v48 = vld [vmem:[%s0 + $0x70] sm:$0xf]
  %v49 = vld [vmem:[%s0 + $0x74] sm:$0xf]
  %v50 = vld [vmem:[%s0 + $0x78] sm:$0xf]
  %v51 = vld [vmem:[%s0 + $0x7c] sm:$0xf]
  %v52 = vld [vmem:[%s0 + $0x80] sm:$0xf]
  %v53 = vld [vmem:[%s0 + $0x84] sm:$0xf]
  %v54 = vld [vmem:[%s0 + $0x88] sm:$0xf]
  %v55 = vld [vmem:[%s0 + $0x8c] sm:$0xf]
  %v56 = vld [vmem:[%s0 + $0x90] sm:$0xf]
  %v57 = vld [vmem:[%s0 + $0x94] sm:$0xf]
  %v58 = vld [vmem:[%s0 + $0x98] sm:$0xf]
  %v59 = vld [vmem:[%s0 + $0x9c] sm:$0xf]
  %v60 = vld [vmem:[%s0 + $0xa0] sm:$0xf]
  %v61 = vld [vmem:[%s0 + $0xa4] sm:$0xf]
  %v62 = vld [vmem:[%s0 + $0xa8] sm:$0xf]
  %v63 = vld [vmem:[%s0 + $0xac] sm:$0xf]
  %v64 = vld [vmem:[%s0 + $0xb0] sm:$0xf]
  %v65 = vld [vmem:[%s0 + $0xb4] sm:$0xf]
  %v66 = vld [vmem:[%s0 + $0xb8] sm:$0xf]
  %v67 = vld [vmem:[%s0 + $0xbc] sm:$0xf]
  %v68 = vld [vmem:[%s0 + $0xc0] sm:$0xf]
  %v69 = vld [vmem:[%s0 + $0xc4] sm:$0xf]
  %v70 = vld [vmem:[%s0 + $0xc8] sm:$0xf]
  %v71 = vld [vmem:[%s0 + $0xcc] sm:$0xf]
  %v72 = vld [vmem:[%s0 + $0xd0] sm:$0xf]
  %v73 = vld [vmem:[%s0 + $0xd4] sm:$0xf]
  %v74 = vld [vmem:[%s0 + $0xd8] sm:$0xf]
  %v75 = vld [vmem:[%s0 + $0xdc] sm:$0xf]
  %v76 = vld [vmem:[%s0 + $0xe0] sm:$0xf]
  %v77 = vld [vmem:[%s0 + $0xe4] sm:$0xf]
  %v78 = vld [vmem:[%s0 + $0xe8] sm:$0xf]
  %v79 = vld [vmem:[%s0 + $0xec] sm:$0xf]
  %v80 = vld [vmem:[%s0 + $0xf0] sm:$0xf]
  %v81 = vld [vmem:[%s0 + $0xf4] sm:$0xf]
  %v82 = vld [vmem:[%s0 + $0xf8] sm:$0xf]
  %v83 = vld [vmem:[%s0 + $0xfc] sm:$0xf]
  %v84 = vld [vmem:[%s0 + $0x100] sm:$0xf]
  %v85 = vld [vmem:[%s0 + $0x104] sm:$0xf]
  %v86 = vld [vmem:[%s0 + $0x108] sm:$0xf]
  %v87 = vld [vmem:[%s0 + $0x10c] sm:$0xf]
  %v88 = vld [vmem:[%s0 + $0x110] sm:$0xf]
  %v89 = vld [vmem:[%s0 + $0x114] sm:$0xf]
  %v90 = vld [vmem:[%s0 + $0x118] sm:$0xf]
  %v91 = vld [vmem:[%s0 + $0x11c] sm:$0xf]
  %v92 = vld [vmem:[%s0 + $0x120] sm:$0xf]
  %v93 = vld [vmem:[%s0 + $0x124] sm:$0xf]
  %v94 = vld [vmem:[%s0 + $0x128] sm:$0xf]
  %v95 = vld [vmem:[%s0 + $0x12c] sm:$0xf]
  %v96 = vld [vmem:[%s0 + $0x130] sm:$0xf]
  %v97 = vld [vmem:[%s0 + $0x134] sm:$0xf]
  %v98 = vld [vmem:[%s0 + $0x138] sm:$0xf]
  %v99 = vld [vmem:[%s0 + $0x13c] sm:$0xf]
  %v100 = vld [vmem:[%s0 + $0x140] sm:$0xf]
  %v101 = vld [vmem:[%s0 + $0x144] sm:$0xf]
  %v102 = vld [vmem:[%s0 + $0x148] sm:$0xf]
  %v103 = vld [vmem:[%s0 + $0x14c] sm:$0xf]
  %v104 = vld [vmem:[%s0 + $0x150] sm:$0xf]
  %v105 = vld [vmem:[%s0 + $0x154] sm:$0xf]
  %v106 = vld [vmem:[%s0 + $0x158] sm:$0xf]
  %v107 = vld [vmem:[%s0 + $0x15c] sm:$0xf]
  %v108 = vld [vmem:[%s0 + $0x160] sm:$0xf]
  %v109 = vld [vmem:[%s0 + $0x164] sm:$0xf]
  %v110 = vld [vmem:[%s0 + $0x168] sm:$0xf]
  %v111 = vld [vmem:[%s0 + $0x16c] sm:$0xf]
  %v112 = vld [vmem:[%s0 + $0x170] sm:$0xf]
  %v113 = vld [vmem:[%s0 + $0x174] sm:$0xf]
  %v114 = vld [vmem:[%s0 + $0x178] sm:$0xf]
  %v115 = vld [vmem:[%s0 + $0x17c] sm:$0xf]
  %v116 = vld [vmem:[%s0 + $0x180] sm:$0xf]
  %v117 = vld [vmem:[%s0 + $0x184] sm:$0xf]
  %v118 = vld [vmem:[%s0 + $0x188] sm:$0xf]
  %v119 = vld [vmem:[%s0 + $0x18c] sm:$0xf]
  %v120 = vld [vmem:[%s0 + $0x190] sm:$0xf]
  %v121 = vld [vmem:[%s0 + $0x194] sm:$0xf]
  %v122 = vld [vmem:[%s0 + $0x198] sm:$0xf]
  %v123 = vld [vmem:[%s0 + $0x19c] sm:$0xf]
  %v124 = vld [vmem:[%s0 + $0x1a0] sm:$0xf]
  %v125 = vld [vmem:[%s0 + $0x1a4] sm:$0xf]
  %v126 = vld [vmem:[%s0 + $0x1a8] sm:$0xf]
  %v127 = vld [vmem:[%s0 + $0x1ac] sm:$0xf]
  %v128 = vld [vmem:[%s0 + $0x1b0] sm:$0xf]
  %v129 = vld [vmem:[%s0 + $0x1b4] sm:$0xf]
  %v130 = vld [vmem:[%s0 + $0x1b8] sm:$0xf]
  %v131 = vld [vmem:[%s0 + $0x1bc] sm:$0xf]
  %v132 = vld [vmem:[%s0 + $0x1c0] sm:$0xf]
  %v133 = vld [vmem:[%s0 + $0x1c4] sm:$0xf]
  %v134 = vld [vmem:[%s0 + $0x1c8] sm:$0xf]
  %v135 = vld [vmem:[%s0 + $0x1cc] sm:$0xf]
  %v136 = vld [vmem:[%s0 + $0x1d0] sm:$0xf]
  %v137 = vld [vmem:[%s0 + $0x1d4] sm:$0xf]
  %v138 = vld [vmem:[%s0 + $0x1d8] sm:$0xf]
  %v139 = vld [vmem:[%s0 + $0x1dc] sm:$0xf]
  %v140 = vld [vmem:[%s0 + $0x1e0] sm:$0xf]
  %v141 = vld [vmem:[%s0 + $0x1e4] sm:$0xf]
  %v142 = vld [vmem:[%s0 + $0x1e8] sm:$0xf]
  %v143 = vld [vmem:[%s0 + $0x1ec] sm:$0xf]
  %v144 = vld [vmem:[%s0 + $0x1f0] sm:$0xf]
  %v145 = vld [vmem:[%s0 + $0x1f4] sm:$0xf]
  %v146 = vld [vmem:[%s0 + $0x1f8] sm:$0xf]
  %v147 = vld [vmem:[%s0 + $0x1fc] sm:$0xf]
  %v148 = vld [vmem:[%s0 + $0x200] sm:$0xf]
  %v149 = vld [vmem:[%s0 + $0x204] sm:$0xf]
  %v150 = vld [vmem:[%s0 + $0x208] sm:$0xf]
  %v151 = vld [vmem:[%s0 + $0x20c] sm:$0xf]
  %v152 = vld [vmem:[%s0 + $0x210] sm:$0xf]
  %v153 = vld [vmem:[%s0 + $0x214] sm:$0xf]
  %v154 = vld [vmem:[%s0 + $0x218] sm:$0xf]
  %v155 = vld [vmem:[%s0 + $0x21c] sm:$0xf]
  %v156 = vld [vmem:[%s0 + $0x220] sm:$0xf]
  %v157 = vld [vmem:[%s0 + $0x224] sm:$0xf]
  %v158 = vld [vmem:[%s0 + $0x228] sm:$0xf]
  %v159 = vld [vmem:[%s0 + $0x22c] sm:$0xf]
  %v160 = vld [vmem:[%s0 + $0x230] sm:$0xf]
  %v161 = vld [vmem:[%s0 + $0x234] sm:$0xf]
  %v162 = vld [vmem:[%s0 + $0x238] sm:$0xf]
  %v163 = vld [vmem:[%s0 + $0x23c] sm:$0xf]
  %v164 = vld [vmem:[%s0 + $0x240] sm:$0xf]
  %v165 = vld [vmem:[%s0 + $0x244] sm:$0xf]
  %v166 = vld [vmem:[%s0 + $0x248] sm:$0xf]
  %v167 = vld [vmem:[%s0 + $0x24c] sm:$0xf]
  %v168 = vld [vmem:[%s0 + $0x250] sm:$0xf]
  %v169 = vld [vmem:[%s0 + $0x254] sm:$0xf]
  %v170 = vld [vmem:[%s0 + $0x258] sm:$0xf]
  %v171 = vld [vmem:[%s0 + $0x25c] sm:$0xf]
  %v172 = vld [vmem:[%s0 + $0x260] sm:$0xf]
  %v173 = vld [vmem:[%s0 + $0x264] sm:$0xf]
  %v174 = vld [vmem:[%s0 + $0x268] sm:$0xf]
  %v175 = vld [vmem:[%s0 + $0x26c] sm:$0xf]
  %v176 = vld [vmem:[%s0 + $0x270] sm:$0xf]
  %v177 = vld [vmem:[%s0 + $0x274] sm:$0xf]
  %v178 = vld [vmem:[%s0 + $0x278] sm:$0xf]
  %v179 = vld [vmem:[%s0 + $0x27c] sm:$0xf]
  %v180 = vld [vmem:[%s0 + $0x280] sm:$0xf]
  %v181 = vld [vmem:[%s0 + $0x284] sm:$0xf]
  %v182 = vld [vmem:[%s0 + $0x288] sm:$0xf]
  %v183 = vld [vmem:[%s0 + $0x28c] sm:$0xf]
  %v184 = vld [vmem:[%s0 + $0x290] sm:$0xf]
  %v185 = vld [vmem:[%s0 + $0x294] sm:$0xf]
  %v186 = vld [vmem:[%s0 + $0x298] sm:$0xf]
  %v187 = vld [vmem:[%s0 + $0x29c] sm:$0xf]
  %v188 = vld [vmem:[%s0 + $0x2a0] sm:$0xf]
  %v189 = vld [vmem:[%s0 + $0x2a4] sm:$0xf]
  %v190 = vld [vmem:[%s0 + $0x2a8] sm:$0xf]
  %v191 = vld [vmem:[%s0 + $0x2ac] sm:$0xf]
  %v192 = vld [vmem:[%s0 + $0x2b0] sm:$0xf]
  %v193 = vld [vmem:[%s0 + $0x2b4] sm:$0xf]
  %v194 = vld [vmem:[%s0 + $0x2b8] sm:$0xf]
  %v195 = vld [vmem:[%s0 + $0x2bc] sm:$0xf]
  %v196 = vld [vmem:[%s0 + $0x2c0] sm:$0xf]
  %v197 = vld [vmem:[%s0 + $0x2c4] sm:$0xf]
  %v198 = vld [vmem:[%s0 + $0x2c8] sm:$0xf]
  %v199 = vld [vmem:[%s0 + $0x2cc] sm:$0xf]
  %v200 = vld [vmem:[%s0 + $0x2d0] sm:$0xf]
  %v201 = vld [vmem:[%s0 + $0x2d4] sm:$0xf]
  %v202 = vld [vmem:[%s0 + $0x2d8] sm:$0xf]
  %v203 = vld [vmem:[%s0 + $0x2dc] sm:$0xf]
  %v204 = vld [vmem:[%s0 + $0x2e0] sm:$0xf]
  %v205 = vld [vmem:[%s0 + $0x2e4] sm:$0xf]
  %v206 = vld [vmem:[%s0 + $0x2e8] sm:$0xf]
  %v207 = vld [vmem:[%s0 + $0x2ec] sm:$0xf]
  %v208 = vld [vmem:[%s0 + $0x2f0] sm:$0xf]
  %v209 = vld [vmem:[%s0 + $0x2f4] sm:$0xf]
  %v210 = vld [vmem:[%s0 + $0x2f8] sm:$0xf]
  %v211 = vld [vmem:[%s0 + $0x2fc] sm:$0xf]
  %v212 = vld [vmem:[%s0 + $0x300] sm:$0xf]
  %v213 = vld [vmem:[%s0 + $0x304] sm:$0xf]
  %v214 = vld [vmem:[%s0 + $0x308] sm:$0xf]
  %v215 = vld [vmem:[%s0 + $0x30c] sm:$0xf]
  %v216 = vld [vmem:[%s0 + $0x310] sm:$0xf]
  %v217 = vld [vmem:[%s0 + $0x314] sm:$0xf]
  %v218 = vld [vmem:[%s0 + $0x318] sm:$0xf]
  %v219 = vld [vmem:[%s0 + $0x31c] sm:$0xf]
  %v220 = vld [vmem:[%s0 + $0x320] sm:$0xf]
  %v221 = vld [vmem:[%s0 + $0x324] sm:$0xf]
  %v222 = vld [vmem:[%s0 + $0x328] sm:$0xf]
  %v223 = vld [vmem:[%s0 + $0x32c] sm:$0xf]
  %v224 = vld [vmem:[%s0 + $0x330] sm:$0xf]
  %v225 = vld [vmem:[%s0 + $0x334] sm:$0xf]
  %v226 = vld [vmem:[%s0 + $0x338] sm:$0xf]
  %v227 = vld [vmem:[%s0 + $0x33c] sm:$0xf]
  %v228 = vld [vmem:[%s0 + $0x340] sm:$0xf]
  %v229 = vld [vmem:[%s0 + $0x344] sm:$0xf]
  %v230 = vld [vmem:[%s0 + $0x348] sm:$0xf]
  %v231 = vld [vmem:[%s0 + $0x34c] sm:$0xf]
  %v232 = vld [vmem:[%s0 + $0x350] sm:$0xf]
  %v233 = vld [vmem:[%s0 + $0x354] sm:$0xf]
  %v234 = vld [vmem:[%s0 + $0x358] sm:$0xf]
  %v235 = vld [vmem:[%s0 + $0x35c] sm:$0xf]
  %v236 = vld [vmem:[%s0 + $0x360] sm:$0xf]
  %v237 = vld [vmem:[%s0 + $0x364] sm:$0xf]
  %v238 = vld [vmem:[%s0 + $0x368] sm:$0xf]
  %v239 = vld [vmem:[%s0 + $0x36c] sm:$0xf]
  %v240 = vld [vmem:[%s0 + $0x370] sm:$0xf]
  %v241 = vld [vmem:[%s0 + $0x374] sm:$0xf]
  %v242 = vld [vmem:[%s0 + $0x378] sm:$0xf]
  %v243 = vld [vmem:[%s0 + $0x37c] sm:$0xf]
  %v244 = vld [vmem:[%s0 + $0x380] sm:$0xf]
  %v245 = vld [vmem:[%s0 + $0x384] sm:$0xf]
  %v246 = vld [vmem:[%s0 + $0x388] sm:$0xf]
  %v247 = vld [vmem:[%s0 + $0x38c] sm:$0xf]
  %v248 = vld [vmem:[%s0 + $0x390] sm:$0xf]
  %v249 = vld [vmem:[%s0 + $0x394] sm:$0xf]
  %v250 = vld [vmem:[%s0 + $0x398] sm:$0xf]
  %v251 = vld [vmem:[%s0 + $0x39c] sm:$0xf]
  %v252 = vld [vmem:[%s0 + $0x3a0] sm:$0xf]
  %v253 = vld [vmem:[%s0 + $0x3a4] sm:$0xf]
  %v254 = vld [vmem:[%s0 + $0x3a8] sm:$0xf]
  %v255 = vld [vmem:[%s0 + $0x3ac] sm:$0xf]
  %v256 = vld [vmem:[%s0 + $0x3b0] sm:$0xf]
  %v257 = vld [vmem:[%s0 + $0x3b4] sm:$0xf]
  %v258 = vld [vmem:[%s0 + $0x3b8] sm:$0xf]
  %v259 = vld [vmem:[%s0 + $0x3bc] sm:$0xf]
  %v260 = vld [vmem:[%s0 + $0x3c0] sm:$0xf]
  %v261 = vld [vmem:[%s0 + $0x3c4] sm:$0xf]
  %v262 = vld [vmem:[%s0 + $0x3c8] sm:$0xf]
  %v263 = vld [vmem:[%s0 + $0x3cc] sm:$0xf]
  %v264 = vld [vmem:[%s0 + $0x3d0] sm:$0xf]
  %v265 = vld [vmem:[%s0 + $0x3d4] sm:$0xf]
  %v266 = vld [vmem:[%s0 + $0x3d8] sm:$0xf]
  %v267 = vld [vmem:[%s0 + $0x3dc] sm:$0xf]
  %v268 = vld [vmem:[%s0 + $0x3e0] sm:$0xf]
  %v269 = vld [vmem:[%s0 + $0x3e4] sm:$0xf]
  %v270 = vld [vmem:[%s0 + $0x3e8] sm:$0xf]
  %v271 = vld [vmem:[%s0 + $0x3ec] sm:$0xf]
  %v272 = vld [vmem:[%s0 + $0x3f0] sm:$0xf]
  %v273 = vld [vmem:[%s0 + $0x3f4] sm:$0xf]
  %v274 = vld [vmem:[%s0 + $0x3f8] sm:$0xf]
  %v275 = vld [vmem:[%s0 + $0x3fc] sm:$0xf]
  %v276 = vunpack.c.l.bf16 %v20
  %v277 = vunpack.c.l.bf16 %v21
  %v278 = vunpack.c.l.bf16 %v22
  %v279 = vunpack.c.l.bf16 %v23
  %v280 = vunpack.c.l.bf16 %v24
  %v281 = vunpack.c.l.bf16 %v25
  %v282 = vunpack.c.l.bf16 %v26
  %v283 = vunpack.c.l.bf16 %v27
  %v284 = vunpack.c.l.bf16 %v28
  %v285 = vunpack.c.l.bf16 %v29
  %v286 = vunpack.c.l.bf16 %v30
  %v287 = vunpack.c.l.bf16 %v31
  %v288 = vunpack.c.l.bf16 %v32
  %v289 = vunpack.c.l.bf16 %v33
  %v290 = vunpack.c.l.bf16 %v34
  %v291 = vunpack.c.l.bf16 %v35
  %v292 = vunpack.c.l.bf16 %v36
  %v293 = vunpack.c.l.bf16 %v37
  %v294 = vunpack.c.l.bf16 %v38
  %v295 = vunpack.c.l.bf16 %v39
  %v296 = vunpack.c.l.bf16 %v40
  %v297 = vunpack.c.l.bf16 %v41
  %v298 = vunpack.c.l.bf16 %v42
  %v299 = vunpack.c.l.bf16 %v43
  %v300 = vunpack.c.l.bf16 %v44
  %v301 = vunpack.c.l.bf16 %v45
  %v302 = vunpack.c.l.bf16 %v46
  %v303 = vunpack.c.l.bf16 %v47
  %v304 = vunpack.c.l.bf16 %v48
  %v305 = vunpack.c.l.bf16 %v49
  %v306 = vunpack.c.l.bf16 %v50
  %v307 = vunpack.c.l.bf16 %v51
  %v308 = vunpack.c.l.bf16 %v52
  %v309 = vunpack.c.l.bf16 %v53
  %v310 = vunpack.c.l.bf16 %v54
  %v311 = vunpack.c.l.bf16 %v55
  %v312 = vunpack.c.l.bf16 %v56
  %v313 = vunpack.c.l.bf16 %v57
  %v314 = vunpack.c.l.bf16 %v58
  %v315 = vunpack.c.l.bf16 %v59
  %v316 = vunpack.c.l.bf16 %v60
  %v317 = vunpack.c.l.bf16 %v61
  %v318 = vunpack.c.l.bf16 %v62
  %v319 = vunpack.c.l.bf16 %v63
  %v320 = vunpack.c.l.bf16 %v64
  %v321 = vunpack.c.l.bf16 %v65
  %v322 = vunpack.c.l.bf16 %v66
  %v323 = vunpack.c.l.bf16 %v67
  %v324 = vunpack.c.l.bf16 %v68
  %v325 = vunpack.c.l.bf16 %v69
  %v326 = vunpack.c.l.bf16 %v70
  %v327 = vunpack.c.l.bf16 %v71
  %v328 = vunpack.c.l.bf16 %v72
  %v329 = vunpack.c.l.bf16 %v73
  %v330 = vunpack.c.l.bf16 %v74
  %v331 = vunpack.c.l.bf16 %v75
  %v332 = vunpack.c.l.bf16 %v76
  %v333 = vunpack.c.l.bf16 %v77
  %v334 = vunpack.c.l.bf16 %v78
  %v335 = vunpack.c.l.bf16 %v79
  %v336 = vunpack.c.l.bf16 %v80
  %v337 = vunpack.c.l.bf16 %v81
  %v338 = vunpack.c.l.bf16 %v82
  %v339 = vunpack.c.l.bf16 %v83
  %v340 = vunpack.c.l.bf16 %v84
  %v341 = vunpack.c.l.bf16 %v85
  %v342 = vunpack.c.l.bf16 %v86
  %v343 = vunpack.c.l.bf16 %v87
  %v344 = vunpack.c.l.bf16 %v88
  %v345 = vunpack.c.l.bf16 %v89
  %v346 = vunpack.c.l.bf16 %v90
  %v347 = vunpack.c.l.bf16 %v91
  %v348 = vunpack.c.l.bf16 %v92
  %v349 = vunpack.c.l.bf16 %v93
  %v350 = vunpack.c.l.bf16 %v94
  %v351 = vunpack.c.l.bf16 %v95
  %v352 = vunpack.c.l.bf16 %v96
  %v353 = vunpack.c.l.bf16 %v97
  %v354 = vunpack.c.l.bf16 %v98
  %v355 = vunpack.c.l.bf16 %v99
  %v356 = vunpack.c.l.bf16 %v100
  %v357 = vunpack.c.l.bf16 %v101
  %v358 = vunpack.c.l.bf16 %v102
  %v359 = vunpack.c.l.bf16 %v103
  %v360 = vunpack.c.l.bf16 %v104
  %v361 = vunpack.c.l.bf16 %v105
  %v362 = vunpack.c.l.bf16 %v106
  %v363 = vunpack.c.l.bf16 %v107
  %v364 = vunpack.c.l.bf16 %v108
  %v365 = vunpack.c.l.bf16 %v109
  %v366 = vunpack.c.l.bf16 %v110
  %v367 = vunpack.c.l.bf16 %v111
  %v368 = vunpack.c.l.bf16 %v112
  %v369 = vunpack.c.l.bf16 %v113
  %v370 = vunpack.c.l.bf16 %v114
  %v371 = vunpack.c.l.bf16 %v115
  %v372 = vunpack.c.l.bf16 %v116
  %v373 = vunpack.c.l.bf16 %v117
  %v374 = vunpack.c.l.bf16 %v118
  %v375 = vunpack.c.l.bf16 %v119
  %v376 = vunpack.c.l.bf16 %v120
  %v377 = vunpack.c.l.bf16 %v121
  %v378 = vunpack.c.l.bf16 %v122
  %v379 = vunpack.c.l.bf16 %v123
  %v380 = vunpack.c.l.bf16 %v124
  %v381 = vunpack.c.l.bf16 %v125
  %v382 = vunpack.c.l.bf16 %v126
  %v383 = vunpack.c.l.bf16 %v127
  %v384 = vunpack.c.l.bf16 %v128
  %v385 = vunpack.c.l.bf16 %v129
  %v386 = vunpack.c.l.bf16 %v130
  %v387 = vunpack.c.l.bf16 %v131
  %v388 = vunpack.c.l.bf16 %v132
  %v389 = vunpack.c.l.bf16 %v133
  %v390 = vunpack.c.l.bf16 %v134
  %v391 = vunpack.c.l.bf16 %v135
  %v392 = vunpack.c.l.bf16 %v136
  %v393 = vunpack.c.l.bf16 %v137
  %v394 = vunpack.c.l.bf16 %v138
  %v395 = vunpack.c.l.bf16 %v139
  %v396 = vunpack.c.l.bf16 %v140
  %v397 = vunpack.c.l.bf16 %v141
  %v398 = vunpack.c.l.bf16 %v142
  %v399 = vunpack.c.l.bf16 %v143
  %v400 = vunpack.c.l.bf16 %v144
  %v401 = vunpack.c.l.bf16 %v145
  %v402 = vunpack.c.l.bf16 %v146
  %v403 = vunpack.c.l.bf16 %v147
  %v404 = vunpack.c.l.bf16 %v148
  %v405 = vunpack.c.l.bf16 %v149
  %v406 = vunpack.c.l.bf16 %v150
  %v407 = vunpack.c.l.bf16 %v151
  %v408 = vunpack.c.l.bf16 %v152
  %v409 = vunpack.c.l.bf16 %v153
  %v410 = vunpack.c.l.bf16 %v154
  %v411 = vunpack.c.l.bf16 %v155
  %v412 = vunpack.c.l.bf16 %v156
  %v413 = vunpack.c.l.bf16 %v157
  %v414 = vunpack.c.l.bf16 %v158
  %v415 = vunpack.c.l.bf16 %v159
  %v416 = vunpack.c.l.bf16 %v160
  %v417 = vunpack.c.l.bf16 %v161
  %v418 = vunpack.c.l.bf16 %v162
  %v419 = vunpack.c.l.bf16 %v163
  %v420 = vunpack.c.l.bf16 %v164
  %v421 = vunpack.c.l.bf16 %v165
  %v422 = vunpack.c.l.bf16 %v166
  %v423 = vunpack.c.l.bf16 %v167
  %v424 = vunpack.c.l.bf16 %v168
  %v425 = vunpack.c.l.bf16 %v169
  %v426 = vunpack.c.l.bf16 %v170
  %v427 = vunpack.c.l.bf16 %v171
  %v428 = vunpack.c.l.bf16 %v172
  %v429 = vunpack.c.l.bf16 %v173
  %v430 = vunpack.c.l.bf16 %v174
  %v431 = vunpack.c.l.bf16 %v175
  %v432 = vunpack.c.l.bf16 %v176
  %v433 = vunpack.c.l.bf16 %v177
  %v434 = vunpack.c.l.bf16 %v178
  %v435 = vunpack.c.l.bf16 %v179
  %v436 = vunpack.c.l.bf16 %v180
  %v437 = vunpack.c.l.bf16 %v181
  %v438 = vunpack.c.l.bf16 %v182
  %v439 = vunpack.c.l.bf16 %v183
  %v440 = vunpack.c.l.bf16 %v184
  %v441 = vunpack.c.l.bf16 %v185
  %v442 = vunpack.c.l.bf16 %v186
  %v443 = vunpack.c.l.bf16 %v187
  %v444 = vunpack.c.l.bf16 %v188
  %v445 = vunpack.c.l.bf16 %v189
  %v446 = vunpack.c.l.bf16 %v190
  %v447 = vunpack.c.l.bf16 %v191
  %v448 = vunpack.c.l.bf16 %v192
  %v449 = vunpack.c.l.bf16 %v193
  %v450 = vunpack.c.l.bf16 %v194
  %v451 = vunpack.c.l.bf16 %v195
  %v452 = vunpack.c.l.bf16 %v196
  %v453 = vunpack.c.l.bf16 %v197
  %v454 = vunpack.c.l.bf16 %v198
  %v455 = vunpack.c.l.bf16 %v199
  %v456 = vunpack.c.l.bf16 %v200
  %v457 = vunpack.c.l.bf16 %v201
  %v458 = vunpack.c.l.bf16 %v202
  %v459 = vunpack.c.l.bf16 %v203
  %v460 = vunpack.c.l.bf16 %v204
  %v461 = vunpack.c.l.bf16 %v205
  %v462 = vunpack.c.l.bf16 %v206
  %v463 = vunpack.c.l.bf16 %v207
  %v464 = vunpack.c.l.bf16 %v208
  %v465 = vunpack.c.l.bf16 %v209
  %v466 = vunpack.c.l.bf16 %v210
  %v467 = vunpack.c.l.bf16 %v211
  %v468 = vunpack.c.l.bf16 %v212
  %v469 = vunpack.c.l.bf16 %v213
  %v470 = vunpack.c.l.bf16 %v214
  %v471 = vunpack.c.l.bf16 %v215
  %v472 = vunpack.c.l.bf16 %v216
  %v473 = vunpack.c.l.bf16 %v217
  %v474 = vunpack.c.l.bf16 %v218
  %v475 = vunpack.c.l.bf16 %v219
  %v476 = vunpack.c.l.bf16 %v220
  %v477 = vunpack.c.l.bf16 %v221
  %v478 = vunpack.c.l.bf16 %v222
  %v479 = vunpack.c.l.bf16 %v223
  %v480 = vunpack.c.l.bf16 %v224
  %v481 = vunpack.c.l.bf16 %v225
  %v482 = vunpack.c.l.bf16 %v226
  %v483 = vunpack.c.l.bf16 %v227
  %v484 = vunpack.c.l.bf16 %v228
  %v485 = vunpack.c.l.bf16 %v229
  %v486 = vunpack.c.l.bf16 %v230
  %v487 = vunpack.c.l.bf16 %v231
  %v488 = vunpack.c.l.bf16 %v232
  %v489 = vunpack.c.l.bf16 %v233
  %v490 = vunpack.c.l.bf16 %v234
  %v491 = vunpack.c.l.bf16 %v235
  %v492 = vunpack.c.l.bf16 %v236
  %v493 = vunpack.c.l.bf16 %v237
  %v494 = vunpack.c.l.bf16 %v238
  %v495 = vunpack.c.l.bf16 %v239
  %v496 = vunpack.c.l.bf16 %v240
  %v497 = vunpack.c.l.bf16 %v241
  %v498 = vunpack.c.l.bf16 %v242
  %v499 = vunpack.c.l.bf16 %v243
  %v500 = vunpack.c.l.bf16 %v244
  %v501 = vunpack.c.l.bf16 %v245
  %v502 = vunpack.c.l.bf16 %v246
  %v503 = vunpack.c.l.bf16 %v247
  %v504 = vunpack.c.l.bf16 %v248
  %v505 = vunpack.c.l.bf16 %v249
  %v506 = vunpack.c.l.bf16 %v250
  %v507 = vunpack.c.l.bf16 %v251
  %v508 = vunpack.c.l.bf16 %v252
  %v509 = vunpack.c.l.bf16 %v253
  %v510 = vunpack.c.l.bf16 %v254
  %v511 = vunpack.c.l.bf16 %v255
  %v512 = vunpack.c.l.bf16 %v256
  %v513 = vunpack.c.l.bf16 %v257
  %v514 = vunpack.c.l.bf16 %v258
  %v515 = vunpack.c.l.bf16 %v259
  %v516 = vunpack.c.l.bf16 %v260
  %v517 = vunpack.c.l.bf16 %v261
  %v518 = vunpack.c.l.bf16 %v262
  %v519 = vunpack.c.l.bf16 %v263
  %v520 = vunpack.c.l.bf16 %v264
  %v521 = vunpack.c.l.bf16 %v265
  %v522 = vunpack.c.l.bf16 %v266
  %v523 = vunpack.c.l.bf16 %v267
  %v524 = vunpack.c.l.bf16 %v268
  %v525 = vunpack.c.l.bf16 %v269
  %v526 = vunpack.c.l.bf16 %v270
  %v527 = vunpack.c.l.bf16 %v271
  %v528 = vunpack.c.l.bf16 %v272
  %v529 = vunpack.c.l.bf16 %v273
  %v530 = vunpack.c.l.bf16 %v274
  %v531 = vunpack.c.l.bf16 %v275
  %v532 = vld [vmem:[%s2] sm:$0x1]
  %v533 = vld [vmem:[%s3] sm:$0x1]
  %v534 = vmul.f32 %v532, %v533
  %v535 = vld [vmem:[%s1] sm:$0x1]
  %v537 = vlaneseq
  %v538 = vshrl.u32 %v537, 7
  %v539 = vsub.s32 0, %v538
  %v540 = vrot.slane %v535, %v539
  %v542 = vsub.f32 %v276, %v540
  %v543 = vsub.f32 %v277, %v540
  %v544 = vsub.f32 %v278, %v540
  %v545 = vsub.f32 %v279, %v540
  %v546 = vsub.f32 %v280, %v540
  %v547 = vsub.f32 %v281, %v540
  %v548 = vsub.f32 %v282, %v540
  %v549 = vsub.f32 %v283, %v540
  %v550 = vsub.f32 %v284, %v540
  %v551 = vsub.f32 %v285, %v540
  %v552 = vsub.f32 %v286, %v540
  %v553 = vsub.f32 %v287, %v540
  %v554 = vsub.f32 %v288, %v540
  %v555 = vsub.f32 %v289, %v540
  %v556 = vsub.f32 %v290, %v540
  %v557 = vsub.f32 %v291, %v540
  %v558 = vsub.f32 %v292, %v540
  %v559 = vsub.f32 %v293, %v540
  %v560 = vsub.f32 %v294, %v540
  %v561 = vsub.f32 %v295, %v540
  %v562 = vsub.f32 %v296, %v540
  %v563 = vsub.f32 %v297, %v540
  %v564 = vsub.f32 %v298, %v540
  %v565 = vsub.f32 %v299, %v540
  %v566 = vsub.f32 %v300, %v540
  %v567 = vsub.f32 %v301, %v540
  %v568 = vsub.f32 %v302, %v540
  %v569 = vsub.f32 %v303, %v540
  %v570 = vsub.f32 %v304, %v540
  %v571 = vsub.f32 %v305, %v540
  %v572 = vsub.f32 %v306, %v540
  %v573 = vsub.f32 %v307, %v540
  %v574 = vsub.f32 %v308, %v540
  %v575 = vsub.f32 %v309, %v540
  %v576 = vsub.f32 %v310, %v540
  %v577 = vsub.f32 %v311, %v540
  %v578 = vsub.f32 %v312, %v540
  %v579 = vsub.f32 %v313, %v540
  %v580 = vsub.f32 %v314, %v540
  %v581 = vsub.f32 %v315, %v540
  %v582 = vsub.f32 %v316, %v540
  %v583 = vsub.f32 %v317, %v540
  %v584 = vsub.f32 %v318, %v540
  %v585 = vsub.f32 %v319, %v540
  %v586 = vsub.f32 %v320, %v540
  %v587 = vsub.f32 %v321, %v540
  %v588 = vsub.f32 %v322, %v540
  %v589 = vsub.f32 %v323, %v540
  %v590 = vsub.f32 %v324, %v540
  %v591 = vsub.f32 %v325, %v540
  %v592 = vsub.f32 %v326, %v540
  %v593 = vsub.f32 %v327, %v540
  %v594 = vsub.f32 %v328, %v540
  %v595 = vsub.f32 %v329, %v540
  %v596 = vsub.f32 %v330, %v540
  %v597 = vsub.f32 %v331, %v540
  %v598 = vsub.f32 %v332, %v540
  %v599 = vsub.f32 %v333, %v540
  %v600 = vsub.f32 %v334, %v540
  %v601 = vsub.f32 %v335, %v540
  %v602 = vsub.f32 %v336, %v540
  %v603 = vsub.f32 %v337, %v540
  %v604 = vsub.f32 %v338, %v540
  %v605 = vsub.f32 %v339, %v540
  %v606 = vsub.f32 %v340, %v540
  %v607 = vsub.f32 %v341, %v540
  %v608 = vsub.f32 %v342, %v540
  %v609 = vsub.f32 %v343, %v540
  %v610 = vsub.f32 %v344, %v540
  %v611 = vsub.f32 %v345, %v540
  %v612 = vsub.f32 %v346, %v540
  %v613 = vsub.f32 %v347, %v540
  %v614 = vsub.f32 %v348, %v540
  %v615 = vsub.f32 %v349, %v540
  %v616 = vsub.f32 %v350, %v540
  %v617 = vsub.f32 %v351, %v540
  %v618 = vsub.f32 %v352, %v540
  %v619 = vsub.f32 %v353, %v540
  %v620 = vsub.f32 %v354, %v540
  %v621 = vsub.f32 %v355, %v540
  %v622 = vsub.f32 %v356, %v540
  %v623 = vsub.f32 %v357, %v540
  %v624 = vsub.f32 %v358, %v540
  %v625 = vsub.f32 %v359, %v540
  %v626 = vsub.f32 %v360, %v540
  %v627 = vsub.f32 %v361, %v540
  %v628 = vsub.f32 %v362, %v540
  %v629 = vsub.f32 %v363, %v540
  %v630 = vsub.f32 %v364, %v540
  %v631 = vsub.f32 %v365, %v540
  %v632 = vsub.f32 %v366, %v540
  %v633 = vsub.f32 %v367, %v540
  %v634 = vsub.f32 %v368, %v540
  %v635 = vsub.f32 %v369, %v540
  %v636 = vsub.f32 %v370, %v540
  %v637 = vsub.f32 %v371, %v540
  %v638 = vsub.f32 %v372, %v540
  %v639 = vsub.f32 %v373, %v540
  %v640 = vsub.f32 %v374, %v540
  %v641 = vsub.f32 %v375, %v540
  %v642 = vsub.f32 %v376, %v540
  %v643 = vsub.f32 %v377, %v540
  %v644 = vsub.f32 %v378, %v540
  %v645 = vsub.f32 %v379, %v540
  %v646 = vsub.f32 %v380, %v540
  %v647 = vsub.f32 %v381, %v540
  %v648 = vsub.f32 %v382, %v540
  %v649 = vsub.f32 %v383, %v540
  %v650 = vsub.f32 %v384, %v540
  %v651 = vsub.f32 %v385, %v540
  %v652 = vsub.f32 %v386, %v540
  %v653 = vsub.f32 %v387, %v540
  %v654 = vsub.f32 %v388, %v540
  %v655 = vsub.f32 %v389, %v540
  %v656 = vsub.f32 %v390, %v540
  %v657 = vsub.f32 %v391, %v540
  %v658 = vsub.f32 %v392, %v540
  %v659 = vsub.f32 %v393, %v540
  %v660 = vsub.f32 %v394, %v540
  %v661 = vsub.f32 %v395, %v540
  %v662 = vsub.f32 %v396, %v540
  %v663 = vsub.f32 %v397, %v540
  %v664 = vsub.f32 %v398, %v540
  %v665 = vsub.f32 %v399, %v540
  %v666 = vsub.f32 %v400, %v540
  %v667 = vsub.f32 %v401, %v540
  %v668 = vsub.f32 %v402, %v540
  %v669 = vsub.f32 %v403, %v540
  %v670 = vsub.f32 %v404, %v540
  %v671 = vsub.f32 %v405, %v540
  %v672 = vsub.f32 %v406, %v540
  %v673 = vsub.f32 %v407, %v540
  %v674 = vsub.f32 %v408, %v540
  %v675 = vsub.f32 %v409, %v540
  %v676 = vsub.f32 %v410, %v540
  %v677 = vsub.f32 %v411, %v540
  %v678 = vsub.f32 %v412, %v540
  %v679 = vsub.f32 %v413, %v540
  %v680 = vsub.f32 %v414, %v540
  %v681 = vsub.f32 %v415, %v540
  %v682 = vsub.f32 %v416, %v540
  %v683 = vsub.f32 %v417, %v540
  %v684 = vsub.f32 %v418, %v540
  %v685 = vsub.f32 %v419, %v540
  %v686 = vsub.f32 %v420, %v540
  %v687 = vsub.f32 %v421, %v540
  %v688 = vsub.f32 %v422, %v540
  %v689 = vsub.f32 %v423, %v540
  %v690 = vsub.f32 %v424, %v540
  %v691 = vsub.f32 %v425, %v540
  %v692 = vsub.f32 %v426, %v540
  %v693 = vsub.f32 %v427, %v540
  %v694 = vsub.f32 %v428, %v540
  %v695 = vsub.f32 %v429, %v540
  %v696 = vsub.f32 %v430, %v540
  %v697 = vsub.f32 %v431, %v540
  %v698 = vsub.f32 %v432, %v540
  %v699 = vsub.f32 %v433, %v540
  %v700 = vsub.f32 %v434, %v540
  %v701 = vsub.f32 %v435, %v540
  %v702 = vsub.f32 %v436, %v540
  %v703 = vsub.f32 %v437, %v540
  %v704 = vsub.f32 %v438, %v540
  %v705 = vsub.f32 %v439, %v540
  %v706 = vsub.f32 %v440, %v540
  %v707 = vsub.f32 %v441, %v540
  %v708 = vsub.f32 %v442, %v540
  %v709 = vsub.f32 %v443, %v540
  %v710 = vsub.f32 %v444, %v540
  %v711 = vsub.f32 %v445, %v540
  %v712 = vsub.f32 %v446, %v540
  %v713 = vsub.f32 %v447, %v540
  %v714 = vsub.f32 %v448, %v540
  %v715 = vsub.f32 %v449, %v540
  %v716 = vsub.f32 %v450, %v540
  %v717 = vsub.f32 %v451, %v540
  %v718 = vsub.f32 %v452, %v540
  %v719 = vsub.f32 %v453, %v540
  %v720 = vsub.f32 %v454, %v540
  %v721 = vsub.f32 %v455, %v540
  %v722 = vsub.f32 %v456, %v540
  %v723 = vsub.f32 %v457, %v540
  %v724 = vsub.f32 %v458, %v540
  %v725 = vsub.f32 %v459, %v540
  %v726 = vsub.f32 %v460, %v540
  %v727 = vsub.f32 %v461, %v540
  %v728 = vsub.f32 %v462, %v540
  %v729 = vsub.f32 %v463, %v540
  %v730 = vsub.f32 %v464, %v540
  %v731 = vsub.f32 %v465, %v540
  %v732 = vsub.f32 %v466, %v540
  %v733 = vsub.f32 %v467, %v540
  %v734 = vsub.f32 %v468, %v540
  %v735 = vsub.f32 %v469, %v540
  %v736 = vsub.f32 %v470, %v540
  %v737 = vsub.f32 %v471, %v540
  %v738 = vsub.f32 %v472, %v540
  %v739 = vsub.f32 %v473, %v540
  %v740 = vsub.f32 %v474, %v540
  %v741 = vsub.f32 %v475, %v540
  %v742 = vsub.f32 %v476, %v540
  %v743 = vsub.f32 %v477, %v540
  %v744 = vsub.f32 %v478, %v540
  %v745 = vsub.f32 %v479, %v540
  %v746 = vsub.f32 %v480, %v540
  %v747 = vsub.f32 %v481, %v540
  %v748 = vsub.f32 %v482, %v540
  %v749 = vsub.f32 %v483, %v540
  %v750 = vsub.f32 %v484, %v540
  %v751 = vsub.f32 %v485, %v540
  %v752 = vsub.f32 %v486, %v540
  %v753 = vsub.f32 %v487, %v540
  %v754 = vsub.f32 %v488, %v540
  %v755 = vsub.f32 %v489, %v540
  %v756 = vsub.f32 %v490, %v540
  %v757 = vsub.f32 %v491, %v540
  %v758 = vsub.f32 %v492, %v540
  %v759 = vsub.f32 %v493, %v540
  %v760 = vsub.f32 %v494, %v540
  %v761 = vsub.f32 %v495, %v540
  %v762 = vsub.f32 %v496, %v540
  %v763 = vsub.f32 %v497, %v540
  %v764 = vsub.f32 %v498, %v540
  %v765 = vsub.f32 %v499, %v540
  %v766 = vsub.f32 %v500, %v540
  %v767 = vsub.f32 %v501, %v540
  %v768 = vsub.f32 %v502, %v540
  %v769 = vsub.f32 %v503, %v540
  %v770 = vsub.f32 %v504, %v540
  %v771 = vsub.f32 %v505, %v540
  %v772 = vsub.f32 %v506, %v540
  %v773 = vsub.f32 %v507, %v540
  %v774 = vsub.f32 %v508, %v540
  %v775 = vsub.f32 %v509, %v540
  %v776 = vsub.f32 %v510, %v540
  %v777 = vsub.f32 %v511, %v540
  %v778 = vsub.f32 %v512, %v540
  %v779 = vsub.f32 %v513, %v540
  %v780 = vsub.f32 %v514, %v540
  %v781 = vsub.f32 %v515, %v540
  %v782 = vsub.f32 %v516, %v540
  %v783 = vsub.f32 %v517, %v540
  %v784 = vsub.f32 %v518, %v540
  %v785 = vsub.f32 %v519, %v540
  %v786 = vsub.f32 %v520, %v540
  %v787 = vsub.f32 %v521, %v540
  %v788 = vsub.f32 %v522, %v540
  %v789 = vsub.f32 %v523, %v540
  %v790 = vsub.f32 %v524, %v540
  %v791 = vsub.f32 %v525, %v540
  %v792 = vsub.f32 %v526, %v540
  %v793 = vsub.f32 %v527, %v540
  %v794 = vsub.f32 %v528, %v540
  %v795 = vsub.f32 %v529, %v540
  %v796 = vsub.f32 %v530, %v540
  %v797 = vsub.f32 %v531, %v540
  %v799 = vlaneseq
  %v800 = vshrl.u32 %v799, 7
  %v801 = vsub.s32 0, %v800
  %v802 = vrot.slane %v534, %v801
  %v804 = vmul.f32 %v542, %v802
  %v805 = vmul.f32 %v543, %v802
  %v806 = vmul.f32 %v544, %v802
  %v807 = vmul.f32 %v545, %v802
  %v808 = vmul.f32 %v546, %v802
  %v809 = vmul.f32 %v547, %v802
  %v810 = vmul.f32 %v548, %v802
  %v811 = vmul.f32 %v549, %v802
  %v812 = vmul.f32 %v550, %v802
  %v813 = vmul.f32 %v551, %v802
  %v814 = vmul.f32 %v552, %v802
  %v815 = vmul.f32 %v553, %v802
  %v816 = vmul.f32 %v554, %v802
  %v817 = vmul.f32 %v555, %v802
  %v818 = vmul.f32 %v556, %v802
  %v819 = vmul.f32 %v557, %v802
  %v820 = vmul.f32 %v558, %v802
  %v821 = vmul.f32 %v559, %v802
  %v822 = vmul.f32 %v560, %v802
  %v823 = vmul.f32 %v561, %v802
  %v824 = vmul.f32 %v562, %v802
  %v825 = vmul.f32 %v563, %v802
  %v826 = vmul.f32 %v564, %v802
  %v827 = vmul.f32 %v565, %v802
  %v828 = vmul.f32 %v566, %v802
  %v829 = vmul.f32 %v567, %v802
  %v830 = vmul.f32 %v568, %v802
  %v831 = vmul.f32 %v569, %v802
  %v832 = vmul.f32 %v570, %v802
  %v833 = vmul.f32 %v571, %v802
  %v834 = vmul.f32 %v572, %v802
  %v835 = vmul.f32 %v573, %v802
  %v836 = vmul.f32 %v574, %v802
  %v837 = vmul.f32 %v575, %v802
  %v838 = vmul.f32 %v576, %v802
  %v839 = vmul.f32 %v577, %v802
  %v840 = vmul.f32 %v578, %v802
  %v841 = vmul.f32 %v579, %v802
  %v842 = vmul.f32 %v580, %v802
  %v843 = vmul.f32 %v581, %v802
  %v844 = vmul.f32 %v582, %v802
  %v845 = vmul.f32 %v583, %v802
  %v846 = vmul.f32 %v584, %v802
  %v847 = vmul.f32 %v585, %v802
  %v848 = vmul.f32 %v586, %v802
  %v849 = vmul.f32 %v587, %v802
  %v850 = vmul.f32 %v588, %v802
  %v851 = vmul.f32 %v589, %v802
  %v852 = vmul.f32 %v590, %v802
  %v853 = vmul.f32 %v591, %v802
  %v854 = vmul.f32 %v592, %v802
  %v855 = vmul.f32 %v593, %v802
  %v856 = vmul.f32 %v594, %v802
  %v857 = vmul.f32 %v595, %v802
  %v858 = vmul.f32 %v596, %v802
  %v859 = vmul.f32 %v597, %v802
  %v860 = vmul.f32 %v598, %v802
  %v861 = vmul.f32 %v599, %v802
  %v862 = vmul.f32 %v600, %v802
  %v863 = vmul.f32 %v601, %v802
  %v864 = vmul.f32 %v602, %v802
  %v865 = vmul.f32 %v603, %v802
  %v866 = vmul.f32 %v604, %v802
  %v867 = vmul.f32 %v605, %v802
  %v868 = vmul.f32 %v606, %v802
  %v869 = vmul.f32 %v607, %v802
  %v870 = vmul.f32 %v608, %v802
  %v871 = vmul.f32 %v609, %v802
  %v872 = vmul.f32 %v610, %v802
  %v873 = vmul.f32 %v611, %v802
  %v874 = vmul.f32 %v612, %v802
  %v875 = vmul.f32 %v613, %v802
  %v876 = vmul.f32 %v614, %v802
  %v877 = vmul.f32 %v615, %v802
  %v878 = vmul.f32 %v616, %v802
  %v879 = vmul.f32 %v617, %v802
  %v880 = vmul.f32 %v618, %v802
  %v881 = vmul.f32 %v619, %v802
  %v882 = vmul.f32 %v620, %v802
  %v883 = vmul.f32 %v621, %v802
  %v884 = vmul.f32 %v622, %v802
  %v885 = vmul.f32 %v623, %v802
  %v886 = vmul.f32 %v624, %v802
  %v887 = vmul.f32 %v625, %v802
  %v888 = vmul.f32 %v626, %v802
  %v889 = vmul.f32 %v627, %v802
  %v890 = vmul.f32 %v628, %v802
  %v891 = vmul.f32 %v629, %v802
  %v892 = vmul.f32 %v630, %v802
  %v893 = vmul.f32 %v631, %v802
  %v894 = vmul.f32 %v632, %v802
  %v895 = vmul.f32 %v633, %v802
  %v896 = vmul.f32 %v634, %v802
  %v897 = vmul.f32 %v635, %v802
  %v898 = vmul.f32 %v636, %v802
  %v899 = vmul.f32 %v637, %v802
  %v900 = vmul.f32 %v638, %v802
  %v901 = vmul.f32 %v639, %v802
  %v902 = vmul.f32 %v640, %v802
  %v903 = vmul.f32 %v641, %v802
  %v904 = vmul.f32 %v642, %v802
  %v905 = vmul.f32 %v643, %v802
  %v906 = vmul.f32 %v644, %v802
  %v907 = vmul.f32 %v645, %v802
  %v908 = vmul.f32 %v646, %v802
  %v909 = vmul.f32 %v647, %v802
  %v910 = vmul.f32 %v648, %v802
  %v911 = vmul.f32 %v649, %v802
  %v912 = vmul.f32 %v650, %v802
  %v913 = vmul.f32 %v651, %v802
  %v914 = vmul.f32 %v652, %v802
  %v915 = vmul.f32 %v653, %v802
  %v916 = vmul.f32 %v654, %v802
  %v917 = vmul.f32 %v655, %v802
  %v918 = vmul.f32 %v656, %v802
  %v919 = vmul.f32 %v657, %v802
  %v920 = vmul.f32 %v658, %v802
  %v921 = vmul.f32 %v659, %v802
  %v922 = vmul.f32 %v660, %v802
  %v923 = vmul.f32 %v661, %v802
  %v924 = vmul.f32 %v662, %v802
  %v925 = vmul.f32 %v663, %v802
  %v926 = vmul.f32 %v664, %v802
  %v927 = vmul.f32 %v665, %v802
  %v928 = vmul.f32 %v666, %v802
  %v929 = vmul.f32 %v667, %v802
  %v930 = vmul.f32 %v668, %v802
  %v931 = vmul.f32 %v669, %v802
  %v932 = vmul.f32 %v670, %v802
  %v933 = vmul.f32 %v671, %v802
  %v934 = vmul.f32 %v672, %v802
  %v935 = vmul.f32 %v673, %v802
  %v936 = vmul.f32 %v674, %v802
  %v937 = vmul.f32 %v675, %v802
  %v938 = vmul.f32 %v676, %v802
  %v939 = vmul.f32 %v677, %v802
  %v940 = vmul.f32 %v678, %v802
  %v941 = vmul.f32 %v679, %v802
  %v942 = vmul.f32 %v680, %v802
  %v943 = vmul.f32 %v681, %v802
  %v944 = vmul.f32 %v682, %v802
  %v945 = vmul.f32 %v683, %v802
  %v946 = vmul.f32 %v684, %v802
  %v947 = vmul.f32 %v685, %v802
  %v948 = vmul.f32 %v686, %v802
  %v949 = vmul.f32 %v687, %v802
  %v950 = vmul.f32 %v688, %v802
  %v951 = vmul.f32 %v689, %v802
  %v952 = vmul.f32 %v690, %v802
  %v953 = vmul.f32 %v691, %v802
  %v954 = vmul.f32 %v692, %v802
  %v955 = vmul.f32 %v693, %v802
  %v956 = vmul.f32 %v694, %v802
  %v957 = vmul.f32 %v695, %v802
  %v958 = vmul.f32 %v696, %v802
  %v959 = vmul.f32 %v697, %v802
  %v960 = vmul.f32 %v698, %v802
  %v961 = vmul.f32 %v699, %v802
  %v962 = vmul.f32 %v700, %v802
  %v963 = vmul.f32 %v701, %v802
  %v964 = vmul.f32 %v702, %v802
  %v965 = vmul.f32 %v703, %v802
  %v966 = vmul.f32 %v704, %v802
  %v967 = vmul.f32 %v705, %v802
  %v968 = vmul.f32 %v706, %v802
  %v969 = vmul.f32 %v707, %v802
  %v970 = vmul.f32 %v708, %v802
  %v971 = vmul.f32 %v709, %v802
  %v972 = vmul.f32 %v710, %v802
  %v973 = vmul.f32 %v711, %v802
  %v974 = vmul.f32 %v712, %v802
  %v975 = vmul.f32 %v713, %v802
  %v976 = vmul.f32 %v714, %v802
  %v977 = vmul.f32 %v715, %v802
  %v978 = vmul.f32 %v716, %v802
  %v979 = vmul.f32 %v717, %v802
  %v980 = vmul.f32 %v718, %v802
  %v981 = vmul.f32 %v719, %v802
  %v982 = vmul.f32 %v720, %v802
  %v983 = vmul.f32 %v721, %v802
  %v984 = vmul.f32 %v722, %v802
  %v985 = vmul.f32 %v723, %v802
  %v986 = vmul.f32 %v724, %v802
  %v987 = vmul.f32 %v725, %v802
  %v988 = vmul.f32 %v726, %v802
  %v989 = vmul.f32 %v727, %v802
  %v990 = vmul.f32 %v728, %v802
  %v991 = vmul.f32 %v729, %v802
  %v992 = vmul.f32 %v730, %v802
  %v993 = vmul.f32 %v731, %v802
  %v994 = vmul.f32 %v732, %v802
  %v995 = vmul.f32 %v733, %v802
  %v996 = vmul.f32 %v734, %v802
  %v997 = vmul.f32 %v735, %v802
  %v998 = vmul.f32 %v736, %v802
  %v999 = vmul.f32 %v737, %v802
  %v1000 = vmul.f32 %v738, %v802
  %v1001 = vmul.f32 %v739, %v802
  %v1002 = vmul.f32 %v740, %v802
  %v1003 = vmul.f32 %v741, %v802
  %v1004 = vmul.f32 %v742, %v802
  %v1005 = vmul.f32 %v743, %v802
  %v1006 = vmul.f32 %v744, %v802
  %v1007 = vmul.f32 %v745, %v802
  %v1008 = vmul.f32 %v746, %v802
  %v1009 = vmul.f32 %v747, %v802
  %v1010 = vmul.f32 %v748, %v802
  %v1011 = vmul.f32 %v749, %v802
  %v1012 = vmul.f32 %v750, %v802
  %v1013 = vmul.f32 %v751, %v802
  %v1014 = vmul.f32 %v752, %v802
  %v1015 = vmul.f32 %v753, %v802
  %v1016 = vmul.f32 %v754, %v802
  %v1017 = vmul.f32 %v755, %v802
  %v1018 = vmul.f32 %v756, %v802
  %v1019 = vmul.f32 %v757, %v802
  %v1020 = vmul.f32 %v758, %v802
  %v1021 = vmul.f32 %v759, %v802
  %v1022 = vmul.f32 %v760, %v802
  %v1023 = vmul.f32 %v761, %v802
  %v1024 = vmul.f32 %v762, %v802
  %v1025 = vmul.f32 %v763, %v802
  %v1026 = vmul.f32 %v764, %v802
  %v1027 = vmul.f32 %v765, %v802
  %v1028 = vmul.f32 %v766, %v802
  %v1029 = vmul.f32 %v767, %v802
  %v1030 = vmul.f32 %v768, %v802
  %v1031 = vmul.f32 %v769, %v802
  %v1032 = vmul.f32 %v770, %v802
  %v1033 = vmul.f32 %v771, %v802
  %v1034 = vmul.f32 %v772, %v802
  %v1035 = vmul.f32 %v773, %v802
  %v1036 = vmul.f32 %v774, %v802
  %v1037 = vmul.f32 %v775, %v802
  %v1038 = vmul.f32 %v776, %v802
  %v1039 = vmul.f32 %v777, %v802
  %v1040 = vmul.f32 %v778, %v802
  %v1041 = vmul.f32 %v779, %v802
  %v1042 = vmul.f32 %v780, %v802
  %v1043 = vmul.f32 %v781, %v802
  %v1044 = vmul.f32 %v782, %v802
  %v1045 = vmul.f32 %v783, %v802
  %v1046 = vmul.f32 %v784, %v802
  %v1047 = vmul.f32 %v785, %v802
  %v1048 = vmul.f32 %v786, %v802
  %v1049 = vmul.f32 %v787, %v802
  %v1050 = vmul.f32 %v788, %v802
  %v1051 = vmul.f32 %v789, %v802
  %v1052 = vmul.f32 %v790, %v802
  %v1053 = vmul.f32 %v791, %v802
  %v1054 = vmul.f32 %v792, %v802
  %v1055 = vmul.f32 %v793, %v802
  %v1056 = vmul.f32 %v794, %v802
  %v1057 = vmul.f32 %v795, %v802
  %v1058 = vmul.f32 %v796, %v802
  %v1059 = vmul.f32 %v797, %v802
  %v1060 = vld [vmem:[%s4] sm:$0x1]
  %v1062 = vlaneseq
  %v1063 = vshrl.u32 %v1062, 7
  %v1064 = vsub.s32 0, %v1063
  %v1065 = vrot.slane %v1060, %v1064
  %v1067 = vadd.f32 %v804, %v1065
  %v1068 = vadd.f32 %v805, %v1065
  %v1069 = vadd.f32 %v806, %v1065
  %v1070 = vadd.f32 %v807, %v1065
  %v1071 = vadd.f32 %v808, %v1065
  %v1072 = vadd.f32 %v809, %v1065
  %v1073 = vadd.f32 %v810, %v1065
  %v1074 = vadd.f32 %v811, %v1065
  %v1075 = vadd.f32 %v812, %v1065
  %v1076 = vadd.f32 %v813, %v1065
  %v1077 = vadd.f32 %v814, %v1065
  %v1078 = vadd.f32 %v815, %v1065
  %v1079 = vadd.f32 %v816, %v1065
  %v1080 = vadd.f32 %v817, %v1065
  %v1081 = vadd.f32 %v818, %v1065
  %v1082 = vadd.f32 %v819, %v1065
  %v1083 = vadd.f32 %v820, %v1065
  %v1084 = vadd.f32 %v821, %v1065
  %v1085 = vadd.f32 %v822, %v1065
  %v1086 = vadd.f32 %v823, %v1065
  %v1087 = vadd.f32 %v824, %v1065
  %v1088 = vadd.f32 %v825, %v1065
  %v1089 = vadd.f32 %v826, %v1065
  %v1090 = vadd.f32 %v827, %v1065
  %v1091 = vadd.f32 %v828, %v1065
  %v1092 = vadd.f32 %v829, %v1065
  %v1093 = vadd.f32 %v830, %v1065
  %v1094 = vadd.f32 %v831, %v1065
  %v1095 = vadd.f32 %v832, %v1065
  %v1096 = vadd.f32 %v833, %v1065
  %v1097 = vadd.f32 %v834, %v1065
  %v1098 = vadd.f32 %v835, %v1065
  %v1099 = vadd.f32 %v836, %v1065
  %v1100 = vadd.f32 %v837, %v1065
  %v1101 = vadd.f32 %v838, %v1065
  %v1102 = vadd.f32 %v839, %v1065
  %v1103 = vadd.f32 %v840, %v1065
  %v1104 = vadd.f32 %v841, %v1065
  %v1105 = vadd.f32 %v842, %v1065
  %v1106 = vadd.f32 %v843, %v1065
  %v1107 = vadd.f32 %v844, %v1065
  %v1108 = vadd.f32 %v845, %v1065
  %v1109 = vadd.f32 %v846, %v1065
  %v1110 = vadd.f32 %v847, %v1065
  %v1111 = vadd.f32 %v848, %v1065
  %v1112 = vadd.f32 %v849, %v1065
  %v1113 = vadd.f32 %v850, %v1065
  %v1114 = vadd.f32 %v851, %v1065
  %v1115 = vadd.f32 %v852, %v1065
  %v1116 = vadd.f32 %v853, %v1065
  %v1117 = vadd.f32 %v854, %v1065
  %v1118 = vadd.f32 %v855, %v1065
  %v1119 = vadd.f32 %v856, %v1065
  %v1120 = vadd.f32 %v857, %v1065
  %v1121 = vadd.f32 %v858, %v1065
  %v1122 = vadd.f32 %v859, %v1065
  %v1123 = vadd.f32 %v860, %v1065
  %v1124 = vadd.f32 %v861, %v1065
  %v1125 = vadd.f32 %v862, %v1065
  %v1126 = vadd.f32 %v863, %v1065
  %v1127 = vadd.f32 %v864, %v1065
  %v1128 = vadd.f32 %v865, %v1065
  %v1129 = vadd.f32 %v866, %v1065
  %v1130 = vadd.f32 %v867, %v1065
  %v1131 = vadd.f32 %v868, %v1065
  %v1132 = vadd.f32 %v869, %v1065
  %v1133 = vadd.f32 %v870, %v1065
  %v1134 = vadd.f32 %v871, %v1065
  %v1135 = vadd.f32 %v872, %v1065
  %v1136 = vadd.f32 %v873, %v1065
  %v1137 = vadd.f32 %v874, %v1065
  %v1138 = vadd.f32 %v875, %v1065
  %v1139 = vadd.f32 %v876, %v1065
  %v1140 = vadd.f32 %v877, %v1065
  %v1141 = vadd.f32 %v878, %v1065
  %v1142 = vadd.f32 %v879, %v1065
  %v1143 = vadd.f32 %v880, %v1065
  %v1144 = vadd.f32 %v881, %v1065
  %v1145 = vadd.f32 %v882, %v1065
  %v1146 = vadd.f32 %v883, %v1065
  %v1147 = vadd.f32 %v884, %v1065
  %v1148 = vadd.f32 %v885, %v1065
  %v1149 = vadd.f32 %v886, %v1065
  %v1150 = vadd.f32 %v887, %v1065
  %v1151 = vadd.f32 %v888, %v1065
  %v1152 = vadd.f32 %v889, %v1065
  %v1153 = vadd.f32 %v890, %v1065
  %v1154 = vadd.f32 %v891, %v1065
  %v1155 = vadd.f32 %v892, %v1065
  %v1156 = vadd.f32 %v893, %v1065
  %v1157 = vadd.f32 %v894, %v1065
  %v1158 = vadd.f32 %v895, %v1065
  %v1159 = vadd.f32 %v896, %v1065
  %v1160 = vadd.f32 %v897, %v1065
  %v1161 = vadd.f32 %v898, %v1065
  %v1162 = vadd.f32 %v899, %v1065
  %v1163 = vadd.f32 %v900, %v1065
  %v1164 = vadd.f32 %v901, %v1065
  %v1165 = vadd.f32 %v902, %v1065
  %v1166 = vadd.f32 %v903, %v1065
  %v1167 = vadd.f32 %v904, %v1065
  %v1168 = vadd.f32 %v905, %v1065
  %v1169 = vadd.f32 %v906, %v1065
  %v1170 = vadd.f32 %v907, %v1065
  %v1171 = vadd.f32 %v908, %v1065
  %v1172 = vadd.f32 %v909, %v1065
  %v1173 = vadd.f32 %v910, %v1065
  %v1174 = vadd.f32 %v911, %v1065
  %v1175 = vadd.f32 %v912, %v1065
  %v1176 = vadd.f32 %v913, %v1065
  %v1177 = vadd.f32 %v914, %v1065
  %v1178 = vadd.f32 %v915, %v1065
  %v1179 = vadd.f32 %v916, %v1065
  %v1180 = vadd.f32 %v917, %v1065
  %v1181 = vadd.f32 %v918, %v1065
  %v1182 = vadd.f32 %v919, %v1065
  %v1183 = vadd.f32 %v920, %v1065
  %v1184 = vadd.f32 %v921, %v1065
  %v1185 = vadd.f32 %v922, %v1065
  %v1186 = vadd.f32 %v923, %v1065
  %v1187 = vadd.f32 %v924, %v1065
  %v1188 = vadd.f32 %v925, %v1065
  %v1189 = vadd.f32 %v926, %v1065
  %v1190 = vadd.f32 %v927, %v1065
  %v1191 = vadd.f32 %v928, %v1065
  %v1192 = vadd.f32 %v929, %v1065
  %v1193 = vadd.f32 %v930, %v1065
  %v1194 = vadd.f32 %v931, %v1065
  %v1195 = vadd.f32 %v932, %v1065
  %v1196 = vadd.f32 %v933, %v1065
  %v1197 = vadd.f32 %v934, %v1065
  %v1198 = vadd.f32 %v935, %v1065
  %v1199 = vadd.f32 %v936, %v1065
  %v1200 = vadd.f32 %v937, %v1065
  %v1201 = vadd.f32 %v938, %v1065
  %v1202 = vadd.f32 %v939, %v1065
  %v1203 = vadd.f32 %v940, %v1065
  %v1204 = vadd.f32 %v941, %v1065
  %v1205 = vadd.f32 %v942, %v1065
  %v1206 = vadd.f32 %v943, %v1065
  %v1207 = vadd.f32 %v944, %v1065
  %v1208 = vadd.f32 %v945, %v1065
  %v1209 = vadd.f32 %v946, %v1065
  %v1210 = vadd.f32 %v947, %v1065
  %v1211 = vadd.f32 %v948, %v1065
  %v1212 = vadd.f32 %v949, %v1065
  %v1213 = vadd.f32 %v950, %v1065
  %v1214 = vadd.f32 %v951, %v1065
  %v1215 = vadd.f32 %v952, %v1065
  %v1216 = vadd.f32 %v953, %v1065
  %v1217 = vadd.f32 %v954, %v1065
  %v1218 = vadd.f32 %v955, %v1065
  %v1219 = vadd.f32 %v956, %v1065
  %v1220 = vadd.f32 %v957, %v1065
  %v1221 = vadd.f32 %v958, %v1065
  %v1222 = vadd.f32 %v959, %v1065
  %v1223 = vadd.f32 %v960, %v1065
  %v1224 = vadd.f32 %v961, %v1065
  %v1225 = vadd.f32 %v962, %v1065
  %v1226 = vadd.f32 %v963, %v1065
  %v1227 = vadd.f32 %v964, %v1065
  %v1228 = vadd.f32 %v965, %v1065
  %v1229 = vadd.f32 %v966, %v1065
  %v1230 = vadd.f32 %v967, %v1065
  %v1231 = vadd.f32 %v968, %v1065
  %v1232 = vadd.f32 %v969, %v1065
  %v1233 = vadd.f32 %v970, %v1065
  %v1234 = vadd.f32 %v971, %v1065
  %v1235 = vadd.f32 %v972, %v1065
  %v1236 = vadd.f32 %v973, %v1065
  %v1237 = vadd.f32 %v974, %v1065
  %v1238 = vadd.f32 %v975, %v1065
  %v1239 = vadd.f32 %v976, %v1065
  %v1240 = vadd.f32 %v977, %v1065
  %v1241 = vadd.f32 %v978, %v1065
  %v1242 = vadd.f32 %v979, %v1065
  %v1243 = vadd.f32 %v980, %v1065
  %v1244 = vadd.f32 %v981, %v1065
  %v1245 = vadd.f32 %v982, %v1065
  %v1246 = vadd.f32 %v983, %v1065
  %v1247 = vadd.f32 %v984, %v1065
  %v1248 = vadd.f32 %v985, %v1065
  %v1249 = vadd.f32 %v986, %v1065
  %v1250 = vadd.f32 %v987, %v1065
  %v1251 = vadd.f32 %v988, %v1065
  %v1252 = vadd.f32 %v989, %v1065
  %v1253 = vadd.f32 %v990, %v1065
  %v1254 = vadd.f32 %v991, %v1065
  %v1255 = vadd.f32 %v992, %v1065
  %v1256 = vadd.f32 %v993, %v1065
  %v1257 = vadd.f32 %v994, %v1065
  %v1258 = vadd.f32 %v995, %v1065
  %v1259 = vadd.f32 %v996, %v1065
  %v1260 = vadd.f32 %v997, %v1065
  %v1261 = vadd.f32 %v998, %v1065
  %v1262 = vadd.f32 %v999, %v1065
  %v1263 = vadd.f32 %v1000, %v1065
  %v1264 = vadd.f32 %v1001, %v1065
  %v1265 = vadd.f32 %v1002, %v1065
  %v1266 = vadd.f32 %v1003, %v1065
  %v1267 = vadd.f32 %v1004, %v1065
  %v1268 = vadd.f32 %v1005, %v1065
  %v1269 = vadd.f32 %v1006, %v1065
  %v1270 = vadd.f32 %v1007, %v1065
  %v1271 = vadd.f32 %v1008, %v1065
  %v1272 = vadd.f32 %v1009, %v1065
  %v1273 = vadd.f32 %v1010, %v1065
  %v1274 = vadd.f32 %v1011, %v1065
  %v1275 = vadd.f32 %v1012, %v1065
  %v1276 = vadd.f32 %v1013, %v1065
  %v1277 = vadd.f32 %v1014, %v1065
  %v1278 = vadd.f32 %v1015, %v1065
  %v1279 = vadd.f32 %v1016, %v1065
  %v1280 = vadd.f32 %v1017, %v1065
  %v1281 = vadd.f32 %v1018, %v1065
  %v1282 = vadd.f32 %v1019, %v1065
  %v1283 = vadd.f32 %v1020, %v1065
  %v1284 = vadd.f32 %v1021, %v1065
  %v1285 = vadd.f32 %v1022, %v1065
  %v1286 = vadd.f32 %v1023, %v1065
  %v1287 = vadd.f32 %v1024, %v1065
  %v1288 = vadd.f32 %v1025, %v1065
  %v1289 = vadd.f32 %v1026, %v1065
  %v1290 = vadd.f32 %v1027, %v1065
  %v1291 = vadd.f32 %v1028, %v1065
  %v1292 = vadd.f32 %v1029, %v1065
  %v1293 = vadd.f32 %v1030, %v1065
  %v1294 = vadd.f32 %v1031, %v1065
  %v1295 = vadd.f32 %v1032, %v1065
  %v1296 = vadd.f32 %v1033, %v1065
  %v1297 = vadd.f32 %v1034, %v1065
  %v1298 = vadd.f32 %v1035, %v1065
  %v1299 = vadd.f32 %v1036, %v1065
  %v1300 = vadd.f32 %v1037, %v1065
  %v1301 = vadd.f32 %v1038, %v1065
  %v1302 = vadd.f32 %v1039, %v1065
  %v1303 = vadd.f32 %v1040, %v1065
  %v1304 = vadd.f32 %v1041, %v1065
  %v1305 = vadd.f32 %v1042, %v1065
  %v1306 = vadd.f32 %v1043, %v1065
  %v1307 = vadd.f32 %v1044, %v1065
  %v1308 = vadd.f32 %v1045, %v1065
  %v1309 = vadd.f32 %v1046, %v1065
  %v1310 = vadd.f32 %v1047, %v1065
  %v1311 = vadd.f32 %v1048, %v1065
  %v1312 = vadd.f32 %v1049, %v1065
  %v1313 = vadd.f32 %v1050, %v1065
  %v1314 = vadd.f32 %v1051, %v1065
  %v1315 = vadd.f32 %v1052, %v1065
  %v1316 = vadd.f32 %v1053, %v1065
  %v1317 = vadd.f32 %v1054, %v1065
  %v1318 = vadd.f32 %v1055, %v1065
  %v1319 = vadd.f32 %v1056, %v1065
  %v1320 = vadd.f32 %v1057, %v1065
  %v1321 = vadd.f32 %v1058, %v1065
  %v1322 = vadd.f32 %v1059, %v1065
  %v1323 = vmax.f32 %v1067, 0.0
  %v1324 = vmax.f32 %v1068, 0.0
  %v1325 = vmax.f32 %v1069, 0.0
  %v1326 = vmax.f32 %v1070, 0.0
  %v1327 = vmax.f32 %v1071, 0.0
  %v1328 = vmax.f32 %v1072, 0.0
  %v1329 = vmax.f32 %v1073, 0.0
  %v1330 = vmax.f32 %v1074, 0.0
  %v1331 = vmax.f32 %v1075, 0.0
  %v1332 = vmax.f32 %v1076, 0.0
  %v1333 = vmax.f32 %v1077, 0.0
  %v1334 = vmax.f32 %v1078, 0.0
  %v1335 = vmax.f32 %v1079, 0.0
  %v1336 = vmax.f32 %v1080, 0.0
  %v1337 = vmax.f32 %v1081, 0.0
  %v1338 = vmax.f32 %v1082, 0.0
  %v1339 = vmax.f32 %v1083, 0.0
  %v1340 = vmax.f32 %v1084, 0.0
  %v1341 = vmax.f32 %v1085, 0.0
  %v1342 = vmax.f32 %v1086, 0.0
  %v1343 = vmax.f32 %v1087, 0.0
  %v1344 = vmax.f32 %v1088, 0.0
  %v1345 = vmax.f32 %v1089, 0.0
  %v1346 = vmax.f32 %v1090, 0.0
  %v1347 = vmax.f32 %v1091, 0.0
  %v1348 = vmax.f32 %v1092, 0.0
  %v1349 = vmax.f32 %v1093, 0.0
  %v1350 = vmax.f32 %v1094, 0.0
  %v1351 = vmax.f32 %v1095, 0.0
  %v1352 = vmax.f32 %v1096, 0.0
  %v1353 = vmax.f32 %v1097, 0.0
  %v1354 = vmax.f32 %v1098, 0.0
  %v1355 = vmax.f32 %v1099, 0.0
  %v1356 = vmax.f32 %v1100, 0.0
  %v1357 = vmax.f32 %v1101, 0.0
  %v1358 = vmax.f32 %v1102, 0.0
  %v1359 = vmax.f32 %v1103, 0.0
  %v1360 = vmax.f32 %v1104, 0.0
  %v1361 = vmax.f32 %v1105, 0.0
  %v1362 = vmax.f32 %v1106, 0.0
  %v1363 = vmax.f32 %v1107, 0.0
  %v1364 = vmax.f32 %v1108, 0.0
  %v1365 = vmax.f32 %v1109, 0.0
  %v1366 = vmax.f32 %v1110, 0.0
  %v1367 = vmax.f32 %v1111, 0.0
  %v1368 = vmax.f32 %v1112, 0.0
  %v1369 = vmax.f32 %v1113, 0.0
  %v1370 = vmax.f32 %v1114, 0.0
  %v1371 = vmax.f32 %v1115, 0.0
  %v1372 = vmax.f32 %v1116, 0.0
  %v1373 = vmax.f32 %v1117, 0.0
  %v1374 = vmax.f32 %v1118, 0.0
  %v1375 = vmax.f32 %v1119, 0.0
  %v1376 = vmax.f32 %v1120, 0.0
  %v1377 = vmax.f32 %v1121, 0.0
  %v1378 = vmax.f32 %v1122, 0.0
  %v1379 = vmax.f32 %v1123, 0.0
  %v1380 = vmax.f32 %v1124, 0.0
  %v1381 = vmax.f32 %v1125, 0.0
  %v1382 = vmax.f32 %v1126, 0.0
  %v1383 = vmax.f32 %v1127, 0.0
  %v1384 = vmax.f32 %v1128, 0.0
  %v1385 = vmax.f32 %v1129, 0.0
  %v1386 = vmax.f32 %v1130, 0.0
  %v1387 = vmax.f32 %v1131, 0.0
  %v1388 = vmax.f32 %v1132, 0.0
  %v1389 = vmax.f32 %v1133, 0.0
  %v1390 = vmax.f32 %v1134, 0.0
  %v1391 = vmax.f32 %v1135, 0.0
  %v1392 = vmax.f32 %v1136, 0.0
  %v1393 = vmax.f32 %v1137, 0.0
  %v1394 = vmax.f32 %v1138, 0.0
  %v1395 = vmax.f32 %v1139, 0.0
  %v1396 = vmax.f32 %v1140, 0.0
  %v1397 = vmax.f32 %v1141, 0.0
  %v1398 = vmax.f32 %v1142, 0.0
  %v1399 = vmax.f32 %v1143, 0.0
  %v1400 = vmax.f32 %v1144, 0.0
  %v1401 = vmax.f32 %v1145, 0.0
  %v1402 = vmax.f32 %v1146, 0.0
  %v1403 = vmax.f32 %v1147, 0.0
  %v1404 = vmax.f32 %v1148, 0.0
  %v1405 = vmax.f32 %v1149, 0.0
  %v1406 = vmax.f32 %v1150, 0.0
  %v1407 = vmax.f32 %v1151, 0.0
  %v1408 = vmax.f32 %v1152, 0.0
  %v1409 = vmax.f32 %v1153, 0.0
  %v1410 = vmax.f32 %v1154, 0.0
  %v1411 = vmax.f32 %v1155, 0.0
  %v1412 = vmax.f32 %v1156, 0.0
  %v1413 = vmax.f32 %v1157, 0.0
  %v1414 = vmax.f32 %v1158, 0.0
  %v1415 = vmax.f32 %v1159, 0.0
  %v1416 = vmax.f32 %v1160, 0.0
  %v1417 = vmax.f32 %v1161, 0.0
  %v1418 = vmax.f32 %v1162, 0.0
  %v1419 = vmax.f32 %v1163, 0.0
  %v1420 = vmax.f32 %v1164, 0.0
  %v1421 = vmax.f32 %v1165, 0.0
  %v1422 = vmax.f32 %v1166, 0.0
  %v1423 = vmax.f32 %v1167, 0.0
  %v1424 = vmax.f32 %v1168, 0.0
  %v1425 = vmax.f32 %v1169, 0.0
  %v1426 = vmax.f32 %v1170, 0.0
  %v1427 = vmax.f32 %v1171, 0.0
  %v1428 = vmax.f32 %v1172, 0.0
  %v1429 = vmax.f32 %v1173, 0.0
  %v1430 = vmax.f32 %v1174, 0.0
  %v1431 = vmax.f32 %v1175, 0.0
  %v1432 = vmax.f32 %v1176, 0.0
  %v1433 = vmax.f32 %v1177, 0.0
  %v1434 = vmax.f32 %v1178, 0.0
  %v1435 = vmax.f32 %v1179, 0.0
  %v1436 = vmax.f32 %v1180, 0.0
  %v1437 = vmax.f32 %v1181, 0.0
  %v1438 = vmax.f32 %v1182, 0.0
  %v1439 = vmax.f32 %v1183, 0.0
  %v1440 = vmax.f32 %v1184, 0.0
  %v1441 = vmax.f32 %v1185, 0.0
  %v1442 = vmax.f32 %v1186, 0.0
  %v1443 = vmax.f32 %v1187, 0.0
  %v1444 = vmax.f32 %v1188, 0.0
  %v1445 = vmax.f32 %v1189, 0.0
  %v1446 = vmax.f32 %v1190, 0.0
  %v1447 = vmax.f32 %v1191, 0.0
  %v1448 = vmax.f32 %v1192, 0.0
  %v1449 = vmax.f32 %v1193, 0.0
  %v1450 = vmax.f32 %v1194, 0.0
  %v1451 = vmax.f32 %v1195, 0.0
  %v1452 = vmax.f32 %v1196, 0.0
  %v1453 = vmax.f32 %v1197, 0.0
  %v1454 = vmax.f32 %v1198, 0.0
  %v1455 = vmax.f32 %v1199, 0.0
  %v1456 = vmax.f32 %v1200, 0.0
  %v1457 = vmax.f32 %v1201, 0.0
  %v1458 = vmax.f32 %v1202, 0.0
  %v1459 = vmax.f32 %v1203, 0.0
  %v1460 = vmax.f32 %v1204, 0.0
  %v1461 = vmax.f32 %v1205, 0.0
  %v1462 = vmax.f32 %v1206, 0.0
  %v1463 = vmax.f32 %v1207, 0.0
  %v1464 = vmax.f32 %v1208, 0.0
  %v1465 = vmax.f32 %v1209, 0.0
  %v1466 = vmax.f32 %v1210, 0.0
  %v1467 = vmax.f32 %v1211, 0.0
  %v1468 = vmax.f32 %v1212, 0.0
  %v1469 = vmax.f32 %v1213, 0.0
  %v1470 = vmax.f32 %v1214, 0.0
  %v1471 = vmax.f32 %v1215, 0.0
  %v1472 = vmax.f32 %v1216, 0.0
  %v1473 = vmax.f32 %v1217, 0.0
  %v1474 = vmax.f32 %v1218, 0.0
  %v1475 = vmax.f32 %v1219, 0.0
  %v1476 = vmax.f32 %v1220, 0.0
  %v1477 = vmax.f32 %v1221, 0.0
  %v1478 = vmax.f32 %v1222, 0.0
  %v1479 = vmax.f32 %v1223, 0.0
  %v1480 = vmax.f32 %v1224, 0.0
  %v1481 = vmax.f32 %v1225, 0.0
  %v1482 = vmax.f32 %v1226, 0.0
  %v1483 = vmax.f32 %v1227, 0.0
  %v1484 = vmax.f32 %v1228, 0.0
  %v1485 = vmax.f32 %v1229, 0.0
  %v1486 = vmax.f32 %v1230, 0.0
  %v1487 = vmax.f32 %v1231, 0.0
  %v1488 = vmax.f32 %v1232, 0.0
  %v1489 = vmax.f32 %v1233, 0.0
  %v1490 = vmax.f32 %v1234, 0.0
  %v1491 = vmax.f32 %v1235, 0.0
  %v1492 = vmax.f32 %v1236, 0.0
  %v1493 = vmax.f32 %v1237, 0.0
  %v1494 = vmax.f32 %v1238, 0.0
  %v1495 = vmax.f32 %v1239, 0.0
  %v1496 = vmax.f32 %v1240, 0.0
  %v1497 = vmax.f32 %v1241, 0.0
  %v1498 = vmax.f32 %v1242, 0.0
  %v1499 = vmax.f32 %v1243, 0.0
  %v1500 = vmax.f32 %v1244, 0.0
  %v1501 = vmax.f32 %v1245, 0.0
  %v1502 = vmax.f32 %v1246, 0.0
  %v1503 = vmax.f32 %v1247, 0.0
  %v1504 = vmax.f32 %v1248, 0.0
  %v1505 = vmax.f32 %v1249, 0.0
  %v1506 = vmax.f32 %v1250, 0.0
  %v1507 = vmax.f32 %v1251, 0.0
  %v1508 = vmax.f32 %v1252, 0.0
  %v1509 = vmax.f32 %v1253, 0.0
  %v1510 = vmax.f32 %v1254, 0.0
  %v1511 = vmax.f32 %v1255, 0.0
  %v1512 = vmax.f32 %v1256, 0.0
  %v1513 = vmax.f32 %v1257, 0.0
  %v1514 = vmax.f32 %v1258, 0.0
  %v1515 = vmax.f32 %v1259, 0.0
  %v1516 = vmax.f32 %v1260, 0.0
  %v1517 = vmax.f32 %v1261, 0.0
  %v1518 = vmax.f32 %v1262, 0.0
  %v1519 = vmax.f32 %v1263, 0.0
  %v1520 = vmax.f32 %v1264, 0.0
  %v1521 = vmax.f32 %v1265, 0.0
  %v1522 = vmax.f32 %v1266, 0.0
  %v1523 = vmax.f32 %v1267, 0.0
  %v1524 = vmax.f32 %v1268, 0.0
  %v1525 = vmax.f32 %v1269, 0.0
  %v1526 = vmax.f32 %v1270, 0.0
  %v1527 = vmax.f32 %v1271, 0.0
  %v1528 = vmax.f32 %v1272, 0.0
  %v1529 = vmax.f32 %v1273, 0.0
  %v1530 = vmax.f32 %v1274, 0.0
  %v1531 = vmax.f32 %v1275, 0.0
  %v1532 = vmax.f32 %v1276, 0.0
  %v1533 = vmax.f32 %v1277, 0.0
  %v1534 = vmax.f32 %v1278, 0.0
  %v1535 = vmax.f32 %v1279, 0.0
  %v1536 = vmax.f32 %v1280, 0.0
  %v1537 = vmax.f32 %v1281, 0.0
  %v1538 = vmax.f32 %v1282, 0.0
  %v1539 = vmax.f32 %v1283, 0.0
  %v1540 = vmax.f32 %v1284, 0.0
  %v1541 = vmax.f32 %v1285, 0.0
  %v1542 = vmax.f32 %v1286, 0.0
  %v1543 = vmax.f32 %v1287, 0.0
  %v1544 = vmax.f32 %v1288, 0.0
  %v1545 = vmax.f32 %v1289, 0.0
  %v1546 = vmax.f32 %v1290, 0.0
  %v1547 = vmax.f32 %v1291, 0.0
  %v1548 = vmax.f32 %v1292, 0.0
  %v1549 = vmax.f32 %v1293, 0.0
  %v1550 = vmax.f32 %v1294, 0.0
  %v1551 = vmax.f32 %v1295, 0.0
  %v1552 = vmax.f32 %v1296, 0.0
  %v1553 = vmax.f32 %v1297, 0.0
  %v1554 = vmax.f32 %v1298, 0.0
  %v1555 = vmax.f32 %v1299, 0.0
  %v1556 = vmax.f32 %v1300, 0.0
  %v1557 = vmax.f32 %v1301, 0.0
  %v1558 = vmax.f32 %v1302, 0.0
  %v1559 = vmax.f32 %v1303, 0.0
  %v1560 = vmax.f32 %v1304, 0.0
  %v1561 = vmax.f32 %v1305, 0.0
  %v1562 = vmax.f32 %v1306, 0.0
  %v1563 = vmax.f32 %v1307, 0.0
  %v1564 = vmax.f32 %v1308, 0.0
  %v1565 = vmax.f32 %v1309, 0.0
  %v1566 = vmax.f32 %v1310, 0.0
  %v1567 = vmax.f32 %v1311, 0.0
  %v1568 = vmax.f32 %v1312, 0.0
  %v1569 = vmax.f32 %v1313, 0.0
  %v1570 = vmax.f32 %v1314, 0.0
  %v1571 = vmax.f32 %v1315, 0.0
  %v1572 = vmax.f32 %v1316, 0.0
  %v1573 = vmax.f32 %v1317, 0.0
  %v1574 = vmax.f32 %v1318, 0.0
  %v1575 = vmax.f32 %v1319, 0.0
  %v1576 = vmax.f32 %v1320, 0.0
  %v1577 = vmax.f32 %v1321, 0.0
  %v1578 = vmax.f32 %v1322, 0.0
  %v1579 = vpack.c.bf16 %v1324, %v1323
  %v1580 = vpack.c.bf16 %v1326, %v1325
  %v1581 = vpack.c.bf16 %v1328, %v1327
  %v1582 = vpack.c.bf16 %v1330, %v1329
  %v1583 = vpack.c.bf16 %v1332, %v1331
  %v1584 = vpack.c.bf16 %v1334, %v1333
  %v1585 = vpack.c.bf16 %v1336, %v1335
  %v1586 = vpack.c.bf16 %v1338, %v1337
  %v1587 = vpack.c.bf16 %v1340, %v1339
  %v1588 = vpack.c.bf16 %v1342, %v1341
  %v1589 = vpack.c.bf16 %v1344, %v1343
  %v1590 = vpack.c.bf16 %v1346, %v1345
  %v1591 = vpack.c.bf16 %v1348, %v1347
  %v1592 = vpack.c.bf16 %v1350, %v1349
  %v1593 = vpack.c.bf16 %v1352, %v1351
  %v1594 = vpack.c.bf16 %v1354, %v1353
  %v1595 = vpack.c.bf16 %v1356, %v1355
  %v1596 = vpack.c.bf16 %v1358, %v1357
  %v1597 = vpack.c.bf16 %v1360, %v1359
  %v1598 = vpack.c.bf16 %v1362, %v1361
  %v1599 = vpack.c.bf16 %v1364, %v1363
  %v1600 = vpack.c.bf16 %v1366, %v1365
  %v1601 = vpack.c.bf16 %v1368, %v1367
  %v1602 = vpack.c.bf16 %v1370, %v1369
  %v1603 = vpack.c.bf16 %v1372, %v1371
  %v1604 = vpack.c.bf16 %v1374, %v1373
  %v1605 = vpack.c.bf16 %v1376, %v1375
  %v1606 = vpack.c.bf16 %v1378, %v1377
  %v1607 = vpack.c.bf16 %v1380, %v1379
  %v1608 = vpack.c.bf16 %v1382, %v1381
  %v1609 = vpack.c.bf16 %v1384, %v1383
  %v1610 = vpack.c.bf16 %v1386, %v1385
  %v1611 = vpack.c.bf16 %v1388, %v1387
  %v1612 = vpack.c.bf16 %v1390, %v1389
  %v1613 = vpack.c.bf16 %v1392, %v1391
  %v1614 = vpack.c.bf16 %v1394, %v1393
  %v1615 = vpack.c.bf16 %v1396, %v1395
  %v1616 = vpack.c.bf16 %v1398, %v1397
  %v1617 = vpack.c.bf16 %v1400, %v1399
  %v1618 = vpack.c.bf16 %v1402, %v1401
  %v1619 = vpack.c.bf16 %v1404, %v1403
  %v1620 = vpack.c.bf16 %v1406, %v1405
  %v1621 = vpack.c.bf16 %v1408, %v1407
  %v1622 = vpack.c.bf16 %v1410, %v1409
  %v1623 = vpack.c.bf16 %v1412, %v1411
  %v1624 = vpack.c.bf16 %v1414, %v1413
  %v1625 = vpack.c.bf16 %v1416, %v1415
  %v1626 = vpack.c.bf16 %v1418, %v1417
  %v1627 = vpack.c.bf16 %v1420, %v1419
  %v1628 = vpack.c.bf16 %v1422, %v1421
  %v1629 = vpack.c.bf16 %v1424, %v1423
  %v1630 = vpack.c.bf16 %v1426, %v1425
  %v1631 = vpack.c.bf16 %v1428, %v1427
  %v1632 = vpack.c.bf16 %v1430, %v1429
  %v1633 = vpack.c.bf16 %v1432, %v1431
  %v1634 = vpack.c.bf16 %v1434, %v1433
  %v1635 = vpack.c.bf16 %v1436, %v1435
  %v1636 = vpack.c.bf16 %v1438, %v1437
  %v1637 = vpack.c.bf16 %v1440, %v1439
  %v1638 = vpack.c.bf16 %v1442, %v1441
  %v1639 = vpack.c.bf16 %v1444, %v1443
  %v1640 = vpack.c.bf16 %v1446, %v1445
  %v1641 = vpack.c.bf16 %v1448, %v1447
  %v1642 = vpack.c.bf16 %v1450, %v1449
  %v1643 = vpack.c.bf16 %v1452, %v1451
  %v1644 = vpack.c.bf16 %v1454, %v1453
  %v1645 = vpack.c.bf16 %v1456, %v1455
  %v1646 = vpack.c.bf16 %v1458, %v1457
  %v1647 = vpack.c.bf16 %v1460, %v1459
  %v1648 = vpack.c.bf16 %v1462, %v1461
  %v1649 = vpack.c.bf16 %v1464, %v1463
  %v1650 = vpack.c.bf16 %v1466, %v1465
  %v1651 = vpack.c.bf16 %v1468, %v1467
  %v1652 = vpack.c.bf16 %v1470, %v1469
  %v1653 = vpack.c.bf16 %v1472, %v1471
  %v1654 = vpack.c.bf16 %v1474, %v1473
  %v1655 = vpack.c.bf16 %v1476, %v1475
  %v1656 = vpack.c.bf16 %v1478, %v1477
  %v1657 = vpack.c.bf16 %v1480, %v1479
  %v1658 = vpack.c.bf16 %v1482, %v1481
  %v1659 = vpack.c.bf16 %v1484, %v1483
  %v1660 = vpack.c.bf16 %v1486, %v1485
  %v1661 = vpack.c.bf16 %v1488, %v1487
  %v1662 = vpack.c.bf16 %v1490, %v1489
  %v1663 = vpack.c.bf16 %v1492, %v1491
  %v1664 = vpack.c.bf16 %v1494, %v1493
  %v1665 = vpack.c.bf16 %v1496, %v1495
  %v1666 = vpack.c.bf16 %v1498, %v1497
  %v1667 = vpack.c.bf16 %v1500, %v1499
  %v1668 = vpack.c.bf16 %v1502, %v1501
  %v1669 = vpack.c.bf16 %v1504, %v1503
  %v1670 = vpack.c.bf16 %v1506, %v1505
  %v1671 = vpack.c.bf16 %v1508, %v1507
  %v1672 = vpack.c.bf16 %v1510, %v1509
  %v1673 = vpack.c.bf16 %v1512, %v1511
  %v1674 = vpack.c.bf16 %v1514, %v1513
  %v1675 = vpack.c.bf16 %v1516, %v1515
  %v1676 = vpack.c.bf16 %v1518, %v1517
  %v1677 = vpack.c.bf16 %v1520, %v1519
  %v1678 = vpack.c.bf16 %v1522, %v1521
  %v1679 = vpack.c.bf16 %v1524, %v1523
  %v1680 = vpack.c.bf16 %v1526, %v1525
  %v1681 = vpack.c.bf16 %v1528, %v1527
  %v1682 = vpack.c.bf16 %v1530, %v1529
  %v1683 = vpack.c.bf16 %v1532, %v1531
  %v1684 = vpack.c.bf16 %v1534, %v1533
  %v1685 = vpack.c.bf16 %v1536, %v1535
  %v1686 = vpack.c.bf16 %v1538, %v1537
  %v1687 = vpack.c.bf16 %v1540, %v1539
  %v1688 = vpack.c.bf16 %v1542, %v1541
  %v1689 = vpack.c.bf16 %v1544, %v1543
  %v1690 = vpack.c.bf16 %v1546, %v1545
  %v1691 = vpack.c.bf16 %v1548, %v1547
  %v1692 = vpack.c.bf16 %v1550, %v1549
  %v1693 = vpack.c.bf16 %v1552, %v1551
  %v1694 = vpack.c.bf16 %v1554, %v1553
  %v1695 = vpack.c.bf16 %v1556, %v1555
  %v1696 = vpack.c.bf16 %v1558, %v1557
  %v1697 = vpack.c.bf16 %v1560, %v1559
  %v1698 = vpack.c.bf16 %v1562, %v1561
  %v1699 = vpack.c.bf16 %v1564, %v1563
  %v1700 = vpack.c.bf16 %v1566, %v1565
  %v1701 = vpack.c.bf16 %v1568, %v1567
  %v1702 = vpack.c.bf16 %v1570, %v1569
  %v1703 = vpack.c.bf16 %v1572, %v1571
  %v1704 = vpack.c.bf16 %v1574, %v1573
  %v1705 = vpack.c.bf16 %v1576, %v1575
  %v1706 = vpack.c.bf16 %v1578, %v1577
  %v1835 = vunpack.c.l.b16 %v1579
  %v1836 = vunpack.c.h.b16 %v1579
  %v1837 = vunpack.c.l.b16 %v1580
  %v1838 = vunpack.c.h.b16 %v1580
  %v1839 = vunpack.c.l.b16 %v1581
  %v1840 = vunpack.c.h.b16 %v1581
  %v1841 = vunpack.c.l.b16 %v1582
  %v1842 = vunpack.c.h.b16 %v1582
  %v1843 = vunpack.c.l.b16 %v1583
  %v1844 = vunpack.c.h.b16 %v1583
  %v1845 = vunpack.c.l.b16 %v1584
  %v1846 = vunpack.c.h.b16 %v1584
  %v1847 = vunpack.c.l.b16 %v1585
  %v1848 = vunpack.c.h.b16 %v1585
  %v1849 = vunpack.c.l.b16 %v1586
  %v1850 = vunpack.c.h.b16 %v1586
  %v1851 = vunpack.c.l.b16 %v1587
  %v1852 = vunpack.c.h.b16 %v1587
  %v1853 = vunpack.c.l.b16 %v1588
  %v1854 = vunpack.c.h.b16 %v1588
  %v1855 = vunpack.c.l.b16 %v1589
  %v1856 = vunpack.c.h.b16 %v1589
  %v1857 = vunpack.c.l.b16 %v1590
  %v1858 = vunpack.c.h.b16 %v1590
  %v1859 = vunpack.c.l.b16 %v1591
  %v1860 = vunpack.c.h.b16 %v1591
  %v1861 = vunpack.c.l.b16 %v1592
  %v1862 = vunpack.c.h.b16 %v1592
  %v1863 = vunpack.c.l.b16 %v1593
  %v1864 = vunpack.c.h.b16 %v1593
  %v1865 = vunpack.c.l.b16 %v1594
  %v1866 = vunpack.c.h.b16 %v1594
  %v1867 = vunpack.c.l.b16 %v1595
  %v1868 = vunpack.c.h.b16 %v1595
  %v1869 = vunpack.c.l.b16 %v1596
  %v1870 = vunpack.c.h.b16 %v1596
  %v1871 = vunpack.c.l.b16 %v1597
  %v1872 = vunpack.c.h.b16 %v1597
  %v1873 = vunpack.c.l.b16 %v1598
  %v1874 = vunpack.c.h.b16 %v1598
  %v1875 = vunpack.c.l.b16 %v1599
  %v1876 = vunpack.c.h.b16 %v1599
  %v1877 = vunpack.c.l.b16 %v1600
  %v1878 = vunpack.c.h.b16 %v1600
  %v1879 = vunpack.c.l.b16 %v1601
  %v1880 = vunpack.c.h.b16 %v1601
  %v1881 = vunpack.c.l.b16 %v1602
  %v1882 = vunpack.c.h.b16 %v1602
  %v1883 = vunpack.c.l.b16 %v1603
  %v1884 = vunpack.c.h.b16 %v1603
  %v1885 = vunpack.c.l.b16 %v1604
  %v1886 = vunpack.c.h.b16 %v1604
  %v1887 = vunpack.c.l.b16 %v1605
  %v1888 = vunpack.c.h.b16 %v1605
  %v1889 = vunpack.c.l.b16 %v1606
  %v1890 = vunpack.c.h.b16 %v1606
  %v1891 = vunpack.c.l.b16 %v1607
  %v1892 = vunpack.c.h.b16 %v1607
  %v1893 = vunpack.c.l.b16 %v1608
  %v1894 = vunpack.c.h.b16 %v1608
  %v1895 = vunpack.c.l.b16 %v1609
  %v1896 = vunpack.c.h.b16 %v1609
  %v1897 = vunpack.c.l.b16 %v1610
  %v1898 = vunpack.c.h.b16 %v1610
  %v1899 = vunpack.c.l.b16 %v1611
  %v1900 = vunpack.c.h.b16 %v1611
  %v1901 = vunpack.c.l.b16 %v1612
  %v1902 = vunpack.c.h.b16 %v1612
  %v1903 = vunpack.c.l.b16 %v1613
  %v1904 = vunpack.c.h.b16 %v1613
  %v1905 = vunpack.c.l.b16 %v1614
  %v1906 = vunpack.c.h.b16 %v1614
  %v1907 = vunpack.c.l.b16 %v1615
  %v1908 = vunpack.c.h.b16 %v1615
  %v1909 = vunpack.c.l.b16 %v1616
  %v1910 = vunpack.c.h.b16 %v1616
  %v1911 = vunpack.c.l.b16 %v1617
  %v1912 = vunpack.c.h.b16 %v1617
  %v1913 = vunpack.c.l.b16 %v1618
  %v1914 = vunpack.c.h.b16 %v1618
  %v1915 = vunpack.c.l.b16 %v1619
  %v1916 = vunpack.c.h.b16 %v1619
  %v1917 = vunpack.c.l.b16 %v1620
  %v1918 = vunpack.c.h.b16 %v1620
  %v1919 = vunpack.c.l.b16 %v1621
  %v1920 = vunpack.c.h.b16 %v1621
  %v1921 = vunpack.c.l.b16 %v1622
  %v1922 = vunpack.c.h.b16 %v1622
  %v1923 = vunpack.c.l.b16 %v1623
  %v1924 = vunpack.c.h.b16 %v1623
  %v1925 = vunpack.c.l.b16 %v1624
  %v1926 = vunpack.c.h.b16 %v1624
  %v1927 = vunpack.c.l.b16 %v1625
  %v1928 = vunpack.c.h.b16 %v1625
  %v1929 = vunpack.c.l.b16 %v1626
  %v1930 = vunpack.c.h.b16 %v1626
  %v1931 = vunpack.c.l.b16 %v1627
  %v1932 = vunpack.c.h.b16 %v1627
  %v1933 = vunpack.c.l.b16 %v1628
  %v1934 = vunpack.c.h.b16 %v1628
  %v1935 = vunpack.c.l.b16 %v1629
  %v1936 = vunpack.c.h.b16 %v1629
  %v1937 = vunpack.c.l.b16 %v1630
  %v1938 = vunpack.c.h.b16 %v1630
  %v1939 = vunpack.c.l.b16 %v1631
  %v1940 = vunpack.c.h.b16 %v1631
  %v1941 = vunpack.c.l.b16 %v1632
  %v1942 = vunpack.c.h.b16 %v1632
  %v1943 = vunpack.c.l.b16 %v1633
  %v1944 = vunpack.c.h.b16 %v1633
  %v1945 = vunpack.c.l.b16 %v1634
  %v1946 = vunpack.c.h.b16 %v1634
  %v1947 = vunpack.c.l.b16 %v1635
  %v1948 = vunpack.c.h.b16 %v1635
  %v1949 = vunpack.c.l.b16 %v1636
  %v1950 = vunpack.c.h.b16 %v1636
  %v1951 = vunpack.c.l.b16 %v1637
  %v1952 = vunpack.c.h.b16 %v1637
  %v1953 = vunpack.c.l.b16 %v1638
  %v1954 = vunpack.c.h.b16 %v1638
  %v1955 = vunpack.c.l.b16 %v1639
  %v1956 = vunpack.c.h.b16 %v1639
  %v1957 = vunpack.c.l.b16 %v1640
  %v1958 = vunpack.c.h.b16 %v1640
  %v1959 = vunpack.c.l.b16 %v1641
  %v1960 = vunpack.c.h.b16 %v1641
  %v1961 = vunpack.c.l.b16 %v1642
  %v1962 = vunpack.c.h.b16 %v1642
  %v1963 = vunpack.c.l.b16 %v1643
  %v1964 = vunpack.c.h.b16 %v1643
  %v1965 = vunpack.c.l.b16 %v1644
  %v1966 = vunpack.c.h.b16 %v1644
  %v1967 = vunpack.c.l.b16 %v1645
  %v1968 = vunpack.c.h.b16 %v1645
  %v1969 = vunpack.c.l.b16 %v1646
  %v1970 = vunpack.c.h.b16 %v1646
  %v1971 = vunpack.c.l.b16 %v1647
  %v1972 = vunpack.c.h.b16 %v1647
  %v1973 = vunpack.c.l.b16 %v1648
  %v1974 = vunpack.c.h.b16 %v1648
  %v1975 = vunpack.c.l.b16 %v1649
  %v1976 = vunpack.c.h.b16 %v1649
  %v1977 = vunpack.c.l.b16 %v1650
  %v1978 = vunpack.c.h.b16 %v1650
  %v1979 = vunpack.c.l.b16 %v1651
  %v1980 = vunpack.c.h.b16 %v1651
  %v1981 = vunpack.c.l.b16 %v1652
  %v1982 = vunpack.c.h.b16 %v1652
  %v1983 = vunpack.c.l.b16 %v1653
  %v1984 = vunpack.c.h.b16 %v1653
  %v1985 = vunpack.c.l.b16 %v1654
  %v1986 = vunpack.c.h.b16 %v1654
  %v1987 = vunpack.c.l.b16 %v1655
  %v1988 = vunpack.c.h.b16 %v1655
  %v1989 = vunpack.c.l.b16 %v1656
  %v1990 = vunpack.c.h.b16 %v1656
  %v1991 = vunpack.c.l.b16 %v1657
  %v1992 = vunpack.c.h.b16 %v1657
  %v1993 = vunpack.c.l.b16 %v1658
  %v1994 = vunpack.c.h.b16 %v1658
  %v1995 = vunpack.c.l.b16 %v1659
  %v1996 = vunpack.c.h.b16 %v1659
  %v1997 = vunpack.c.l.b16 %v1660
  %v1998 = vunpack.c.h.b16 %v1660
  %v1999 = vunpack.c.l.b16 %v1661
  %v2000 = vunpack.c.h.b16 %v1661
  %v2001 = vunpack.c.l.b16 %v1662
  %v2002 = vunpack.c.h.b16 %v1662
  %v2003 = vunpack.c.l.b16 %v1663
  %v2004 = vunpack.c.h.b16 %v1663
  %v2005 = vunpack.c.l.b16 %v1664
  %v2006 = vunpack.c.h.b16 %v1664
  %v2007 = vunpack.c.l.b16 %v1665
  %v2008 = vunpack.c.h.b16 %v1665
  %v2009 = vunpack.c.l.b16 %v1666
  %v2010 = vunpack.c.h.b16 %v1666
  %v2011 = vunpack.c.l.b16 %v1667
  %v2012 = vunpack.c.h.b16 %v1667
  %v2013 = vunpack.c.l.b16 %v1668
  %v2014 = vunpack.c.h.b16 %v1668
  %v2015 = vunpack.c.l.b16 %v1669
  %v2016 = vunpack.c.h.b16 %v1669
  %v2017 = vunpack.c.l.b16 %v1670
  %v2018 = vunpack.c.h.b16 %v1670
  %v2019 = vunpack.c.l.b16 %v1671
  %v2020 = vunpack.c.h.b16 %v1671
  %v2021 = vunpack.c.l.b16 %v1672
  %v2022 = vunpack.c.h.b16 %v1672
  %v2023 = vunpack.c.l.b16 %v1673
  %v2024 = vunpack.c.h.b16 %v1673
  %v2025 = vunpack.c.l.b16 %v1674
  %v2026 = vunpack.c.h.b16 %v1674
  %v2027 = vunpack.c.l.b16 %v1675
  %v2028 = vunpack.c.h.b16 %v1675
  %v2029 = vunpack.c.l.b16 %v1676
  %v2030 = vunpack.c.h.b16 %v1676
  %v2031 = vunpack.c.l.b16 %v1677
  %v2032 = vunpack.c.h.b16 %v1677
  %v2033 = vunpack.c.l.b16 %v1678
  %v2034 = vunpack.c.h.b16 %v1678
  %v2035 = vunpack.c.l.b16 %v1679
  %v2036 = vunpack.c.h.b16 %v1679
  %v2037 = vunpack.c.l.b16 %v1680
  %v2038 = vunpack.c.h.b16 %v1680
  %v2039 = vunpack.c.l.b16 %v1681
  %v2040 = vunpack.c.h.b16 %v1681
  %v2041 = vunpack.c.l.b16 %v1682
  %v2042 = vunpack.c.h.b16 %v1682
  %v2043 = vunpack.c.l.b16 %v1683
  %v2044 = vunpack.c.h.b16 %v1683
  %v2045 = vunpack.c.l.b16 %v1684
  %v2046 = vunpack.c.h.b16 %v1684
  %v2047 = vunpack.c.l.b16 %v1685
  %v2048 = vunpack.c.h.b16 %v1685
  %v2049 = vunpack.c.l.b16 %v1686
  %v2050 = vunpack.c.h.b16 %v1686
  %v2051 = vunpack.c.l.b16 %v1687
  %v2052 = vunpack.c.h.b16 %v1687
  %v2053 = vunpack.c.l.b16 %v1688
  %v2054 = vunpack.c.h.b16 %v1688
  %v2055 = vunpack.c.l.b16 %v1689
  %v2056 = vunpack.c.h.b16 %v1689
  %v2057 = vunpack.c.l.b16 %v1690
  %v2058 = vunpack.c.h.b16 %v1690
  %v2059 = vunpack.c.l.b16 %v1691
  %v2060 = vunpack.c.h.b16 %v1691
  %v2061 = vunpack.c.l.b16 %v1692
  %v2062 = vunpack.c.h.b16 %v1692
  %v2063 = vunpack.c.l.b16 %v1693
  %v2064 = vunpack.c.h.b16 %v1693
  %v2065 = vunpack.c.l.b16 %v1694
  %v2066 = vunpack.c.h.b16 %v1694
  %v2067 = vunpack.c.l.b16 %v1695
  %v2068 = vunpack.c.h.b16 %v1695
  %v2069 = vunpack.c.l.b16 %v1696
  %v2070 = vunpack.c.h.b16 %v1696
  %v2071 = vunpack.c.l.b16 %v1697
  %v2072 = vunpack.c.h.b16 %v1697
  %v2073 = vunpack.c.l.b16 %v1698
  %v2074 = vunpack.c.h.b16 %v1698
  %v2075 = vunpack.c.l.b16 %v1699
  %v2076 = vunpack.c.h.b16 %v1699
  %v2077 = vunpack.c.l.b16 %v1700
  %v2078 = vunpack.c.h.b16 %v1700
  %v2079 = vunpack.c.l.b16 %v1701
  %v2080 = vunpack.c.h.b16 %v1701
  %v2081 = vunpack.c.l.b16 %v1702
  %v2082 = vunpack.c.h.b16 %v1702
  %v2083 = vunpack.c.l.b16 %v1703
  %v2084 = vunpack.c.h.b16 %v1703
  %v2085 = vunpack.c.l.b16 %v1704
  %v2086 = vunpack.c.h.b16 %v1704
  %v2087 = vunpack.c.l.b16 %v1705
  %v2088 = vunpack.c.h.b16 %v1705
  %v2089 = vunpack.c.l.b16 %v1706
  %v2090 = vunpack.c.h.b16 %v1706
  %v2091 = vpack.c.b16 %v1835, %v1835
  %v2092 = vpack.c.b16 %v1836, %v1836
  %v2093 = vpack.c.b16 %v1837, %v1837
  %v2094 = vpack.c.b16 %v1838, %v1838
  %v2095 = vpack.c.b16 %v1839, %v1839
  %v2096 = vpack.c.b16 %v1840, %v1840
  %v2097 = vpack.c.b16 %v1841, %v1841
  %v2098 = vpack.c.b16 %v1842, %v1842
  %v2099 = vpack.c.b16 %v1843, %v1843
  %v2100 = vpack.c.b16 %v1844, %v1844
  %v2101 = vpack.c.b16 %v1845, %v1845
  %v2102 = vpack.c.b16 %v1846, %v1846
  %v2103 = vpack.c.b16 %v1847, %v1847
  %v2104 = vpack.c.b16 %v1848, %v1848
  %v2105 = vpack.c.b16 %v1849, %v1849
  %v2106 = vpack.c.b16 %v1850, %v1850
  %v2107 = vpack.c.b16 %v1851, %v1851
  %v2108 = vpack.c.b16 %v1852, %v1852
  %v2109 = vpack.c.b16 %v1853, %v1853
  %v2110 = vpack.c.b16 %v1854, %v1854
  %v2111 = vpack.c.b16 %v1855, %v1855
  %v2112 = vpack.c.b16 %v1856, %v1856
  %v2113 = vpack.c.b16 %v1857, %v1857
  %v2114 = vpack.c.b16 %v1858, %v1858
  %v2115 = vpack.c.b16 %v1859, %v1859
  %v2116 = vpack.c.b16 %v1860, %v1860
  %v2117 = vpack.c.b16 %v1861, %v1861
  %v2118 = vpack.c.b16 %v1862, %v1862
  %v2119 = vpack.c.b16 %v1863, %v1863
  %v2120 = vpack.c.b16 %v1864, %v1864
  %v2121 = vpack.c.b16 %v1865, %v1865
  %v2122 = vpack.c.b16 %v1866, %v1866
  %v2123 = vpack.c.b16 %v1867, %v1867
  %v2124 = vpack.c.b16 %v1868, %v1868
  %v2125 = vpack.c.b16 %v1869, %v1869
  %v2126 = vpack.c.b16 %v1870, %v1870
  %v2127 = vpack.c.b16 %v1871, %v1871
  %v2128 = vpack.c.b16 %v1872, %v1872
  %v2129 = vpack.c.b16 %v1873, %v1873
  %v2130 = vpack.c.b16 %v1874, %v1874
  %v2131 = vpack.c.b16 %v1875, %v1875
  %v2132 = vpack.c.b16 %v1876, %v1876
  %v2133 = vpack.c.b16 %v1877, %v1877
  %v2134 = vpack.c.b16 %v1878, %v1878
  %v2135 = vpack.c.b16 %v1879, %v1879
  %v2136 = vpack.c.b16 %v1880, %v1880
  %v2137 = vpack.c.b16 %v1881, %v1881
  %v2138 = vpack.c.b16 %v1882, %v1882
  %v2139 = vpack.c.b16 %v1883, %v1883
  %v2140 = vpack.c.b16 %v1884, %v1884
  %v2141 = vpack.c.b16 %v1885, %v1885
  %v2142 = vpack.c.b16 %v1886, %v1886
  %v2143 = vpack.c.b16 %v1887, %v1887
  %v2144 = vpack.c.b16 %v1888, %v1888
  %v2145 = vpack.c.b16 %v1889, %v1889
  %v2146 = vpack.c.b16 %v1890, %v1890
  %v2147 = vpack.c.b16 %v1891, %v1891
  %v2148 = vpack.c.b16 %v1892, %v1892
  %v2149 = vpack.c.b16 %v1893, %v1893
  %v2150 = vpack.c.b16 %v1894, %v1894
  %v2151 = vpack.c.b16 %v1895, %v1895
  %v2152 = vpack.c.b16 %v1896, %v1896
  %v2153 = vpack.c.b16 %v1897, %v1897
  %v2154 = vpack.c.b16 %v1898, %v1898
  %v2155 = vpack.c.b16 %v1899, %v1899
  %v2156 = vpack.c.b16 %v1900, %v1900
  %v2157 = vpack.c.b16 %v1901, %v1901
  %v2158 = vpack.c.b16 %v1902, %v1902
  %v2159 = vpack.c.b16 %v1903, %v1903
  %v2160 = vpack.c.b16 %v1904, %v1904
  %v2161 = vpack.c.b16 %v1905, %v1905
  %v2162 = vpack.c.b16 %v1906, %v1906
  %v2163 = vpack.c.b16 %v1907, %v1907
  %v2164 = vpack.c.b16 %v1908, %v1908
  %v2165 = vpack.c.b16 %v1909, %v1909
  %v2166 = vpack.c.b16 %v1910, %v1910
  %v2167 = vpack.c.b16 %v1911, %v1911
  %v2168 = vpack.c.b16 %v1912, %v1912
  %v2169 = vpack.c.b16 %v1913, %v1913
  %v2170 = vpack.c.b16 %v1914, %v1914
  %v2171 = vpack.c.b16 %v1915, %v1915
  %v2172 = vpack.c.b16 %v1916, %v1916
  %v2173 = vpack.c.b16 %v1917, %v1917
  %v2174 = vpack.c.b16 %v1918, %v1918
  %v2175 = vpack.c.b16 %v1919, %v1919
  %v2176 = vpack.c.b16 %v1920, %v1920
  %v2177 = vpack.c.b16 %v1921, %v1921
  %v2178 = vpack.c.b16 %v1922, %v1922
  %v2179 = vpack.c.b16 %v1923, %v1923
  %v2180 = vpack.c.b16 %v1924, %v1924
  %v2181 = vpack.c.b16 %v1925, %v1925
  %v2182 = vpack.c.b16 %v1926, %v1926
  %v2183 = vpack.c.b16 %v1927, %v1927
  %v2184 = vpack.c.b16 %v1928, %v1928
  %v2185 = vpack.c.b16 %v1929, %v1929
  %v2186 = vpack.c.b16 %v1930, %v1930
  %v2187 = vpack.c.b16 %v1931, %v1931
  %v2188 = vpack.c.b16 %v1932, %v1932
  %v2189 = vpack.c.b16 %v1933, %v1933
  %v2190 = vpack.c.b16 %v1934, %v1934
  %v2191 = vpack.c.b16 %v1935, %v1935
  %v2192 = vpack.c.b16 %v1936, %v1936
  %v2193 = vpack.c.b16 %v1937, %v1937
  %v2194 = vpack.c.b16 %v1938, %v1938
  %v2195 = vpack.c.b16 %v1939, %v1939
  %v2196 = vpack.c.b16 %v1940, %v1940
  %v2197 = vpack.c.b16 %v1941, %v1941
  %v2198 = vpack.c.b16 %v1942, %v1942
  %v2199 = vpack.c.b16 %v1943, %v1943
  %v2200 = vpack.c.b16 %v1944, %v1944
  %v2201 = vpack.c.b16 %v1945, %v1945
  %v2202 = vpack.c.b16 %v1946, %v1946
  %v2203 = vpack.c.b16 %v1947, %v1947
  %v2204 = vpack.c.b16 %v1948, %v1948
  %v2205 = vpack.c.b16 %v1949, %v1949
  %v2206 = vpack.c.b16 %v1950, %v1950
  %v2207 = vpack.c.b16 %v1951, %v1951
  %v2208 = vpack.c.b16 %v1952, %v1952
  %v2209 = vpack.c.b16 %v1953, %v1953
  %v2210 = vpack.c.b16 %v1954, %v1954
  %v2211 = vpack.c.b16 %v1955, %v1955
  %v2212 = vpack.c.b16 %v1956, %v1956
  %v2213 = vpack.c.b16 %v1957, %v1957
  %v2214 = vpack.c.b16 %v1958, %v1958
  %v2215 = vpack.c.b16 %v1959, %v1959
  %v2216 = vpack.c.b16 %v1960, %v1960
  %v2217 = vpack.c.b16 %v1961, %v1961
  %v2218 = vpack.c.b16 %v1962, %v1962
  %v2219 = vpack.c.b16 %v1963, %v1963
  %v2220 = vpack.c.b16 %v1964, %v1964
  %v2221 = vpack.c.b16 %v1965, %v1965
  %v2222 = vpack.c.b16 %v1966, %v1966
  %v2223 = vpack.c.b16 %v1967, %v1967
  %v2224 = vpack.c.b16 %v1968, %v1968
  %v2225 = vpack.c.b16 %v1969, %v1969
  %v2226 = vpack.c.b16 %v1970, %v1970
  %v2227 = vpack.c.b16 %v1971, %v1971
  %v2228 = vpack.c.b16 %v1972, %v1972
  %v2229 = vpack.c.b16 %v1973, %v1973
  %v2230 = vpack.c.b16 %v1974, %v1974
  %v2231 = vpack.c.b16 %v1975, %v1975
  %v2232 = vpack.c.b16 %v1976, %v1976
  %v2233 = vpack.c.b16 %v1977, %v1977
  %v2234 = vpack.c.b16 %v1978, %v1978
  %v2235 = vpack.c.b16 %v1979, %v1979
  %v2236 = vpack.c.b16 %v1980, %v1980
  %v2237 = vpack.c.b16 %v1981, %v1981
  %v2238 = vpack.c.b16 %v1982, %v1982
  %v2239 = vpack.c.b16 %v1983, %v1983
  %v2240 = vpack.c.b16 %v1984, %v1984
  %v2241 = vpack.c.b16 %v1985, %v1985
  %v2242 = vpack.c.b16 %v1986, %v1986
  %v2243 = vpack.c.b16 %v1987, %v1987
  %v2244 = vpack.c.b16 %v1988, %v1988
  %v2245 = vpack.c.b16 %v1989, %v1989
  %v2246 = vpack.c.b16 %v1990, %v1990
  %v2247 = vpack.c.b16 %v1991, %v1991
  %v2248 = vpack.c.b16 %v1992, %v1992
  %v2249 = vpack.c.b16 %v1993, %v1993
  %v2250 = vpack.c.b16 %v1994, %v1994
  %v2251 = vpack.c.b16 %v1995, %v1995
  %v2252 = vpack.c.b16 %v1996, %v1996
  %v2253 = vpack.c.b16 %v1997, %v1997
  %v2254 = vpack.c.b16 %v1998, %v1998
  %v2255 = vpack.c.b16 %v1999, %v1999
  %v2256 = vpack.c.b16 %v2000, %v2000
  %v2257 = vpack.c.b16 %v2001, %v2001
  %v2258 = vpack.c.b16 %v2002, %v2002
  %v2259 = vpack.c.b16 %v2003, %v2003
  %v2260 = vpack.c.b16 %v2004, %v2004
  %v2261 = vpack.c.b16 %v2005, %v2005
  %v2262 = vpack.c.b16 %v2006, %v2006
  %v2263 = vpack.c.b16 %v2007, %v2007
  %v2264 = vpack.c.b16 %v2008, %v2008
  %v2265 = vpack.c.b16 %v2009, %v2009
  %v2266 = vpack.c.b16 %v2010, %v2010
  %v2267 = vpack.c.b16 %v2011, %v2011
  %v2268 = vpack.c.b16 %v2012, %v2012
  %v2269 = vpack.c.b16 %v2013, %v2013
  %v2270 = vpack.c.b16 %v2014, %v2014
  %v2271 = vpack.c.b16 %v2015, %v2015
  %v2272 = vpack.c.b16 %v2016, %v2016
  %v2273 = vpack.c.b16 %v2017, %v2017
  %v2274 = vpack.c.b16 %v2018, %v2018
  %v2275 = vpack.c.b16 %v2019, %v2019
  %v2276 = vpack.c.b16 %v2020, %v2020
  %v2277 = vpack.c.b16 %v2021, %v2021
  %v2278 = vpack.c.b16 %v2022, %v2022
  %v2279 = vpack.c.b16 %v2023, %v2023
  %v2280 = vpack.c.b16 %v2024, %v2024
  %v2281 = vpack.c.b16 %v2025, %v2025
  %v2282 = vpack.c.b16 %v2026, %v2026
  %v2283 = vpack.c.b16 %v2027, %v2027
  %v2284 = vpack.c.b16 %v2028, %v2028
  %v2285 = vpack.c.b16 %v2029, %v2029
  %v2286 = vpack.c.b16 %v2030, %v2030
  %v2287 = vpack.c.b16 %v2031, %v2031
  %v2288 = vpack.c.b16 %v2032, %v2032
  %v2289 = vpack.c.b16 %v2033, %v2033
  %v2290 = vpack.c.b16 %v2034, %v2034
  %v2291 = vpack.c.b16 %v2035, %v2035
  %v2292 = vpack.c.b16 %v2036, %v2036
  %v2293 = vpack.c.b16 %v2037, %v2037
  %v2294 = vpack.c.b16 %v2038, %v2038
  %v2295 = vpack.c.b16 %v2039, %v2039
  %v2296 = vpack.c.b16 %v2040, %v2040
  %v2297 = vpack.c.b16 %v2041, %v2041
  %v2298 = vpack.c.b16 %v2042, %v2042
  %v2299 = vpack.c.b16 %v2043, %v2043
  %v2300 = vpack.c.b16 %v2044, %v2044
  %v2301 = vpack.c.b16 %v2045, %v2045
  %v2302 = vpack.c.b16 %v2046, %v2046
  %v2303 = vpack.c.b16 %v2047, %v2047
  %v2304 = vpack.c.b16 %v2048, %v2048
  %v2305 = vpack.c.b16 %v2049, %v2049
  %v2306 = vpack.c.b16 %v2050, %v2050
  %v2307 = vpack.c.b16 %v2051, %v2051
  %v2308 = vpack.c.b16 %v2052, %v2052
  %v2309 = vpack.c.b16 %v2053, %v2053
  %v2310 = vpack.c.b16 %v2054, %v2054
  %v2311 = vpack.c.b16 %v2055, %v2055
  %v2312 = vpack.c.b16 %v2056, %v2056
  %v2313 = vpack.c.b16 %v2057, %v2057
  %v2314 = vpack.c.b16 %v2058, %v2058
  %v2315 = vpack.c.b16 %v2059, %v2059
  %v2316 = vpack.c.b16 %v2060, %v2060
  %v2317 = vpack.c.b16 %v2061, %v2061
  %v2318 = vpack.c.b16 %v2062, %v2062
  %v2319 = vpack.c.b16 %v2063, %v2063
  %v2320 = vpack.c.b16 %v2064, %v2064
  %v2321 = vpack.c.b16 %v2065, %v2065
  %v2322 = vpack.c.b16 %v2066, %v2066
  %v2323 = vpack.c.b16 %v2067, %v2067
  %v2324 = vpack.c.b16 %v2068, %v2068
  %v2325 = vpack.c.b16 %v2069, %v2069
  %v2326 = vpack.c.b16 %v2070, %v2070
  %v2327 = vpack.c.b16 %v2071, %v2071
  %v2328 = vpack.c.b16 %v2072, %v2072
  %v2329 = vpack.c.b16 %v2073, %v2073
  %v2330 = vpack.c.b16 %v2074, %v2074
  %v2331 = vpack.c.b16 %v2075, %v2075
  %v2332 = vpack.c.b16 %v2076, %v2076
  %v2333 = vpack.c.b16 %v2077, %v2077
  %v2334 = vpack.c.b16 %v2078, %v2078
  %v2335 = vpack.c.b16 %v2079, %v2079
  %v2336 = vpack.c.b16 %v2080, %v2080
  %v2337 = vpack.c.b16 %v2081, %v2081
  %v2338 = vpack.c.b16 %v2082, %v2082
  %v2339 = vpack.c.b16 %v2083, %v2083
  %v2340 = vpack.c.b16 %v2084, %v2084
  %v2341 = vpack.c.b16 %v2085, %v2085
  %v2342 = vpack.c.b16 %v2086, %v2086
  %v2343 = vpack.c.b16 %v2087, %v2087
  %v2344 = vpack.c.b16 %v2088, %v2088
  %v2345 = vpack.c.b16 %v2089, %v2089
  %v2346 = vpack.c.b16 %v2090, %v2090
  %vm2603 = vcmask 60416
  %2604 = vst.msk [vmem:[%s5] sm:$0xf] %vm2603, %v2091
  %2605 = vst.msk [vmem:[%s5 + $0x4] sm:$0xf] %vm2603, %v2092
  %2606 = vst.msk [vmem:[%s5 + $0x8] sm:$0xf] %vm2603, %v2093
  %2607 = vst.msk [vmem:[%s5 + $0xc] sm:$0xf] %vm2603, %v2094
  %2608 = vst.msk [vmem:[%s5 + $0x10] sm:$0xf] %vm2603, %v2095
  %2609 = vst.msk [vmem:[%s5 + $0x14] sm:$0xf] %vm2603, %v2096
  %2610 = vst.msk [vmem:[%s5 + $0x18] sm:$0xf] %vm2603, %v2097
  %2611 = vst.msk [vmem:[%s5 + $0x1c] sm:$0xf] %vm2603, %v2098
  %2612 = vst.msk [vmem:[%s5 + $0x20] sm:$0xf] %vm2603, %v2099
  %2613 = vst.msk [vmem:[%s5 + $0x24] sm:$0xf] %vm2603, %v2100
  %2614 = vst.msk [vmem:[%s5 + $0x28] sm:$0xf] %vm2603, %v2101
  %2615 = vst.msk [vmem:[%s5 + $0x2c] sm:$0xf] %vm2603, %v2102
  %2616 = vst.msk [vmem:[%s5 + $0x30] sm:$0xf] %vm2603, %v2103
  %2617 = vst.msk [vmem:[%s5 + $0x34] sm:$0xf] %vm2603, %v2104
  %2618 = vst.msk [vmem:[%s5 + $0x38] sm:$0xf] %vm2603, %v2105
  %2619 = vst.msk [vmem:[%s5 + $0x3c] sm:$0xf] %vm2603, %v2106
  %2620 = vst.msk [vmem:[%s5 + $0x40] sm:$0xf] %vm2603, %v2107
  %2621 = vst.msk [vmem:[%s5 + $0x44] sm:$0xf] %vm2603, %v2108
  %2622 = vst.msk [vmem:[%s5 + $0x48] sm:$0xf] %vm2603, %v2109
  %2623 = vst.msk [vmem:[%s5 + $0x4c] sm:$0xf] %vm2603, %v2110
  %2624 = vst.msk [vmem:[%s5 + $0x50] sm:$0xf] %vm2603, %v2111
  %2625 = vst.msk [vmem:[%s5 + $0x54] sm:$0xf] %vm2603, %v2112
  %2626 = vst.msk [vmem:[%s5 + $0x58] sm:$0xf] %vm2603, %v2113
  %2627 = vst.msk [vmem:[%s5 + $0x5c] sm:$0xf] %vm2603, %v2114
  %2628 = vst.msk [vmem:[%s5 + $0x60] sm:$0xf] %vm2603, %v2115
  %2629 = vst.msk [vmem:[%s5 + $0x64] sm:$0xf] %vm2603, %v2116
  %2630 = vst.msk [vmem:[%s5 + $0x68] sm:$0xf] %vm2603, %v2117
  %2631 = vst.msk [vmem:[%s5 + $0x6c] sm:$0xf] %vm2603, %v2118
  %2632 = vst.msk [vmem:[%s5 + $0x70] sm:$0xf] %vm2603, %v2119
  %2633 = vst.msk [vmem:[%s5 + $0x74] sm:$0xf] %vm2603, %v2120
  %2634 = vst.msk [vmem:[%s5 + $0x78] sm:$0xf] %vm2603, %v2121
  %2635 = vst.msk [vmem:[%s5 + $0x7c] sm:$0xf] %vm2603, %v2122
  %2636 = vst.msk [vmem:[%s5 + $0x80] sm:$0xf] %vm2603, %v2123
  %2637 = vst.msk [vmem:[%s5 + $0x84] sm:$0xf] %vm2603, %v2124
  %2638 = vst.msk [vmem:[%s5 + $0x88] sm:$0xf] %vm2603, %v2125
  %2639 = vst.msk [vmem:[%s5 + $0x8c] sm:$0xf] %vm2603, %v2126
  %2640 = vst.msk [vmem:[%s5 + $0x90] sm:$0xf] %vm2603, %v2127
  %2641 = vst.msk [vmem:[%s5 + $0x94] sm:$0xf] %vm2603, %v2128
  %2642 = vst.msk [vmem:[%s5 + $0x98] sm:$0xf] %vm2603, %v2129
  %2643 = vst.msk [vmem:[%s5 + $0x9c] sm:$0xf] %vm2603, %v2130
  %2644 = vst.msk [vmem:[%s5 + $0xa0] sm:$0xf] %vm2603, %v2131
  %2645 = vst.msk [vmem:[%s5 + $0xa4] sm:$0xf] %vm2603, %v2132
  %2646 = vst.msk [vmem:[%s5 + $0xa8] sm:$0xf] %vm2603, %v2133
  %2647 = vst.msk [vmem:[%s5 + $0xac] sm:$0xf] %vm2603, %v2134
  %2648 = vst.msk [vmem:[%s5 + $0xb0] sm:$0xf] %vm2603, %v2135
  %2649 = vst.msk [vmem:[%s5 + $0xb4] sm:$0xf] %vm2603, %v2136
  %2650 = vst.msk [vmem:[%s5 + $0xb8] sm:$0xf] %vm2603, %v2137
  %2651 = vst.msk [vmem:[%s5 + $0xbc] sm:$0xf] %vm2603, %v2138
  %2652 = vst.msk [vmem:[%s5 + $0xc0] sm:$0xf] %vm2603, %v2139
  %2653 = vst.msk [vmem:[%s5 + $0xc4] sm:$0xf] %vm2603, %v2140
  %2654 = vst.msk [vmem:[%s5 + $0xc8] sm:$0xf] %vm2603, %v2141
  %2655 = vst.msk [vmem:[%s5 + $0xcc] sm:$0xf] %vm2603, %v2142
  %2656 = vst.msk [vmem:[%s5 + $0xd0] sm:$0xf] %vm2603, %v2143
  %2657 = vst.msk [vmem:[%s5 + $0xd4] sm:$0xf] %vm2603, %v2144
  %2658 = vst.msk [vmem:[%s5 + $0xd8] sm:$0xf] %vm2603, %v2145
  %2659 = vst.msk [vmem:[%s5 + $0xdc] sm:$0xf] %vm2603, %v2146
  %2660 = vst.msk [vmem:[%s5 + $0xe0] sm:$0xf] %vm2603, %v2147
  %2661 = vst.msk [vmem:[%s5 + $0xe4] sm:$0xf] %vm2603, %v2148
  %2662 = vst.msk [vmem:[%s5 + $0xe8] sm:$0xf] %vm2603, %v2149
  %2663 = vst.msk [vmem:[%s5 + $0xec] sm:$0xf] %vm2603, %v2150
  %2664 = vst.msk [vmem:[%s5 + $0xf0] sm:$0xf] %vm2603, %v2151
  %2665 = vst.msk [vmem:[%s5 + $0xf4] sm:$0xf] %vm2603, %v2152
  %2666 = vst.msk [vmem:[%s5 + $0xf8] sm:$0xf] %vm2603, %v2153
  %2667 = vst.msk [vmem:[%s5 + $0xfc] sm:$0xf] %vm2603, %v2154
  %2668 = vst.msk [vmem:[%s5 + $0x100] sm:$0xf] %vm2603, %v2155
  %2669 = vst.msk [vmem:[%s5 + $0x104] sm:$0xf] %vm2603, %v2156
  %2670 = vst.msk [vmem:[%s5 + $0x108] sm:$0xf] %vm2603, %v2157
  %2671 = vst.msk [vmem:[%s5 + $0x10c] sm:$0xf] %vm2603, %v2158
  %2672 = vst.msk [vmem:[%s5 + $0x110] sm:$0xf] %vm2603, %v2159
  %2673 = vst.msk [vmem:[%s5 + $0x114] sm:$0xf] %vm2603, %v2160
  %2674 = vst.msk [vmem:[%s5 + $0x118] sm:$0xf] %vm2603, %v2161
  %2675 = vst.msk [vmem:[%s5 + $0x11c] sm:$0xf] %vm2603, %v2162
  %2676 = vst.msk [vmem:[%s5 + $0x120] sm:$0xf] %vm2603, %v2163
  %2677 = vst.msk [vmem:[%s5 + $0x124] sm:$0xf] %vm2603, %v2164
  %2678 = vst.msk [vmem:[%s5 + $0x128] sm:$0xf] %vm2603, %v2165
  %2679 = vst.msk [vmem:[%s5 + $0x12c] sm:$0xf] %vm2603, %v2166
  %2680 = vst.msk [vmem:[%s5 + $0x130] sm:$0xf] %vm2603, %v2167
  %2681 = vst.msk [vmem:[%s5 + $0x134] sm:$0xf] %vm2603, %v2168
  %2682 = vst.msk [vmem:[%s5 + $0x138] sm:$0xf] %vm2603, %v2169
  %2683 = vst.msk [vmem:[%s5 + $0x13c] sm:$0xf] %vm2603, %v2170
  %2684 = vst.msk [vmem:[%s5 + $0x140] sm:$0xf] %vm2603, %v2171
  %2685 = vst.msk [vmem:[%s5 + $0x144] sm:$0xf] %vm2603, %v2172
  %2686 = vst.msk [vmem:[%s5 + $0x148] sm:$0xf] %vm2603, %v2173
  %2687 = vst.msk [vmem:[%s5 + $0x14c] sm:$0xf] %vm2603, %v2174
  %2688 = vst.msk [vmem:[%s5 + $0x150] sm:$0xf] %vm2603, %v2175
  %2689 = vst.msk [vmem:[%s5 + $0x154] sm:$0xf] %vm2603, %v2176
  %2690 = vst.msk [vmem:[%s5 + $0x158] sm:$0xf] %vm2603, %v2177
  %2691 = vst.msk [vmem:[%s5 + $0x15c] sm:$0xf] %vm2603, %v2178
  %2692 = vst.msk [vmem:[%s5 + $0x160] sm:$0xf] %vm2603, %v2179
  %2693 = vst.msk [vmem:[%s5 + $0x164] sm:$0xf] %vm2603, %v2180
  %2694 = vst.msk [vmem:[%s5 + $0x168] sm:$0xf] %vm2603, %v2181
  %2695 = vst.msk [vmem:[%s5 + $0x16c] sm:$0xf] %vm2603, %v2182
  %2696 = vst.msk [vmem:[%s5 + $0x170] sm:$0xf] %vm2603, %v2183
  %2697 = vst.msk [vmem:[%s5 + $0x174] sm:$0xf] %vm2603, %v2184
  %2698 = vst.msk [vmem:[%s5 + $0x178] sm:$0xf] %vm2603, %v2185
  %2699 = vst.msk [vmem:[%s5 + $0x17c] sm:$0xf] %vm2603, %v2186
  %2700 = vst.msk [vmem:[%s5 + $0x180] sm:$0xf] %vm2603, %v2187
  %2701 = vst.msk [vmem:[%s5 + $0x184] sm:$0xf] %vm2603, %v2188
  %2702 = vst.msk [vmem:[%s5 + $0x188] sm:$0xf] %vm2603, %v2189
  %2703 = vst.msk [vmem:[%s5 + $0x18c] sm:$0xf] %vm2603, %v2190
  %2704 = vst.msk [vmem:[%s5 + $0x190] sm:$0xf] %vm2603, %v2191
  %2705 = vst.msk [vmem:[%s5 + $0x194] sm:$0xf] %vm2603, %v2192
  %2706 = vst.msk [vmem:[%s5 + $0x198] sm:$0xf] %vm2603, %v2193
  %2707 = vst.msk [vmem:[%s5 + $0x19c] sm:$0xf] %vm2603, %v2194
  %2708 = vst.msk [vmem:[%s5 + $0x1a0] sm:$0xf] %vm2603, %v2195
  %2709 = vst.msk [vmem:[%s5 + $0x1a4] sm:$0xf] %vm2603, %v2196
  %2710 = vst.msk [vmem:[%s5 + $0x1a8] sm:$0xf] %vm2603, %v2197
  %2711 = vst.msk [vmem:[%s5 + $0x1ac] sm:$0xf] %vm2603, %v2198
  %2712 = vst.msk [vmem:[%s5 + $0x1b0] sm:$0xf] %vm2603, %v2199
  %2713 = vst.msk [vmem:[%s5 + $0x1b4] sm:$0xf] %vm2603, %v2200
  %2714 = vst.msk [vmem:[%s5 + $0x1b8] sm:$0xf] %vm2603, %v2201
  %2715 = vst.msk [vmem:[%s5 + $0x1bc] sm:$0xf] %vm2603, %v2202
  %2716 = vst.msk [vmem:[%s5 + $0x1c0] sm:$0xf] %vm2603, %v2203
  %2717 = vst.msk [vmem:[%s5 + $0x1c4] sm:$0xf] %vm2603, %v2204
  %2718 = vst.msk [vmem:[%s5 + $0x1c8] sm:$0xf] %vm2603, %v2205
  %2719 = vst.msk [vmem:[%s5 + $0x1cc] sm:$0xf] %vm2603, %v2206
  %2720 = vst.msk [vmem:[%s5 + $0x1d0] sm:$0xf] %vm2603, %v2207
  %2721 = vst.msk [vmem:[%s5 + $0x1d4] sm:$0xf] %vm2603, %v2208
  %2722 = vst.msk [vmem:[%s5 + $0x1d8] sm:$0xf] %vm2603, %v2209
  %2723 = vst.msk [vmem:[%s5 + $0x1dc] sm:$0xf] %vm2603, %v2210
  %2724 = vst.msk [vmem:[%s5 + $0x1e0] sm:$0xf] %vm2603, %v2211
  %2725 = vst.msk [vmem:[%s5 + $0x1e4] sm:$0xf] %vm2603, %v2212
  %2726 = vst.msk [vmem:[%s5 + $0x1e8] sm:$0xf] %vm2603, %v2213
  %2727 = vst.msk [vmem:[%s5 + $0x1ec] sm:$0xf] %vm2603, %v2214
  %2728 = vst.msk [vmem:[%s5 + $0x1f0] sm:$0xf] %vm2603, %v2215
  %2729 = vst.msk [vmem:[%s5 + $0x1f4] sm:$0xf] %vm2603, %v2216
  %2730 = vst.msk [vmem:[%s5 + $0x1f8] sm:$0xf] %vm2603, %v2217
  %2731 = vst.msk [vmem:[%s5 + $0x1fc] sm:$0xf] %vm2603, %v2218
  %2732 = vst.msk [vmem:[%s5 + $0x200] sm:$0xf] %vm2603, %v2219
  %2733 = vst.msk [vmem:[%s5 + $0x204] sm:$0xf] %vm2603, %v2220
  %2734 = vst.msk [vmem:[%s5 + $0x208] sm:$0xf] %vm2603, %v2221
  %2735 = vst.msk [vmem:[%s5 + $0x20c] sm:$0xf] %vm2603, %v2222
  %2736 = vst.msk [vmem:[%s5 + $0x210] sm:$0xf] %vm2603, %v2223
  %2737 = vst.msk [vmem:[%s5 + $0x214] sm:$0xf] %vm2603, %v2224
  %2738 = vst.msk [vmem:[%s5 + $0x218] sm:$0xf] %vm2603, %v2225
  %2739 = vst.msk [vmem:[%s5 + $0x21c] sm:$0xf] %vm2603, %v2226
  %2740 = vst.msk [vmem:[%s5 + $0x220] sm:$0xf] %vm2603, %v2227
  %2741 = vst.msk [vmem:[%s5 + $0x224] sm:$0xf] %vm2603, %v2228
  %2742 = vst.msk [vmem:[%s5 + $0x228] sm:$0xf] %vm2603, %v2229
  %2743 = vst.msk [vmem:[%s5 + $0x22c] sm:$0xf] %vm2603, %v2230
  %2744 = vst.msk [vmem:[%s5 + $0x230] sm:$0xf] %vm2603, %v2231
  %2745 = vst.msk [vmem:[%s5 + $0x234] sm:$0xf] %vm2603, %v2232
  %2746 = vst.msk [vmem:[%s5 + $0x238] sm:$0xf] %vm2603, %v2233
  %2747 = vst.msk [vmem:[%s5 + $0x23c] sm:$0xf] %vm2603, %v2234
  %2748 = vst.msk [vmem:[%s5 + $0x240] sm:$0xf] %vm2603, %v2235
  %2749 = vst.msk [vmem:[%s5 + $0x244] sm:$0xf] %vm2603, %v2236
  %2750 = vst.msk [vmem:[%s5 + $0x248] sm:$0xf] %vm2603, %v2237
  %2751 = vst.msk [vmem:[%s5 + $0x24c] sm:$0xf] %vm2603, %v2238
  %2752 = vst.msk [vmem:[%s5 + $0x250] sm:$0xf] %vm2603, %v2239
  %2753 = vst.msk [vmem:[%s5 + $0x254] sm:$0xf] %vm2603, %v2240
  %2754 = vst.msk [vmem:[%s5 + $0x258] sm:$0xf] %vm2603, %v2241
  %2755 = vst.msk [vmem:[%s5 + $0x25c] sm:$0xf] %vm2603, %v2242
  %2756 = vst.msk [vmem:[%s5 + $0x260] sm:$0xf] %vm2603, %v2243
  %2757 = vst.msk [vmem:[%s5 + $0x264] sm:$0xf] %vm2603, %v2244
  %2758 = vst.msk [vmem:[%s5 + $0x268] sm:$0xf] %vm2603, %v2245
  %2759 = vst.msk [vmem:[%s5 + $0x26c] sm:$0xf] %vm2603, %v2246
  %2760 = vst.msk [vmem:[%s5 + $0x270] sm:$0xf] %vm2603, %v2247
  %2761 = vst.msk [vmem:[%s5 + $0x274] sm:$0xf] %vm2603, %v2248
  %2762 = vst.msk [vmem:[%s5 + $0x278] sm:$0xf] %vm2603, %v2249
  %2763 = vst.msk [vmem:[%s5 + $0x27c] sm:$0xf] %vm2603, %v2250
  %2764 = vst.msk [vmem:[%s5 + $0x280] sm:$0xf] %vm2603, %v2251
  %2765 = vst.msk [vmem:[%s5 + $0x284] sm:$0xf] %vm2603, %v2252
  %2766 = vst.msk [vmem:[%s5 + $0x288] sm:$0xf] %vm2603, %v2253
  %2767 = vst.msk [vmem:[%s5 + $0x28c] sm:$0xf] %vm2603, %v2254
  %2768 = vst.msk [vmem:[%s5 + $0x290] sm:$0xf] %vm2603, %v2255
  %2769 = vst.msk [vmem:[%s5 + $0x294] sm:$0xf] %vm2603, %v2256
  %2770 = vst.msk [vmem:[%s5 + $0x298] sm:$0xf] %vm2603, %v2257
  %2771 = vst.msk [vmem:[%s5 + $0x29c] sm:$0xf] %vm2603, %v2258
  %2772 = vst.msk [vmem:[%s5 + $0x2a0] sm:$0xf] %vm2603, %v2259
  %2773 = vst.msk [vmem:[%s5 + $0x2a4] sm:$0xf] %vm2603, %v2260
  %2774 = vst.msk [vmem:[%s5 + $0x2a8] sm:$0xf] %vm2603, %v2261
  %2775 = vst.msk [vmem:[%s5 + $0x2ac] sm:$0xf] %vm2603, %v2262
  %2776 = vst.msk [vmem:[%s5 + $0x2b0] sm:$0xf] %vm2603, %v2263
  %2777 = vst.msk [vmem:[%s5 + $0x2b4] sm:$0xf] %vm2603, %v2264
  %2778 = vst.msk [vmem:[%s5 + $0x2b8] sm:$0xf] %vm2603, %v2265
  %2779 = vst.msk [vmem:[%s5 + $0x2bc] sm:$0xf] %vm2603, %v2266
  %2780 = vst.msk [vmem:[%s5 + $0x2c0] sm:$0xf] %vm2603, %v2267
  %2781 = vst.msk [vmem:[%s5 + $0x2c4] sm:$0xf] %vm2603, %v2268
  %2782 = vst.msk [vmem:[%s5 + $0x2c8] sm:$0xf] %vm2603, %v2269
  %2783 = vst.msk [vmem:[%s5 + $0x2cc] sm:$0xf] %vm2603, %v2270
  %2784 = vst.msk [vmem:[%s5 + $0x2d0] sm:$0xf] %vm2603, %v2271
  %2785 = vst.msk [vmem:[%s5 + $0x2d4] sm:$0xf] %vm2603, %v2272
  %2786 = vst.msk [vmem:[%s5 + $0x2d8] sm:$0xf] %vm2603, %v2273
  %2787 = vst.msk [vmem:[%s5 + $0x2dc] sm:$0xf] %vm2603, %v2274
  %2788 = vst.msk [vmem:[%s5 + $0x2e0] sm:$0xf] %vm2603, %v2275
  %2789 = vst.msk [vmem:[%s5 + $0x2e4] sm:$0xf] %vm2603, %v2276
  %2790 = vst.msk [vmem:[%s5 + $0x2e8] sm:$0xf] %vm2603, %v2277
  %2791 = vst.msk [vmem:[%s5 + $0x2ec] sm:$0xf] %vm2603, %v2278
  %2792 = vst.msk [vmem:[%s5 + $0x2f0] sm:$0xf] %vm2603, %v2279
  %2793 = vst.msk [vmem:[%s5 + $0x2f4] sm:$0xf] %vm2603, %v2280
  %2794 = vst.msk [vmem:[%s5 + $0x2f8] sm:$0xf] %vm2603, %v2281
  %2795 = vst.msk [vmem:[%s5 + $0x2fc] sm:$0xf] %vm2603, %v2282
  %2796 = vst.msk [vmem:[%s5 + $0x300] sm:$0xf] %vm2603, %v2283
  %2797 = vst.msk [vmem:[%s5 + $0x304] sm:$0xf] %vm2603, %v2284
  %2798 = vst.msk [vmem:[%s5 + $0x308] sm:$0xf] %vm2603, %v2285
  %2799 = vst.msk [vmem:[%s5 + $0x30c] sm:$0xf] %vm2603, %v2286
  %2800 = vst.msk [vmem:[%s5 + $0x310] sm:$0xf] %vm2603, %v2287
  %2801 = vst.msk [vmem:[%s5 + $0x314] sm:$0xf] %vm2603, %v2288
  %2802 = vst.msk [vmem:[%s5 + $0x318] sm:$0xf] %vm2603, %v2289
  %2803 = vst.msk [vmem:[%s5 + $0x31c] sm:$0xf] %vm2603, %v2290
  %2804 = vst.msk [vmem:[%s5 + $0x320] sm:$0xf] %vm2603, %v2291
  %2805 = vst.msk [vmem:[%s5 + $0x324] sm:$0xf] %vm2603, %v2292
  %2806 = vst.msk [vmem:[%s5 + $0x328] sm:$0xf] %vm2603, %v2293
  %2807 = vst.msk [vmem:[%s5 + $0x32c] sm:$0xf] %vm2603, %v2294
  %2808 = vst.msk [vmem:[%s5 + $0x330] sm:$0xf] %vm2603, %v2295
  %2809 = vst.msk [vmem:[%s5 + $0x334] sm:$0xf] %vm2603, %v2296
  %2810 = vst.msk [vmem:[%s5 + $0x338] sm:$0xf] %vm2603, %v2297
  %2811 = vst.msk [vmem:[%s5 + $0x33c] sm:$0xf] %vm2603, %v2298
  %2812 = vst.msk [vmem:[%s5 + $0x340] sm:$0xf] %vm2603, %v2299
  %2813 = vst.msk [vmem:[%s5 + $0x344] sm:$0xf] %vm2603, %v2300
  %2814 = vst.msk [vmem:[%s5 + $0x348] sm:$0xf] %vm2603, %v2301
  %2815 = vst.msk [vmem:[%s5 + $0x34c] sm:$0xf] %vm2603, %v2302
  %2816 = vst.msk [vmem:[%s5 + $0x350] sm:$0xf] %vm2603, %v2303
  %2817 = vst.msk [vmem:[%s5 + $0x354] sm:$0xf] %vm2603, %v2304
  %2818 = vst.msk [vmem:[%s5 + $0x358] sm:$0xf] %vm2603, %v2305
  %2819 = vst.msk [vmem:[%s5 + $0x35c] sm:$0xf] %vm2603, %v2306
  %2820 = vst.msk [vmem:[%s5 + $0x360] sm:$0xf] %vm2603, %v2307
  %2821 = vst.msk [vmem:[%s5 + $0x364] sm:$0xf] %vm2603, %v2308
  %2822 = vst.msk [vmem:[%s5 + $0x368] sm:$0xf] %vm2603, %v2309
  %2823 = vst.msk [vmem:[%s5 + $0x36c] sm:$0xf] %vm2603, %v2310
  %2824 = vst.msk [vmem:[%s5 + $0x370] sm:$0xf] %vm2603, %v2311
  %2825 = vst.msk [vmem:[%s5 + $0x374] sm:$0xf] %vm2603, %v2312
  %2826 = vst.msk [vmem:[%s5 + $0x378] sm:$0xf] %vm2603, %v2313
  %2827 = vst.msk [vmem:[%s5 + $0x37c] sm:$0xf] %vm2603, %v2314
  %2828 = vst.msk [vmem:[%s5 + $0x380] sm:$0xf] %vm2603, %v2315
  %2829 = vst.msk [vmem:[%s5 + $0x384] sm:$0xf] %vm2603, %v2316
  %2830 = vst.msk [vmem:[%s5 + $0x388] sm:$0xf] %vm2603, %v2317
  %2831 = vst.msk [vmem:[%s5 + $0x38c] sm:$0xf] %vm2603, %v2318
  %2832 = vst.msk [vmem:[%s5 + $0x390] sm:$0xf] %vm2603, %v2319
  %2833 = vst.msk [vmem:[%s5 + $0x394] sm:$0xf] %vm2603, %v2320
  %2834 = vst.msk [vmem:[%s5 + $0x398] sm:$0xf] %vm2603, %v2321
  %2835 = vst.msk [vmem:[%s5 + $0x39c] sm:$0xf] %vm2603, %v2322
  %2836 = vst.msk [vmem:[%s5 + $0x3a0] sm:$0xf] %vm2603, %v2323
  %2837 = vst.msk [vmem:[%s5 + $0x3a4] sm:$0xf] %vm2603, %v2324
  %2838 = vst.msk [vmem:[%s5 + $0x3a8] sm:$0xf] %vm2603, %v2325
  %2839 = vst.msk [vmem:[%s5 + $0x3ac] sm:$0xf] %vm2603, %v2326
  %2840 = vst.msk [vmem:[%s5 + $0x3b0] sm:$0xf] %vm2603, %v2327
  %2841 = vst.msk [vmem:[%s5 + $0x3b4] sm:$0xf] %vm2603, %v2328
  %2842 = vst.msk [vmem:[%s5 + $0x3b8] sm:$0xf] %vm2603, %v2329
  %2843 = vst.msk [vmem:[%s5 + $0x3bc] sm:$0xf] %vm2603, %v2330
  %2844 = vst.msk [vmem:[%s5 + $0x3c0] sm:$0xf] %vm2603, %v2331
  %2845 = vst.msk [vmem:[%s5 + $0x3c4] sm:$0xf] %vm2603, %v2332
  %2846 = vst.msk [vmem:[%s5 + $0x3c8] sm:$0xf] %vm2603, %v2333
  %2847 = vst.msk [vmem:[%s5 + $0x3cc] sm:$0xf] %vm2603, %v2334
  %2848 = vst.msk [vmem:[%s5 + $0x3d0] sm:$0xf] %vm2603, %v2335
  %2849 = vst.msk [vmem:[%s5 + $0x3d4] sm:$0xf] %vm2603, %v2336
  %2850 = vst.msk [vmem:[%s5 + $0x3d8] sm:$0xf] %vm2603, %v2337
  %2851 = vst.msk [vmem:[%s5 + $0x3dc] sm:$0xf] %vm2603, %v2338
  %2852 = vst.msk [vmem:[%s5 + $0x3e0] sm:$0xf] %vm2603, %v2339
  %2853 = vst.msk [vmem:[%s5 + $0x3e4] sm:$0xf] %vm2603, %v2340
  %2854 = vst.msk [vmem:[%s5 + $0x3e8] sm:$0xf] %vm2603, %v2341
  %2855 = vst.msk [vmem:[%s5 + $0x3ec] sm:$0xf] %vm2603, %v2342
  %2856 = vst.msk [vmem:[%s5 + $0x3f0] sm:$0xf] %vm2603, %v2343
  %2857 = vst.msk [vmem:[%s5 + $0x3f4] sm:$0xf] %vm2603, %v2344
  %2858 = vst.msk [vmem:[%s5 + $0x3f8] sm:$0xf] %vm2603, %v2345
  %2859 = vst.msk [vmem:[%s5 + $0x3fc] sm:$0xf] %vm2603, %v2346
  // Predicated region
  $region22: #{netg_forward.24} parent=0 // pred_check
    _
  $region23: #{netg_forward.24} parent=0 // pred_check_branch
    %2861 = sbr.rel (0) target = $region25
  $region24: #{netg_forward.24} parent=0 // pred_region
    _
  $region25: #{netg_forward.24} parent=0 // pred_fallthru
    _
  // Predicated region
  $region26: #{netg_forward.24} parent=0 // pred_check
    _
  $region27: #{netg_forward.24} parent=0 // pred_check_branch
    %2863 = sbr.rel (0) target = $region29
  $region28: #{netg_forward.24} parent=0 // pred_region
    _
  $region29: #{netg_forward.24} parent=0 // pred_fallthru
    _

// kernel: netg_forward.25
$region0: #{netg_forward.25}
  #allocation0 [shape = 'u32[]', space=smem, size = 0x4, offset = 0x4, fixed_abs, tag = 'smem constant byte address 0x4 - core index']
  #allocation1 [shape = 'u32[144,128]{1,0:T(1,128)}', space=vmem, size = 0x12000, scoped, tag = 'internal scratch']
  %s0 = inlined_call_operand.vmem [shape: bf16[3072,128], index: 0, kind: input, shape index: {}]
  %s1 = inlined_call_operand.vmem [shape: bf16[128,128], index: 1, kind: input, shape index: {}]
  %s2 = inlined_call_operand.vmem [shape: bf16[3072,128], index: 2, kind: output, shape index: {}]
  %s3 = sld [smem:[#allocation0]]
  $region41: #{netg_forward.25} parent=0
    _
  %s5 = ssub.s32 1, %s3
  %s6 = scalar_select 0, %s5, %s3
  loop: start=0, step=1, limit=5
  $region2: #{netg_forward.25} parent=0 // loop_pre_header
    _
  $region3: #{netg_forward.25} parent=0 // loop_header
    %s8 = sphi 0, %s12
    %p9 = scmp.ge.s32.totalorder %s8, 5
    %s18 = sphi 0, %s20
    %s21 = sphi 0, %s18
    %s22 = sphi 0, %s21
    %s38 = sphi 0, %s22
    %s42 = sphi 0, %s42
    %s44 = sphi 0, %s42
    %s45 = sphi 0, %s44
    %s59 = sphi 0, %s45
    %s65 = sphi 0, %s67
    %s68 = sphi 0, %s65
    %s69 = sphi 0, %s68
    %s85 = sphi 0, %s69
  $region4: #{netg_forward.25} parent=0 // loop_header_branch
    %11 = sbr.rel (%p9) target = $region8
  $region5: #{netg_forward.25} parent=0 // loop_body
    %s13 = ssub.s32 %s8, 1
    %s14 = ssub.s32 %s8, 2
    %s15 = sadd.s32 %s8, 1
    %s16 = ssub.s32 %s8, %s15
    %p17 = scmp.eq.s32.totalorder %s16, 0
    %s19 = sadd.s32 %s18, 1
    %s20 = scalar_select %p17, %s18, %s19
    %p23 = pneg %p17
    %p24 = scmp.eq.s32.totalorder %s8, 2
    %p25 = por %p23, %p24
    %p26 = scmp.ne.s32.totalorder %s18, %s21
    %p27 = scmp.eq.s32.totalorder %s8, 0
    %p28 = por %p26, %p27
    %p29 = scmp.ne.s32.totalorder %s18, %s21
    %p30 = scmp.eq.s32.totalorder %s13, 2
    %p31 = por %p29, %p30
    %p32 = scmp.ne.s32.totalorder %s21, %s22
    %p33 = scmp.eq.s32.totalorder %s13, 0
    %p34 = por %p32, %p33
    %p35 = scmp.ne.s32.totalorder %s21, %s22
    %p36 = scmp.eq.s32.totalorder %s14, 2
    %p37 = por %p35, %p36
    %p39 = scmp.ne.s32.totalorder %s22, %s38
    %p40 = scmp.eq.s32.totalorder %s14, 0
    %p41 = por %p39, %p40
    %s43 = sadd.s32 %s42, 1
    %p46 = scmp.eq.s32.totalorder %s8, 2
    %p47 = scmp.ne.s32.totalorder %s42, %s44
    %p48 = scmp.eq.s32.totalorder %s8, 0
    %p49 = por %p47, %p48
    %p50 = scmp.ne.s32.totalorder %s42, %s44
    %p51 = scmp.eq.s32.totalorder %s13, 2
    %p52 = por %p50, %p51
    %p53 = scmp.ne.s32.totalorder %s44, %s45
    %p54 = scmp.eq.s32.totalorder %s13, 0
    %p55 = por %p53, %p54
    %p56 = scmp.ne.s32.totalorder %s44, %s45
    %p57 = scmp.eq.s32.totalorder %s14, 2
    %p58 = por %p56, %p57
    %p60 = scmp.ne.s32.totalorder %s45, %s59
    %p61 = scmp.eq.s32.totalorder %s14, 0
    %p62 = por %p60, %p61
    %s63 = ssub.s32 %s8, %s15
    %p64 = scmp.eq.s32.totalorder %s63, 0
    %s66 = sadd.s32 %s65, 1
    %s67 = scalar_select %p64, %s65, %s66
    %p70 = pneg %p64
    %p71 = scmp.eq.s32.totalorder %s8, 2
    %p72 = por %p70, %p71
    %p73 = scmp.ne.s32.totalorder %s65, %s68
    %p74 = scmp.eq.s32.totalorder %s8, 0
    %p75 = por %p73, %p74
    %p76 = scmp.ne.s32.totalorder %s65, %s68
    %p77 = scmp.eq.s32.totalorder %s13, 2
    %p78 = por %p76, %p77
    %p79 = scmp.ne.s32.totalorder %s68, %s69
    %p80 = scmp.eq.s32.totalorder %s13, 0
    %p81 = por %p79, %p80
    %p82 = scmp.ne.s32.totalorder %s68, %s69
    %p83 = scmp.eq.s32.totalorder %s14, 2
    %p84 = por %p82, %p83
    %p86 = scmp.ne.s32.totalorder %s69, %s85
    %p87 = scmp.eq.s32.totalorder %s14, 0
    %p88 = por %p86, %p87
    %p89 = scmp.le.s32.totalorder 1, %s8
    %p90 = scmp.lt.s32.totalorder %s8, 4
    %p91 = pnand %p89, %p90
    %p92 = pneg %p91
    // Predicated region
    $region9: #{netg_forward.25} parent=5 // pred_check
      _
    $region10: #{netg_forward.25} parent=5 // pred_check_branch
      %94 = sbr.rel (%p91) target = $region12
    $region11: #{netg_forward.25} parent=5 // pred_region
      %s95 = ssub.s32 %s8, 1
      // Predicated region
      $region13: #{netg_forward.25} parent=11 // pred_check
        %p96 = pneg %p55
      $region14: #{netg_forward.25} parent=11 // pred_check_branch
        %98 = sbr.rel (%p96) target = $region16
      $region15: #{netg_forward.25} parent=11 // pred_region
        _
      $region16: #{netg_forward.25} parent=11 // pred_fallthru
        _
    $region12: #{netg_forward.25} parent=5 // pred_fallthru
      _
    %p99 = scmp.lt.s32.totalorder %s8, 3
    // Predicated region
    $region17: #{netg_forward.25} parent=5 // pred_check
      %p100 = pneg %p99
    $region18: #{netg_forward.25} parent=5 // pred_check_branch
      %102 = sbr.rel (%p100) target = $region20
    $region19: #{netg_forward.25} parent=5 // pred_region
      // Predicated region
      $region21: #{netg_forward.25} parent=19 // pred_check
        %p103 = pneg %p28
      $region22: #{netg_forward.25} parent=19 // pred_check_branch
        %105 = sbr.rel (%p103) target = $region24
      $region23: #{netg_forward.25} parent=19 // pred_region
        %s106 = smul.u32 128, %s8
        %p107 = scmp.lt.s32.totalorder %s106, 383
        %s108 = scalar_select %p107, %s106, 383
        %s109 = smul.addr %s108, 4
        %s110 = scalar_lea.vmem %s0, %s109
        %s111 = smul.u32 128, %s8
      $region24: #{netg_forward.25} parent=19 // pred_fallthru
        _
    $region20: #{netg_forward.25} parent=5 // pred_fallthru
      _
    %p112 = scmp.le.s32.totalorder 1, %s8
    %p113 = scmp.lt.s32.totalorder %s8, 4
    %p114 = pnand %p112, %p113
    %p115 = pneg %p114
    // Predicated region
    $region25: #{netg_forward.25} parent=5 // pred_check
      _
    $region26: #{netg_forward.25} parent=5 // pred_check_branch
      %117 = sbr.rel (%p114) target = $region28
    $region27: #{netg_forward.25} parent=5 // pred_region
      %s118 = ssub.s32 %s8, 1
      %s119 = smul.u32 128, %s13
      %p120 = scmp.lt.s32.totalorder %s119, 383
      %s121 = scalar_select %p120, %s119, 383
      %s122 = smul.addr %s121, 4
      %s123 = scalar_lea.vmem %s0, %s122
      %p124 = pneg %p34
      %p125 = pneg %p31
      %p126 = pneg %p55
      %p127 = pneg %p52
      %p128 = pneg %p81
      %p129 = pneg %p78
      %s130 = smul.u32 128, %s13
      %p131 = scmp.lt.s32.totalorder %s130, 383
      %s132 = scalar_select %p131, %s130, 383
      %s133 = smul.addr %s132, 4
      %s134 = scalar_lea.vmem %s2, %s133
      %s135 = smul.u32 128, %s13
      %p136 = scmp.lt.s32.totalorder %s135, 383
      %s137 = scalar_select %p136, %s135, 383
      %s138 = smul.addr %s137, 4
      %s139 = scalar_lea.vmem %s0, %s138
      %s140 = smul.u32 128, %s13
      %s141 = smul.u32 128, %s13
      %p142 = scmp.lt.s32.totalorder %s141, 383
      %s143 = scalar_select %p142, %s141, 383
      %s144 = smul.addr %s143, 4
      %s145 = scalar_lea.vmem %s2, %s144
      %s146 = smul.u32 128, %s13
      %v148 = vld [vmem:[%s139] sm:$0xf]
      %v149 = vld [vmem:[%s139 + $0x4] sm:$0xf]
      %v150 = vld [vmem:[%s139 + $0x8] sm:$0xf]
      %v151 = vld [vmem:[%s139 + $0xc] sm:$0xf]
      %v152 = vld [vmem:[%s139 + $0x10] sm:$0xf]
      %v153 = vld [vmem:[%s139 + $0x14] sm:$0xf]
      %v154 = vld [vmem:[%s139 + $0x18] sm:$0xf]
      %v155 = vld [vmem:[%s139 + $0x1c] sm:$0xf]
      %v156 = vld [vmem:[%s139 + $0x20] sm:$0xf]
      %v157 = vld [vmem:[%s139 + $0x24] sm:$0xf]
      %v158 = vld [vmem:[%s139 + $0x28] sm:$0xf]
      %v159 = vld [vmem:[%s139 + $0x2c] sm:$0xf]
      %v160 = vld [vmem:[%s139 + $0x30] sm:$0xf]
      %v161 = vld [vmem:[%s139 + $0x34] sm:$0xf]
      %v162 = vld [vmem:[%s139 + $0x38] sm:$0xf]
      %v163 = vld [vmem:[%s139 + $0x3c] sm:$0xf]
      %v164 = vld [vmem:[%s139 + $0x40] sm:$0xf]
      %v165 = vld [vmem:[%s139 + $0x44] sm:$0xf]
      %v166 = vld [vmem:[%s139 + $0x48] sm:$0xf]
      %v167 = vld [vmem:[%s139 + $0x4c] sm:$0xf]
      %v168 = vld [vmem:[%s139 + $0x50] sm:$0xf]
      %v169 = vld [vmem:[%s139 + $0x54] sm:$0xf]
      %v170 = vld [vmem:[%s139 + $0x58] sm:$0xf]
      %v171 = vld [vmem:[%s139 + $0x5c] sm:$0xf]
      %v172 = vld [vmem:[%s139 + $0x60] sm:$0xf]
      %v173 = vld [vmem:[%s139 + $0x64] sm:$0xf]
      %v174 = vld [vmem:[%s139 + $0x68] sm:$0xf]
      %v175 = vld [vmem:[%s139 + $0x6c] sm:$0xf]
      %v176 = vld [vmem:[%s139 + $0x70] sm:$0xf]
      %v177 = vld [vmem:[%s139 + $0x74] sm:$0xf]
      %v178 = vld [vmem:[%s139 + $0x78] sm:$0xf]
      %v179 = vld [vmem:[%s139 + $0x7c] sm:$0xf]
      %v180 = vld [vmem:[%s139 + $0x80] sm:$0xf]
      %v181 = vld [vmem:[%s139 + $0x84] sm:$0xf]
      %v182 = vld [vmem:[%s139 + $0x88] sm:$0xf]
      %v183 = vld [vmem:[%s139 + $0x8c] sm:$0xf]
      %v184 = vld [vmem:[%s139 + $0x90] sm:$0xf]
      %v185 = vld [vmem:[%s139 + $0x94] sm:$0xf]
      %v186 = vld [vmem:[%s139 + $0x98] sm:$0xf]
      %v187 = vld [vmem:[%s139 + $0x9c] sm:$0xf]
      %v188 = vld [vmem:[%s139 + $0xa0] sm:$0xf]
      %v189 = vld [vmem:[%s139 + $0xa4] sm:$0xf]
      %v190 = vld [vmem:[%s139 + $0xa8] sm:$0xf]
      %v191 = vld [vmem:[%s139 + $0xac] sm:$0xf]
      %v192 = vld [vmem:[%s139 + $0xb0] sm:$0xf]
      %v193 = vld [vmem:[%s139 + $0xb4] sm:$0xf]
      %v194 = vld [vmem:[%s139 + $0xb8] sm:$0xf]
      %v195 = vld [vmem:[%s139 + $0xbc] sm:$0xf]
      %v196 = vld [vmem:[%s139 + $0xc0] sm:$0xf]
      %v197 = vld [vmem:[%s139 + $0xc4] sm:$0xf]
      %v198 = vld [vmem:[%s139 + $0xc8] sm:$0xf]
      %v199 = vld [vmem:[%s139 + $0xcc] sm:$0xf]
      %v200 = vld [vmem:[%s139 + $0xd0] sm:$0xf]
      %v201 = vld [vmem:[%s139 + $0xd4] sm:$0xf]
      %v202 = vld [vmem:[%s139 + $0xd8] sm:$0xf]
      %v203 = vld [vmem:[%s139 + $0xdc] sm:$0xf]
      %v204 = vld [vmem:[%s139 + $0xe0] sm:$0xf]
      %v205 = vld [vmem:[%s139 + $0xe4] sm:$0xf]
      %v206 = vld [vmem:[%s139 + $0xe8] sm:$0xf]
      %v207 = vld [vmem:[%s139 + $0xec] sm:$0xf]
      %v208 = vld [vmem:[%s139 + $0xf0] sm:$0xf]
      %v209 = vld [vmem:[%s139 + $0xf4] sm:$0xf]
      %v210 = vld [vmem:[%s139 + $0xf8] sm:$0xf]
      %v211 = vld [vmem:[%s139 + $0xfc] sm:$0xf]
      %v212 = vld [vmem:[%s139 + $0x100] sm:$0xf]
      %v213 = vld [vmem:[%s139 + $0x104] sm:$0xf]
      %v214 = vld [vmem:[%s139 + $0x108] sm:$0xf]
      %v215 = vld [vmem:[%s139 + $0x10c] sm:$0xf]
      %v216 = vld [vmem:[%s139 + $0x110] sm:$0xf]
      %v217 = vld [vmem:[%s139 + $0x114] sm:$0xf]
      %v218 = vld [vmem:[%s139 + $0x118] sm:$0xf]
      %v219 = vld [vmem:[%s139 + $0x11c] sm:$0xf]
      %v220 = vld [vmem:[%s139 + $0x120] sm:$0xf]
      %v221 = vld [vmem:[%s139 + $0x124] sm:$0xf]
      %v222 = vld [vmem:[%s139 + $0x128] sm:$0xf]
      %v223 = vld [vmem:[%s139 + $0x12c] sm:$0xf]
      %v224 = vld [vmem:[%s139 + $0x130] sm:$0xf]
      %v225 = vld [vmem:[%s139 + $0x134] sm:$0xf]
      %v226 = vld [vmem:[%s139 + $0x138] sm:$0xf]
      %v227 = vld [vmem:[%s139 + $0x13c] sm:$0xf]
      %v228 = vld [vmem:[%s139 + $0x140] sm:$0xf]
      %v229 = vld [vmem:[%s139 + $0x144] sm:$0xf]
      %v230 = vld [vmem:[%s139 + $0x148] sm:$0xf]
      %v231 = vld [vmem:[%s139 + $0x14c] sm:$0xf]
      %v232 = vld [vmem:[%s139 + $0x150] sm:$0xf]
      %v233 = vld [vmem:[%s139 + $0x154] sm:$0xf]
      %v234 = vld [vmem:[%s139 + $0x158] sm:$0xf]
      %v235 = vld [vmem:[%s139 + $0x15c] sm:$0xf]
      %v236 = vld [vmem:[%s139 + $0x160] sm:$0xf]
      %v237 = vld [vmem:[%s139 + $0x164] sm:$0xf]
      %v238 = vld [vmem:[%s139 + $0x168] sm:$0xf]
      %v239 = vld [vmem:[%s139 + $0x16c] sm:$0xf]
      %v240 = vld [vmem:[%s139 + $0x170] sm:$0xf]
      %v241 = vld [vmem:[%s139 + $0x174] sm:$0xf]
      %v242 = vld [vmem:[%s139 + $0x178] sm:$0xf]
      %v243 = vld [vmem:[%s139 + $0x17c] sm:$0xf]
      %v244 = vld [vmem:[%s139 + $0x180] sm:$0xf]
      %v245 = vld [vmem:[%s139 + $0x184] sm:$0xf]
      %v246 = vld [vmem:[%s139 + $0x188] sm:$0xf]
      %v247 = vld [vmem:[%s139 + $0x18c] sm:$0xf]
      %v248 = vld [vmem:[%s139 + $0x190] sm:$0xf]
      %v249 = vld [vmem:[%s139 + $0x194] sm:$0xf]
      %v250 = vld [vmem:[%s139 + $0x198] sm:$0xf]
      %v251 = vld [vmem:[%s139 + $0x19c] sm:$0xf]
      %v252 = vld [vmem:[%s139 + $0x1a0] sm:$0xf]
      %v253 = vld [vmem:[%s139 + $0x1a4] sm:$0xf]
      %v254 = vld [vmem:[%s139 + $0x1a8] sm:$0xf]
      %v255 = vld [vmem:[%s139 + $0x1ac] sm:$0xf]
      %v256 = vld [vmem:[%s139 + $0x1b0] sm:$0xf]
      %v257 = vld [vmem:[%s139 + $0x1b4] sm:$0xf]
      %v258 = vld [vmem:[%s139 + $0x1b8] sm:$0xf]
      %v259 = vld [vmem:[%s139 + $0x1bc] sm:$0xf]
      %v260 = vld [vmem:[%s139 + $0x1c0] sm:$0xf]
      %v261 = vld [vmem:[%s139 + $0x1c4] sm:$0xf]
      %v262 = vld [vmem:[%s139 + $0x1c8] sm:$0xf]
      %v263 = vld [vmem:[%s139 + $0x1cc] sm:$0xf]
      %v264 = vld [vmem:[%s139 + $0x1d0] sm:$0xf]
      %v265 = vld [vmem:[%s139 + $0x1d4] sm:$0xf]
      %v266 = vld [vmem:[%s139 + $0x1d8] sm:$0xf]
      %v267 = vld [vmem:[%s139 + $0x1dc] sm:$0xf]
      %v268 = vld [vmem:[%s139 + $0x1e0] sm:$0xf]
      %v269 = vld [vmem:[%s139 + $0x1e4] sm:$0xf]
      %v270 = vld [vmem:[%s139 + $0x1e8] sm:$0xf]
      %v271 = vld [vmem:[%s139 + $0x1ec] sm:$0xf]
      %v272 = vld [vmem:[%s139 + $0x1f0] sm:$0xf]
      %v273 = vld [vmem:[%s139 + $0x1f4] sm:$0xf]
      %v274 = vld [vmem:[%s139 + $0x1f8] sm:$0xf]
      %v275 = vld [vmem:[%s139 + $0x1fc] sm:$0xf]
      %v276 = vld [vmem:[%s1] sm:$0xf]
      %v277 = vld [vmem:[%s1 + $0x4] sm:$0xf]
      %v278 = vld [vmem:[%s1 + $0x8] sm:$0xf]
      %v279 = vld [vmem:[%s1 + $0xc] sm:$0xf]
      %v280 = vld [vmem:[%s1 + $0x10] sm:$0xf]
      %v281 = vld [vmem:[%s1 + $0x14] sm:$0xf]
      %v282 = vld [vmem:[%s1 + $0x18] sm:$0xf]
      %v283 = vld [vmem:[%s1 + $0x1c] sm:$0xf]
      %v284 = vld [vmem:[%s1 + $0x20] sm:$0xf]
      %v285 = vld [vmem:[%s1 + $0x24] sm:$0xf]
      %v286 = vld [vmem:[%s1 + $0x28] sm:$0xf]
      %v287 = vld [vmem:[%s1 + $0x2c] sm:$0xf]
      %v288 = vld [vmem:[%s1 + $0x30] sm:$0xf]
      %v289 = vld [vmem:[%s1 + $0x34] sm:$0xf]
      %v290 = vld [vmem:[%s1 + $0x38] sm:$0xf]
      %v291 = vld [vmem:[%s1 + $0x3c] sm:$0xf]
      %v420 = vunpack.c.l.b16 %v148
      %v421 = vunpack.c.l.b16 %v149
      %v422 = vunpack.c.l.b16 %v150
      %v423 = vunpack.c.l.b16 %v151
      %v424 = vunpack.c.l.b16 %v152
      %v425 = vunpack.c.l.b16 %v153
      %v426 = vunpack.c.l.b16 %v154
      %v427 = vunpack.c.l.b16 %v155
      %v428 = vunpack.c.l.b16 %v156
      %v429 = vunpack.c.l.b16 %v157
      %v430 = vunpack.c.l.b16 %v158
      %v431 = vunpack.c.l.b16 %v159
      %v432 = vunpack.c.l.b16 %v160
      %v433 = vunpack.c.l.b16 %v161
      %v434 = vunpack.c.l.b16 %v162
      %v435 = vunpack.c.l.b16 %v163
      %v436 = vunpack.c.l.b16 %v164
      %v437 = vunpack.c.l.b16 %v165
      %v438 = vunpack.c.l.b16 %v166
      %v439 = vunpack.c.l.b16 %v167
      %v440 = vunpack.c.l.b16 %v168
      %v441 = vunpack.c.l.b16 %v169
      %v442 = vunpack.c.l.b16 %v170
      %v443 = vunpack.c.l.b16 %v171
      %v444 = vunpack.c.l.b16 %v172
      %v445 = vunpack.c.l.b16 %v173
      %v446 = vunpack.c.l.b16 %v174
      %v447 = vunpack.c.l.b16 %v175
      %v448 = vunpack.c.l.b16 %v176
      %v449 = vunpack.c.l.b16 %v177
      %v450 = vunpack.c.l.b16 %v178
      %v451 = vunpack.c.l.b16 %v179
      %v452 = vunpack.c.l.b16 %v180
      %v453 = vunpack.c.l.b16 %v181
      %v454 = vunpack.c.l.b16 %v182
      %v455 = vunpack.c.l.b16 %v183
      %v456 = vunpack.c.l.b16 %v184
      %v457 = vunpack.c.l.b16 %v185
      %v458 = vunpack.c.l.b16 %v186
      %v459 = vunpack.c.l.b16 %v187
      %v460 = vunpack.c.l.b16 %v188
      %v461 = vunpack.c.l.b16 %v189
      %v462 = vunpack.c.l.b16 %v190
      %v463 = vunpack.c.l.b16 %v191
      %v464 = vunpack.c.l.b16 %v192
      %v465 = vunpack.c.l.b16 %v193
      %v466 = vunpack.c.l.b16 %v194
      %v467 = vunpack.c.l.b16 %v195
      %v468 = vunpack.c.l.b16 %v196
      %v469 = vunpack.c.l.b16 %v197
      %v470 = vunpack.c.l.b16 %v198
      %v471 = vunpack.c.l.b16 %v199
      %v472 = vunpack.c.l.b16 %v200
      %v473 = vunpack.c.l.b16 %v201
      %v474 = vunpack.c.l.b16 %v202
      %v475 = vunpack.c.l.b16 %v203
      %v476 = vunpack.c.l.b16 %v204
      %v477 = vunpack.c.l.b16 %v205
      %v478 = vunpack.c.l.b16 %v206
      %v479 = vunpack.c.l.b16 %v207
      %v480 = vunpack.c.l.b16 %v208
      %v481 = vunpack.c.l.b16 %v209
      %v482 = vunpack.c.l.b16 %v210
      %v483 = vunpack.c.l.b16 %v211
      %v484 = vunpack.c.l.b16 %v212
      %v485 = vunpack.c.l.b16 %v213
      %v486 = vunpack.c.l.b16 %v214
      %v487 = vunpack.c.l.b16 %v215
      %v488 = vunpack.c.l.b16 %v216
      %v489 = vunpack.c.l.b16 %v217
      %v490 = vunpack.c.l.b16 %v218
      %v491 = vunpack.c.l.b16 %v219
      %v492 = vunpack.c.l.b16 %v220
      %v493 = vunpack.c.l.b16 %v221
      %v494 = vunpack.c.l.b16 %v222
      %v495 = vunpack.c.l.b16 %v223
      %v496 = vunpack.c.l.b16 %v224
      %v497 = vunpack.c.l.b16 %v225
      %v498 = vunpack.c.l.b16 %v226
      %v499 = vunpack.c.l.b16 %v227
      %v500 = vunpack.c.l.b16 %v228
      %v501 = vunpack.c.l.b16 %v229
      %v502 = vunpack.c.l.b16 %v230
      %v503 = vunpack.c.l.b16 %v231
      %v504 = vunpack.c.l.b16 %v232
      %v505 = vunpack.c.l.b16 %v233
      %v506 = vunpack.c.l.b16 %v234
      %v507 = vunpack.c.l.b16 %v235
      %v508 = vunpack.c.l.b16 %v236
      %v509 = vunpack.c.l.b16 %v237
      %v510 = vunpack.c.l.b16 %v238
      %v511 = vunpack.c.l.b16 %v239
      %v512 = vunpack.c.l.b16 %v240
      %v513 = vunpack.c.l.b16 %v241
      %v514 = vunpack.c.l.b16 %v242
      %v515 = vunpack.c.l.b16 %v243
      %v516 = vunpack.c.l.b16 %v244
      %v517 = vunpack.c.l.b16 %v245
      %v518 = vunpack.c.l.b16 %v246
      %v519 = vunpack.c.l.b16 %v247
      %v520 = vunpack.c.l.b16 %v248
      %v521 = vunpack.c.l.b16 %v249
      %v522 = vunpack.c.l.b16 %v250
      %v523 = vunpack.c.l.b16 %v251
      %v524 = vunpack.c.l.b16 %v252
      %v525 = vunpack.c.l.b16 %v253
      %v526 = vunpack.c.l.b16 %v254
      %v527 = vunpack.c.l.b16 %v255
      %v528 = vunpack.c.l.b16 %v256
      %v529 = vunpack.c.l.b16 %v257
      %v530 = vunpack.c.l.b16 %v258
      %v531 = vunpack.c.l.b16 %v259
      %v532 = vunpack.c.l.b16 %v260
      %v533 = vunpack.c.l.b16 %v261
      %v534 = vunpack.c.l.b16 %v262
      %v535 = vunpack.c.l.b16 %v263
      %v536 = vunpack.c.l.b16 %v264
      %v537 = vunpack.c.l.b16 %v265
      %v538 = vunpack.c.l.b16 %v266
      %v539 = vunpack.c.l.b16 %v267
      %v540 = vunpack.c.l.b16 %v268
      %v541 = vunpack.c.l.b16 %v269
      %v542 = vunpack.c.l.b16 %v270
      %v543 = vunpack.c.l.b16 %v271
      %v544 = vunpack.c.l.b16 %v272
      %v545 = vunpack.c.l.b16 %v273
      %v546 = vunpack.c.l.b16 %v274
      %v547 = vunpack.c.l.b16 %v275
      %v548 = vpack.c.b16 %v421, %v420
      %v549 = vpack.c.b16 %v423, %v422
      %v550 = vpack.c.b16 %v425, %v424
      %v551 = vpack.c.b16 %v427, %v426
      %v552 = vpack.c.b16 %v429, %v428
      %v553 = vpack.c.b16 %v431, %v430
      %v554 = vpack.c.b16 %v433, %v432
      %v555 = vpack.c.b16 %v435, %v434
      %v556 = vpack.c.b16 %v437, %v436
      %v557 = vpack.c.b16 %v439, %v438
      %v558 = vpack.c.b16 %v441, %v440
      %v559 = vpack.c.b16 %v443, %v442
      %v560 = vpack.c.b16 %v445, %v444
      %v561 = vpack.c.b16 %v447, %v446
      %v562 = vpack.c.b16 %v449, %v448
      %v563 = vpack.c.b16 %v451, %v450
      %v564 = vpack.c.b16 %v453, %v452
      %v565 = vpack.c.b16 %v455, %v454
      %v566 = vpack.c.b16 %v457, %v456
      %v567 = vpack.c.b16 %v459, %v458
      %v568 = vpack.c.b16 %v461, %v460
      %v569 = vpack.c.b16 %v463, %v462
      %v570 = vpack.c.b16 %v465, %v464
      %v571 = vpack.c.b16 %v467, %v466
      %v572 = vpack.c.b16 %v469, %v468
      %v573 = vpack.c.b16 %v471, %v470
      %v574 = vpack.c.b16 %v473, %v472
      %v575 = vpack.c.b16 %v475, %v474
      %v576 = vpack.c.b16 %v477, %v476
      %v577 = vpack.c.b16 %v479, %v478
      %v578 = vpack.c.b16 %v481, %v480
      %v579 = vpack.c.b16 %v483, %v482
      %v580 = vpack.c.b16 %v485, %v484
      %v581 = vpack.c.b16 %v487, %v486
      %v582 = vpack.c.b16 %v489, %v488
      %v583 = vpack.c.b16 %v491, %v490
      %v584 = vpack.c.b16 %v493, %v492
      %v585 = vpack.c.b16 %v495, %v494
      %v586 = vpack.c.b16 %v497, %v496
      %v587 = vpack.c.b16 %v499, %v498
      %v588 = vpack.c.b16 %v501, %v500
      %v589 = vpack.c.b16 %v503, %v502
      %v590 = vpack.c.b16 %v505, %v504
      %v591 = vpack.c.b16 %v507, %v506
      %v592 = vpack.c.b16 %v509, %v508
      %v593 = vpack.c.b16 %v511, %v510
      %v594 = vpack.c.b16 %v513, %v512
      %v595 = vpack.c.b16 %v515, %v514
      %v596 = vpack.c.b16 %v517, %v516
      %v597 = vpack.c.b16 %v519, %v518
      %v598 = vpack.c.b16 %v521, %v520
      %v599 = vpack.c.b16 %v523, %v522
      %v600 = vpack.c.b16 %v525, %v524
      %v601 = vpack.c.b16 %v527, %v526
      %v602 = vpack.c.b16 %v529, %v528
      %v603 = vpack.c.b16 %v531, %v530
      %v604 = vpack.c.b16 %v533, %v532
      %v605 = vpack.c.b16 %v535, %v534
      %v606 = vpack.c.b16 %v537, %v536
      %v607 = vpack.c.b16 %v539, %v538
      %v608 = vpack.c.b16 %v541, %v540
      %v609 = vpack.c.b16 %v543, %v542
      %v610 = vpack.c.b16 %v545, %v544
      %v611 = vpack.c.b16 %v547, %v546
      %v692 = vunpack.c.l.b16 %v276
      %v693 = vunpack.c.l.b16 %v277
      %v694 = vunpack.c.l.b16 %v278
      %v695 = vunpack.c.l.b16 %v279
      %v696 = vunpack.c.l.b16 %v280
      %v697 = vunpack.c.l.b16 %v281
      %v698 = vunpack.c.l.b16 %v282
      %v699 = vunpack.c.l.b16 %v283
      %v700 = vunpack.c.l.b16 %v284
      %v701 = vunpack.c.l.b16 %v285
      %v702 = vunpack.c.l.b16 %v286
      %v703 = vunpack.c.l.b16 %v287
      %v704 = vunpack.c.l.b16 %v288
      %v705 = vunpack.c.l.b16 %v289
      %v706 = vunpack.c.l.b16 %v290
      %v707 = vunpack.c.l.b16 %v291
      %v708 = vpack.c.b16 %v693, %v692
      %v709 = vpack.c.b16 %v695, %v694
      %v710 = vpack.c.b16 %v697, %v696
      %v711 = vpack.c.b16 %v699, %v698
      %v712 = vpack.c.b16 %v701, %v700
      %v713 = vpack.c.b16 %v703, %v702
      %v714 = vpack.c.b16 %v705, %v704
      %v715 = vpack.c.b16 %v707, %v706
      %724 = vmatprep.subr.bf16.mxu0 0
      %725 = vmatpush1.bf16.msra.mxu0 %v708
      %726 = vmatprep.subr.bf16.mxu0 0
      %727 = vmatpush1.bf16.msra.mxu0 %v709
      %728 = vmatprep.subr.bf16.mxu0 0
      %729 = vmatpush1.bf16.msra.mxu0 %v710
      %730 = vmatprep.subr.bf16.mxu0 0
      %731 = vmatpush1.bf16.msra.mxu0 %v711
      %732 = vmatprep.subr.bf16.mxu0 0
      %733 = vmatpush1.bf16.msra.mxu0 %v712
      %734 = vmatprep.subr.bf16.mxu0 0
      %735 = vmatpush1.bf16.msra.mxu0 %v713
      %736 = vmatprep.subr.bf16.mxu0 0
      %737 = vmatpush1.bf16.msra.mxu0 %v714
      %738 = vmatprep.subr.bf16.mxu0 0
      %739 = vmatpush1.bf16.msra.mxu0 %v715
      %740 = vmatprep.subr.bf16.mxu0 0
      %741 = vmatpush1.bf16.msra.mxu0 0
      %742 = vmatprep.subr.bf16.mxu0 0
      %743 = vmatpush1.bf16.msra.mxu0 0
      %744 = vmatprep.subr.bf16.mxu0 0
      %745 = vmatpush1.bf16.msra.mxu0 0
      %746 = vmatprep.subr.bf16.mxu0 0
      %747 = vmatpush1.bf16.msra.mxu0 0
      %748 = vmatprep.subr.bf16.mxu0 0
      %749 = vmatpush1.bf16.msra.mxu0 0
      %750 = vmatprep.subr.bf16.mxu0 0
      %751 = vmatpush1.bf16.msra.mxu0 0
      %752 = vmatprep.subr.bf16.mxu0 0
      %753 = vmatpush1.bf16.msra.mxu0 0
      %754 = vmatprep.subr.bf16.mxu0 0
      %755 = vmatpush1.bf16.msra.mxu0 0
      %756 = vmatprep.mubr.bf16.mxu0 0
      %757 = vmatmul.mubr.bf16.gmra.mrb[0].mxu0 %v548
      %v758 = vpop.f32.mrb[0].mxu0
      %v759 = vadd.f32 0.0, %v758
      %v760 = vpop.f32.mrb[0].mxu0
      %v761 = vpop.f32.mrb[0].mxu0
      %v762 = vadd.f32 0.0, %v761
      %v763 = vpop.f32.mrb[0].mxu0
      %764 = vmatprep.mubr.bf16.mxu0 0
      %765 = vmatmul.mubr.bf16.gmra.mrb[0].mxu0 %v549
      %v766 = vpop.f32.mrb[0].mxu0
      %v767 = vadd.f32 0.0, %v766
      %v768 = vpop.f32.mrb[0].mxu0
      %v769 = vpop.f32.mrb[0].mxu0
      %v770 = vadd.f32 0.0, %v769
      %v771 = vpop.f32.mrb[0].mxu0
      %772 = vmatprep.mubr.bf16.mxu0 0
      %773 = vmatmul.mubr.bf16.gmra.mrb[0].mxu0 %v550
      %v774 = vpop.f32.mrb[0].mxu0
      %v775 = vadd.f32 0.0, %v774
      %v776 = vpop.f32.mrb[0].mxu0
      %v777 = vpop.f32.mrb[0].mxu0
      %v778 = vadd.f32 0.0, %v777
      %v779 = vpop.f32.mrb[0].mxu0
      %780 = vmatprep.mubr.bf16.mxu0 0
      %781 = vmatmul.mubr.bf16.gmra.mrb[0].mxu0 %v551
      %v782 = vpop.f32.mrb[0].mxu0
      %v783 = vadd.f32 0.0, %v782
      %v784 = vpop.f32.mrb[0].mxu0
      %v785 = vpop.f32.mrb[0].mxu0
      %v786 = vadd.f32 0.0, %v785
      %v787 = vpop.f32.mrb[0].mxu0
      %788 = vmatprep.mubr.bf16.mxu0 0
      %789 = vmatmul.mubr.bf16.gmra.mrb[0].mxu0 %v552
      %v790 = vpop.f32.mrb[0].mxu0
      %v791 = vadd.f32 0.0, %v790
      %v792 = vpop.f32.mrb[0].mxu0
      %v793 = vpop.f32.mrb[0].mxu0
      %v794 = vadd.f32 0.0, %v793
      %v795 = vpop.f32.mrb[0].mxu0
      %796 = vmatprep.mubr.bf16.mxu0 0
      %797 = vmatmul.mubr.bf16.gmra.mrb[0].mxu0 %v553
      %v798 = vpop.f32.mrb[0].mxu0
      %v799 = vadd.f32 0.0, %v798
      %v800 = vpop.f32.mrb[0].mxu0
      %v801 = vpop.f32.mrb[0].mxu0
      %v802 = vadd.f32 0.0, %v801
      %v803 = vpop.f32.mrb[0].mxu0
      %804 = vmatprep.mubr.bf16.mxu0 0
      %805 = vmatmul.mubr.bf16.gmra.mrb[0].mxu0 %v554
      %v806 = vpop.f32.mrb[0].mxu0
      %v807 = vadd.f32 0.0, %v806
      %v808 = vpop.f32.mrb[0].mxu0
      %v809 = vpop.f32.mrb[0].mxu0
      %v810 = vadd.f32 0.0, %v809
      %v811 = vpop.f32.mrb[0].mxu0
      %812 = vmatprep.mubr.bf16.mxu0 0
      %813 = vmatmul.mubr.bf16.gmra.mrb[0].mxu0 %v555
      %v814 = vpop.f32.mrb[0].mxu0
      %v815 = vadd.f32 0.0, %v814
      %v816 = vpop.f32.mrb[0].mxu0
      %v817 = vpop.f32.mrb[0].mxu0
      %v818 = vadd.f32 0.0, %v817
      %v819 = vpop.f32.mrb[0].mxu0
      %820 = vmatprep.mubr.bf16.mxu0 0
      %821 = vmatmul.mubr.bf16.gmra.mrb[0].mxu0 %v556
      %v822 = vpop.f32.mrb[0].mxu0
      %v823 = vadd.f32 0.0, %v822
      %v824 = vpop.f32.mrb[0].mxu0
      %v825 = vpop.f32.mrb[0].mxu0
      %v826 = vadd.f32 0.0, %v825
      %v827 = vpop.f32.mrb[0].mxu0
      %828 = vmatprep.mubr.bf16.mxu0 0
      %829 = vmatmul.mubr.bf16.gmra.mrb[0].mxu0 %v557
      %v830 = vpop.f32.mrb[0].mxu0
      %v831 = vadd.f32 0.0, %v830
      %v832 = vpop.f32.mrb[0].mxu0
      %v833 = vpop.f32.mrb[0].mxu0
      %v834 = vadd.f32 0.0, %v833
      %v835 = vpop.f32.mrb[0].mxu0
      %836 = vmatprep.mubr.bf16.mxu0 0
      %837 = vmatmul.mubr.bf16.gmra.mrb[0].mxu0 %v558
      %v838 = vpop.f32.mrb[0].mxu0
      %v839 = vadd.f32 0.0, %v838
      %v840 = vpop.f32.mrb[0].mxu0
      %v841 = vpop.f32.mrb[0].mxu0
      %v842 = vadd.f32 0.0, %v841
      %v843 = vpop.f32.mrb[0].mxu0
      %844 = vmatprep.mubr.bf16.mxu0 0
      %845 = vmatmul.mubr.bf16.gmra.mrb[0].mxu0 %v559
      %v846 = vpop.f32.mrb[0].mxu0
      %v847 = vadd.f32 0.0, %v846
      %v848 = vpop.f32.mrb[0].mxu0
      %v849 = vpop.f32.mrb[0].mxu0
      %v850 = vadd.f32 0.0, %v849
      %v851 = vpop.f32.mrb[0].mxu0
      %852 = vmatprep.mubr.bf16.mxu0 0
      %853 = vmatmul.mubr.bf16.gmra.mrb[0].mxu0 %v560
      %v854 = vpop.f32.mrb[0].mxu0
      %v855 = vadd.f32 0.0, %v854
      %v856 = vpop.f32.mrb[0].mxu0
      %v857 = vpop.f32.mrb[0].mxu0
      %v858 = vadd.f32 0.0, %v857
      %v859 = vpop.f32.mrb[0].mxu0
      %860 = vmatprep.mubr.bf16.mxu0 0
      %861 = vmatmul.mubr.bf16.gmra.mrb[0].mxu0 %v561
      %v862 = vpop.f32.mrb[0].mxu0
      %v863 = vadd.f32 0.0, %v862
      %v864 = vpop.f32.mrb[0].mxu0
      %v865 = vpop.f32.mrb[0].mxu0
      %v866 = vadd.f32 0.0, %v865
      %v867 = vpop.f32.mrb[0].mxu0
      %868 = vmatprep.mubr.bf16.mxu0 0
      %869 = vmatmul.mubr.bf16.gmra.mrb[0].mxu0 %v562
      %v870 = vpop.f32.mrb[0].mxu0
      %v871 = vadd.f32 0.0, %v870
      %v872 = vpop.f32.mrb[0].mxu0
      %v873 = vpop.f32.mrb[0].mxu0
      %v874 = vadd.f32 0.0, %v873
      %v875 = vpop.f32.mrb[0].mxu0
      %876 = vmatprep.mubr.bf16.mxu0 0
      %877 = vmatmul.mubr.bf16.gmra.mrb[0].mxu0 %v563
      %v878 = vpop.f32.mrb[0].mxu0
      %v879 = vadd.f32 0.0, %v878
      %v880 = vpop.f32.mrb[0].mxu0
      %v881 = vpop.f32.mrb[0].mxu0
      %v882 = vadd.f32 0.0, %v881
      %v883 = vpop.f32.mrb[0].mxu0
      %884 = vmatprep.mubr.bf16.mxu0 0
      %885 = vmatmul.mubr.bf16.gmra.mrb[0].mxu0 %v564
      %v886 = vpop.f32.mrb[0].mxu0
      %v887 = vadd.f32 0.0, %v886
      %v888 = vpop.f32.mrb[0].mxu0
      %v889 = vpop.f32.mrb[0].mxu0
      %v890 = vadd.f32 0.0, %v889
      %v891 = vpop.f32.mrb[0].mxu0
      %892 = vmatprep.mubr.bf16.mxu0 0
      %893 = vmatmul.mubr.bf16.gmra.mrb[0].mxu0 %v565
      %v894 = vpop.f32.mrb[0].mxu0
      %v895 = vadd.f32 0.0, %v894
      %v896 = vpop.f32.mrb[0].mxu0
      %v897 = vpop.f32.mrb[0].mxu0
      %v898 = vadd.f32 0.0, %v897
      %v899 = vpop.f32.mrb[0].mxu0
      %900 = vmatprep.mubr.bf16.mxu0 0
      %901 = vmatmul.mubr.bf16.gmra.mrb[0].mxu0 %v566
      %v902 = vpop.f32.mrb[0].mxu0
      %v903 = vadd.f32 0.0, %v902
      %v904 = vpop.f32.mrb[0].mxu0
      %v905 = vpop.f32.mrb[0].mxu0
      %v906 = vadd.f32 0.0, %v905
      %v907 = vpop.f32.mrb[0].mxu0
      %908 = vmatprep.mubr.bf16.mxu0 0
      %909 = vmatmul.mubr.bf16.gmra.mrb[0].mxu0 %v567
      %v910 = vpop.f32.mrb[0].mxu0
      %v911 = vadd.f32 0.0, %v910
      %v912 = vpop.f32.mrb[0].mxu0
      %v913 = vpop.f32.mrb[0].mxu0
      %v914 = vadd.f32 0.0, %v913
      %v915 = vpop.f32.mrb[0].mxu0
      %916 = vmatprep.mubr.bf16.mxu0 0
      %917 = vmatmul.mubr.bf16.gmra.mrb[0].mxu0 %v568
      %v918 = vpop.f32.mrb[0].mxu0
      %v919 = vadd.f32 0.0, %v918
      %v920 = vpop.f32.mrb[0].mxu0
      %v921 = vpop.f32.mrb[0].mxu0
      %v922 = vadd.f32 0.0, %v921
      %v923 = vpop.f32.mrb[0].mxu0
      %924 = vmatprep.mubr.bf16.mxu0 0
      %925 = vmatmul.mubr.bf16.gmra.mrb[0].mxu0 %v569
      %v926 = vpop.f32.mrb[0].mxu0
      %v927 = vadd.f32 0.0, %v926
      %v928 = vpop.f32.mrb[0].mxu0
      %v929 = vpop.f32.mrb[0].mxu0
      %v930 = vadd.f32 0.0, %v929
      %v931 = vpop.f32.mrb[0].mxu0
      %932 = vmatprep.mubr.bf16.mxu0 0
      %933 = vmatmul.mubr.bf16.gmra.mrb[0].mxu0 %v570
      %v934 = vpop.f32.mrb[0].mxu0
      %v935 = vadd.f32 0.0, %v934
      %v936 = vpop.f32.mrb[0].mxu0
      %v937 = vpop.f32.mrb[0].mxu0
      %v938 = vadd.f32 0.0, %v937
      %v939 = vpop.f32.mrb[0].mxu0
      %940 = vmatprep.mubr.bf16.mxu0 0
      %941 = vmatmul.mubr.bf16.gmra.mrb[0].mxu0 %v571
      %v942 = vpop.f32.mrb[0].mxu0
      %v943 = vadd.f32 0.0, %v942
      %v944 = vpop.f32.mrb[0].mxu0
      %v945 = vpop.f32.mrb[0].mxu0
      %v946 = vadd.f32 0.0, %v945
      %v947 = vpop.f32.mrb[0].mxu0
      %948 = vmatprep.mubr.bf16.mxu0 0
      %949 = vmatmul.mubr.bf16.gmra.mrb[0].mxu0 %v572
      %v950 = vpop.f32.mrb[0].mxu0
      %v951 = vadd.f32 0.0, %v950
      %v952 = vpop.f32.mrb[0].mxu0
      %v953 = vpop.f32.mrb[0].mxu0
      %v954 = vadd.f32 0.0, %v953
      %v955 = vpop.f32.mrb[0].mxu0
      %956 = vmatprep.mubr.bf16.mxu0 0
      %957 = vmatmul.mubr.bf16.gmra.mrb[0].mxu0 %v573
      %v958 = vpop.f32.mrb[0].mxu0
      %v959 = vadd.f32 0.0, %v958
      %v960 = vpop.f32.mrb[0].mxu0
      %v961 = vpop.f32.mrb[0].mxu0
      %v962 = vadd.f32 0.0, %v961
      %v963 = vpop.f32.mrb[0].mxu0
      %964 = vmatprep.mubr.bf16.mxu0 0
      %965 = vmatmul.mubr.bf16.gmra.mrb[0].mxu0 %v574
      %v966 = vpop.f32.mrb[0].mxu0
      %v967 = vadd.f32 0.0, %v966
      %v968 = vpop.f32.mrb[0].mxu0
      %v969 = vpop.f32.mrb[0].mxu0
      %v970 = vadd.f32 0.0, %v969
      %v971 = vpop.f32.mrb[0].mxu0
      %972 = vmatprep.mubr.bf16.mxu0 0
      %973 = vmatmul.mubr.bf16.gmra.mrb[0].mxu0 %v575
      %v974 = vpop.f32.mrb[0].mxu0
      %v975 = vadd.f32 0.0, %v974
      %v976 = vpop.f32.mrb[0].mxu0
      %v977 = vpop.f32.mrb[0].mxu0
      %v978 = vadd.f32 0.0, %v977
      %v979 = vpop.f32.mrb[0].mxu0
      %980 = vmatprep.mubr.bf16.mxu0 0
      %981 = vmatmul.mubr.bf16.gmra.mrb[0].mxu0 %v576
      %v982 = vpop.f32.mrb[0].mxu0
      %v983 = vadd.f32 0.0, %v982
      %v984 = vpop.f32.mrb[0].mxu0
      %v985 = vpop.f32.mrb[0].mxu0
      %v986 = vadd.f32 0.0, %v985
      %v987 = vpop.f32.mrb[0].mxu0
      %988 = vmatprep.mubr.bf16.mxu0 0
      %989 = vmatmul.mubr.bf16.gmra.mrb[0].mxu0 %v577
      %v990 = vpop.f32.mrb[0].mxu0
      %v991 = vadd.f32 0.0, %v990
      %v992 = vpop.f32.mrb[0].mxu0
      %v993 = vpop.f32.mrb[0].mxu0
      %v994 = vadd.f32 0.0, %v993
      %v995 = vpop.f32.mrb[0].mxu0
      %996 = vmatprep.mubr.bf16.mxu0 0
      %997 = vmatmul.mubr.bf16.gmra.mrb[0].mxu0 %v578
      %v998 = vpop.f32.mrb[0].mxu0
      %v999 = vadd.f32 0.0, %v998
      %v1000 = vpop.f32.mrb[0].mxu0
      %v1001 = vpop.f32.mrb[0].mxu0
      %v1002 = vadd.f32 0.0, %v1001
      %v1003 = vpop.f32.mrb[0].mxu0
      %1004 = vmatprep.mubr.bf16.mxu0 0
      %1005 = vmatmul.mubr.bf16.gmra.mrb[0].mxu0 %v579
      %v1006 = vpop.f32.mrb[0].mxu0
      %v1007 = vadd.f32 0.0, %v1006
      %v1008 = vpop.f32.mrb[0].mxu0
      %v1009 = vpop.f32.mrb[0].mxu0
      %v1010 = vadd.f32 0.0, %v1009
      %v1011 = vpop.f32.mrb[0].mxu0
      %1012 = vmatprep.mubr.bf16.mxu0 0
      %1013 = vmatmul.mubr.bf16.gmra.mrb[0].mxu0 %v580
      %v1014 = vpop.f32.mrb[0].mxu0
      %v1015 = vadd.f32 0.0, %v1014
      %v1016 = vpop.f32.mrb[0].mxu0
      %v1017 = vpop.f32.mrb[0].mxu0
      %v1018 = vadd.f32 0.0, %v1017
      %v1019 = vpop.f32.mrb[0].mxu0
      %1020 = vmatprep.mubr.bf16.mxu0 0
      %1021 = vmatmul.mubr.bf16.gmra.mrb[0].mxu0 %v581
      %v1022 = vpop.f32.mrb[0].mxu0
      %v1023 = vadd.f32 0.0, %v1022
      %v1024 = vpop.f32.mrb[0].mxu0
      %v1025 = vpop.f32.mrb[0].mxu0
      %v1026 = vadd.f32 0.0, %v1025
      %v1027 = vpop.f32.mrb[0].mxu0
      %1028 = vmatprep.mubr.bf16.mxu0 0
      %1029 = vmatmul.mubr.bf16.gmra.mrb[0].mxu0 %v582
      %v1030 = vpop.f32.mrb[0].mxu0
      %v1031 = vadd.f32 0.0, %v1030
      %v1032 = vpop.f32.mrb[0].mxu0
      %v1033 = vpop.f32.mrb[0].mxu0
      %v1034 = vadd.f32 0.0, %v1033
      %v1035 = vpop.f32.mrb[0].mxu0
      %1036 = vmatprep.mubr.bf16.mxu0 0
      %1037 = vmatmul.mubr.bf16.gmra.mrb[0].mxu0 %v583
      %v1038 = vpop.f32.mrb[0].mxu0
      %v1039 = vadd.f32 0.0, %v1038
      %v1040 = vpop.f32.mrb[0].mxu0
      %v1041 = vpop.f32.mrb[0].mxu0
      %v1042 = vadd.f32 0.0, %v1041
      %v1043 = vpop.f32.mrb[0].mxu0
      %1044 = vmatprep.mubr.bf16.mxu0 0
      %1045 = vmatmul.mubr.bf16.gmra.mrb[0].mxu0 %v584
      %v1046 = vpop.f32.mrb[0].mxu0
      %v1047 = vadd.f32 0.0, %v1046
      %v1048 = vpop.f32.mrb[0].mxu0
      %v1049 = vpop.f32.mrb[0].mxu0
      %v1050 = vadd.f32 0.0, %v1049
      %v1051 = vpop.f32.mrb[0].mxu0
      %1052 = vmatprep.mubr.bf16.mxu0 0
      %1053 = vmatmul.mubr.bf16.gmra.mrb[0].mxu0 %v585
      %v1054 = vpop.f32.mrb[0].mxu0
      %v1055 = vadd.f32 0.0, %v1054
      %v1056 = vpop.f32.mrb[0].mxu0
      %v1057 = vpop.f32.mrb[0].mxu0
      %v1058 = vadd.f32 0.0, %v1057
      %v1059 = vpop.f32.mrb[0].mxu0
      %1060 = vmatprep.mubr.bf16.mxu0 0
      %1061 = vmatmul.mubr.bf16.gmra.mrb[0].mxu0 %v586
      %v1062 = vpop.f32.mrb[0].mxu0
      %v1063 = vadd.f32 0.0, %v1062
      %v1064 = vpop.f32.mrb[0].mxu0
      %v1065 = vpop.f32.mrb[0].mxu0
      %v1066 = vadd.f32 0.0, %v1065
      %v1067 = vpop.f32.mrb[0].mxu0
      %1068 = vmatprep.mubr.bf16.mxu0 0
      %1069 = vmatmul.mubr.bf16.gmra.mrb[0].mxu0 %v587
      %v1070 = vpop.f32.mrb[0].mxu0
      %v1071 = vadd.f32 0.0, %v1070
      %v1072 = vpop.f32.mrb[0].mxu0
      %v1073 = vpop.f32.mrb[0].mxu0
      %v1074 = vadd.f32 0.0, %v1073
      %v1075 = vpop.f32.mrb[0].mxu0
      %1076 = vmatprep.mubr.bf16.mxu0 0
      %1077 = vmatmul.mubr.bf16.gmra.mrb[0].mxu0 %v588
      %v1078 = vpop.f32.mrb[0].mxu0
      %v1079 = vadd.f32 0.0, %v1078
      %v1080 = vpop.f32.mrb[0].mxu0
      %v1081 = vpop.f32.mrb[0].mxu0
      %v1082 = vadd.f32 0.0, %v1081
      %v1083 = vpop.f32.mrb[0].mxu0
      %1084 = vmatprep.mubr.bf16.mxu0 0
      %1085 = vmatmul.mubr.bf16.gmra.mrb[0].mxu0 %v589
      %v1086 = vpop.f32.mrb[0].mxu0
      %v1087 = vadd.f32 0.0, %v1086
      %v1088 = vpop.f32.mrb[0].mxu0
      %v1089 = vpop.f32.mrb[0].mxu0
      %v1090 = vadd.f32 0.0, %v1089
      %v1091 = vpop.f32.mrb[0].mxu0
      %1092 = vmatprep.mubr.bf16.mxu0 0
      %1093 = vmatmul.mubr.bf16.gmra.mrb[0].mxu0 %v590
      %v1094 = vpop.f32.mrb[0].mxu0
      %v1095 = vadd.f32 0.0, %v1094
      %v1096 = vpop.f32.mrb[0].mxu0
      %v1097 = vpop.f32.mrb[0].mxu0
      %v1098 = vadd.f32 0.0, %v1097
      %v1099 = vpop.f32.mrb[0].mxu0
      %1100 = vmatprep.mubr.bf16.mxu0 0
      %1101 = vmatmul.mubr.bf16.gmra.mrb[0].mxu0 %v591
      %v1102 = vpop.f32.mrb[0].mxu0
      %v1103 = vadd.f32 0.0, %v1102
      %v1104 = vpop.f32.mrb[0].mxu0
      %v1105 = vpop.f32.mrb[0].mxu0
      %v1106 = vadd.f32 0.0, %v1105
      %v1107 = vpop.f32.mrb[0].mxu0
      %1108 = vmatprep.mubr.bf16.mxu0 0
      %1109 = vmatmul.mubr.bf16.gmra.mrb[0].mxu0 %v592
      %v1110 = vpop.f32.mrb[0].mxu0
      %v1111 = vadd.f32 0.0, %v1110
      %v1112 = vpop.f32.mrb[0].mxu0
      %v1113 = vpop.f32.mrb[0].mxu0
      %v1114 = vadd.f32 0.0, %v1113
      %v1115 = vpop.f32.mrb[0].mxu0
      %1116 = vmatprep.mubr.bf16.mxu0 0
      %1117 = vmatmul.mubr.bf16.gmra.mrb[0].mxu0 %v593
      %v1118 = vpop.f32.mrb[0].mxu0
      %v1119 = vadd.f32 0.0, %v1118
      %v1120 = vpop.f32.mrb[0].mxu0
      %v1121 = vpop.f32.mrb[0].mxu0
      %v1122 = vadd.f32 0.0, %v1121
      %v1123 = vpop.f32.mrb[0].mxu0
      %1124 = vmatprep.mubr.bf16.mxu0 0
      %1125 = vmatmul.mubr.bf16.gmra.mrb[0].mxu0 %v594
      %v1126 = vpop.f32.mrb[0].mxu0
      %v1127 = vadd.f32 0.0, %v1126
      %v1128 = vpop.f32.mrb[0].mxu0
      %v1129 = vpop.f32.mrb[0].mxu0
      %v1130 = vadd.f32 0.0, %v1129
      %v1131 = vpop.f32.mrb[0].mxu0
      %1132 = vmatprep.mubr.bf16.mxu0 0
      %1133 = vmatmul.mubr.bf16.gmra.mrb[0].mxu0 %v595
      %v1134 = vpop.f32.mrb[0].mxu0
      %v1135 = vadd.f32 0.0, %v1134
      %v1136 = vpop.f32.mrb[0].mxu0
      %v1137 = vpop.f32.mrb[0].mxu0
      %v1138 = vadd.f32 0.0, %v1137
      %v1139 = vpop.f32.mrb[0].mxu0
      %1140 = vmatprep.mubr.bf16.mxu0 0
      %1141 = vmatmul.mubr.bf16.gmra.mrb[0].mxu0 %v596
      %v1142 = vpop.f32.mrb[0].mxu0
      %v1143 = vadd.f32 0.0, %v1142
      %v1144 = vpop.f32.mrb[0].mxu0
      %v1145 = vpop.f32.mrb[0].mxu0
      %v1146 = vadd.f32 0.0, %v1145
      %v1147 = vpop.f32.mrb[0].mxu0
      %1148 = vmatprep.mubr.bf16.mxu0 0
      %1149 = vmatmul.mubr.bf16.gmra.mrb[0].mxu0 %v597
      %v1150 = vpop.f32.mrb[0].mxu0
      %v1151 = vadd.f32 0.0, %v1150
      %v1152 = vpop.f32.mrb[0].mxu0
      %v1153 = vpop.f32.mrb[0].mxu0
      %v1154 = vadd.f32 0.0, %v1153
      %v1155 = vpop.f32.mrb[0].mxu0
      %1156 = vmatprep.mubr.bf16.mxu0 0
      %1157 = vmatmul.mubr.bf16.gmra.mrb[0].mxu0 %v598
      %v1158 = vpop.f32.mrb[0].mxu0
      %v1159 = vadd.f32 0.0, %v1158
      %v1160 = vpop.f32.mrb[0].mxu0
      %v1161 = vpop.f32.mrb[0].mxu0
      %v1162 = vadd.f32 0.0, %v1161
      %v1163 = vpop.f32.mrb[0].mxu0
      %1164 = vmatprep.mubr.bf16.mxu0 0
      %1165 = vmatmul.mubr.bf16.gmra.mrb[0].mxu0 %v599
      %v1166 = vpop.f32.mrb[0].mxu0
      %v1167 = vadd.f32 0.0, %v1166
      %v1168 = vpop.f32.mrb[0].mxu0
      %v1169 = vpop.f32.mrb[0].mxu0
      %v1170 = vadd.f32 0.0, %v1169
      %v1171 = vpop.f32.mrb[0].mxu0
      %1172 = vmatprep.mubr.bf16.mxu0 0
      %1173 = vmatmul.mubr.bf16.gmra.mrb[0].mxu0 %v600
      %v1174 = vpop.f32.mrb[0].mxu0
      %v1175 = vadd.f32 0.0, %v1174
      %v1176 = vpop.f32.mrb[0].mxu0
      %v1177 = vpop.f32.mrb[0].mxu0
      %v1178 = vadd.f32 0.0, %v1177
      %v1179 = vpop.f32.mrb[0].mxu0
      %1180 = vmatprep.mubr.bf16.mxu0 0
      %1181 = vmatmul.mubr.bf16.gmra.mrb[0].mxu0 %v601
      %v1182 = vpop.f32.mrb[0].mxu0
      %v1183 = vadd.f32 0.0, %v1182
      %v1184 = vpop.f32.mrb[0].mxu0
      %v1185 = vpop.f32.mrb[0].mxu0
      %v1186 = vadd.f32 0.0, %v1185
      %v1187 = vpop.f32.mrb[0].mxu0
      %1188 = vmatprep.mubr.bf16.mxu0 0
      %1189 = vmatmul.mubr.bf16.gmra.mrb[0].mxu0 %v602
      %v1190 = vpop.f32.mrb[0].mxu0
      %v1191 = vadd.f32 0.0, %v1190
      %v1192 = vpop.f32.mrb[0].mxu0
      %v1193 = vpop.f32.mrb[0].mxu0
      %v1194 = vadd.f32 0.0, %v1193
      %v1195 = vpop.f32.mrb[0].mxu0
      %1196 = vmatprep.mubr.bf16.mxu0 0
      %1197 = vmatmul.mubr.bf16.gmra.mrb[0].mxu0 %v603
      %v1198 = vpop.f32.mrb[0].mxu0
      %v1199 = vadd.f32 0.0, %v1198
      %v1200 = vpop.f32.mrb[0].mxu0
      %v1201 = vpop.f32.mrb[0].mxu0
      %v1202 = vadd.f32 0.0, %v1201
      %v1203 = vpop.f32.mrb[0].mxu0
      %1204 = vmatprep.mubr.bf16.mxu0 0
      %1205 = vmatmul.mubr.bf16.gmra.mrb[0].mxu0 %v604
      %v1206 = vpop.f32.mrb[0].mxu0
      %v1207 = vadd.f32 0.0, %v1206
      %v1208 = vpop.f32.mrb[0].mxu0
      %v1209 = vpop.f32.mrb[0].mxu0
      %v1210 = vadd.f32 0.0, %v1209
      %v1211 = vpop.f32.mrb[0].mxu0
      %1212 = vmatprep.mubr.bf16.mxu0 0
      %1213 = vmatmul.mubr.bf16.gmra.mrb[0].mxu0 %v605
      %v1214 = vpop.f32.mrb[0].mxu0
      %v1215 = vadd.f32 0.0, %v1214
      %v1216 = vpop.f32.mrb[0].mxu0
      %v1217 = vpop.f32.mrb[0].mxu0
      %v1218 = vadd.f32 0.0, %v1217
      %v1219 = vpop.f32.mrb[0].mxu0
      %1220 = vmatprep.mubr.bf16.mxu0 0
      %1221 = vmatmul.mubr.bf16.gmra.mrb[0].mxu0 %v606
      %v1222 = vpop.f32.mrb[0].mxu0
      %v1223 = vadd.f32 0.0, %v1222
      %v1224 = vpop.f32.mrb[0].mxu0
      %v1225 = vpop.f32.mrb[0].mxu0
      %v1226 = vadd.f32 0.0, %v1225
      %v1227 = vpop.f32.mrb[0].mxu0
      %1228 = vmatprep.mubr.bf16.mxu0 0
      %1229 = vmatmul.mubr.bf16.gmra.mrb[0].mxu0 %v607
      %v1230 = vpop.f32.mrb[0].mxu0
      %v1231 = vadd.f32 0.0, %v1230
      %v1232 = vpop.f32.mrb[0].mxu0
      %v1233 = vpop.f32.mrb[0].mxu0
      %v1234 = vadd.f32 0.0, %v1233
      %v1235 = vpop.f32.mrb[0].mxu0
      %1236 = vmatprep.mubr.bf16.mxu0 0
      %1237 = vmatmul.mubr.bf16.gmra.mrb[0].mxu0 %v608
      %v1238 = vpop.f32.mrb[0].mxu0
      %v1239 = vadd.f32 0.0, %v1238
      %v1240 = vpop.f32.mrb[0].mxu0
      %v1241 = vpop.f32.mrb[0].mxu0
      %v1242 = vadd.f32 0.0, %v1241
      %v1243 = vpop.f32.mrb[0].mxu0
      %1244 = vmatprep.mubr.bf16.mxu0 0
      %1245 = vmatmul.mubr.bf16.gmra.mrb[0].mxu0 %v609
      %v1246 = vpop.f32.mrb[0].mxu0
      %v1247 = vadd.f32 0.0, %v1246
      %v1248 = vpop.f32.mrb[0].mxu0
      %v1249 = vpop.f32.mrb[0].mxu0
      %v1250 = vadd.f32 0.0, %v1249
      %v1251 = vpop.f32.mrb[0].mxu0
      %1252 = vmatprep.mubr.bf16.mxu0 0
      %1253 = vmatmul.mubr.bf16.gmra.mrb[0].mxu0 %v610
      %v1254 = vpop.f32.mrb[0].mxu0
      %v1255 = vadd.f32 0.0, %v1254
      %v1256 = vpop.f32.mrb[0].mxu0
      %v1257 = vpop.f32.mrb[0].mxu0
      %v1258 = vadd.f32 0.0, %v1257
      %v1259 = vpop.f32.mrb[0].mxu0
      %1260 = vmatprep.mubr.bf16.mxu0 0
      %1261 = vmatmul.mubr.bf16.gmra.mrb[0].mxu0 %v611
      %v1262 = vpop.f32.mrb[0].mxu0
      %v1263 = vadd.f32 0.0, %v1262
      %v1264 = vpop.f32.mrb[0].mxu0
      %v1265 = vpop.f32.mrb[0].mxu0
      %v1266 = vadd.f32 0.0, %v1265
      %v1267 = vpop.f32.mrb[0].mxu0
      %1268 = vdwg.mxu0
      %v1269 = vtanh.pop %v759
      %v1270 = vtanh.pop %v762
      %v1271 = vtanh.pop %v767
      %v1272 = vtanh.pop %v770
      %v1273 = vtanh.pop %v775
      %v1274 = vtanh.pop %v778
      %v1275 = vtanh.pop %v783
      %v1276 = vtanh.pop %v786
      %v1277 = vtanh.pop %v791
      %v1278 = vtanh.pop %v794
      %v1279 = vtanh.pop %v799
      %v1280 = vtanh.pop %v802
      %v1281 = vtanh.pop %v807
      %v1282 = vtanh.pop %v810
      %v1283 = vtanh.pop %v815
      %v1284 = vtanh.pop %v818
      %v1285 = vtanh.pop %v823
      %v1286 = vtanh.pop %v826
      %v1287 = vtanh.pop %v831
      %v1288 = vtanh.pop %v834
      %v1289 = vtanh.pop %v839
      %v1290 = vtanh.pop %v842
      %v1291 = vtanh.pop %v847
      %v1292 = vtanh.pop %v850
      %v1293 = vtanh.pop %v855
      %v1294 = vtanh.pop %v858
      %v1295 = vtanh.pop %v863
      %v1296 = vtanh.pop %v866
      %v1297 = vtanh.pop %v871
      %v1298 = vtanh.pop %v874
      %v1299 = vtanh.pop %v879
      %v1300 = vtanh.pop %v882
      %v1301 = vtanh.pop %v887
      %v1302 = vtanh.pop %v890
      %v1303 = vtanh.pop %v895
      %v1304 = vtanh.pop %v898
      %v1305 = vtanh.pop %v903
      %v1306 = vtanh.pop %v906
      %v1307 = vtanh.pop %v911
      %v1308 = vtanh.pop %v914
      %v1309 = vtanh.pop %v919
      %v1310 = vtanh.pop %v922
      %v1311 = vtanh.pop %v927
      %v1312 = vtanh.pop %v930
      %v1313 = vtanh.pop %v935
      %v1314 = vtanh.pop %v938
      %v1315 = vtanh.pop %v943
      %v1316 = vtanh.pop %v946
      %v1317 = vtanh.pop %v951
      %v1318 = vtanh.pop %v954
      %v1319 = vtanh.pop %v959
      %v1320 = vtanh.pop %v962
      %v1321 = vtanh.pop %v967
      %v1322 = vtanh.pop %v970
      %v1323 = vtanh.pop %v975
      %v1324 = vtanh.pop %v978
      %v1325 = vtanh.pop %v983
      %v1326 = vtanh.pop %v986
      %v1327 = vtanh.pop %v991
      %v1328 = vtanh.pop %v994
      %v1329 = vtanh.pop %v999
      %v1330 = vtanh.pop %v1002
      %v1331 = vtanh.pop %v1007
      %v1332 = vtanh.pop %v1010
      %v1333 = vtanh.pop %v1015
      %v1334 = vtanh.pop %v1018
      %v1335 = vtanh.pop %v1023
      %v1336 = vtanh.pop %v1026
      %v1337 = vtanh.pop %v1031
      %v1338 = vtanh.pop %v1034
      %v1339 = vtanh.pop %v1039
      %v1340 = vtanh.pop %v1042
      %v1341 = vtanh.pop %v1047
      %v1342 = vtanh.pop %v1050
      %v1343 = vtanh.pop %v1055
      %v1344 = vtanh.pop %v1058
      %v1345 = vtanh.pop %v1063
      %v1346 = vtanh.pop %v1066
      %v1347 = vtanh.pop %v1071
      %v1348 = vtanh.pop %v1074
      %v1349 = vtanh.pop %v1079
      %v1350 = vtanh.pop %v1082
      %v1351 = vtanh.pop %v1087
      %v1352 = vtanh.pop %v1090
      %v1353 = vtanh.pop %v1095
      %v1354 = vtanh.pop %v1098
      %v1355 = vtanh.pop %v1103
      %v1356 = vtanh.pop %v1106
      %v1357 = vtanh.pop %v1111
      %v1358 = vtanh.pop %v1114
      %v1359 = vtanh.pop %v1119
      %v1360 = vtanh.pop %v1122
      %v1361 = vtanh.pop %v1127
      %v1362 = vtanh.pop %v1130
      %v1363 = vtanh.pop %v1135
      %v1364 = vtanh.pop %v1138
      %v1365 = vtanh.pop %v1143
      %v1366 = vtanh.pop %v1146
      %v1367 = vtanh.pop %v1151
      %v1368 = vtanh.pop %v1154
      %v1369 = vtanh.pop %v1159
      %v1370 = vtanh.pop %v1162
      %v1371 = vtanh.pop %v1167
      %v1372 = vtanh.pop %v1170
      %v1373 = vtanh.pop %v1175
      %v1374 = vtanh.pop %v1178
      %v1375 = vtanh.pop %v1183
      %v1376 = vtanh.pop %v1186
      %v1377 = vtanh.pop %v1191
      %v1378 = vtanh.pop %v1194
      %v1379 = vtanh.pop %v1199
      %v1380 = vtanh.pop %v1202
      %v1381 = vtanh.pop %v1207
      %v1382 = vtanh.pop %v1210
      %v1383 = vtanh.pop %v1215
      %v1384 = vtanh.pop %v1218
      %v1385 = vtanh.pop %v1223
      %v1386 = vtanh.pop %v1226
      %v1387 = vtanh.pop %v1231
      %v1388 = vtanh.pop %v1234
      %v1389 = vtanh.pop %v1239
      %v1390 = vtanh.pop %v1242
      %v1391 = vtanh.pop %v1247
      %v1392 = vtanh.pop %v1250
      %v1393 = vtanh.pop %v1255
      %v1394 = vtanh.pop %v1258
      %v1395 = vtanh.pop %v1263
      %v1396 = vtanh.pop %v1266
      %v1397 = vpack.c.bf16 %v1270, %v1269
      %v1398 = vpack.c.bf16 %v1272, %v1271
      %v1399 = vpack.c.bf16 %v1274, %v1273
      %v1400 = vpack.c.bf16 %v1276, %v1275
      %v1401 = vpack.c.bf16 %v1278, %v1277
      %v1402 = vpack.c.bf16 %v1280, %v1279
      %v1403 = vpack.c.bf16 %v1282, %v1281
      %v1404 = vpack.c.bf16 %v1284, %v1283
      %v1405 = vpack.c.bf16 %v1286, %v1285
      %v1406 = vpack.c.bf16 %v1288, %v1287
      %v1407 = vpack.c.bf16 %v1290, %v1289
      %v1408 = vpack.c.bf16 %v1292, %v1291
      %v1409 = vpack.c.bf16 %v1294, %v1293
      %v1410 = vpack.c.bf16 %v1296, %v1295
      %v1411 = vpack.c.bf16 %v1298, %v1297
      %v1412 = vpack.c.bf16 %v1300, %v1299
      %v1413 = vpack.c.bf16 %v1302, %v1301
      %v1414 = vpack.c.bf16 %v1304, %v1303
      %v1415 = vpack.c.bf16 %v1306, %v1305
      %v1416 = vpack.c.bf16 %v1308, %v1307
      %v1417 = vpack.c.bf16 %v1310, %v1309
      %v1418 = vpack.c.bf16 %v1312, %v1311
      %v1419 = vpack.c.bf16 %v1314, %v1313
      %v1420 = vpack.c.bf16 %v1316, %v1315
      %v1421 = vpack.c.bf16 %v1318, %v1317
      %v1422 = vpack.c.bf16 %v1320, %v1319
      %v1423 = vpack.c.bf16 %v1322, %v1321
      %v1424 = vpack.c.bf16 %v1324, %v1323
      %v1425 = vpack.c.bf16 %v1326, %v1325
      %v1426 = vpack.c.bf16 %v1328, %v1327
      %v1427 = vpack.c.bf16 %v1330, %v1329
      %v1428 = vpack.c.bf16 %v1332, %v1331
      %v1429 = vpack.c.bf16 %v1334, %v1333
      %v1430 = vpack.c.bf16 %v1336, %v1335
      %v1431 = vpack.c.bf16 %v1338, %v1337
      %v1432 = vpack.c.bf16 %v1340, %v1339
      %v1433 = vpack.c.bf16 %v1342, %v1341
      %v1434 = vpack.c.bf16 %v1344, %v1343
      %v1435 = vpack.c.bf16 %v1346, %v1345
      %v1436 = vpack.c.bf16 %v1348, %v1347
      %v1437 = vpack.c.bf16 %v1350, %v1349
      %v1438 = vpack.c.bf16 %v1352, %v1351
      %v1439 = vpack.c.bf16 %v1354, %v1353
      %v1440 = vpack.c.bf16 %v1356, %v1355
      %v1441 = vpack.c.bf16 %v1358, %v1357
      %v1442 = vpack.c.bf16 %v1360, %v1359
      %v1443 = vpack.c.bf16 %v1362, %v1361
      %v1444 = vpack.c.bf16 %v1364, %v1363
      %v1445 = vpack.c.bf16 %v1366, %v1365
      %v1446 = vpack.c.bf16 %v1368, %v1367
      %v1447 = vpack.c.bf16 %v1370, %v1369
      %v1448 = vpack.c.bf16 %v1372, %v1371
      %v1449 = vpack.c.bf16 %v1374, %v1373
      %v1450 = vpack.c.bf16 %v1376, %v1375
      %v1451 = vpack.c.bf16 %v1378, %v1377
      %v1452 = vpack.c.bf16 %v1380, %v1379
      %v1453 = vpack.c.bf16 %v1382, %v1381
      %v1454 = vpack.c.bf16 %v1384, %v1383
      %v1455 = vpack.c.bf16 %v1386, %v1385
      %v1456 = vpack.c.bf16 %v1388, %v1387
      %v1457 = vpack.c.bf16 %v1390, %v1389
      %v1458 = vpack.c.bf16 %v1392, %v1391
      %v1459 = vpack.c.bf16 %v1394, %v1393
      %v1460 = vpack.c.bf16 %v1396, %v1395
      %v1525 = vunpack.c.l.b16 %v1397
      %v1526 = vunpack.c.h.b16 %v1397
      %v1527 = vunpack.c.l.b16 %v1398
      %v1528 = vunpack.c.h.b16 %v1398
      %v1529 = vunpack.c.l.b16 %v1399
      %v1530 = vunpack.c.h.b16 %v1399
      %v1531 = vunpack.c.l.b16 %v1400
      %v1532 = vunpack.c.h.b16 %v1400
      %v1533 = vunpack.c.l.b16 %v1401
      %v1534 = vunpack.c.h.b16 %v1401
      %v1535 = vunpack.c.l.b16 %v1402
      %v1536 = vunpack.c.h.b16 %v1402
      %v1537 = vunpack.c.l.b16 %v1403
      %v1538 = vunpack.c.h.b16 %v1403
      %v1539 = vunpack.c.l.b16 %v1404
      %v1540 = vunpack.c.h.b16 %v1404
      %v1541 = vunpack.c.l.b16 %v1405
      %v1542 = vunpack.c.h.b16 %v1405
      %v1543 = vunpack.c.l.b16 %v1406
      %v1544 = vunpack.c.h.b16 %v1406
      %v1545 = vunpack.c.l.b16 %v1407
      %v1546 = vunpack.c.h.b16 %v1407
      %v1547 = vunpack.c.l.b16 %v1408
      %v1548 = vunpack.c.h.b16 %v1408
      %v1549 = vunpack.c.l.b16 %v1409
      %v1550 = vunpack.c.h.b16 %v1409
      %v1551 = vunpack.c.l.b16 %v1410
      %v1552 = vunpack.c.h.b16 %v1410
      %v1553 = vunpack.c.l.b16 %v1411
      %v1554 = vunpack.c.h.b16 %v1411
      %v1555 = vunpack.c.l.b16 %v1412
      %v1556 = vunpack.c.h.b16 %v1412
      %v1557 = vunpack.c.l.b16 %v1413
      %v1558 = vunpack.c.h.b16 %v1413
      %v1559 = vunpack.c.l.b16 %v1414
      %v1560 = vunpack.c.h.b16 %v1414
      %v1561 = vunpack.c.l.b16 %v1415
      %v1562 = vunpack.c.h.b16 %v1415
      %v1563 = vunpack.c.l.b16 %v1416
      %v1564 = vunpack.c.h.b16 %v1416
      %v1565 = vunpack.c.l.b16 %v1417
      %v1566 = vunpack.c.h.b16 %v1417
      %v1567 = vunpack.c.l.b16 %v1418
      %v1568 = vunpack.c.h.b16 %v1418
      %v1569 = vunpack.c.l.b16 %v1419
      %v1570 = vunpack.c.h.b16 %v1419
      %v1571 = vunpack.c.l.b16 %v1420
      %v1572 = vunpack.c.h.b16 %v1420
      %v1573 = vunpack.c.l.b16 %v1421
      %v1574 = vunpack.c.h.b16 %v1421
      %v1575 = vunpack.c.l.b16 %v1422
      %v1576 = vunpack.c.h.b16 %v1422
      %v1577 = vunpack.c.l.b16 %v1423
      %v1578 = vunpack.c.h.b16 %v1423
      %v1579 = vunpack.c.l.b16 %v1424
      %v1580 = vunpack.c.h.b16 %v1424
      %v1581 = vunpack.c.l.b16 %v1425
      %v1582 = vunpack.c.h.b16 %v1425
      %v1583 = vunpack.c.l.b16 %v1426
      %v1584 = vunpack.c.h.b16 %v1426
      %v1585 = vunpack.c.l.b16 %v1427
      %v1586 = vunpack.c.h.b16 %v1427
      %v1587 = vunpack.c.l.b16 %v1428
      %v1588 = vunpack.c.h.b16 %v1428
      %v1589 = vunpack.c.l.b16 %v1429
      %v1590 = vunpack.c.h.b16 %v1429
      %v1591 = vunpack.c.l.b16 %v1430
      %v1592 = vunpack.c.h.b16 %v1430
      %v1593 = vunpack.c.l.b16 %v1431
      %v1594 = vunpack.c.h.b16 %v1431
      %v1595 = vunpack.c.l.b16 %v1432
      %v1596 = vunpack.c.h.b16 %v1432
      %v1597 = vunpack.c.l.b16 %v1433
      %v1598 = vunpack.c.h.b16 %v1433
      %v1599 = vunpack.c.l.b16 %v1434
      %v1600 = vunpack.c.h.b16 %v1434
      %v1601 = vunpack.c.l.b16 %v1435
      %v1602 = vunpack.c.h.b16 %v1435
      %v1603 = vunpack.c.l.b16 %v1436
      %v1604 = vunpack.c.h.b16 %v1436
      %v1605 = vunpack.c.l.b16 %v1437
      %v1606 = vunpack.c.h.b16 %v1437
      %v1607 = vunpack.c.l.b16 %v1438
      %v1608 = vunpack.c.h.b16 %v1438
      %v1609 = vunpack.c.l.b16 %v1439
      %v1610 = vunpack.c.h.b16 %v1439
      %v1611 = vunpack.c.l.b16 %v1440
      %v1612 = vunpack.c.h.b16 %v1440
      %v1613 = vunpack.c.l.b16 %v1441
      %v1614 = vunpack.c.h.b16 %v1441
      %v1615 = vunpack.c.l.b16 %v1442
      %v1616 = vunpack.c.h.b16 %v1442
      %v1617 = vunpack.c.l.b16 %v1443
      %v1618 = vunpack.c.h.b16 %v1443
      %v1619 = vunpack.c.l.b16 %v1444
      %v1620 = vunpack.c.h.b16 %v1444
      %v1621 = vunpack.c.l.b16 %v1445
      %v1622 = vunpack.c.h.b16 %v1445
      %v1623 = vunpack.c.l.b16 %v1446
      %v1624 = vunpack.c.h.b16 %v1446
      %v1625 = vunpack.c.l.b16 %v1447
      %v1626 = vunpack.c.h.b16 %v1447
      %v1627 = vunpack.c.l.b16 %v1448
      %v1628 = vunpack.c.h.b16 %v1448
      %v1629 = vunpack.c.l.b16 %v1449
      %v1630 = vunpack.c.h.b16 %v1449
      %v1631 = vunpack.c.l.b16 %v1450
      %v1632 = vunpack.c.h.b16 %v1450
      %v1633 = vunpack.c.l.b16 %v1451
      %v1634 = vunpack.c.h.b16 %v1451
      %v1635 = vunpack.c.l.b16 %v1452
      %v1636 = vunpack.c.h.b16 %v1452
      %v1637 = vunpack.c.l.b16 %v1453
      %v1638 = vunpack.c.h.b16 %v1453
      %v1639 = vunpack.c.l.b16 %v1454
      %v1640 = vunpack.c.h.b16 %v1454
      %v1641 = vunpack.c.l.b16 %v1455
      %v1642 = vunpack.c.h.b16 %v1455
      %v1643 = vunpack.c.l.b16 %v1456
      %v1644 = vunpack.c.h.b16 %v1456
      %v1645 = vunpack.c.l.b16 %v1457
      %v1646 = vunpack.c.h.b16 %v1457
      %v1647 = vunpack.c.l.b16 %v1458
      %v1648 = vunpack.c.h.b16 %v1458
      %v1649 = vunpack.c.l.b16 %v1459
      %v1650 = vunpack.c.h.b16 %v1459
      %v1651 = vunpack.c.l.b16 %v1460
      %v1652 = vunpack.c.h.b16 %v1460
      %v1653 = vpack.c.b16 %v1525, %v1525
      %v1654 = vpack.c.b16 %v1526, %v1526
      %v1655 = vpack.c.b16 %v1527, %v1527
      %v1656 = vpack.c.b16 %v1528, %v1528
      %v1657 = vpack.c.b16 %v1529, %v1529
      %v1658 = vpack.c.b16 %v1530, %v1530
      %v1659 = vpack.c.b16 %v1531, %v1531
      %v1660 = vpack.c.b16 %v1532, %v1532
      %v1661 = vpack.c.b16 %v1533, %v1533
      %v1662 = vpack.c.b16 %v1534, %v1534
      %v1663 = vpack.c.b16 %v1535, %v1535
      %v1664 = vpack.c.b16 %v1536, %v1536
      %v1665 = vpack.c.b16 %v1537, %v1537
      %v1666 = vpack.c.b16 %v1538, %v1538
      %v1667 = vpack.c.b16 %v1539, %v1539
      %v1668 = vpack.c.b16 %v1540, %v1540
      %v1669 = vpack.c.b16 %v1541, %v1541
      %v1670 = vpack.c.b16 %v1542, %v1542
      %v1671 = vpack.c.b16 %v1543, %v1543
      %v1672 = vpack.c.b16 %v1544, %v1544
      %v1673 = vpack.c.b16 %v1545, %v1545
      %v1674 = vpack.c.b16 %v1546, %v1546
      %v1675 = vpack.c.b16 %v1547, %v1547
      %v1676 = vpack.c.b16 %v1548, %v1548
      %v1677 = vpack.c.b16 %v1549, %v1549
      %v1678 = vpack.c.b16 %v1550, %v1550
      %v1679 = vpack.c.b16 %v1551, %v1551
      %v1680 = vpack.c.b16 %v1552, %v1552
      %v1681 = vpack.c.b16 %v1553, %v1553
      %v1682 = vpack.c.b16 %v1554, %v1554
      %v1683 = vpack.c.b16 %v1555, %v1555
      %v1684 = vpack.c.b16 %v1556, %v1556
      %v1685 = vpack.c.b16 %v1557, %v1557
      %v1686 = vpack.c.b16 %v1558, %v1558
      %v1687 = vpack.c.b16 %v1559, %v1559
      %v1688 = vpack.c.b16 %v1560, %v1560
      %v1689 = vpack.c.b16 %v1561, %v1561
      %v1690 = vpack.c.b16 %v1562, %v1562
      %v1691 = vpack.c.b16 %v1563, %v1563
      %v1692 = vpack.c.b16 %v1564, %v1564
      %v1693 = vpack.c.b16 %v1565, %v1565
      %v1694 = vpack.c.b16 %v1566, %v1566
      %v1695 = vpack.c.b16 %v1567, %v1567
      %v1696 = vpack.c.b16 %v1568, %v1568
      %v1697 = vpack.c.b16 %v1569, %v1569
      %v1698 = vpack.c.b16 %v1570, %v1570
      %v1699 = vpack.c.b16 %v1571, %v1571
      %v1700 = vpack.c.b16 %v1572, %v1572
      %v1701 = vpack.c.b16 %v1573, %v1573
      %v1702 = vpack.c.b16 %v1574, %v1574
      %v1703 = vpack.c.b16 %v1575, %v1575
      %v1704 = vpack.c.b16 %v1576, %v1576
      %v1705 = vpack.c.b16 %v1577, %v1577
      %v1706 = vpack.c.b16 %v1578, %v1578
      %v1707 = vpack.c.b16 %v1579, %v1579
      %v1708 = vpack.c.b16 %v1580, %v1580
      %v1709 = vpack.c.b16 %v1581, %v1581
      %v1710 = vpack.c.b16 %v1582, %v1582
      %v1711 = vpack.c.b16 %v1583, %v1583
      %v1712 = vpack.c.b16 %v1584, %v1584
      %v1713 = vpack.c.b16 %v1585, %v1585
      %v1714 = vpack.c.b16 %v1586, %v1586
      %v1715 = vpack.c.b16 %v1587, %v1587
      %v1716 = vpack.c.b16 %v1588, %v1588
      %v1717 = vpack.c.b16 %v1589, %v1589
      %v1718 = vpack.c.b16 %v1590, %v1590
      %v1719 = vpack.c.b16 %v1591, %v1591
      %v1720 = vpack.c.b16 %v1592, %v1592
      %v1721 = vpack.c.b16 %v1593, %v1593
      %v1722 = vpack.c.b16 %v1594, %v1594
      %v1723 = vpack.c.b16 %v1595, %v1595
      %v1724 = vpack.c.b16 %v1596, %v1596
      %v1725 = vpack.c.b16 %v1597, %v1597
      %v1726 = vpack.c.b16 %v1598, %v1598
      %v1727 = vpack.c.b16 %v1599, %v1599
      %v1728 = vpack.c.b16 %v1600, %v1600
      %v1729 = vpack.c.b16 %v1601, %v1601
      %v1730 = vpack.c.b16 %v1602, %v1602
      %v1731 = vpack.c.b16 %v1603, %v1603
      %v1732 = vpack.c.b16 %v1604, %v1604
      %v1733 = vpack.c.b16 %v1605, %v1605
      %v1734 = vpack.c.b16 %v1606, %v1606
      %v1735 = vpack.c.b16 %v1607, %v1607
      %v1736 = vpack.c.b16 %v1608, %v1608
      %v1737 = vpack.c.b16 %v1609, %v1609
      %v1738 = vpack.c.b16 %v1610, %v1610
      %v1739 = vpack.c.b16 %v1611, %v1611
      %v1740 = vpack.c.b16 %v1612, %v1612
      %v1741 = vpack.c.b16 %v1613, %v1613
      %v1742 = vpack.c.b16 %v1614, %v1614
      %v1743 = vpack.c.b16 %v1615, %v1615
      %v1744 = vpack.c.b16 %v1616, %v1616
      %v1745 = vpack.c.b16 %v1617, %v1617
      %v1746 = vpack.c.b16 %v1618, %v1618
      %v1747 = vpack.c.b16 %v1619, %v1619
      %v1748 = vpack.c.b16 %v1620, %v1620
      %v1749 = vpack.c.b16 %v1621, %v1621
      %v1750 = vpack.c.b16 %v1622, %v1622
      %v1751 = vpack.c.b16 %v1623, %v1623
      %v1752 = vpack.c.b16 %v1624, %v1624
      %v1753 = vpack.c.b16 %v1625, %v1625
      %v1754 = vpack.c.b16 %v1626, %v1626
      %v1755 = vpack.c.b16 %v1627, %v1627
      %v1756 = vpack.c.b16 %v1628, %v1628
      %v1757 = vpack.c.b16 %v1629, %v1629
      %v1758 = vpack.c.b16 %v1630, %v1630
      %v1759 = vpack.c.b16 %v1631, %v1631
      %v1760 = vpack.c.b16 %v1632, %v1632
      %v1761 = vpack.c.b16 %v1633, %v1633
      %v1762 = vpack.c.b16 %v1634, %v1634
      %v1763 = vpack.c.b16 %v1635, %v1635
      %v1764 = vpack.c.b16 %v1636, %v1636
      %v1765 = vpack.c.b16 %v1637, %v1637
      %v1766 = vpack.c.b16 %v1638, %v1638
      %v1767 = vpack.c.b16 %v1639, %v1639
      %v1768 = vpack.c.b16 %v1640, %v1640
      %v1769 = vpack.c.b16 %v1641, %v1641
      %v1770 = vpack.c.b16 %v1642, %v1642
      %v1771 = vpack.c.b16 %v1643, %v1643
      %v1772 = vpack.c.b16 %v1644, %v1644
      %v1773 = vpack.c.b16 %v1645, %v1645
      %v1774 = vpack.c.b16 %v1646, %v1646
      %v1775 = vpack.c.b16 %v1647, %v1647
      %v1776 = vpack.c.b16 %v1648, %v1648
      %v1777 = vpack.c.b16 %v1649, %v1649
      %v1778 = vpack.c.b16 %v1650, %v1650
      %v1779 = vpack.c.b16 %v1651, %v1651
      %v1780 = vpack.c.b16 %v1652, %v1652
      %1909 = vst [vmem:[%s145] sm:$0xf] %v1653
      %1910 = vst [vmem:[%s145 + $0x4] sm:$0xf] %v1654
      %1911 = vst [vmem:[%s145 + $0x8] sm:$0xf] %v1655
      %1912 = vst [vmem:[%s145 + $0xc] sm:$0xf] %v1656
      %1913 = vst [vmem:[%s145 + $0x10] sm:$0xf] %v1657
      %1914 = vst [vmem:[%s145 + $0x14] sm:$0xf] %v1658
      %1915 = vst [vmem:[%s145 + $0x18] sm:$0xf] %v1659
      %1916 = vst [vmem:[%s145 + $0x1c] sm:$0xf] %v1660
      %1917 = vst [vmem:[%s145 + $0x20] sm:$0xf] %v1661
      %1918 = vst [vmem:[%s145 + $0x24] sm:$0xf] %v1662
      %1919 = vst [vmem:[%s145 + $0x28] sm:$0xf] %v1663
      %1920 = vst [vmem:[%s145 + $0x2c] sm:$0xf] %v1664
      %1921 = vst [vmem:[%s145 + $0x30] sm:$0xf] %v1665
      %1922 = vst [vmem:[%s145 + $0x34] sm:$0xf] %v1666
      %1923 = vst [vmem:[%s145 + $0x38] sm:$0xf] %v1667
      %1924 = vst [vmem:[%s145 + $0x3c] sm:$0xf] %v1668
      %1925 = vst [vmem:[%s145 + $0x40] sm:$0xf] %v1669
      %1926 = vst [vmem:[%s145 + $0x44] sm:$0xf] %v1670
      %1927 = vst [vmem:[%s145 + $0x48] sm:$0xf] %v1671
      %1928 = vst [vmem:[%s145 + $0x4c] sm:$0xf] %v1672
      %1929 = vst [vmem:[%s145 + $0x50] sm:$0xf] %v1673
      %1930 = vst [vmem:[%s145 + $0x54] sm:$0xf] %v1674
      %1931 = vst [vmem:[%s145 + $0x58] sm:$0xf] %v1675
      %1932 = vst [vmem:[%s145 + $0x5c] sm:$0xf] %v1676
      %1933 = vst [vmem:[%s145 + $0x60] sm:$0xf] %v1677
      %1934 = vst [vmem:[%s145 + $0x64] sm:$0xf] %v1678
      %1935 = vst [vmem:[%s145 + $0x68] sm:$0xf] %v1679
      %1936 = vst [vmem:[%s145 + $0x6c] sm:$0xf] %v1680
      %1937 = vst [vmem:[%s145 + $0x70] sm:$0xf] %v1681
      %1938 = vst [vmem:[%s145 + $0x74] sm:$0xf] %v1682
      %1939 = vst [vmem:[%s145 + $0x78] sm:$0xf] %v1683
      %1940 = vst [vmem:[%s145 + $0x7c] sm:$0xf] %v1684
      %1941 = vst [vmem:[%s145 + $0x80] sm:$0xf] %v1685
      %1942 = vst [vmem:[%s145 + $0x84] sm:$0xf] %v1686
      %1943 = vst [vmem:[%s145 + $0x88] sm:$0xf] %v1687
      %1944 = vst [vmem:[%s145 + $0x8c] sm:$0xf] %v1688
      %1945 = vst [vmem:[%s145 + $0x90] sm:$0xf] %v1689
      %1946 = vst [vmem:[%s145 + $0x94] sm:$0xf] %v1690
      %1947 = vst [vmem:[%s145 + $0x98] sm:$0xf] %v1691
      %1948 = vst [vmem:[%s145 + $0x9c] sm:$0xf] %v1692
      %1949 = vst [vmem:[%s145 + $0xa0] sm:$0xf] %v1693
      %1950 = vst [vmem:[%s145 + $0xa4] sm:$0xf] %v1694
      %1951 = vst [vmem:[%s145 + $0xa8] sm:$0xf] %v1695
      %1952 = vst [vmem:[%s145 + $0xac] sm:$0xf] %v1696
      %1953 = vst [vmem:[%s145 + $0xb0] sm:$0xf] %v1697
      %1954 = vst [vmem:[%s145 + $0xb4] sm:$0xf] %v1698
      %1955 = vst [vmem:[%s145 + $0xb8] sm:$0xf] %v1699
      %1956 = vst [vmem:[%s145 + $0xbc] sm:$0xf] %v1700
      %1957 = vst [vmem:[%s145 + $0xc0] sm:$0xf] %v1701
      %1958 = vst [vmem:[%s145 + $0xc4] sm:$0xf] %v1702
      %1959 = vst [vmem:[%s145 + $0xc8] sm:$0xf] %v1703
      %1960 = vst [vmem:[%s145 + $0xcc] sm:$0xf] %v1704
      %1961 = vst [vmem:[%s145 + $0xd0] sm:$0xf] %v1705
      %1962 = vst [vmem:[%s145 + $0xd4] sm:$0xf] %v1706
      %1963 = vst [vmem:[%s145 + $0xd8] sm:$0xf] %v1707
      %1964 = vst [vmem:[%s145 + $0xdc] sm:$0xf] %v1708
      %1965 = vst [vmem:[%s145 + $0xe0] sm:$0xf] %v1709
      %1966 = vst [vmem:[%s145 + $0xe4] sm:$0xf] %v1710
      %1967 = vst [vmem:[%s145 + $0xe8] sm:$0xf] %v1711
      %1968 = vst [vmem:[%s145 + $0xec] sm:$0xf] %v1712
      %1969 = vst [vmem:[%s145 + $0xf0] sm:$0xf] %v1713
      %1970 = vst [vmem:[%s145 + $0xf4] sm:$0xf] %v1714
      %1971 = vst [vmem:[%s145 + $0xf8] sm:$0xf] %v1715
      %1972 = vst [vmem:[%s145 + $0xfc] sm:$0xf] %v1716
      %1973 = vst [vmem:[%s145 + $0x100] sm:$0xf] %v1717
      %1974 = vst [vmem:[%s145 + $0x104] sm:$0xf] %v1718
      %1975 = vst [vmem:[%s145 + $0x108] sm:$0xf] %v1719
      %1976 = vst [vmem:[%s145 + $0x10c] sm:$0xf] %v1720
      %1977 = vst [vmem:[%s145 + $0x110] sm:$0xf] %v1721
      %1978 = vst [vmem:[%s145 + $0x114] sm:$0xf] %v1722
      %1979 = vst [vmem:[%s145 + $0x118] sm:$0xf] %v1723
      %1980 = vst [vmem:[%s145 + $0x11c] sm:$0xf] %v1724
      %1981 = vst [vmem:[%s145 + $0x120] sm:$0xf] %v1725
      %1982 = vst [vmem:[%s145 + $0x124] sm:$0xf] %v1726
      %1983 = vst [vmem:[%s145 + $0x128] sm:$0xf] %v1727
      %1984 = vst [vmem:[%s145 + $0x12c] sm:$0xf] %v1728
      %1985 = vst [vmem:[%s145 + $0x130] sm:$0xf] %v1729
      %1986 = vst [vmem:[%s145 + $0x134] sm:$0xf] %v1730
      %1987 = vst [vmem:[%s145 + $0x138] sm:$0xf] %v1731
      %1988 = vst [vmem:[%s145 + $0x13c] sm:$0xf] %v1732
      %1989 = vst [vmem:[%s145 + $0x140] sm:$0xf] %v1733
      %1990 = vst [vmem:[%s145 + $0x144] sm:$0xf] %v1734
      %1991 = vst [vmem:[%s145 + $0x148] sm:$0xf] %v1735
      %1992 = vst [vmem:[%s145 + $0x14c] sm:$0xf] %v1736
      %1993 = vst [vmem:[%s145 + $0x150] sm:$0xf] %v1737
      %1994 = vst [vmem:[%s145 + $0x154] sm:$0xf] %v1738
      %1995 = vst [vmem:[%s145 + $0x158] sm:$0xf] %v1739
      %1996 = vst [vmem:[%s145 + $0x15c] sm:$0xf] %v1740
      %1997 = vst [vmem:[%s145 + $0x160] sm:$0xf] %v1741
      %1998 = vst [vmem:[%s145 + $0x164] sm:$0xf] %v1742
      %1999 = vst [vmem:[%s145 + $0x168] sm:$0xf] %v1743
      %2000 = vst [vmem:[%s145 + $0x16c] sm:$0xf] %v1744
      %2001 = vst [vmem:[%s145 + $0x170] sm:$0xf] %v1745
      %2002 = vst [vmem:[%s145 + $0x174] sm:$0xf] %v1746
      %2003 = vst [vmem:[%s145 + $0x178] sm:$0xf] %v1747
      %2004 = vst [vmem:[%s145 + $0x17c] sm:$0xf] %v1748
      %2005 = vst [vmem:[%s145 + $0x180] sm:$0xf] %v1749
      %2006 = vst [vmem:[%s145 + $0x184] sm:$0xf] %v1750
      %2007 = vst [vmem:[%s145 + $0x188] sm:$0xf] %v1751
      %2008 = vst [vmem:[%s145 + $0x18c] sm:$0xf] %v1752
      %2009 = vst [vmem:[%s145 + $0x190] sm:$0xf] %v1753
      %2010 = vst [vmem:[%s145 + $0x194] sm:$0xf] %v1754
      %2011 = vst [vmem:[%s145 + $0x198] sm:$0xf] %v1755
      %2012 = vst [vmem:[%s145 + $0x19c] sm:$0xf] %v1756
      %2013 = vst [vmem:[%s145 + $0x1a0] sm:$0xf] %v1757
      %2014 = vst [vmem:[%s145 + $0x1a4] sm:$0xf] %v1758
      %2015 = vst [vmem:[%s145 + $0x1a8] sm:$0xf] %v1759
      %2016 = vst [vmem:[%s145 + $0x1ac] sm:$0xf] %v1760
      %2017 = vst [vmem:[%s145 + $0x1b0] sm:$0xf] %v1761
      %2018 = vst [vmem:[%s145 + $0x1b4] sm:$0xf] %v1762
      %2019 = vst [vmem:[%s145 + $0x1b8] sm:$0xf] %v1763
      %2020 = vst [vmem:[%s145 + $0x1bc] sm:$0xf] %v1764
      %2021 = vst [vmem:[%s145 + $0x1c0] sm:$0xf] %v1765
      %2022 = vst [vmem:[%s145 + $0x1c4] sm:$0xf] %v1766
      %2023 = vst [vmem:[%s145 + $0x1c8] sm:$0xf] %v1767
      %2024 = vst [vmem:[%s145 + $0x1cc] sm:$0xf] %v1768
      %2025 = vst [vmem:[%s145 + $0x1d0] sm:$0xf] %v1769
      %2026 = vst [vmem:[%s145 + $0x1d4] sm:$0xf] %v1770
      %2027 = vst [vmem:[%s145 + $0x1d8] sm:$0xf] %v1771
      %2028 = vst [vmem:[%s145 + $0x1dc] sm:$0xf] %v1772
      %2029 = vst [vmem:[%s145 + $0x1e0] sm:$0xf] %v1773
      %2030 = vst [vmem:[%s145 + $0x1e4] sm:$0xf] %v1774
      %2031 = vst [vmem:[%s145 + $0x1e8] sm:$0xf] %v1775
      %2032 = vst [vmem:[%s145 + $0x1ec] sm:$0xf] %v1776
      %2033 = vst [vmem:[%s145 + $0x1f0] sm:$0xf] %v1777
      %2034 = vst [vmem:[%s145 + $0x1f4] sm:$0xf] %v1778
      %2035 = vst [vmem:[%s145 + $0x1f8] sm:$0xf] %v1779
      %2036 = vst [vmem:[%s145 + $0x1fc] sm:$0xf] %v1780
      %s2037 = smul.u32 128, %s13
      %p2038 = scmp.lt.s32.totalorder %s2037, 383
      %s2039 = scalar_select %p2038, %s2037, 383
      %s2040 = smul.addr %s2039, 4
      %s2041 = scalar_lea.vmem %s2, %s2040
      // Predicated region
      $region29: #{netg_forward.25} parent=27 // pred_check
        %p2042 = pneg %p78
      $region30: #{netg_forward.25} parent=27 // pred_check_branch
        %2044 = sbr.rel (%p2042) target = $region32
      $region31: #{netg_forward.25} parent=27 // pred_region
        %s2045 = smul.u32 128, %s13
      $region32: #{netg_forward.25} parent=27 // pred_fallthru
        _
    $region28: #{netg_forward.25} parent=5 // pred_fallthru
      _
    %p2046 = scmp.le.s32.totalorder 2, %s8
    // Predicated region
    $region33: #{netg_forward.25} parent=5 // pred_check
      %p2047 = pneg %p2046
    $region34: #{netg_forward.25} parent=5 // pred_check_branch
      %2049 = sbr.rel (%p2047) target = $region36
    $region35: #{netg_forward.25} parent=5 // pred_region
      %s2050 = ssub.s32 %s8, 2
      // Predicated region
      $region37: #{netg_forward.25} parent=35 // pred_check
        %p2051 = pneg %p84
      $region38: #{netg_forward.25} parent=35 // pred_check_branch
        %2053 = sbr.rel (%p2051) target = $region40
      $region39: #{netg_forward.25} parent=35 // pred_region
        %s2054 = smul.u32 128, %s14
        %p2055 = scmp.lt.s32.totalorder %s2054, 383
        %s2056 = scalar_select %p2055, %s2054, 383
        %s2057 = smul.addr %s2056, 4
        %s2058 = scalar_lea.vmem %s2, %s2057
      $region40: #{netg_forward.25} parent=35 // pred_fallthru
        _
    $region36: #{netg_forward.25} parent=5 // pred_fallthru
      _
  $region6: #{netg_forward.25} parent=0 // loop_footer
    %s12 = sadd.s32 1, %s8
  $region7: #{netg_forward.25} parent=0 // loop_footer_branch
    %7 = sbr.rel target = $region3
  $region8: #{netg_forward.25} parent=0 // loop_exit
    _

</llo_original>
